<compile_context>
chip_gen: v7x
topology: tpu7x:2x2x1
jax: 0.10.0
libtpu: 0.0.40
codegen_flags: <defaults>
</compile_context>

<pallas_src>
import functools
import math

import jax
import jax.numpy as jnp
import numpy as np
from jax.experimental import pallas as pl
from jax.experimental.pallas import tpu as pltpu

EPS = 1e-5  # nn.LayerNorm default
KEYS = ("wfc", "bfc", "g1", "be1", "w1", "b1", "w2", "b2", "g2", "be2")
VEC_ORDER = ("bfc", "g1", "be1", "b1", "b2", "g2", "be2")


# ----------------------------------------------------------------------------
# In-kernel helpers
# ----------------------------------------------------------------------------
def _layernorm(x, gamma, beta):
    mu = jnp.mean(x, axis=-1, keepdims=True)
    var = jnp.mean((x - mu) ** 2, axis=-1, keepdims=True)
    return (x - mu) * jax.lax.rsqrt(var + EPS) * gamma + beta


def _attention(v, k, q, head_masks, *, embed_size):
    """Multi-head attention via per-head lane masks (no lane slice/concat)."""
    scale = 1.0 / math.sqrt(float(embed_size))
    out = None
    for hm in head_masks:
        # energy_h[n,q,k] = sum_{e in head h} Q[n,q,e] K[n,k,e]
        s = jnp.einsum("nqe,nke->nqk", q, k * hm,
                       preferred_element_type=jnp.float32) * scale
        s = s - jnp.max(s, axis=-1, keepdims=True)
        p = jnp.exp(s)
        attn = p * pl.reciprocal(jnp.sum(p, axis=-1, keepdims=True), approx=False)
        # context_h is non-zero only in head-h lanes; summing over heads
        # reproduces the concat-of-heads layout exactly.
        ctx = jnp.einsum("nqk,nke->nqe", attn, v * hm,
                         preferred_element_type=jnp.float32)
        out = ctx if out is None else out + ctx
    return out


def _block(v, k, q, lw, head_masks, *, embed_size):
    """One TransformerBlock. v/k/q: (N, L, E) f32; lw: dict of layer weights."""
    N, Lq, E = q.shape
    o = _attention(v, k, q, head_masks, embed_size=embed_size)
    # fc_out + residual + LN1 + FFN + residual + LN2, batch fused into rows
    o2 = o.reshape(N * Lq, E)
    q2 = q.reshape(N * Lq, E)
    a = jnp.dot(o2, lw["wfc"], preferred_element_type=jnp.float32) + lw["bfc"]
    x = _layernorm(a + q2, lw["g1"], lw["be1"])
    h1 = jnp.maximum(
        jnp.dot(x, lw["w1"], preferred_element_type=jnp.float32) + lw["b1"], 0.0)
    ff = jnp.dot(h1, lw["w2"], preferred_element_type=jnp.float32) + lw["b2"]
    y = _layernorm(ff + x, lw["g2"], lw["be2"])
    return y.reshape(N, Lq, E)


def _unpack_layer(w_ref, l, E, FF):
    """Static slices out of the packed (num_layers, 2E+FF+7, max(E,FF)) slab."""
    lw = {
        "wfc": w_ref[l, 0:E, 0:E],
        "w1": w_ref[l, E:2 * E, 0:FF],
        "w2": w_ref[l, 2 * E:2 * E + FF, 0:E],
    }
    r0 = 2 * E + FF
    vecs = w_ref[l, r0:r0 + len(VEC_ORDER), :]
    for i, name in enumerate(VEC_ORDER):
        width = FF if name == "b1" else E
        lw[name] = vecs[i, 0:width]
    return lw


# ----------------------------------------------------------------------------
# Fused whole-model kernel (encoder + decoder + vocab projection)
# ----------------------------------------------------------------------------
def transformer_kernel(src_ref, trg_ref, encw_ref, decw_ref, fc_ref, out_ref,
                       *, num_layers, heads, head_dim, embed_size, ff_dim):
    E, FF, D = embed_size, ff_dim, head_dim
    N, Ls, _ = src_ref.shape
    _, Lt, _ = trg_ref.shape

    lane = jax.lax.broadcasted_iota(jnp.int32, (1, 1, E), 2)
    head_masks = [((lane >= h * D) & (lane < (h + 1) * D)).astype(jnp.float32)
                  for h in range(heads)]

    # ---- Encoder ----
    x = src_ref[...]
    for l in range(num_layers):
        lw = _unpack_layer(encw_ref, l, E, FF)
        x = _block(x, x, x, lw, head_masks, embed_size=E)
    enc_out = x

    # ---- Decoder (value = y, key = enc_out, query = y, as in the reference) ----
    y = trg_ref[...]
    for l in range(num_layers):
        lw = _unpack_layer(decw_ref, l, E, FF)
        y = _block(y, enc_out, y, lw, head_masks, embed_size=E)

    # ---- final vocab projection (output padded to 128 lanes -> dense stores) ----
    Vpad = fc_ref.shape[1]
    y2 = y.reshape(N * Lt, E)
    fcw = fc_ref[0:E, :]
    fcb = fc_ref[E, :]
    out = jnp.dot(y2, fcw, preferred_element_type=jnp.float32) + fcb
    out_ref[...] = out.reshape(N, Lt, Vpad)


# ----------------------------------------------------------------------------
# Wrapper
# ----------------------------------------------------------------------------
def _multi_tensorcore():
    """True only on chips with >1 TensorCore (v7x) -- gate the batch grid."""
    try:
        kind = jax.devices()[0].device_kind.lower().replace(" ", "")
    except Exception:  # pragma: no cover
        return False
    return ("v7" in kind) or ("tpu7" in kind)


def transformer_forward(src, trg, params, *, heads, trg_vocab):
    N, Ls = src.shape
    _, Lt = trg.shape
    E = params["enc_word_emb"].shape[1]
    enc_w, dec_w, fc = params["enc_w"], params["dec_w"], params["fc"]
    num_layers = enc_w.shape[0]
    FF = enc_w.shape[1] - 2 * E - len(VEC_ORDER)
    Vpad = fc.shape[1]

    # Embedding lookups (gathers) stay in plain-JAX glue outside the kernel.
    src_x = params["enc_word_emb"][src] + params["enc_pos_emb"][:Ls][None]
    trg_x = params["dec_word_emb"][trg] + params["dec_pos_emb"][:Lt][None]

    kernel = functools.partial(transformer_kernel,
                               num_layers=num_layers, heads=heads,
                               head_dim=E // heads, embed_size=E, ff_dim=FF)

    if _multi_tensorcore() and N > 1:
        # v7x: split independent batch rows across the 2 TensorCores.
        grid = (N,)
        src_spec = pl.BlockSpec((1, Ls, E), lambda i: (i, 0, 0))
        trg_spec = pl.BlockSpec((1, Lt, E), lambda i: (i, 0, 0))
        out_spec = pl.BlockSpec((1, Lt, Vpad), lambda i: (i, 0, 0))
        sem = ("parallel",)
    else:
        # v5e/v6e: one TensorCore -> one grid step, whole arrays resident.
        grid = (1,)
        src_spec = pl.BlockSpec((N, Ls, E), lambda i: (0, 0, 0))
        trg_spec = pl.BlockSpec((N, Lt, E), lambda i: (0, 0, 0))
        out_spec = pl.BlockSpec((N, Lt, Vpad), lambda i: (0, 0, 0))
        sem = ("arbitrary",)

    w_specs = [pl.BlockSpec(a.shape, lambda i, _n=a.ndim: (0,) * _n)
               for a in (enc_w, dec_w, fc)]

    out = pl.pallas_call(
        kernel,
        out_shape=jax.ShapeDtypeStruct((N, Lt, Vpad), jnp.float32),
        grid=grid,
        in_specs=[src_spec, trg_spec] + w_specs,
        out_specs=out_spec,
        compiler_params=pltpu.CompilerParams(dimension_semantics=sem),
    )(src_x, trg_x, enc_w, dec_w, fc)
    return out[:, :, :trg_vocab]


# ----------------------------------------------------------------------------
# Parameter init + one-time packing (hoisted out of the per-call wrapper)
# ----------------------------------------------------------------------------
def _uniform(key, shape, fan_in):
    bound = 1.0 / math.sqrt(fan_in)
    return jax.random.uniform(key, shape, jnp.float32, -bound, bound)


def init_layer(key, E, FF):
    ks = jax.random.split(key, 6)
    return {
        "wfc": _uniform(ks[0], (E, E), E),
        "bfc": _uniform(ks[1], (1, E), E),
        "g1": jnp.ones((1, E), jnp.float32),
        "be1": jnp.zeros((1, E), jnp.float32),
        "w1": _uniform(ks[2], (E, FF), E),
        "b1": _uniform(ks[3], (1, FF), E),
        "w2": _uniform(ks[4], (FF, E), FF),
        "b2": _uniform(ks[5], (1, E), FF),
        "g2": jnp.ones((1, E), jnp.float32),
        "be2": jnp.zeros((1, E), jnp.float32),
    }


def init_stack(key, E, FF, num_layers):
    layers = [init_layer(k, E, FF) for k in jax.random.split(key, num_layers)]
    return {name: jnp.stack([l[name] for l in layers]) for name in KEYS}


def init_params(key, src_vocab, trg_vocab, E, num_layers, FF, max_len):
    keys = jax.random.split(key, 8)
    enc = {
        "word_emb": jax.random.normal(keys[0], (src_vocab, E), jnp.float32),
        "pos_emb": jax.random.normal(keys[1], (max_len, E), jnp.float32),
        "layers": init_stack(keys[2], E, FF, num_layers),
    }
    dec = {
        "word_emb": jax.random.normal(keys[3], (trg_vocab, E), jnp.float32),
        "pos_emb": jax.random.normal(keys[4], (max_len, E), jnp.float32),
        "layers": init_stack(keys[5], E, FF, num_layers),
        "fc_w": _uniform(keys[6], (E, trg_vocab), E),
        "fc_b": _uniform(keys[7], (1, trg_vocab), E),
    }
    return enc, dec


def pack_layer_stack(stack, E, FF):
    """Pack one layer stack into a single (num_layers, 2E+FF+7, max(E,FF)) slab."""
    L = stack["wfc"].shape[0]
    CM = max(E, FF)
    rows = 2 * E + FF + len(VEC_ORDER)
    slab = jnp.zeros((L, rows, CM), jnp.float32)
    slab = slab.at[:, 0:E, 0:E].set(stack["wfc"])
    slab = slab.at[:, E:2 * E, 0:FF].set(stack["w1"])
    slab = slab.at[:, 2 * E:2 * E + FF, 0:E].set(stack["w2"])
    r0 = 2 * E + FF
    for i, name in enumerate(VEC_ORDER):
        vec = stack[name].reshape(L, -1)
        slab = slab.at[:, r0 + i, 0:vec.shape[1]].set(vec)
    return slab


def pack_params(enc_p, dec_p):
    """One-time packing: weight slabs + lane-dense (padded) vocab projection."""
    E = enc_p["word_emb"].shape[1]
    FF = enc_p["layers"]["w1"].shape[2]
    V = dec_p["fc_w"].shape[1]
    Vpad = ((V + 127) // 128) * 128
    fc = jnp.concatenate([dec_p["fc_w"], dec_p["fc_b"]], axis=0)   # (E+1, V)
    fc = jnp.pad(fc, ((0, 0), (0, Vpad - V)))                      # (E+1, Vpad)
    return {
        "enc_word_emb": enc_p["word_emb"],
        "enc_pos_emb": enc_p["pos_emb"],
        "dec_word_emb": dec_p["word_emb"],
        "dec_pos_emb": dec_p["pos_emb"],
        "enc_w": pack_layer_stack(enc_p["layers"], E, FF),
        "dec_w": pack_layer_stack(dec_p["layers"], E, FF),
        "fc": fc,
    }


# ----------------------------------------------------------------------------
# Pure-JAX reference (mirrors the PyTorch forward) for a correctness check
# ----------------------------------------------------------------------------
def _layer_params(stack, l):
    return {k: stack[k][l] for k in KEYS}


def _ref_block(value, key, query, lp, heads):
    N, Lq, E = query.shape
    D = E // heads
    q = query.reshape(N, Lq, heads, D)
    k = key.reshape(N, key.shape[1], heads, D)
    v = value.reshape(N, value.shape[1], heads, D)
    energy = jnp.einsum("nqhd,nkhd->nhqk", q, k)
    attn = jax.nn.softmax(energy / math.sqrt(E), axis=3)
    o = jnp.einsum("nhql,nlhd->nqhd", attn, v).reshape(N, Lq, E)
    o = o @ lp["wfc"] + lp["bfc"]
    x = o + query
    mu = x.mean(-1, keepdims=True)
    var = ((x - mu) ** 2).mean(-1, keepdims=True)
    x = (x - mu) / jnp.sqrt(var + EPS) * lp["g1"] + lp["be1"]
    ff = jnp.maximum(x @ lp["w1"] + lp["b1"], 0.0) @ lp["w2"] + lp["b2"]
    y = ff + x
    mu2 = y.mean(-1, keepdims=True)
    var2 = ((y - mu2) ** 2).mean(-1, keepdims=True)
    return (y - mu2) / jnp.sqrt(var2 + EPS) * lp["g2"] + lp["be2"]


def _ref_forward(src, trg, enc_p, dec_p, heads):
    Ls, Lt = src.shape[1], trg.shape[1]
    num_layers = enc_p["layers"]["wfc"].shape[0]
    x = enc_p["word_emb"][src] + enc_p["pos_emb"][jnp.arange(Ls)][None]
    for l in range(num_layers):
        lp = _layer_params(enc_p["layers"], l)
        x = _ref_block(x, x, x, lp, heads)
    y = dec_p["word_emb"][trg] + dec_p["pos_emb"][jnp.arange(Lt)][None]
    for l in range(num_layers):
        lp = _layer_params(dec_p["layers"], l)
        y = _ref_block(y, x, y, lp, heads)
    return y @ dec_p["fc_w"] + dec_p["fc_b"]


# ----------------------------------------------------------------------------
if __name__ == "__main__":
    src_vocab, trg_vocab = 50, 60
    embed_size, num_layers, heads = 32, 2, 4
    forward_expansion, max_length = 2, 16
    FF = forward_expansion * embed_size
    N, L = 2, 8  # src/trg seq lengths equal (required by the reference semantics)

    root = jax.random.PRNGKey(0)
    k_param, k_src, k_trg = jax.random.split(root, 3)
    enc_p, dec_p = init_params(k_param, src_vocab, trg_vocab, embed_size,
                               num_layers, FF, max_length)
    params = pack_params(enc_p, dec_p)   # one-time packing / padding

    src = jax.random.randint(k_src, (N, L), 0, src_vocab, dtype=jnp.int32)
    trg = jax.random.randint(k_trg, (N, L), 0, trg_vocab, dtype=jnp.int32)

    fwd = jax.jit(functools.partial(transformer_forward,
                                    heads=heads, trg_vocab=trg_vocab))
    out = jax.block_until_ready(fwd(src, trg, params))

    ref = jax.block_until_ready(_ref_forward(src, trg, enc_p, dec_p, heads))
    np.testing.assert_allclose(np.asarray(out), np.asarray(ref),
                               rtol=1e-4, atol=1e-4)
    assert out.shape == (N, L, trg_vocab)
    print("KERNEL_OK")
</pallas_src>

<mosaic_0001>
module attributes {stable_mosaic.version = 11 : i64} {
  func.func @transformer_kernel(%arg0: i32, %arg1: memref<2x8x32xf32, #tpu.memory_space<vmem>>, %arg2: memref<2x8x32xf32, #tpu.memory_space<vmem>>, %arg3: memref<2x135x64xf32, #tpu.memory_space<vmem>>, %arg4: memref<2x135x64xf32, #tpu.memory_space<vmem>>, %arg5: memref<33x128xf32, #tpu.memory_space<vmem>>, %arg6: memref<2x8x128xf32, #tpu.memory_space<vmem>>) attributes {dimension_semantics = [#tpu.dimension_semantics<arbitrary>], iteration_bounds = array<i64: 1>, scalar_prefetch = 0 : i64, scratch_operands = 0 : i64, tpu.core_type = #tpu.core_type<tc>, window_params = [{pipeline_mode = #tpu.pipeline_mode<synchronous>, transform_indices = @transform_0, window_bounds = array<i64: 2, 8, 32>}, {pipeline_mode = #tpu.pipeline_mode<synchronous>, transform_indices = @transform_1, window_bounds = array<i64: 2, 8, 32>}, {pipeline_mode = #tpu.pipeline_mode<synchronous>, transform_indices = @transform_2, window_bounds = array<i64: 2, 135, 64>}, {pipeline_mode = #tpu.pipeline_mode<synchronous>, transform_indices = @transform_3, window_bounds = array<i64: 2, 135, 64>}, {pipeline_mode = #tpu.pipeline_mode<synchronous>, transform_indices = @transform_4, window_bounds = array<i64: 33, 128>}, {pipeline_mode = #tpu.pipeline_mode<synchronous>, transform_indices = @transform_5, window_bounds = array<i64: 2, 8, 128>}]} {
    %0 = tpu.iota {dimensions = array<i32: 2>} : vector<1x1x32xi32>
    %c0_i32 = arith.constant 0 : i32
    %1 = vector.broadcast %c0_i32 : i32 to vector<1x1x32xi32>
    %2 = arith.cmpi sge, %0, %1 : vector<1x1x32xi32>
    %c8_i32 = arith.constant 8 : i32
    %3 = vector.broadcast %c8_i32 : i32 to vector<1x1x32xi32>
    %4 = arith.cmpi slt, %0, %3 : vector<1x1x32xi32>
    %5 = arith.andi %2, %4 : vector<1x1x32xi1>
    %6 = arith.extui %5 : vector<1x1x32xi1> to vector<1x1x32xi32>
    %7 = arith.sitofp %6 : vector<1x1x32xi32> to vector<1x1x32xf32>
    %c8_i32_0 = arith.constant 8 : i32
    %8 = vector.broadcast %c8_i32_0 : i32 to vector<1x1x32xi32>
    %9 = arith.cmpi sge, %0, %8 : vector<1x1x32xi32>
    %c16_i32 = arith.constant 16 : i32
    %10 = vector.broadcast %c16_i32 : i32 to vector<1x1x32xi32>
    %11 = arith.cmpi slt, %0, %10 : vector<1x1x32xi32>
    %12 = arith.andi %9, %11 : vector<1x1x32xi1>
    %13 = arith.extui %12 : vector<1x1x32xi1> to vector<1x1x32xi32>
    %14 = arith.sitofp %13 : vector<1x1x32xi32> to vector<1x1x32xf32>
    %c16_i32_1 = arith.constant 16 : i32
    %15 = vector.broadcast %c16_i32_1 : i32 to vector<1x1x32xi32>
    %16 = arith.cmpi sge, %0, %15 : vector<1x1x32xi32>
    %c24_i32 = arith.constant 24 : i32
    %17 = vector.broadcast %c24_i32 : i32 to vector<1x1x32xi32>
    %18 = arith.cmpi slt, %0, %17 : vector<1x1x32xi32>
    %19 = arith.andi %16, %18 : vector<1x1x32xi1>
    %20 = arith.extui %19 : vector<1x1x32xi1> to vector<1x1x32xi32>
    %21 = arith.sitofp %20 : vector<1x1x32xi32> to vector<1x1x32xf32>
    %c24_i32_2 = arith.constant 24 : i32
    %22 = vector.broadcast %c24_i32_2 : i32 to vector<1x1x32xi32>
    %23 = arith.cmpi sge, %0, %22 : vector<1x1x32xi32>
    %c32_i32 = arith.constant 32 : i32
    %24 = vector.broadcast %c32_i32 : i32 to vector<1x1x32xi32>
    %25 = arith.cmpi slt, %0, %24 : vector<1x1x32xi32>
    %26 = arith.andi %23, %25 : vector<1x1x32xi1>
    %27 = arith.extui %26 : vector<1x1x32xi1> to vector<1x1x32xi32>
    %28 = arith.sitofp %27 : vector<1x1x32xi32> to vector<1x1x32xf32>
    %c0 = arith.constant 0 : index
    %c0_3 = arith.constant 0 : index
    %c0_4 = arith.constant 0 : index
    %29 = vector.load %arg1[%c0, %c0_3, %c0_4] : memref<2x8x32xf32, #tpu.memory_space<vmem>>, vector<2x8x32xf32>
    %c0_5 = arith.constant 0 : index
    %c0_6 = arith.constant 0 : index
    %c0_7 = arith.constant 0 : index
    %30 = vector.load %arg3[%c0_5, %c0_6, %c0_7] : memref<2x135x64xf32, #tpu.memory_space<vmem>>, vector<1x32x32xf32>
    %31 = vector.shape_cast %30 : vector<1x32x32xf32> to vector<32x32xf32>
    %c0_8 = arith.constant 0 : index
    %c32 = arith.constant 32 : index
    %c0_9 = arith.constant 0 : index
    %32 = vector.load %arg3[%c0_8, %c32, %c0_9] : memref<2x135x64xf32, #tpu.memory_space<vmem>>, vector<1x32x64xf32>
    %33 = vector.shape_cast %32 : vector<1x32x64xf32> to vector<32x64xf32>
    %c0_10 = arith.constant 0 : index
    %c64 = arith.constant 64 : index
    %c0_11 = arith.constant 0 : index
    %34 = vector.load %arg3[%c0_10, %c64, %c0_11] : memref<2x135x64xf32, #tpu.memory_space<vmem>>, vector<1x64x32xf32>
    %35 = vector.shape_cast %34 : vector<1x64x32xf32> to vector<64x32xf32>
    %c0_12 = arith.constant 0 : index
    %c128 = arith.constant 128 : index
    %c0_13 = arith.constant 0 : index
    %36 = vector.load %arg3[%c0_12, %c128, %c0_13] : memref<2x135x64xf32, #tpu.memory_space<vmem>>, vector<1x7x64xf32>
    %37 = vector.shape_cast %36 : vector<1x7x64xf32> to vector<7x64xf32>
    %38 = vector.extract_strided_slice %37 {offsets = [0, 0], sizes = [1, 32], strides = [1, 1]} : vector<7x64xf32> to vector<1x32xf32>
    %39 = vector.shape_cast %38 : vector<1x32xf32> to vector<32xf32>
    %40 = vector.extract_strided_slice %37 {offsets = [1, 0], sizes = [1, 32], strides = [1, 1]} : vector<7x64xf32> to vector<1x32xf32>
    %41 = vector.shape_cast %40 : vector<1x32xf32> to vector<32xf32>
    %42 = vector.extract_strided_slice %37 {offsets = [2, 0], sizes = [1, 32], strides = [1, 1]} : vector<7x64xf32> to vector<1x32xf32>
    %43 = vector.shape_cast %42 : vector<1x32xf32> to vector<32xf32>
    %44 = vector.extract_strided_slice %37 {offsets = [3, 0], sizes = [1, 64], strides = [1, 1]} : vector<7x64xf32> to vector<1x64xf32>
    %45 = vector.shape_cast %44 : vector<1x64xf32> to vector<64xf32>
    %46 = vector.extract_strided_slice %37 {offsets = [4, 0], sizes = [1, 32], strides = [1, 1]} : vector<7x64xf32> to vector<1x32xf32>
    %47 = vector.shape_cast %46 : vector<1x32xf32> to vector<32xf32>
    %48 = vector.extract_strided_slice %37 {offsets = [5, 0], sizes = [1, 32], strides = [1, 1]} : vector<7x64xf32> to vector<1x32xf32>
    %49 = vector.shape_cast %48 : vector<1x32xf32> to vector<32xf32>
    %50 = vector.extract_strided_slice %37 {offsets = [6, 0], sizes = [1, 32], strides = [1, 1]} : vector<7x64xf32> to vector<1x32xf32>
    %51 = vector.shape_cast %50 : vector<1x32xf32> to vector<32xf32>
    %52 = vector.broadcast %7 : vector<1x1x32xf32> to vector<2x8x32xf32>
    %53 = arith.mulf %29, %52 : vector<2x8x32xf32>
    "tpu.trace_start"() <{level = 10 : i32, message = "nqe,nke->nqk"}> : () -> ()
    %cst = arith.constant dense<0.000000e+00> : vector<2x8x8xf32>
    %54 = tpu.matmul %29, %53, %cst {dimension_numbers = #tpu.dot_dimension_numbers<[2], [2], [1], [1], [0, 0, 0, 1, 1, 1], [0], [0]>} : vector<2x8x32xf32>, vector<2x8x32xf32>, vector<2x8x8xf32> -> vector<2x8x8xf32>
    "tpu.trace_stop"() : () -> ()
    %cst_14 = arith.constant 0.176776692 : f32
    %55 = vector.broadcast %cst_14 : f32 to vector<2x8x8xf32>
    %56 = arith.mulf %54, %55 : vector<2x8x8xf32>
    %cst_15 = arith.constant dense<0xFF800000> : vector<2x8xf32>
    %57 = vector.multi_reduction <maximumf>, %56, %cst_15 [2] : vector<2x8x8xf32> to vector<2x8xf32>
    %58 = vector.shape_cast %57 : vector<2x8xf32> to vector<2x8x1xf32>
    %59 = vector.broadcast %58 : vector<2x8x1xf32> to vector<2x8x8xf32>
    %60 = arith.subf %56, %59 : vector<2x8x8xf32>
    %61 = math.exp %60 : vector<2x8x8xf32>
    %cst_16 = arith.constant dense<0.000000e+00> : vector<2x8xf32>
    %62 = vector.multi_reduction <add>, %61, %cst_16 [2] : vector<2x8x8xf32> to vector<2x8xf32>
    %63 = vector.shape_cast %62 : vector<2x8xf32> to vector<2x8x1xf32>
    %64 = tpu.reciprocal %63 : vector<2x8x1xf32> -> vector<2x8x1xf32>
    %65 = vector.broadcast %64 : vector<2x8x1xf32> to vector<2x8x8xf32>
    %66 = arith.mulf %61, %65 : vector<2x8x8xf32>
    %67 = vector.broadcast %7 : vector<1x1x32xf32> to vector<2x8x32xf32>
    %68 = arith.mulf %29, %67 : vector<2x8x32xf32>
    "tpu.trace_start"() <{level = 10 : i32, message = "nqk,nke->nqe"}> : () -> ()
    %cst_17 = arith.constant dense<0.000000e+00> : vector<2x8x32xf32>
    %69 = tpu.matmul %66, %68, %cst_17 {dimension_numbers = #tpu.dot_dimension_numbers<[2], [1], [1], [2], [0, 0, 0, 1, 1, 2], [0], [0]>} : vector<2x8x8xf32>, vector<2x8x32xf32>, vector<2x8x32xf32> -> vector<2x8x32xf32>
    "tpu.trace_stop"() : () -> ()
    %70 = vector.broadcast %14 : vector<1x1x32xf32> to vector<2x8x32xf32>
    %71 = arith.mulf %29, %70 : vector<2x8x32xf32>
    "tpu.trace_start"() <{level = 10 : i32, message = "nqe,nke->nqk"}> : () -> ()
    %cst_18 = arith.constant dense<0.000000e+00> : vector<2x8x8xf32>
    %72 = tpu.matmul %29, %71, %cst_18 {dimension_numbers = #tpu.dot_dimension_numbers<[2], [2], [1], [1], [0, 0, 0, 1, 1, 1], [0], [0]>} : vector<2x8x32xf32>, vector<2x8x32xf32>, vector<2x8x8xf32> -> vector<2x8x8xf32>
    "tpu.trace_stop"() : () -> ()
    %cst_19 = arith.constant 0.176776692 : f32
    %73 = vector.broadcast %cst_19 : f32 to vector<2x8x8xf32>
    %74 = arith.mulf %72, %73 : vector<2x8x8xf32>
    %cst_20 = arith.constant dense<0xFF800000> : vector<2x8xf32>
    %75 = vector.multi_reduction <maximumf>, %74, %cst_20 [2] : vector<2x8x8xf32> to vector<2x8xf32>
    %76 = vector.shape_cast %75 : vector<2x8xf32> to vector<2x8x1xf32>
    %77 = vector.broadcast %76 : vector<2x8x1xf32> to vector<2x8x8xf32>
    %78 = arith.subf %74, %77 : vector<2x8x8xf32>
    %79 = math.exp %78 : vector<2x8x8xf32>
    %cst_21 = arith.constant dense<0.000000e+00> : vector<2x8xf32>
    %80 = vector.multi_reduction <add>, %79, %cst_21 [2] : vector<2x8x8xf32> to vector<2x8xf32>
    %81 = vector.shape_cast %80 : vector<2x8xf32> to vector<2x8x1xf32>
    %82 = tpu.reciprocal %81 : vector<2x8x1xf32> -> vector<2x8x1xf32>
    %83 = vector.broadcast %82 : vector<2x8x1xf32> to vector<2x8x8xf32>
    %84 = arith.mulf %79, %83 : vector<2x8x8xf32>
    %85 = vector.broadcast %14 : vector<1x1x32xf32> to vector<2x8x32xf32>
    %86 = arith.mulf %29, %85 : vector<2x8x32xf32>
    "tpu.trace_start"() <{level = 10 : i32, message = "nqk,nke->nqe"}> : () -> ()
    %cst_22 = arith.constant dense<0.000000e+00> : vector<2x8x32xf32>
    %87 = tpu.matmul %84, %86, %cst_22 {dimension_numbers = #tpu.dot_dimension_numbers<[2], [1], [1], [2], [0, 0, 0, 1, 1, 2], [0], [0]>} : vector<2x8x8xf32>, vector<2x8x32xf32>, vector<2x8x32xf32> -> vector<2x8x32xf32>
    "tpu.trace_stop"() : () -> ()
    %88 = arith.addf %69, %87 : vector<2x8x32xf32>
    %89 = vector.broadcast %21 : vector<1x1x32xf32> to vector<2x8x32xf32>
    %90 = arith.mulf %29, %89 : vector<2x8x32xf32>
    "tpu.trace_start"() <{level = 10 : i32, message = "nqe,nke->nqk"}> : () -> ()
    %cst_23 = arith.constant dense<0.000000e+00> : vector<2x8x8xf32>
    %91 = tpu.matmul %29, %90, %cst_23 {dimension_numbers = #tpu.dot_dimension_numbers<[2], [2], [1], [1], [0, 0, 0, 1, 1, 1], [0], [0]>} : vector<2x8x32xf32>, vector<2x8x32xf32>, vector<2x8x8xf32> -> vector<2x8x8xf32>
    "tpu.trace_stop"() : () -> ()
    %cst_24 = arith.constant 0.176776692 : f32
    %92 = vector.broadcast %cst_24 : f32 to vector<2x8x8xf32>
    %93 = arith.mulf %91, %92 : vector<2x8x8xf32>
    %cst_25 = arith.constant dense<0xFF800000> : vector<2x8xf32>
    %94 = vector.multi_reduction <maximumf>, %93, %cst_25 [2] : vector<2x8x8xf32> to vector<2x8xf32>
    %95 = vector.shape_cast %94 : vector<2x8xf32> to vector<2x8x1xf32>
    %96 = vector.broadcast %95 : vector<2x8x1xf32> to vector<2x8x8xf32>
    %97 = arith.subf %93, %96 : vector<2x8x8xf32>
    %98 = math.exp %97 : vector<2x8x8xf32>
    %cst_26 = arith.constant dense<0.000000e+00> : vector<2x8xf32>
    %99 = vector.multi_reduction <add>, %98, %cst_26 [2] : vector<2x8x8xf32> to vector<2x8xf32>
    %100 = vector.shape_cast %99 : vector<2x8xf32> to vector<2x8x1xf32>
    %101 = tpu.reciprocal %100 : vector<2x8x1xf32> -> vector<2x8x1xf32>
    %102 = vector.broadcast %101 : vector<2x8x1xf32> to vector<2x8x8xf32>
    %103 = arith.mulf %98, %102 : vector<2x8x8xf32>
    %104 = vector.broadcast %21 : vector<1x1x32xf32> to vector<2x8x32xf32>
    %105 = arith.mulf %29, %104 : vector<2x8x32xf32>
    "tpu.trace_start"() <{level = 10 : i32, message = "nqk,nke->nqe"}> : () -> ()
    %cst_27 = arith.constant dense<0.000000e+00> : vector<2x8x32xf32>
    %106 = tpu.matmul %103, %105, %cst_27 {dimension_numbers = #tpu.dot_dimension_numbers<[2], [1], [1], [2], [0, 0, 0, 1, 1, 2], [0], [0]>} : vector<2x8x8xf32>, vector<2x8x32xf32>, vector<2x8x32xf32> -> vector<2x8x32xf32>
    "tpu.trace_stop"() : () -> ()
    %107 = arith.addf %88, %106 : vector<2x8x32xf32>
    %108 = vector.broadcast %28 : vector<1x1x32xf32> to vector<2x8x32xf32>
    %109 = arith.mulf %29, %108 : vector<2x8x32xf32>
    "tpu.trace_start"() <{level = 10 : i32, message = "nqe,nke->nqk"}> : () -> ()
    %cst_28 = arith.constant dense<0.000000e+00> : vector<2x8x8xf32>
    %110 = tpu.matmul %29, %109, %cst_28 {dimension_numbers = #tpu.dot_dimension_numbers<[2], [2], [1], [1], [0, 0, 0, 1, 1, 1], [0], [0]>} : vector<2x8x32xf32>, vector<2x8x32xf32>, vector<2x8x8xf32> -> vector<2x8x8xf32>
    "tpu.trace_stop"() : () -> ()
    %cst_29 = arith.constant 0.176776692 : f32
    %111 = vector.broadcast %cst_29 : f32 to vector<2x8x8xf32>
    %112 = arith.mulf %110, %111 : vector<2x8x8xf32>
    %cst_30 = arith.constant dense<0xFF800000> : vector<2x8xf32>
    %113 = vector.multi_reduction <maximumf>, %112, %cst_30 [2] : vector<2x8x8xf32> to vector<2x8xf32>
    %114 = vector.shape_cast %113 : vector<2x8xf32> to vector<2x8x1xf32>
    %115 = vector.broadcast %114 : vector<2x8x1xf32> to vector<2x8x8xf32>
    %116 = arith.subf %112, %115 : vector<2x8x8xf32>
    %117 = math.exp %116 : vector<2x8x8xf32>
    %cst_31 = arith.constant dense<0.000000e+00> : vector<2x8xf32>
    %118 = vector.multi_reduction <add>, %117, %cst_31 [2] : vector<2x8x8xf32> to vector<2x8xf32>
    %119 = vector.shape_cast %118 : vector<2x8xf32> to vector<2x8x1xf32>
    %120 = tpu.reciprocal %119 : vector<2x8x1xf32> -> vector<2x8x1xf32>
    %121 = vector.broadcast %120 : vector<2x8x1xf32> to vector<2x8x8xf32>
    %122 = arith.mulf %117, %121 : vector<2x8x8xf32>
    %123 = vector.broadcast %28 : vector<1x1x32xf32> to vector<2x8x32xf32>
    %124 = arith.mulf %29, %123 : vector<2x8x32xf32>
    "tpu.trace_start"() <{level = 10 : i32, message = "nqk,nke->nqe"}> : () -> ()
    %cst_32 = arith.constant dense<0.000000e+00> : vector<2x8x32xf32>
    %125 = tpu.matmul %122, %124, %cst_32 {dimension_numbers = #tpu.dot_dimension_numbers<[2], [1], [1], [2], [0, 0, 0, 1, 1, 2], [0], [0]>} : vector<2x8x8xf32>, vector<2x8x32xf32>, vector<2x8x32xf32> -> vector<2x8x32xf32>
    "tpu.trace_stop"() : () -> ()
    %126 = arith.addf %107, %125 : vector<2x8x32xf32>
    %127 = vector.shape_cast %126 : vector<2x8x32xf32> to vector<16x32xf32>
    %128 = vector.shape_cast %29 : vector<2x8x32xf32> to vector<16x32xf32>
    %cst_33 = arith.constant dense<0.000000e+00> : vector<16x32xf32>
    %129 = tpu.matmul %127, %31, %cst_33 {dimension_numbers = #tpu.dot_dimension_numbers<[1], [0], [0], [1], [0, 0, 1, 1], [], []>} : vector<16x32xf32>, vector<32x32xf32>, vector<16x32xf32> -> vector<16x32xf32>
    %130 = vector.shape_cast %39 : vector<32xf32> to vector<1x32xf32>
    %131 = vector.broadcast %130 : vector<1x32xf32> to vector<16x32xf32>
    %132 = arith.addf %129, %131 : vector<16x32xf32>
    %133 = arith.addf %132, %128 : vector<16x32xf32>
    %cst_34 = arith.constant dense<0.000000e+00> : vector<16xf32>
    %134 = vector.multi_reduction <add>, %133, %cst_34 [1] : vector<16x32xf32> to vector<16xf32>
    %135 = vector.shape_cast %134 : vector<16xf32> to vector<16x1xf32>
    %cst_35 = arith.constant 3.200000e+01 : f32
    %136 = vector.broadcast %cst_35 : f32 to vector<16x1xf32>
    %137 = arith.divf %135, %136 : vector<16x1xf32>
    %138 = vector.broadcast %137 : vector<16x1xf32> to vector<16x32xf32>
    %139 = arith.subf %133, %138 : vector<16x32xf32>
    %140 = arith.mulf %139, %139 : vector<16x32xf32>
    %cst_36 = arith.constant dense<0.000000e+00> : vector<16xf32>
    %141 = vector.multi_reduction <add>, %140, %cst_36 [1] : vector<16x32xf32> to vector<16xf32>
    %142 = vector.shape_cast %141 : vector<16xf32> to vector<16x1xf32>
    %cst_37 = arith.constant 3.200000e+01 : f32
    %143 = vector.broadcast %cst_37 : f32 to vector<16x1xf32>
    %144 = arith.divf %142, %143 : vector<16x1xf32>
    %145 = vector.broadcast %137 : vector<16x1xf32> to vector<16x32xf32>
    %146 = arith.subf %133, %145 : vector<16x32xf32>
    %cst_38 = arith.constant 9.99999974E-6 : f32
    %147 = vector.broadcast %cst_38 : f32 to vector<16x1xf32>
    %148 = arith.addf %144, %147 : vector<16x1xf32>
    %149 = math.rsqrt %148 : vector<16x1xf32>
    %150 = vector.broadcast %149 : vector<16x1xf32> to vector<16x32xf32>
    %151 = arith.mulf %146, %150 : vector<16x32xf32>
    %152 = vector.shape_cast %41 : vector<32xf32> to vector<1x32xf32>
    %153 = vector.broadcast %152 : vector<1x32xf32> to vector<16x32xf32>
    %154 = arith.mulf %151, %153 : vector<16x32xf32>
    %155 = vector.shape_cast %43 : vector<32xf32> to vector<1x32xf32>
    %156 = vector.broadcast %155 : vector<1x32xf32> to vector<16x32xf32>
    %157 = arith.addf %154, %156 : vector<16x32xf32>
    %cst_39 = arith.constant dense<0.000000e+00> : vector<16x64xf32>
    %158 = tpu.matmul %157, %33, %cst_39 {dimension_numbers = #tpu.dot_dimension_numbers<[1], [0], [0], [1], [0, 0, 1, 1], [], []>} : vector<16x32xf32>, vector<32x64xf32>, vector<16x64xf32> -> vector<16x64xf32>
    %159 = vector.shape_cast %45 : vector<64xf32> to vector<1x64xf32>
    %160 = vector.broadcast %159 : vector<1x64xf32> to vector<16x64xf32>
    %161 = arith.addf %158, %160 : vector<16x64xf32>
    %cst_40 = arith.constant 0.000000e+00 : f32
    %162 = vector.broadcast %cst_40 : f32 to vector<16x64xf32>
    %163 = arith.maximumf %161, %162 : vector<16x64xf32>
    %cst_41 = arith.constant dense<0.000000e+00> : vector<16x32xf32>
    %164 = tpu.matmul %163, %35, %cst_41 {dimension_numbers = #tpu.dot_dimension_numbers<[1], [0], [0], [1], [0, 0, 1, 1], [], []>} : vector<16x64xf32>, vector<64x32xf32>, vector<16x32xf32> -> vector<16x32xf32>
    %165 = vector.shape_cast %47 : vector<32xf32> to vector<1x32xf32>
    %166 = vector.broadcast %165 : vector<1x32xf32> to vector<16x32xf32>
    %167 = arith.addf %164, %166 : vector<16x32xf32>
    %168 = arith.addf %167, %157 : vector<16x32xf32>
    %cst_42 = arith.constant dense<0.000000e+00> : vector<16xf32>
    %169 = vector.multi_reduction <add>, %168, %cst_42 [1] : vector<16x32xf32> to vector<16xf32>
    %170 = vector.shape_cast %169 : vector<16xf32> to vector<16x1xf32>
    %cst_43 = arith.constant 3.200000e+01 : f32
    %171 = vector.broadcast %cst_43 : f32 to vector<16x1xf32>
    %172 = arith.divf %170, %171 : vector<16x1xf32>
    %173 = vector.broadcast %172 : vector<16x1xf32> to vector<16x32xf32>
    %174 = arith.subf %168, %173 : vector<16x32xf32>
    %175 = arith.mulf %174, %174 : vector<16x32xf32>
    %cst_44 = arith.constant dense<0.000000e+00> : vector<16xf32>
    %176 = vector.multi_reduction <add>, %175, %cst_44 [1] : vector<16x32xf32> to vector<16xf32>
    %177 = vector.shape_cast %176 : vector<16xf32> to vector<16x1xf32>
    %cst_45 = arith.constant 3.200000e+01 : f32
    %178 = vector.broadcast %cst_45 : f32 to vector<16x1xf32>
    %179 = arith.divf %177, %178 : vector<16x1xf32>
    %180 = vector.broadcast %172 : vector<16x1xf32> to vector<16x32xf32>
    %181 = arith.subf %168, %180 : vector<16x32xf32>
    %cst_46 = arith.constant 9.99999974E-6 : f32
    %182 = vector.broadcast %cst_46 : f32 to vector<16x1xf32>
    %183 = arith.addf %179, %182 : vector<16x1xf32>
    %184 = math.rsqrt %183 : vector<16x1xf32>
    %185 = vector.broadcast %184 : vector<16x1xf32> to vector<16x32xf32>
    %186 = arith.mulf %181, %185 : vector<16x32xf32>
    %187 = vector.shape_cast %49 : vector<32xf32> to vector<1x32xf32>
    %188 = vector.broadcast %187 : vector<1x32xf32> to vector<16x32xf32>
    %189 = arith.mulf %186, %188 : vector<16x32xf32>
    %190 = vector.shape_cast %51 : vector<32xf32> to vector<1x32xf32>
    %191 = vector.broadcast %190 : vector<1x32xf32> to vector<16x32xf32>
    %192 = arith.addf %189, %191 : vector<16x32xf32>
    %193 = vector.shape_cast %192 : vector<16x32xf32> to vector<2x8x32xf32>
    %c1 = arith.constant 1 : index
    %c0_47 = arith.constant 0 : index
    %c0_48 = arith.constant 0 : index
    %194 = vector.load %arg3[%c1, %c0_47, %c0_48] : memref<2x135x64xf32, #tpu.memory_space<vmem>>, vector<1x32x32xf32>
    %195 = vector.shape_cast %194 : vector<1x32x32xf32> to vector<32x32xf32>
    %c1_49 = arith.constant 1 : index
    %c32_50 = arith.constant 32 : index
    %c0_51 = arith.constant 0 : index
    %196 = vector.load %arg3[%c1_49, %c32_50, %c0_51] : memref<2x135x64xf32, #tpu.memory_space<vmem>>, vector<1x32x64xf32>
    %197 = vector.shape_cast %196 : vector<1x32x64xf32> to vector<32x64xf32>
    %c1_52 = arith.constant 1 : index
    %c64_53 = arith.constant 64 : index
    %c0_54 = arith.constant 0 : index
    %198 = vector.load %arg3[%c1_52, %c64_53, %c0_54] : memref<2x135x64xf32, #tpu.memory_space<vmem>>, vector<1x64x32xf32>
    %199 = vector.shape_cast %198 : vector<1x64x32xf32> to vector<64x32xf32>
    %c1_55 = arith.constant 1 : index
    %c128_56 = arith.constant 128 : index
    %c0_57 = arith.constant 0 : index
    %200 = vector.load %arg3[%c1_55, %c128_56, %c0_57] : memref<2x135x64xf32, #tpu.memory_space<vmem>>, vector<1x7x64xf32>
    %201 = vector.shape_cast %200 : vector<1x7x64xf32> to vector<7x64xf32>
    %202 = vector.extract_strided_slice %201 {offsets = [0, 0], sizes = [1, 32], strides = [1, 1]} : vector<7x64xf32> to vector<1x32xf32>
    %203 = vector.shape_cast %202 : vector<1x32xf32> to vector<32xf32>
    %204 = vector.extract_strided_slice %201 {offsets = [1, 0], sizes = [1, 32], strides = [1, 1]} : vector<7x64xf32> to vector<1x32xf32>
    %205 = vector.shape_cast %204 : vector<1x32xf32> to vector<32xf32>
    %206 = vector.extract_strided_slice %201 {offsets = [2, 0], sizes = [1, 32], strides = [1, 1]} : vector<7x64xf32> to vector<1x32xf32>
    %207 = vector.shape_cast %206 : vector<1x32xf32> to vector<32xf32>
    %208 = vector.extract_strided_slice %201 {offsets = [3, 0], sizes = [1, 64], strides = [1, 1]} : vector<7x64xf32> to vector<1x64xf32>
    %209 = vector.shape_cast %208 : vector<1x64xf32> to vector<64xf32>
    %210 = vector.extract_strided_slice %201 {offsets = [4, 0], sizes = [1, 32], strides = [1, 1]} : vector<7x64xf32> to vector<1x32xf32>
    %211 = vector.shape_cast %210 : vector<1x32xf32> to vector<32xf32>
    %212 = vector.extract_strided_slice %201 {offsets = [5, 0], sizes = [1, 32], strides = [1, 1]} : vector<7x64xf32> to vector<1x32xf32>
    %213 = vector.shape_cast %212 : vector<1x32xf32> to vector<32xf32>
    %214 = vector.extract_strided_slice %201 {offsets = [6, 0], sizes = [1, 32], strides = [1, 1]} : vector<7x64xf32> to vector<1x32xf32>
    %215 = vector.shape_cast %214 : vector<1x32xf32> to vector<32xf32>
    %216 = vector.broadcast %7 : vector<1x1x32xf32> to vector<2x8x32xf32>
    %217 = arith.mulf %193, %216 : vector<2x8x32xf32>
    "tpu.trace_start"() <{level = 10 : i32, message = "nqe,nke->nqk"}> : () -> ()
    %cst_58 = arith.constant dense<0.000000e+00> : vector<2x8x8xf32>
    %218 = tpu.matmul %193, %217, %cst_58 {dimension_numbers = #tpu.dot_dimension_numbers<[2], [2], [1], [1], [0, 0, 0, 1, 1, 1], [0], [0]>} : vector<2x8x32xf32>, vector<2x8x32xf32>, vector<2x8x8xf32> -> vector<2x8x8xf32>
    "tpu.trace_stop"() : () -> ()
    %cst_59 = arith.constant 0.176776692 : f32
    %219 = vector.broadcast %cst_59 : f32 to vector<2x8x8xf32>
    %220 = arith.mulf %218, %219 : vector<2x8x8xf32>
    %cst_60 = arith.constant dense<0xFF800000> : vector<2x8xf32>
    %221 = vector.multi_reduction <maximumf>, %220, %cst_60 [2] : vector<2x8x8xf32> to vector<2x8xf32>
    %222 = vector.shape_cast %221 : vector<2x8xf32> to vector<2x8x1xf32>
    %223 = vector.broadcast %222 : vector<2x8x1xf32> to vector<2x8x8xf32>
    %224 = arith.subf %220, %223 : vector<2x8x8xf32>
    %225 = math.exp %224 : vector<2x8x8xf32>
    %cst_61 = arith.constant dense<0.000000e+00> : vector<2x8xf32>
    %226 = vector.multi_reduction <add>, %225, %cst_61 [2] : vector<2x8x8xf32> to vector<2x8xf32>
    %227 = vector.shape_cast %226 : vector<2x8xf32> to vector<2x8x1xf32>
    %228 = tpu.reciprocal %227 : vector<2x8x1xf32> -> vector<2x8x1xf32>
    %229 = vector.broadcast %228 : vector<2x8x1xf32> to vector<2x8x8xf32>
    %230 = arith.mulf %225, %229 : vector<2x8x8xf32>
    %231 = vector.broadcast %7 : vector<1x1x32xf32> to vector<2x8x32xf32>
    %232 = arith.mulf %193, %231 : vector<2x8x32xf32>
    "tpu.trace_start"() <{level = 10 : i32, message = "nqk,nke->nqe"}> : () -> ()
    %cst_62 = arith.constant dense<0.000000e+00> : vector<2x8x32xf32>
    %233 = tpu.matmul %230, %232, %cst_62 {dimension_numbers = #tpu.dot_dimension_numbers<[2], [1], [1], [2], [0, 0, 0, 1, 1, 2], [0], [0]>} : vector<2x8x8xf32>, vector<2x8x32xf32>, vector<2x8x32xf32> -> vector<2x8x32xf32>
    "tpu.trace_stop"() : () -> ()
    %234 = vector.broadcast %14 : vector<1x1x32xf32> to vector<2x8x32xf32>
    %235 = arith.mulf %193, %234 : vector<2x8x32xf32>
    "tpu.trace_start"() <{level = 10 : i32, message = "nqe,nke->nqk"}> : () -> ()
    %cst_63 = arith.constant dense<0.000000e+00> : vector<2x8x8xf32>
    %236 = tpu.matmul %193, %235, %cst_63 {dimension_numbers = #tpu.dot_dimension_numbers<[2], [2], [1], [1], [0, 0, 0, 1, 1, 1], [0], [0]>} : vector<2x8x32xf32>, vector<2x8x32xf32>, vector<2x8x8xf32> -> vector<2x8x8xf32>
    "tpu.trace_stop"() : () -> ()
    %cst_64 = arith.constant 0.176776692 : f32
    %237 = vector.broadcast %cst_64 : f32 to vector<2x8x8xf32>
    %238 = arith.mulf %236, %237 : vector<2x8x8xf32>
    %cst_65 = arith.constant dense<0xFF800000> : vector<2x8xf32>
    %239 = vector.multi_reduction <maximumf>, %238, %cst_65 [2] : vector<2x8x8xf32> to vector<2x8xf32>
    %240 = vector.shape_cast %239 : vector<2x8xf32> to vector<2x8x1xf32>
    %241 = vector.broadcast %240 : vector<2x8x1xf32> to vector<2x8x8xf32>
    %242 = arith.subf %238, %241 : vector<2x8x8xf32>
    %243 = math.exp %242 : vector<2x8x8xf32>
    %cst_66 = arith.constant dense<0.000000e+00> : vector<2x8xf32>
    %244 = vector.multi_reduction <add>, %243, %cst_66 [2] : vector<2x8x8xf32> to vector<2x8xf32>
    %245 = vector.shape_cast %244 : vector<2x8xf32> to vector<2x8x1xf32>
    %246 = tpu.reciprocal %245 : vector<2x8x1xf32> -> vector<2x8x1xf32>
    %247 = vector.broadcast %246 : vector<2x8x1xf32> to vector<2x8x8xf32>
    %248 = arith.mulf %243, %247 : vector<2x8x8xf32>
    %249 = vector.broadcast %14 : vector<1x1x32xf32> to vector<2x8x32xf32>
    %250 = arith.mulf %193, %249 : vector<2x8x32xf32>
    "tpu.trace_start"() <{level = 10 : i32, message = "nqk,nke->nqe"}> : () -> ()
    %cst_67 = arith.constant dense<0.000000e+00> : vector<2x8x32xf32>
    %251 = tpu.matmul %248, %250, %cst_67 {dimension_numbers = #tpu.dot_dimension_numbers<[2], [1], [1], [2], [0, 0, 0, 1, 1, 2], [0], [0]>} : vector<2x8x8xf32>, vector<2x8x32xf32>, vector<2x8x32xf32> -> vector<2x8x32xf32>
    "tpu.trace_stop"() : () -> ()
    %252 = arith.addf %233, %251 : vector<2x8x32xf32>
    %253 = vector.broadcast %21 : vector<1x1x32xf32> to vector<2x8x32xf32>
    %254 = arith.mulf %193, %253 : vector<2x8x32xf32>
    "tpu.trace_start"() <{level = 10 : i32, message = "nqe,nke->nqk"}> : () -> ()
    %cst_68 = arith.constant dense<0.000000e+00> : vector<2x8x8xf32>
    %255 = tpu.matmul %193, %254, %cst_68 {dimension_numbers = #tpu.dot_dimension_numbers<[2], [2], [1], [1], [0, 0, 0, 1, 1, 1], [0], [0]>} : vector<2x8x32xf32>, vector<2x8x32xf32>, vector<2x8x8xf32> -> vector<2x8x8xf32>
    "tpu.trace_stop"() : () -> ()
    %cst_69 = arith.constant 0.176776692 : f32
    %256 = vector.broadcast %cst_69 : f32 to vector<2x8x8xf32>
    %257 = arith.mulf %255, %256 : vector<2x8x8xf32>
    %cst_70 = arith.constant dense<0xFF800000> : vector<2x8xf32>
    %258 = vector.multi_reduction <maximumf>, %257, %cst_70 [2] : vector<2x8x8xf32> to vector<2x8xf32>
    %259 = vector.shape_cast %258 : vector<2x8xf32> to vector<2x8x1xf32>
    %260 = vector.broadcast %259 : vector<2x8x1xf32> to vector<2x8x8xf32>
    %261 = arith.subf %257, %260 : vector<2x8x8xf32>
    %262 = math.exp %261 : vector<2x8x8xf32>
    %cst_71 = arith.constant dense<0.000000e+00> : vector<2x8xf32>
    %263 = vector.multi_reduction <add>, %262, %cst_71 [2] : vector<2x8x8xf32> to vector<2x8xf32>
    %264 = vector.shape_cast %263 : vector<2x8xf32> to vector<2x8x1xf32>
    %265 = tpu.reciprocal %264 : vector<2x8x1xf32> -> vector<2x8x1xf32>
    %266 = vector.broadcast %265 : vector<2x8x1xf32> to vector<2x8x8xf32>
    %267 = arith.mulf %262, %266 : vector<2x8x8xf32>
    %268 = vector.broadcast %21 : vector<1x1x32xf32> to vector<2x8x32xf32>
    %269 = arith.mulf %193, %268 : vector<2x8x32xf32>
    "tpu.trace_start"() <{level = 10 : i32, message = "nqk,nke->nqe"}> : () -> ()
    %cst_72 = arith.constant dense<0.000000e+00> : vector<2x8x32xf32>
    %270 = tpu.matmul %267, %269, %cst_72 {dimension_numbers = #tpu.dot_dimension_numbers<[2], [1], [1], [2], [0, 0, 0, 1, 1, 2], [0], [0]>} : vector<2x8x8xf32>, vector<2x8x32xf32>, vector<2x8x32xf32> -> vector<2x8x32xf32>
    "tpu.trace_stop"() : () -> ()
    %271 = arith.addf %252, %270 : vector<2x8x32xf32>
    %272 = vector.broadcast %28 : vector<1x1x32xf32> to vector<2x8x32xf32>
    %273 = arith.mulf %193, %272 : vector<2x8x32xf32>
    "tpu.trace_start"() <{level = 10 : i32, message = "nqe,nke->nqk"}> : () -> ()
    %cst_73 = arith.constant dense<0.000000e+00> : vector<2x8x8xf32>
    %274 = tpu.matmul %193, %273, %cst_73 {dimension_numbers = #tpu.dot_dimension_numbers<[2], [2], [1], [1], [0, 0, 0, 1, 1, 1], [0], [0]>} : vector<2x8x32xf32>, vector<2x8x32xf32>, vector<2x8x8xf32> -> vector<2x8x8xf32>
    "tpu.trace_stop"() : () -> ()
    %cst_74 = arith.constant 0.176776692 : f32
    %275 = vector.broadcast %cst_74 : f32 to vector<2x8x8xf32>
    %276 = arith.mulf %274, %275 : vector<2x8x8xf32>
    %cst_75 = arith.constant dense<0xFF800000> : vector<2x8xf32>
    %277 = vector.multi_reduction <maximumf>, %276, %cst_75 [2] : vector<2x8x8xf32> to vector<2x8xf32>
    %278 = vector.shape_cast %277 : vector<2x8xf32> to vector<2x8x1xf32>
    %279 = vector.broadcast %278 : vector<2x8x1xf32> to vector<2x8x8xf32>
    %280 = arith.subf %276, %279 : vector<2x8x8xf32>
    %281 = math.exp %280 : vector<2x8x8xf32>
    %cst_76 = arith.constant dense<0.000000e+00> : vector<2x8xf32>
    %282 = vector.multi_reduction <add>, %281, %cst_76 [2] : vector<2x8x8xf32> to vector<2x8xf32>
    %283 = vector.shape_cast %282 : vector<2x8xf32> to vector<2x8x1xf32>
    %284 = tpu.reciprocal %283 : vector<2x8x1xf32> -> vector<2x8x1xf32>
    %285 = vector.broadcast %284 : vector<2x8x1xf32> to vector<2x8x8xf32>
    %286 = arith.mulf %281, %285 : vector<2x8x8xf32>
    %287 = vector.broadcast %28 : vector<1x1x32xf32> to vector<2x8x32xf32>
    %288 = arith.mulf %193, %287 : vector<2x8x32xf32>
    "tpu.trace_start"() <{level = 10 : i32, message = "nqk,nke->nqe"}> : () -> ()
    %cst_77 = arith.constant dense<0.000000e+00> : vector<2x8x32xf32>
    %289 = tpu.matmul %286, %288, %cst_77 {dimension_numbers = #tpu.dot_dimension_numbers<[2], [1], [1], [2], [0, 0, 0, 1, 1, 2], [0], [0]>} : vector<2x8x8xf32>, vector<2x8x32xf32>, vector<2x8x32xf32> -> vector<2x8x32xf32>
    "tpu.trace_stop"() : () -> ()
    %290 = arith.addf %271, %289 : vector<2x8x32xf32>
    %291 = vector.shape_cast %290 : vector<2x8x32xf32> to vector<16x32xf32>
    %292 = vector.shape_cast %193 : vector<2x8x32xf32> to vector<16x32xf32>
    %cst_78 = arith.constant dense<0.000000e+00> : vector<16x32xf32>
    %293 = tpu.matmul %291, %195, %cst_78 {dimension_numbers = #tpu.dot_dimension_numbers<[1], [0], [0], [1], [0, 0, 1, 1], [], []>} : vector<16x32xf32>, vector<32x32xf32>, vector<16x32xf32> -> vector<16x32xf32>
    %294 = vector.shape_cast %203 : vector<32xf32> to vector<1x32xf32>
    %295 = vector.broadcast %294 : vector<1x32xf32> to vector<16x32xf32>
    %296 = arith.addf %293, %295 : vector<16x32xf32>
    %297 = arith.addf %296, %292 : vector<16x32xf32>
    %cst_79 = arith.constant dense<0.000000e+00> : vector<16xf32>
    %298 = vector.multi_reduction <add>, %297, %cst_79 [1] : vector<16x32xf32> to vector<16xf32>
    %299 = vector.shape_cast %298 : vector<16xf32> to vector<16x1xf32>
    %cst_80 = arith.constant 3.200000e+01 : f32
    %300 = vector.broadcast %cst_80 : f32 to vector<16x1xf32>
    %301 = arith.divf %299, %300 : vector<16x1xf32>
    %302 = vector.broadcast %301 : vector<16x1xf32> to vector<16x32xf32>
    %303 = arith.subf %297, %302 : vector<16x32xf32>
    %304 = arith.mulf %303, %303 : vector<16x32xf32>
    %cst_81 = arith.constant dense<0.000000e+00> : vector<16xf32>
    %305 = vector.multi_reduction <add>, %304, %cst_81 [1] : vector<16x32xf32> to vector<16xf32>
    %306 = vector.shape_cast %305 : vector<16xf32> to vector<16x1xf32>
    %cst_82 = arith.constant 3.200000e+01 : f32
    %307 = vector.broadcast %cst_82 : f32 to vector<16x1xf32>
    %308 = arith.divf %306, %307 : vector<16x1xf32>
    %309 = vector.broadcast %301 : vector<16x1xf32> to vector<16x32xf32>
    %310 = arith.subf %297, %309 : vector<16x32xf32>
    %cst_83 = arith.constant 9.99999974E-6 : f32
    %311 = vector.broadcast %cst_83 : f32 to vector<16x1xf32>
    %312 = arith.addf %308, %311 : vector<16x1xf32>
    %313 = math.rsqrt %312 : vector<16x1xf32>
    %314 = vector.broadcast %313 : vector<16x1xf32> to vector<16x32xf32>
    %315 = arith.mulf %310, %314 : vector<16x32xf32>
    %316 = vector.shape_cast %205 : vector<32xf32> to vector<1x32xf32>
    %317 = vector.broadcast %316 : vector<1x32xf32> to vector<16x32xf32>
    %318 = arith.mulf %315, %317 : vector<16x32xf32>
    %319 = vector.shape_cast %207 : vector<32xf32> to vector<1x32xf32>
    %320 = vector.broadcast %319 : vector<1x32xf32> to vector<16x32xf32>
    %321 = arith.addf %318, %320 : vector<16x32xf32>
    %cst_84 = arith.constant dense<0.000000e+00> : vector<16x64xf32>
    %322 = tpu.matmul %321, %197, %cst_84 {dimension_numbers = #tpu.dot_dimension_numbers<[1], [0], [0], [1], [0, 0, 1, 1], [], []>} : vector<16x32xf32>, vector<32x64xf32>, vector<16x64xf32> -> vector<16x64xf32>
    %323 = vector.shape_cast %209 : vector<64xf32> to vector<1x64xf32>
    %324 = vector.broadcast %323 : vector<1x64xf32> to vector<16x64xf32>
    %325 = arith.addf %322, %324 : vector<16x64xf32>
    %cst_85 = arith.constant 0.000000e+00 : f32
    %326 = vector.broadcast %cst_85 : f32 to vector<16x64xf32>
    %327 = arith.maximumf %325, %326 : vector<16x64xf32>
    %cst_86 = arith.constant dense<0.000000e+00> : vector<16x32xf32>
    %328 = tpu.matmul %327, %199, %cst_86 {dimension_numbers = #tpu.dot_dimension_numbers<[1], [0], [0], [1], [0, 0, 1, 1], [], []>} : vector<16x64xf32>, vector<64x32xf32>, vector<16x32xf32> -> vector<16x32xf32>
    %329 = vector.shape_cast %211 : vector<32xf32> to vector<1x32xf32>
    %330 = vector.broadcast %329 : vector<1x32xf32> to vector<16x32xf32>
    %331 = arith.addf %328, %330 : vector<16x32xf32>
    %332 = arith.addf %331, %321 : vector<16x32xf32>
    %cst_87 = arith.constant dense<0.000000e+00> : vector<16xf32>
    %333 = vector.multi_reduction <add>, %332, %cst_87 [1] : vector<16x32xf32> to vector<16xf32>
    %334 = vector.shape_cast %333 : vector<16xf32> to vector<16x1xf32>
    %cst_88 = arith.constant 3.200000e+01 : f32
    %335 = vector.broadcast %cst_88 : f32 to vector<16x1xf32>
    %336 = arith.divf %334, %335 : vector<16x1xf32>
    %337 = vector.broadcast %336 : vector<16x1xf32> to vector<16x32xf32>
    %338 = arith.subf %332, %337 : vector<16x32xf32>
    %339 = arith.mulf %338, %338 : vector<16x32xf32>
    %cst_89 = arith.constant dense<0.000000e+00> : vector<16xf32>
    %340 = vector.multi_reduction <add>, %339, %cst_89 [1] : vector<16x32xf32> to vector<16xf32>
    %341 = vector.shape_cast %340 : vector<16xf32> to vector<16x1xf32>
    %cst_90 = arith.constant 3.200000e+01 : f32
    %342 = vector.broadcast %cst_90 : f32 to vector<16x1xf32>
    %343 = arith.divf %341, %342 : vector<16x1xf32>
    %344 = vector.broadcast %336 : vector<16x1xf32> to vector<16x32xf32>
    %345 = arith.subf %332, %344 : vector<16x32xf32>
    %cst_91 = arith.constant 9.99999974E-6 : f32
    %346 = vector.broadcast %cst_91 : f32 to vector<16x1xf32>
    %347 = arith.addf %343, %346 : vector<16x1xf32>
    %348 = math.rsqrt %347 : vector<16x1xf32>
    %349 = vector.broadcast %348 : vector<16x1xf32> to vector<16x32xf32>
    %350 = arith.mulf %345, %349 : vector<16x32xf32>
    %351 = vector.shape_cast %213 : vector<32xf32> to vector<1x32xf32>
    %352 = vector.broadcast %351 : vector<1x32xf32> to vector<16x32xf32>
    %353 = arith.mulf %350, %352 : vector<16x32xf32>
    %354 = vector.shape_cast %215 : vector<32xf32> to vector<1x32xf32>
    %355 = vector.broadcast %354 : vector<1x32xf32> to vector<16x32xf32>
    %356 = arith.addf %353, %355 : vector<16x32xf32>
    %357 = vector.shape_cast %356 : vector<16x32xf32> to vector<2x8x32xf32>
    %c0_92 = arith.constant 0 : index
    %c0_93 = arith.constant 0 : index
    %c0_94 = arith.constant 0 : index
    %358 = vector.load %arg2[%c0_92, %c0_93, %c0_94] : memref<2x8x32xf32, #tpu.memory_space<vmem>>, vector<2x8x32xf32>
    %c0_95 = arith.constant 0 : index
    %c0_96 = arith.constant 0 : index
    %c0_97 = arith.constant 0 : index
    %359 = vector.load %arg4[%c0_95, %c0_96, %c0_97] : memref<2x135x64xf32, #tpu.memory_space<vmem>>, vector<1x32x32xf32>
    %360 = vector.shape_cast %359 : vector<1x32x32xf32> to vector<32x32xf32>
    %c0_98 = arith.constant 0 : index
    %c32_99 = arith.constant 32 : index
    %c0_100 = arith.constant 0 : index
    %361 = vector.load %arg4[%c0_98, %c32_99, %c0_100] : memref<2x135x64xf32, #tpu.memory_space<vmem>>, vector<1x32x64xf32>
    %362 = vector.shape_cast %361 : vector<1x32x64xf32> to vector<32x64xf32>
    %c0_101 = arith.constant 0 : index
    %c64_102 = arith.constant 64 : index
    %c0_103 = arith.constant 0 : index
    %363 = vector.load %arg4[%c0_101, %c64_102, %c0_103] : memref<2x135x64xf32, #tpu.memory_space<vmem>>, vector<1x64x32xf32>
    %364 = vector.shape_cast %363 : vector<1x64x32xf32> to vector<64x32xf32>
    %c0_104 = arith.constant 0 : index
    %c128_105 = arith.constant 128 : index
    %c0_106 = arith.constant 0 : index
    %365 = vector.load %arg4[%c0_104, %c128_105, %c0_106] : memref<2x135x64xf32, #tpu.memory_space<vmem>>, vector<1x7x64xf32>
    %366 = vector.shape_cast %365 : vector<1x7x64xf32> to vector<7x64xf32>
    %367 = vector.extract_strided_slice %366 {offsets = [0, 0], sizes = [1, 32], strides = [1, 1]} : vector<7x64xf32> to vector<1x32xf32>
    %368 = vector.shape_cast %367 : vector<1x32xf32> to vector<32xf32>
    %369 = vector.extract_strided_slice %366 {offsets = [1, 0], sizes = [1, 32], strides = [1, 1]} : vector<7x64xf32> to vector<1x32xf32>
    %370 = vector.shape_cast %369 : vector<1x32xf32> to vector<32xf32>
    %371 = vector.extract_strided_slice %366 {offsets = [2, 0], sizes = [1, 32], strides = [1, 1]} : vector<7x64xf32> to vector<1x32xf32>
    %372 = vector.shape_cast %371 : vector<1x32xf32> to vector<32xf32>
    %373 = vector.extract_strided_slice %366 {offsets = [3, 0], sizes = [1, 64], strides = [1, 1]} : vector<7x64xf32> to vector<1x64xf32>
    %374 = vector.shape_cast %373 : vector<1x64xf32> to vector<64xf32>
    %375 = vector.extract_strided_slice %366 {offsets = [4, 0], sizes = [1, 32], strides = [1, 1]} : vector<7x64xf32> to vector<1x32xf32>
    %376 = vector.shape_cast %375 : vector<1x32xf32> to vector<32xf32>
    %377 = vector.extract_strided_slice %366 {offsets = [5, 0], sizes = [1, 32], strides = [1, 1]} : vector<7x64xf32> to vector<1x32xf32>
    %378 = vector.shape_cast %377 : vector<1x32xf32> to vector<32xf32>
    %379 = vector.extract_strided_slice %366 {offsets = [6, 0], sizes = [1, 32], strides = [1, 1]} : vector<7x64xf32> to vector<1x32xf32>
    %380 = vector.shape_cast %379 : vector<1x32xf32> to vector<32xf32>
    %381 = vector.broadcast %7 : vector<1x1x32xf32> to vector<2x8x32xf32>
    %382 = arith.mulf %357, %381 : vector<2x8x32xf32>
    "tpu.trace_start"() <{level = 10 : i32, message = "nqe,nke->nqk"}> : () -> ()
    %cst_107 = arith.constant dense<0.000000e+00> : vector<2x8x8xf32>
    %383 = tpu.matmul %358, %382, %cst_107 {dimension_numbers = #tpu.dot_dimension_numbers<[2], [2], [1], [1], [0, 0, 0, 1, 1, 1], [0], [0]>} : vector<2x8x32xf32>, vector<2x8x32xf32>, vector<2x8x8xf32> -> vector<2x8x8xf32>
    "tpu.trace_stop"() : () -> ()
    %cst_108 = arith.constant 0.176776692 : f32
    %384 = vector.broadcast %cst_108 : f32 to vector<2x8x8xf32>
    %385 = arith.mulf %383, %384 : vector<2x8x8xf32>
    %cst_109 = arith.constant dense<0xFF800000> : vector<2x8xf32>
    %386 = vector.multi_reduction <maximumf>, %385, %cst_109 [2] : vector<2x8x8xf32> to vector<2x8xf32>
    %387 = vector.shape_cast %386 : vector<2x8xf32> to vector<2x8x1xf32>
    %388 = vector.broadcast %387 : vector<2x8x1xf32> to vector<2x8x8xf32>
    %389 = arith.subf %385, %388 : vector<2x8x8xf32>
    %390 = math.exp %389 : vector<2x8x8xf32>
    %cst_110 = arith.constant dense<0.000000e+00> : vector<2x8xf32>
    %391 = vector.multi_reduction <add>, %390, %cst_110 [2] : vector<2x8x8xf32> to vector<2x8xf32>
    %392 = vector.shape_cast %391 : vector<2x8xf32> to vector<2x8x1xf32>
    %393 = tpu.reciprocal %392 : vector<2x8x1xf32> -> vector<2x8x1xf32>
    %394 = vector.broadcast %393 : vector<2x8x1xf32> to vector<2x8x8xf32>
    %395 = arith.mulf %390, %394 : vector<2x8x8xf32>
    %396 = vector.broadcast %7 : vector<1x1x32xf32> to vector<2x8x32xf32>
    %397 = arith.mulf %358, %396 : vector<2x8x32xf32>
    "tpu.trace_start"() <{level = 10 : i32, message = "nqk,nke->nqe"}> : () -> ()
    %cst_111 = arith.constant dense<0.000000e+00> : vector<2x8x32xf32>
    %398 = tpu.matmul %395, %397, %cst_111 {dimension_numbers = #tpu.dot_dimension_numbers<[2], [1], [1], [2], [0, 0, 0, 1, 1, 2], [0], [0]>} : vector<2x8x8xf32>, vector<2x8x32xf32>, vector<2x8x32xf32> -> vector<2x8x32xf32>
    "tpu.trace_stop"() : () -> ()
    %399 = vector.broadcast %14 : vector<1x1x32xf32> to vector<2x8x32xf32>
    %400 = arith.mulf %357, %399 : vector<2x8x32xf32>
    "tpu.trace_start"() <{level = 10 : i32, message = "nqe,nke->nqk"}> : () -> ()
    %cst_112 = arith.constant dense<0.000000e+00> : vector<2x8x8xf32>
    %401 = tpu.matmul %358, %400, %cst_112 {dimension_numbers = #tpu.dot_dimension_numbers<[2], [2], [1], [1], [0, 0, 0, 1, 1, 1], [0], [0]>} : vector<2x8x32xf32>, vector<2x8x32xf32>, vector<2x8x8xf32> -> vector<2x8x8xf32>
    "tpu.trace_stop"() : () -> ()
    %cst_113 = arith.constant 0.176776692 : f32
    %402 = vector.broadcast %cst_113 : f32 to vector<2x8x8xf32>
    %403 = arith.mulf %401, %402 : vector<2x8x8xf32>
    %cst_114 = arith.constant dense<0xFF800000> : vector<2x8xf32>
    %404 = vector.multi_reduction <maximumf>, %403, %cst_114 [2] : vector<2x8x8xf32> to vector<2x8xf32>
    %405 = vector.shape_cast %404 : vector<2x8xf32> to vector<2x8x1xf32>
    %406 = vector.broadcast %405 : vector<2x8x1xf32> to vector<2x8x8xf32>
    %407 = arith.subf %403, %406 : vector<2x8x8xf32>
    %408 = math.exp %407 : vector<2x8x8xf32>
    %cst_115 = arith.constant dense<0.000000e+00> : vector<2x8xf32>
    %409 = vector.multi_reduction <add>, %408, %cst_115 [2] : vector<2x8x8xf32> to vector<2x8xf32>
    %410 = vector.shape_cast %409 : vector<2x8xf32> to vector<2x8x1xf32>
    %411 = tpu.reciprocal %410 : vector<2x8x1xf32> -> vector<2x8x1xf32>
    %412 = vector.broadcast %411 : vector<2x8x1xf32> to vector<2x8x8xf32>
    %413 = arith.mulf %408, %412 : vector<2x8x8xf32>
    %414 = vector.broadcast %14 : vector<1x1x32xf32> to vector<2x8x32xf32>
    %415 = arith.mulf %358, %414 : vector<2x8x32xf32>
    "tpu.trace_start"() <{level = 10 : i32, message = "nqk,nke->nqe"}> : () -> ()
    %cst_116 = arith.constant dense<0.000000e+00> : vector<2x8x32xf32>
    %416 = tpu.matmul %413, %415, %cst_116 {dimension_numbers = #tpu.dot_dimension_numbers<[2], [1], [1], [2], [0, 0, 0, 1, 1, 2], [0], [0]>} : vector<2x8x8xf32>, vector<2x8x32xf32>, vector<2x8x32xf32> -> vector<2x8x32xf32>
    "tpu.trace_stop"() : () -> ()
    %417 = arith.addf %398, %416 : vector<2x8x32xf32>
    %418 = vector.broadcast %21 : vector<1x1x32xf32> to vector<2x8x32xf32>
    %419 = arith.mulf %357, %418 : vector<2x8x32xf32>
    "tpu.trace_start"() <{level = 10 : i32, message = "nqe,nke->nqk"}> : () -> ()
    %cst_117 = arith.constant dense<0.000000e+00> : vector<2x8x8xf32>
    %420 = tpu.matmul %358, %419, %cst_117 {dimension_numbers = #tpu.dot_dimension_numbers<[2], [2], [1], [1], [0, 0, 0, 1, 1, 1], [0], [0]>} : vector<2x8x32xf32>, vector<2x8x32xf32>, vector<2x8x8xf32> -> vector<2x8x8xf32>
    "tpu.trace_stop"() : () -> ()
    %cst_118 = arith.constant 0.176776692 : f32
    %421 = vector.broadcast %cst_118 : f32 to vector<2x8x8xf32>
    %422 = arith.mulf %420, %421 : vector<2x8x8xf32>
    %cst_119 = arith.constant dense<0xFF800000> : vector<2x8xf32>
    %423 = vector.multi_reduction <maximumf>, %422, %cst_119 [2] : vector<2x8x8xf32> to vector<2x8xf32>
    %424 = vector.shape_cast %423 : vector<2x8xf32> to vector<2x8x1xf32>
    %425 = vector.broadcast %424 : vector<2x8x1xf32> to vector<2x8x8xf32>
    %426 = arith.subf %422, %425 : vector<2x8x8xf32>
    %427 = math.exp %426 : vector<2x8x8xf32>
    %cst_120 = arith.constant dense<0.000000e+00> : vector<2x8xf32>
    %428 = vector.multi_reduction <add>, %427, %cst_120 [2] : vector<2x8x8xf32> to vector<2x8xf32>
    %429 = vector.shape_cast %428 : vector<2x8xf32> to vector<2x8x1xf32>
    %430 = tpu.reciprocal %429 : vector<2x8x1xf32> -> vector<2x8x1xf32>
    %431 = vector.broadcast %430 : vector<2x8x1xf32> to vector<2x8x8xf32>
    %432 = arith.mulf %427, %431 : vector<2x8x8xf32>
    %433 = vector.broadcast %21 : vector<1x1x32xf32> to vector<2x8x32xf32>
    %434 = arith.mulf %358, %433 : vector<2x8x32xf32>
    "tpu.trace_start"() <{level = 10 : i32, message = "nqk,nke->nqe"}> : () -> ()
    %cst_121 = arith.constant dense<0.000000e+00> : vector<2x8x32xf32>
    %435 = tpu.matmul %432, %434, %cst_121 {dimension_numbers = #tpu.dot_dimension_numbers<[2], [1], [1], [2], [0, 0, 0, 1, 1, 2], [0], [0]>} : vector<2x8x8xf32>, vector<2x8x32xf32>, vector<2x8x32xf32> -> vector<2x8x32xf32>
    "tpu.trace_stop"() : () -> ()
    %436 = arith.addf %417, %435 : vector<2x8x32xf32>
    %437 = vector.broadcast %28 : vector<1x1x32xf32> to vector<2x8x32xf32>
    %438 = arith.mulf %357, %437 : vector<2x8x32xf32>
    "tpu.trace_start"() <{level = 10 : i32, message = "nqe,nke->nqk"}> : () -> ()
    %cst_122 = arith.constant dense<0.000000e+00> : vector<2x8x8xf32>
    %439 = tpu.matmul %358, %438, %cst_122 {dimension_numbers = #tpu.dot_dimension_numbers<[2], [2], [1], [1], [0, 0, 0, 1, 1, 1], [0], [0]>} : vector<2x8x32xf32>, vector<2x8x32xf32>, vector<2x8x8xf32> -> vector<2x8x8xf32>
    "tpu.trace_stop"() : () -> ()
    %cst_123 = arith.constant 0.176776692 : f32
    %440 = vector.broadcast %cst_123 : f32 to vector<2x8x8xf32>
    %441 = arith.mulf %439, %440 : vector<2x8x8xf32>
    %cst_124 = arith.constant dense<0xFF800000> : vector<2x8xf32>
    %442 = vector.multi_reduction <maximumf>, %441, %cst_124 [2] : vector<2x8x8xf32> to vector<2x8xf32>
    %443 = vector.shape_cast %442 : vector<2x8xf32> to vector<2x8x1xf32>
    %444 = vector.broadcast %443 : vector<2x8x1xf32> to vector<2x8x8xf32>
    %445 = arith.subf %441, %444 : vector<2x8x8xf32>
    %446 = math.exp %445 : vector<2x8x8xf32>
    %cst_125 = arith.constant dense<0.000000e+00> : vector<2x8xf32>
    %447 = vector.multi_reduction <add>, %446, %cst_125 [2] : vector<2x8x8xf32> to vector<2x8xf32>
    %448 = vector.shape_cast %447 : vector<2x8xf32> to vector<2x8x1xf32>
    %449 = tpu.reciprocal %448 : vector<2x8x1xf32> -> vector<2x8x1xf32>
    %450 = vector.broadcast %449 : vector<2x8x1xf32> to vector<2x8x8xf32>
    %451 = arith.mulf %446, %450 : vector<2x8x8xf32>
    %452 = vector.broadcast %28 : vector<1x1x32xf32> to vector<2x8x32xf32>
    %453 = arith.mulf %358, %452 : vector<2x8x32xf32>
    "tpu.trace_start"() <{level = 10 : i32, message = "nqk,nke->nqe"}> : () -> ()
    %cst_126 = arith.constant dense<0.000000e+00> : vector<2x8x32xf32>
    %454 = tpu.matmul %451, %453, %cst_126 {dimension_numbers = #tpu.dot_dimension_numbers<[2], [1], [1], [2], [0, 0, 0, 1, 1, 2], [0], [0]>} : vector<2x8x8xf32>, vector<2x8x32xf32>, vector<2x8x32xf32> -> vector<2x8x32xf32>
    "tpu.trace_stop"() : () -> ()
    %455 = arith.addf %436, %454 : vector<2x8x32xf32>
    %456 = vector.shape_cast %455 : vector<2x8x32xf32> to vector<16x32xf32>
    %457 = vector.shape_cast %358 : vector<2x8x32xf32> to vector<16x32xf32>
    %cst_127 = arith.constant dense<0.000000e+00> : vector<16x32xf32>
    %458 = tpu.matmul %456, %360, %cst_127 {dimension_numbers = #tpu.dot_dimension_numbers<[1], [0], [0], [1], [0, 0, 1, 1], [], []>} : vector<16x32xf32>, vector<32x32xf32>, vector<16x32xf32> -> vector<16x32xf32>
    %459 = vector.shape_cast %368 : vector<32xf32> to vector<1x32xf32>
    %460 = vector.broadcast %459 : vector<1x32xf32> to vector<16x32xf32>
    %461 = arith.addf %458, %460 : vector<16x32xf32>
    %462 = arith.addf %461, %457 : vector<16x32xf32>
    %cst_128 = arith.constant dense<0.000000e+00> : vector<16xf32>
    %463 = vector.multi_reduction <add>, %462, %cst_128 [1] : vector<16x32xf32> to vector<16xf32>
    %464 = vector.shape_cast %463 : vector<16xf32> to vector<16x1xf32>
    %cst_129 = arith.constant 3.200000e+01 : f32
    %465 = vector.broadcast %cst_129 : f32 to vector<16x1xf32>
    %466 = arith.divf %464, %465 : vector<16x1xf32>
    %467 = vector.broadcast %466 : vector<16x1xf32> to vector<16x32xf32>
    %468 = arith.subf %462, %467 : vector<16x32xf32>
    %469 = arith.mulf %468, %468 : vector<16x32xf32>
    %cst_130 = arith.constant dense<0.000000e+00> : vector<16xf32>
    %470 = vector.multi_reduction <add>, %469, %cst_130 [1] : vector<16x32xf32> to vector<16xf32>
    %471 = vector.shape_cast %470 : vector<16xf32> to vector<16x1xf32>
    %cst_131 = arith.constant 3.200000e+01 : f32
    %472 = vector.broadcast %cst_131 : f32 to vector<16x1xf32>
    %473 = arith.divf %471, %472 : vector<16x1xf32>
    %474 = vector.broadcast %466 : vector<16x1xf32> to vector<16x32xf32>
    %475 = arith.subf %462, %474 : vector<16x32xf32>
    %cst_132 = arith.constant 9.99999974E-6 : f32
    %476 = vector.broadcast %cst_132 : f32 to vector<16x1xf32>
    %477 = arith.addf %473, %476 : vector<16x1xf32>
    %478 = math.rsqrt %477 : vector<16x1xf32>
    %479 = vector.broadcast %478 : vector<16x1xf32> to vector<16x32xf32>
    %480 = arith.mulf %475, %479 : vector<16x32xf32>
    %481 = vector.shape_cast %370 : vector<32xf32> to vector<1x32xf32>
    %482 = vector.broadcast %481 : vector<1x32xf32> to vector<16x32xf32>
    %483 = arith.mulf %480, %482 : vector<16x32xf32>
    %484 = vector.shape_cast %372 : vector<32xf32> to vector<1x32xf32>
    %485 = vector.broadcast %484 : vector<1x32xf32> to vector<16x32xf32>
    %486 = arith.addf %483, %485 : vector<16x32xf32>
    %cst_133 = arith.constant dense<0.000000e+00> : vector<16x64xf32>
    %487 = tpu.matmul %486, %362, %cst_133 {dimension_numbers = #tpu.dot_dimension_numbers<[1], [0], [0], [1], [0, 0, 1, 1], [], []>} : vector<16x32xf32>, vector<32x64xf32>, vector<16x64xf32> -> vector<16x64xf32>
    %488 = vector.shape_cast %374 : vector<64xf32> to vector<1x64xf32>
    %489 = vector.broadcast %488 : vector<1x64xf32> to vector<16x64xf32>
    %490 = arith.addf %487, %489 : vector<16x64xf32>
    %cst_134 = arith.constant 0.000000e+00 : f32
    %491 = vector.broadcast %cst_134 : f32 to vector<16x64xf32>
    %492 = arith.maximumf %490, %491 : vector<16x64xf32>
    %cst_135 = arith.constant dense<0.000000e+00> : vector<16x32xf32>
    %493 = tpu.matmul %492, %364, %cst_135 {dimension_numbers = #tpu.dot_dimension_numbers<[1], [0], [0], [1], [0, 0, 1, 1], [], []>} : vector<16x64xf32>, vector<64x32xf32>, vector<16x32xf32> -> vector<16x32xf32>
    %494 = vector.shape_cast %376 : vector<32xf32> to vector<1x32xf32>
    %495 = vector.broadcast %494 : vector<1x32xf32> to vector<16x32xf32>
    %496 = arith.addf %493, %495 : vector<16x32xf32>
    %497 = arith.addf %496, %486 : vector<16x32xf32>
    %cst_136 = arith.constant dense<0.000000e+00> : vector<16xf32>
    %498 = vector.multi_reduction <add>, %497, %cst_136 [1] : vector<16x32xf32> to vector<16xf32>
    %499 = vector.shape_cast %498 : vector<16xf32> to vector<16x1xf32>
    %cst_137 = arith.constant 3.200000e+01 : f32
    %500 = vector.broadcast %cst_137 : f32 to vector<16x1xf32>
    %501 = arith.divf %499, %500 : vector<16x1xf32>
    %502 = vector.broadcast %501 : vector<16x1xf32> to vector<16x32xf32>
    %503 = arith.subf %497, %502 : vector<16x32xf32>
    %504 = arith.mulf %503, %503 : vector<16x32xf32>
    %cst_138 = arith.constant dense<0.000000e+00> : vector<16xf32>
    %505 = vector.multi_reduction <add>, %504, %cst_138 [1] : vector<16x32xf32> to vector<16xf32>
    %506 = vector.shape_cast %505 : vector<16xf32> to vector<16x1xf32>
    %cst_139 = arith.constant 3.200000e+01 : f32
    %507 = vector.broadcast %cst_139 : f32 to vector<16x1xf32>
    %508 = arith.divf %506, %507 : vector<16x1xf32>
    %509 = vector.broadcast %501 : vector<16x1xf32> to vector<16x32xf32>
    %510 = arith.subf %497, %509 : vector<16x32xf32>
    %cst_140 = arith.constant 9.99999974E-6 : f32
    %511 = vector.broadcast %cst_140 : f32 to vector<16x1xf32>
    %512 = arith.addf %508, %511 : vector<16x1xf32>
    %513 = math.rsqrt %512 : vector<16x1xf32>
    %514 = vector.broadcast %513 : vector<16x1xf32> to vector<16x32xf32>
    %515 = arith.mulf %510, %514 : vector<16x32xf32>
    %516 = vector.shape_cast %378 : vector<32xf32> to vector<1x32xf32>
    %517 = vector.broadcast %516 : vector<1x32xf32> to vector<16x32xf32>
    %518 = arith.mulf %515, %517 : vector<16x32xf32>
    %519 = vector.shape_cast %380 : vector<32xf32> to vector<1x32xf32>
    %520 = vector.broadcast %519 : vector<1x32xf32> to vector<16x32xf32>
    %521 = arith.addf %518, %520 : vector<16x32xf32>
    %522 = vector.shape_cast %521 : vector<16x32xf32> to vector<2x8x32xf32>
    %c1_141 = arith.constant 1 : index
    %c0_142 = arith.constant 0 : index
    %c0_143 = arith.constant 0 : index
    %523 = vector.load %arg4[%c1_141, %c0_142, %c0_143] : memref<2x135x64xf32, #tpu.memory_space<vmem>>, vector<1x32x32xf32>
    %524 = vector.shape_cast %523 : vector<1x32x32xf32> to vector<32x32xf32>
    %c1_144 = arith.constant 1 : index
    %c32_145 = arith.constant 32 : index
    %c0_146 = arith.constant 0 : index
    %525 = vector.load %arg4[%c1_144, %c32_145, %c0_146] : memref<2x135x64xf32, #tpu.memory_space<vmem>>, vector<1x32x64xf32>
    %526 = vector.shape_cast %525 : vector<1x32x64xf32> to vector<32x64xf32>
    %c1_147 = arith.constant 1 : index
    %c64_148 = arith.constant 64 : index
    %c0_149 = arith.constant 0 : index
    %527 = vector.load %arg4[%c1_147, %c64_148, %c0_149] : memref<2x135x64xf32, #tpu.memory_space<vmem>>, vector<1x64x32xf32>
    %528 = vector.shape_cast %527 : vector<1x64x32xf32> to vector<64x32xf32>
    %c1_150 = arith.constant 1 : index
    %c128_151 = arith.constant 128 : index
    %c0_152 = arith.constant 0 : index
    %529 = vector.load %arg4[%c1_150, %c128_151, %c0_152] : memref<2x135x64xf32, #tpu.memory_space<vmem>>, vector<1x7x64xf32>
    %530 = vector.shape_cast %529 : vector<1x7x64xf32> to vector<7x64xf32>
    %531 = vector.extract_strided_slice %530 {offsets = [0, 0], sizes = [1, 32], strides = [1, 1]} : vector<7x64xf32> to vector<1x32xf32>
    %532 = vector.shape_cast %531 : vector<1x32xf32> to vector<32xf32>
    %533 = vector.extract_strided_slice %530 {offsets = [1, 0], sizes = [1, 32], strides = [1, 1]} : vector<7x64xf32> to vector<1x32xf32>
    %534 = vector.shape_cast %533 : vector<1x32xf32> to vector<32xf32>
    %535 = vector.extract_strided_slice %530 {offsets = [2, 0], sizes = [1, 32], strides = [1, 1]} : vector<7x64xf32> to vector<1x32xf32>
    %536 = vector.shape_cast %535 : vector<1x32xf32> to vector<32xf32>
    %537 = vector.extract_strided_slice %530 {offsets = [3, 0], sizes = [1, 64], strides = [1, 1]} : vector<7x64xf32> to vector<1x64xf32>
    %538 = vector.shape_cast %537 : vector<1x64xf32> to vector<64xf32>
    %539 = vector.extract_strided_slice %530 {offsets = [4, 0], sizes = [1, 32], strides = [1, 1]} : vector<7x64xf32> to vector<1x32xf32>
    %540 = vector.shape_cast %539 : vector<1x32xf32> to vector<32xf32>
    %541 = vector.extract_strided_slice %530 {offsets = [5, 0], sizes = [1, 32], strides = [1, 1]} : vector<7x64xf32> to vector<1x32xf32>
    %542 = vector.shape_cast %541 : vector<1x32xf32> to vector<32xf32>
    %543 = vector.extract_strided_slice %530 {offsets = [6, 0], sizes = [1, 32], strides = [1, 1]} : vector<7x64xf32> to vector<1x32xf32>
    %544 = vector.shape_cast %543 : vector<1x32xf32> to vector<32xf32>
    %545 = vector.broadcast %7 : vector<1x1x32xf32> to vector<2x8x32xf32>
    %546 = arith.mulf %357, %545 : vector<2x8x32xf32>
    "tpu.trace_start"() <{level = 10 : i32, message = "nqe,nke->nqk"}> : () -> ()
    %cst_153 = arith.constant dense<0.000000e+00> : vector<2x8x8xf32>
    %547 = tpu.matmul %522, %546, %cst_153 {dimension_numbers = #tpu.dot_dimension_numbers<[2], [2], [1], [1], [0, 0, 0, 1, 1, 1], [0], [0]>} : vector<2x8x32xf32>, vector<2x8x32xf32>, vector<2x8x8xf32> -> vector<2x8x8xf32>
    "tpu.trace_stop"() : () -> ()
    %cst_154 = arith.constant 0.176776692 : f32
    %548 = vector.broadcast %cst_154 : f32 to vector<2x8x8xf32>
    %549 = arith.mulf %547, %548 : vector<2x8x8xf32>
    %cst_155 = arith.constant dense<0xFF800000> : vector<2x8xf32>
    %550 = vector.multi_reduction <maximumf>, %549, %cst_155 [2] : vector<2x8x8xf32> to vector<2x8xf32>
    %551 = vector.shape_cast %550 : vector<2x8xf32> to vector<2x8x1xf32>
    %552 = vector.broadcast %551 : vector<2x8x1xf32> to vector<2x8x8xf32>
    %553 = arith.subf %549, %552 : vector<2x8x8xf32>
    %554 = math.exp %553 : vector<2x8x8xf32>
    %cst_156 = arith.constant dense<0.000000e+00> : vector<2x8xf32>
    %555 = vector.multi_reduction <add>, %554, %cst_156 [2] : vector<2x8x8xf32> to vector<2x8xf32>
    %556 = vector.shape_cast %555 : vector<2x8xf32> to vector<2x8x1xf32>
    %557 = tpu.reciprocal %556 : vector<2x8x1xf32> -> vector<2x8x1xf32>
    %558 = vector.broadcast %557 : vector<2x8x1xf32> to vector<2x8x8xf32>
    %559 = arith.mulf %554, %558 : vector<2x8x8xf32>
    %560 = vector.broadcast %7 : vector<1x1x32xf32> to vector<2x8x32xf32>
    %561 = arith.mulf %522, %560 : vector<2x8x32xf32>
    "tpu.trace_start"() <{level = 10 : i32, message = "nqk,nke->nqe"}> : () -> ()
    %cst_157 = arith.constant dense<0.000000e+00> : vector<2x8x32xf32>
    %562 = tpu.matmul %559, %561, %cst_157 {dimension_numbers = #tpu.dot_dimension_numbers<[2], [1], [1], [2], [0, 0, 0, 1, 1, 2], [0], [0]>} : vector<2x8x8xf32>, vector<2x8x32xf32>, vector<2x8x32xf32> -> vector<2x8x32xf32>
    "tpu.trace_stop"() : () -> ()
    %563 = vector.broadcast %14 : vector<1x1x32xf32> to vector<2x8x32xf32>
    %564 = arith.mulf %357, %563 : vector<2x8x32xf32>
    "tpu.trace_start"() <{level = 10 : i32, message = "nqe,nke->nqk"}> : () -> ()
    %cst_158 = arith.constant dense<0.000000e+00> : vector<2x8x8xf32>
    %565 = tpu.matmul %522, %564, %cst_158 {dimension_numbers = #tpu.dot_dimension_numbers<[2], [2], [1], [1], [0, 0, 0, 1, 1, 1], [0], [0]>} : vector<2x8x32xf32>, vector<2x8x32xf32>, vector<2x8x8xf32> -> vector<2x8x8xf32>
    "tpu.trace_stop"() : () -> ()
    %cst_159 = arith.constant 0.176776692 : f32
    %566 = vector.broadcast %cst_159 : f32 to vector<2x8x8xf32>
    %567 = arith.mulf %565, %566 : vector<2x8x8xf32>
    %cst_160 = arith.constant dense<0xFF800000> : vector<2x8xf32>
    %568 = vector.multi_reduction <maximumf>, %567, %cst_160 [2] : vector<2x8x8xf32> to vector<2x8xf32>
    %569 = vector.shape_cast %568 : vector<2x8xf32> to vector<2x8x1xf32>
    %570 = vector.broadcast %569 : vector<2x8x1xf32> to vector<2x8x8xf32>
    %571 = arith.subf %567, %570 : vector<2x8x8xf32>
    %572 = math.exp %571 : vector<2x8x8xf32>
    %cst_161 = arith.constant dense<0.000000e+00> : vector<2x8xf32>
    %573 = vector.multi_reduction <add>, %572, %cst_161 [2] : vector<2x8x8xf32> to vector<2x8xf32>
    %574 = vector.shape_cast %573 : vector<2x8xf32> to vector<2x8x1xf32>
    %575 = tpu.reciprocal %574 : vector<2x8x1xf32> -> vector<2x8x1xf32>
    %576 = vector.broadcast %575 : vector<2x8x1xf32> to vector<2x8x8xf32>
    %577 = arith.mulf %572, %576 : vector<2x8x8xf32>
    %578 = vector.broadcast %14 : vector<1x1x32xf32> to vector<2x8x32xf32>
    %579 = arith.mulf %522, %578 : vector<2x8x32xf32>
    "tpu.trace_start"() <{level = 10 : i32, message = "nqk,nke->nqe"}> : () -> ()
    %cst_162 = arith.constant dense<0.000000e+00> : vector<2x8x32xf32>
    %580 = tpu.matmul %577, %579, %cst_162 {dimension_numbers = #tpu.dot_dimension_numbers<[2], [1], [1], [2], [0, 0, 0, 1, 1, 2], [0], [0]>} : vector<2x8x8xf32>, vector<2x8x32xf32>, vector<2x8x32xf32> -> vector<2x8x32xf32>
    "tpu.trace_stop"() : () -> ()
    %581 = arith.addf %562, %580 : vector<2x8x32xf32>
    %582 = vector.broadcast %21 : vector<1x1x32xf32> to vector<2x8x32xf32>
    %583 = arith.mulf %357, %582 : vector<2x8x32xf32>
    "tpu.trace_start"() <{level = 10 : i32, message = "nqe,nke->nqk"}> : () -> ()
    %cst_163 = arith.constant dense<0.000000e+00> : vector<2x8x8xf32>
    %584 = tpu.matmul %522, %583, %cst_163 {dimension_numbers = #tpu.dot_dimension_numbers<[2], [2], [1], [1], [0, 0, 0, 1, 1, 1], [0], [0]>} : vector<2x8x32xf32>, vector<2x8x32xf32>, vector<2x8x8xf32> -> vector<2x8x8xf32>
    "tpu.trace_stop"() : () -> ()
    %cst_164 = arith.constant 0.176776692 : f32
    %585 = vector.broadcast %cst_164 : f32 to vector<2x8x8xf32>
    %586 = arith.mulf %584, %585 : vector<2x8x8xf32>
    %cst_165 = arith.constant dense<0xFF800000> : vector<2x8xf32>
    %587 = vector.multi_reduction <maximumf>, %586, %cst_165 [2] : vector<2x8x8xf32> to vector<2x8xf32>
    %588 = vector.shape_cast %587 : vector<2x8xf32> to vector<2x8x1xf32>
    %589 = vector.broadcast %588 : vector<2x8x1xf32> to vector<2x8x8xf32>
    %590 = arith.subf %586, %589 : vector<2x8x8xf32>
    %591 = math.exp %590 : vector<2x8x8xf32>
    %cst_166 = arith.constant dense<0.000000e+00> : vector<2x8xf32>
    %592 = vector.multi_reduction <add>, %591, %cst_166 [2] : vector<2x8x8xf32> to vector<2x8xf32>
    %593 = vector.shape_cast %592 : vector<2x8xf32> to vector<2x8x1xf32>
    %594 = tpu.reciprocal %593 : vector<2x8x1xf32> -> vector<2x8x1xf32>
    %595 = vector.broadcast %594 : vector<2x8x1xf32> to vector<2x8x8xf32>
    %596 = arith.mulf %591, %595 : vector<2x8x8xf32>
    %597 = vector.broadcast %21 : vector<1x1x32xf32> to vector<2x8x32xf32>
    %598 = arith.mulf %522, %597 : vector<2x8x32xf32>
    "tpu.trace_start"() <{level = 10 : i32, message = "nqk,nke->nqe"}> : () -> ()
    %cst_167 = arith.constant dense<0.000000e+00> : vector<2x8x32xf32>
    %599 = tpu.matmul %596, %598, %cst_167 {dimension_numbers = #tpu.dot_dimension_numbers<[2], [1], [1], [2], [0, 0, 0, 1, 1, 2], [0], [0]>} : vector<2x8x8xf32>, vector<2x8x32xf32>, vector<2x8x32xf32> -> vector<2x8x32xf32>
    "tpu.trace_stop"() : () -> ()
    %600 = arith.addf %581, %599 : vector<2x8x32xf32>
    %601 = vector.broadcast %28 : vector<1x1x32xf32> to vector<2x8x32xf32>
    %602 = arith.mulf %357, %601 : vector<2x8x32xf32>
    "tpu.trace_start"() <{level = 10 : i32, message = "nqe,nke->nqk"}> : () -> ()
    %cst_168 = arith.constant dense<0.000000e+00> : vector<2x8x8xf32>
    %603 = tpu.matmul %522, %602, %cst_168 {dimension_numbers = #tpu.dot_dimension_numbers<[2], [2], [1], [1], [0, 0, 0, 1, 1, 1], [0], [0]>} : vector<2x8x32xf32>, vector<2x8x32xf32>, vector<2x8x8xf32> -> vector<2x8x8xf32>
    "tpu.trace_stop"() : () -> ()
    %cst_169 = arith.constant 0.176776692 : f32
    %604 = vector.broadcast %cst_169 : f32 to vector<2x8x8xf32>
    %605 = arith.mulf %603, %604 : vector<2x8x8xf32>
    %cst_170 = arith.constant dense<0xFF800000> : vector<2x8xf32>
    %606 = vector.multi_reduction <maximumf>, %605, %cst_170 [2] : vector<2x8x8xf32> to vector<2x8xf32>
    %607 = vector.shape_cast %606 : vector<2x8xf32> to vector<2x8x1xf32>
    %608 = vector.broadcast %607 : vector<2x8x1xf32> to vector<2x8x8xf32>
    %609 = arith.subf %605, %608 : vector<2x8x8xf32>
    %610 = math.exp %609 : vector<2x8x8xf32>
    %cst_171 = arith.constant dense<0.000000e+00> : vector<2x8xf32>
    %611 = vector.multi_reduction <add>, %610, %cst_171 [2] : vector<2x8x8xf32> to vector<2x8xf32>
    %612 = vector.shape_cast %611 : vector<2x8xf32> to vector<2x8x1xf32>
    %613 = tpu.reciprocal %612 : vector<2x8x1xf32> -> vector<2x8x1xf32>
    %614 = vector.broadcast %613 : vector<2x8x1xf32> to vector<2x8x8xf32>
    %615 = arith.mulf %610, %614 : vector<2x8x8xf32>
    %616 = vector.broadcast %28 : vector<1x1x32xf32> to vector<2x8x32xf32>
    %617 = arith.mulf %522, %616 : vector<2x8x32xf32>
    "tpu.trace_start"() <{level = 10 : i32, message = "nqk,nke->nqe"}> : () -> ()
    %cst_172 = arith.constant dense<0.000000e+00> : vector<2x8x32xf32>
    %618 = tpu.matmul %615, %617, %cst_172 {dimension_numbers = #tpu.dot_dimension_numbers<[2], [1], [1], [2], [0, 0, 0, 1, 1, 2], [0], [0]>} : vector<2x8x8xf32>, vector<2x8x32xf32>, vector<2x8x32xf32> -> vector<2x8x32xf32>
    "tpu.trace_stop"() : () -> ()
    %619 = arith.addf %600, %618 : vector<2x8x32xf32>
    %620 = vector.shape_cast %619 : vector<2x8x32xf32> to vector<16x32xf32>
    %621 = vector.shape_cast %522 : vector<2x8x32xf32> to vector<16x32xf32>
    %cst_173 = arith.constant dense<0.000000e+00> : vector<16x32xf32>
    %622 = tpu.matmul %620, %524, %cst_173 {dimension_numbers = #tpu.dot_dimension_numbers<[1], [0], [0], [1], [0, 0, 1, 1], [], []>} : vector<16x32xf32>, vector<32x32xf32>, vector<16x32xf32> -> vector<16x32xf32>
    %623 = vector.shape_cast %532 : vector<32xf32> to vector<1x32xf32>
    %624 = vector.broadcast %623 : vector<1x32xf32> to vector<16x32xf32>
    %625 = arith.addf %622, %624 : vector<16x32xf32>
    %626 = arith.addf %625, %621 : vector<16x32xf32>
    %cst_174 = arith.constant dense<0.000000e+00> : vector<16xf32>
    %627 = vector.multi_reduction <add>, %626, %cst_174 [1] : vector<16x32xf32> to vector<16xf32>
    %628 = vector.shape_cast %627 : vector<16xf32> to vector<16x1xf32>
    %cst_175 = arith.constant 3.200000e+01 : f32
    %629 = vector.broadcast %cst_175 : f32 to vector<16x1xf32>
    %630 = arith.divf %628, %629 : vector<16x1xf32>
    %631 = vector.broadcast %630 : vector<16x1xf32> to vector<16x32xf32>
    %632 = arith.subf %626, %631 : vector<16x32xf32>
    %633 = arith.mulf %632, %632 : vector<16x32xf32>
    %cst_176 = arith.constant dense<0.000000e+00> : vector<16xf32>
    %634 = vector.multi_reduction <add>, %633, %cst_176 [1] : vector<16x32xf32> to vector<16xf32>
    %635 = vector.shape_cast %634 : vector<16xf32> to vector<16x1xf32>
    %cst_177 = arith.constant 3.200000e+01 : f32
    %636 = vector.broadcast %cst_177 : f32 to vector<16x1xf32>
    %637 = arith.divf %635, %636 : vector<16x1xf32>
    %638 = vector.broadcast %630 : vector<16x1xf32> to vector<16x32xf32>
    %639 = arith.subf %626, %638 : vector<16x32xf32>
    %cst_178 = arith.constant 9.99999974E-6 : f32
    %640 = vector.broadcast %cst_178 : f32 to vector<16x1xf32>
    %641 = arith.addf %637, %640 : vector<16x1xf32>
    %642 = math.rsqrt %641 : vector<16x1xf32>
    %643 = vector.broadcast %642 : vector<16x1xf32> to vector<16x32xf32>
    %644 = arith.mulf %639, %643 : vector<16x32xf32>
    %645 = vector.shape_cast %534 : vector<32xf32> to vector<1x32xf32>
    %646 = vector.broadcast %645 : vector<1x32xf32> to vector<16x32xf32>
    %647 = arith.mulf %644, %646 : vector<16x32xf32>
    %648 = vector.shape_cast %536 : vector<32xf32> to vector<1x32xf32>
    %649 = vector.broadcast %648 : vector<1x32xf32> to vector<16x32xf32>
    %650 = arith.addf %647, %649 : vector<16x32xf32>
    %cst_179 = arith.constant dense<0.000000e+00> : vector<16x64xf32>
    %651 = tpu.matmul %650, %526, %cst_179 {dimension_numbers = #tpu.dot_dimension_numbers<[1], [0], [0], [1], [0, 0, 1, 1], [], []>} : vector<16x32xf32>, vector<32x64xf32>, vector<16x64xf32> -> vector<16x64xf32>
    %652 = vector.shape_cast %538 : vector<64xf32> to vector<1x64xf32>
    %653 = vector.broadcast %652 : vector<1x64xf32> to vector<16x64xf32>
    %654 = arith.addf %651, %653 : vector<16x64xf32>
    %cst_180 = arith.constant 0.000000e+00 : f32
    %655 = vector.broadcast %cst_180 : f32 to vector<16x64xf32>
    %656 = arith.maximumf %654, %655 : vector<16x64xf32>
    %cst_181 = arith.constant dense<0.000000e+00> : vector<16x32xf32>
    %657 = tpu.matmul %656, %528, %cst_181 {dimension_numbers = #tpu.dot_dimension_numbers<[1], [0], [0], [1], [0, 0, 1, 1], [], []>} : vector<16x64xf32>, vector<64x32xf32>, vector<16x32xf32> -> vector<16x32xf32>
    %658 = vector.shape_cast %540 : vector<32xf32> to vector<1x32xf32>
    %659 = vector.broadcast %658 : vector<1x32xf32> to vector<16x32xf32>
    %660 = arith.addf %657, %659 : vector<16x32xf32>
    %661 = arith.addf %660, %650 : vector<16x32xf32>
    %cst_182 = arith.constant dense<0.000000e+00> : vector<16xf32>
    %662 = vector.multi_reduction <add>, %661, %cst_182 [1] : vector<16x32xf32> to vector<16xf32>
    %663 = vector.shape_cast %662 : vector<16xf32> to vector<16x1xf32>
    %cst_183 = arith.constant 3.200000e+01 : f32
    %664 = vector.broadcast %cst_183 : f32 to vector<16x1xf32>
    %665 = arith.divf %663, %664 : vector<16x1xf32>
    %666 = vector.broadcast %665 : vector<16x1xf32> to vector<16x32xf32>
    %667 = arith.subf %661, %666 : vector<16x32xf32>
    %668 = arith.mulf %667, %667 : vector<16x32xf32>
    %cst_184 = arith.constant dense<0.000000e+00> : vector<16xf32>
    %669 = vector.multi_reduction <add>, %668, %cst_184 [1] : vector<16x32xf32> to vector<16xf32>
    %670 = vector.shape_cast %669 : vector<16xf32> to vector<16x1xf32>
    %cst_185 = arith.constant 3.200000e+01 : f32
    %671 = vector.broadcast %cst_185 : f32 to vector<16x1xf32>
    %672 = arith.divf %670, %671 : vector<16x1xf32>
    %673 = vector.broadcast %665 : vector<16x1xf32> to vector<16x32xf32>
    %674 = arith.subf %661, %673 : vector<16x32xf32>
    %cst_186 = arith.constant 9.99999974E-6 : f32
    %675 = vector.broadcast %cst_186 : f32 to vector<16x1xf32>
    %676 = arith.addf %672, %675 : vector<16x1xf32>
    %677 = math.rsqrt %676 : vector<16x1xf32>
    %678 = vector.broadcast %677 : vector<16x1xf32> to vector<16x32xf32>
    %679 = arith.mulf %674, %678 : vector<16x32xf32>
    %680 = vector.shape_cast %542 : vector<32xf32> to vector<1x32xf32>
    %681 = vector.broadcast %680 : vector<1x32xf32> to vector<16x32xf32>
    %682 = arith.mulf %679, %681 : vector<16x32xf32>
    %683 = vector.shape_cast %544 : vector<32xf32> to vector<1x32xf32>
    %684 = vector.broadcast %683 : vector<1x32xf32> to vector<16x32xf32>
    %685 = arith.addf %682, %684 : vector<16x32xf32>
    %686 = vector.shape_cast %685 : vector<16x32xf32> to vector<2x8x32xf32>
    %687 = vector.shape_cast %686 : vector<2x8x32xf32> to vector<16x32xf32>
    %c0_187 = arith.constant 0 : index
    %c0_188 = arith.constant 0 : index
    %688 = vector.load %arg5[%c0_187, %c0_188] : memref<33x128xf32, #tpu.memory_space<vmem>>, vector<32x128xf32>
    %c32_189 = arith.constant 32 : index
    %c0_190 = arith.constant 0 : index
    %689 = vector.load %arg5[%c32_189, %c0_190] : memref<33x128xf32, #tpu.memory_space<vmem>>, vector<1x128xf32>
    %690 = vector.shape_cast %689 : vector<1x128xf32> to vector<128xf32>
    %cst_191 = arith.constant dense<0.000000e+00> : vector<16x128xf32>
    %691 = tpu.matmul %687, %688, %cst_191 {dimension_numbers = #tpu.dot_dimension_numbers<[1], [0], [0], [1], [0, 0, 1, 1], [], []>} : vector<16x32xf32>, vector<32x128xf32>, vector<16x128xf32> -> vector<16x128xf32>
    %692 = vector.shape_cast %690 : vector<128xf32> to vector<1x128xf32>
    %693 = vector.broadcast %692 : vector<1x128xf32> to vector<16x128xf32>
    %694 = arith.addf %691, %693 : vector<16x128xf32>
    %695 = vector.shape_cast %694 : vector<16x128xf32> to vector<2x8x128xf32>
    %c0_192 = arith.constant 0 : index
    %c0_193 = arith.constant 0 : index
    %c0_194 = arith.constant 0 : index
    %696 = vector.load %arg6[%c0_192, %c0_193, %c0_194] : memref<2x8x128xf32, #tpu.memory_space<vmem>>, vector<2x8x128xf32>
    tpu.vector_store %arg6[%c0_192, %c0_193, %c0_194], %695 {strides = array<i32>} : memref<2x8x128xf32, #tpu.memory_space<vmem>>, vector<2x8x128xf32>,
    return
  }
  func.func @transform_0(%arg0: i32) -> (i32, i32, i32) {
    %c0_i32 = arith.constant 0 : i32
    %c0_i32_0 = arith.constant 0 : i32
    %c0_i32_1 = arith.constant 0 : i32
    %c0_i32_2 = arith.constant 0 : i32
    return %c0_i32, %c0_i32_0, %c0_i32_1 : i32, i32, i32
  }
  func.func @transform_1(%arg0: i32) -> (i32, i32, i32) {
    %c0_i32 = arith.constant 0 : i32
    %c0_i32_0 = arith.constant 0 : i32
    %c0_i32_1 = arith.constant 0 : i32
    %c0_i32_2 = arith.constant 0 : i32
    return %c0_i32, %c0_i32_0, %c0_i32_1 : i32, i32, i32
  }
  func.func @transform_2(%arg0: i32) -> (i32, i32, i32) {
    %c0_i32 = arith.constant 0 : i32
    %c0_i32_0 = arith.constant 0 : i32
    %c0_i32_1 = arith.constant 0 : i32
    %c0_i32_2 = arith.constant 0 : i32
    return %c0_i32, %c0_i32_0, %c0_i32_1 : i32, i32, i32
  }
  func.func @transform_3(%arg0: i32) -> (i32, i32, i32) {
    %c0_i32 = arith.constant 0 : i32
    %c0_i32_0 = arith.constant 0 : i32
    %c0_i32_1 = arith.constant 0 : i32
    %c0_i32_2 = arith.constant 0 : i32
    return %c0_i32, %c0_i32_0, %c0_i32_1 : i32, i32, i32
  }
  func.func @transform_4(%arg0: i32) -> (i32, i32) {
    %c0_i32 = arith.constant 0 : i32
    %c0_i32_0 = arith.constant 0 : i32
    %c0_i32_1 = arith.constant 0 : i32
    return %c0_i32, %c0_i32_0 : i32, i32
  }
  func.func @transform_5(%arg0: i32) -> (i32, i32, i32) {
    %c0_i32 = arith.constant 0 : i32
    %c0_i32_0 = arith.constant 0 : i32
    %c0_i32_1 = arith.constant 0 : i32
    %c0_i32_2 = arith.constant 0 : i32
    return %c0_i32, %c0_i32_0, %c0_i32_1 : i32, i32, i32
  }
}

</mosaic_0001>

<llo_original>
// kernel: transformer_forward.1
$region0: #{transformer_forward.1}
  #allocation0 [shape = 'u32[]', space=smem, size = 0x4, offset = 0x4, fixed_abs, tag = 'smem constant byte address 0x4 - core index']
  #allocation1 [shape = 'u32[144,128]{1,0:T(1,128)}', space=vmem, size = 0x12000, scoped, tag = 'internal scratch']
  %s0 = inlined_call_operand.vmem [shape: f32[2,8,32], index: 0, kind: input, shape index: {}]
  %s1 = inlined_call_operand.vmem [shape: f32[2,8,32], index: 1, kind: input, shape index: {}]
  %s2 = inlined_call_operand.vmem [shape: f32[2,135,64], index: 2, kind: input, shape index: {}]
  %s3 = inlined_call_operand.vmem [shape: f32[2,135,64], index: 3, kind: input, shape index: {}]
  %s4 = inlined_call_operand.vmem [shape: f32[33,128], index: 4, kind: input, shape index: {}]
  %s5 = inlined_call_operand.hbm [shape: f32[2,8,128], index: 5, kind: output, shape index: {}]
  %s6 = sld [smem:[#allocation0]]
  $region30: #{transformer_forward.1} parent=0
    _
  %s8 = ssub.s32 1, %s6
  %s9 = scalar_select 0, %s8, %s6
  $region1: #{transformer_forward.1} parent=0
    #allocation2 [shape = 'u8[8192]{0}', space=vmem, size = 0x2000, scoped, tag = 'output window, operand 0, single buffered']
    #allocation3 [shape = 's32[1]{0}', space=sflag, size = 0x4, scoped, tag = 'scoped memory for transformer_forward.1']
    %10 = vsyncpa [#allocation3], 0
    // Predicated region
    $region2: #{transformer_forward.1} parent=1 // pred_check
      _
    $region3: #{transformer_forward.1} parent=1 // pred_check_branch
      %12 = sbr.rel (0) target = $region5
    $region4: #{transformer_forward.1} parent=1 // pred_region
      _
    $region5: #{transformer_forward.1} parent=1 // pred_fallthru
      _
    // Predicated region
    $region6: #{transformer_forward.1} parent=1 // pred_check
      _
    $region7: #{transformer_forward.1} parent=1 // pred_check_branch
      %14 = sbr.rel (0) target = $region9
    $region8: #{transformer_forward.1} parent=1 // pred_region
      _
    $region9: #{transformer_forward.1} parent=1 // pred_fallthru
      _
    // Predicated region
    $region10: #{transformer_forward.1} parent=1 // pred_check
      _
    $region11: #{transformer_forward.1} parent=1 // pred_check_branch
      %16 = sbr.rel (0) target = $region13
    $region12: #{transformer_forward.1} parent=1 // pred_region
      _
    $region13: #{transformer_forward.1} parent=1 // pred_fallthru
      _
    // Predicated region
    $region14: #{transformer_forward.1} parent=1 // pred_check
      _
    $region15: #{transformer_forward.1} parent=1 // pred_check_branch
      %18 = sbr.rel (0) target = $region17
    $region16: #{transformer_forward.1} parent=1 // pred_region
      _
    $region17: #{transformer_forward.1} parent=1 // pred_fallthru
      _
    // Predicated region
    $region18: #{transformer_forward.1} parent=1 // pred_check
      _
    $region19: #{transformer_forward.1} parent=1 // pred_check_branch
      %20 = sbr.rel (0) target = $region21
    $region20: #{transformer_forward.1} parent=1 // pred_region
      _
    $region21: #{transformer_forward.1} parent=1 // pred_fallthru
      _
    %v21 = vlaneseq
    %v22 = vand.u32 %v21, 127
    %vm23 = vcmp.ge.s32.totalorder %v22, 0
    %vm24 = vcmp.lt.s32.totalorder %v22, 8
    %vm25 = vmand %vm23, %vm24
    %v26 = vsel %vm25, 1, 0
    %v27 = vcvt.s32.f32 %v26
    %vm28 = vcmp.ge.s32.totalorder %v22, 8
    %vm29 = vcmp.lt.s32.totalorder %v22, 16
    %vm30 = vmand %vm28, %vm29
    %v31 = vsel %vm30, 1, 0
    %v32 = vcvt.s32.f32 %v31
    %vm33 = vcmp.ge.s32.totalorder %v22, 16
    %vm34 = vcmp.lt.s32.totalorder %v22, 24
    %vm35 = vmand %vm33, %vm34
    %v36 = vsel %vm35, 1, 0
    %v37 = vcvt.s32.f32 %v36
    %vm38 = vcmp.ge.s32.totalorder %v22, 24
    %vm39 = vcmp.lt.s32.totalorder %v22, 32
    %vm40 = vmand %vm38, %vm39
    %v41 = vsel %vm40, 1, 0
    %v42 = vcvt.s32.f32 %v41
    %v43 = vld [vmem:[%s0] sm:$0xff]
    %v44 = vld [vmem:[%s0 + $0x8] sm:$0xff]
    %v45 = vld [vmem:[%s2] sm:$0xff]
    %v46 = vld [vmem:[%s2 + $0x8] sm:$0xff]
    %v47 = vld [vmem:[%s2 + $0x10] sm:$0xff]
    %v48 = vld [vmem:[%s2 + $0x18] sm:$0xff]
    %v49 = vld [vmem:[%s2 + $0x20] sm:$0xff]
    %v50 = vld [vmem:[%s2 + $0x28] sm:$0xff]
    %v51 = vld [vmem:[%s2 + $0x30] sm:$0xff]
    %v52 = vld [vmem:[%s2 + $0x38] sm:$0xff]
    %v53 = vld [vmem:[%s2 + $0x40] sm:$0xff]
    %v54 = vld [vmem:[%s2 + $0x48] sm:$0xff]
    %v55 = vld [vmem:[%s2 + $0x50] sm:$0xff]
    %v56 = vld [vmem:[%s2 + $0x58] sm:$0xff]
    %v57 = vld [vmem:[%s2 + $0x60] sm:$0xff]
    %v58 = vld [vmem:[%s2 + $0x68] sm:$0xff]
    %v59 = vld [vmem:[%s2 + $0x70] sm:$0xff]
    %v60 = vld [vmem:[%s2 + $0x78] sm:$0xff]
    %v61 = vld [vmem:[%s2 + $0x80] sm:$0x7f]
    %v62 = vmul.f32 %v43, %v27
    %v63 = vmul.f32 %v44, %v27
    %vm64 = vcmask 261120
    %v66 = vsel %vm64, %v43, 0
    %v69 = vsel %vm64, %v62, 0
    %71 = vmatprep.subr.mxu0 0.0
    %72 = vmatpush1.xpose.msra.mxu0 %v69
    %73 = vmatprep.subr.mxu0 0.0
    %74 = vmatpush1.xpose.msra.mxu0 0.0
    %75 = vmatprep.subr.mxu0 0.0
    %76 = vmatpush1.xpose.msra.mxu0 0.0
    %77 = vmatprep.subr.mxu0 0.0
    %78 = vmatpush1.xpose.msra.mxu0 0.0
    %79 = vmatprep.subr.mxu0 0.0
    %80 = vmatpush1.xpose.msra.mxu0 0.0
    %81 = vmatprep.subr.mxu0 0.0
    %82 = vmatpush1.xpose.msra.mxu0 0.0
    %83 = vmatprep.subr.mxu0 0.0
    %84 = vmatpush1.xpose.msra.mxu0 0.0
    %85 = vmatprep.subr.mxu0 0.0
    %86 = vmatpush1.xpose.msra.mxu0 0.0
    %87 = vmatprep.subr.mxu0 0.0
    %88 = vmatpush1.xpose.msra.mxu0 0.0
    %89 = vmatprep.subr.mxu0 0.0
    %90 = vmatpush1.xpose.msra.mxu0 0.0
    %91 = vmatprep.subr.mxu0 0.0
    %92 = vmatpush1.xpose.msra.mxu0 0.0
    %93 = vmatprep.subr.mxu0 0.0
    %94 = vmatpush1.xpose.msra.mxu0 0.0
    %95 = vmatprep.subr.mxu0 0.0
    %96 = vmatpush1.xpose.msra.mxu0 0.0
    %97 = vmatprep.subr.mxu0 0.0
    %98 = vmatpush1.xpose.msra.mxu0 0.0
    %99 = vmatprep.subr.mxu0 0.0
    %100 = vmatpush1.xpose.msra.mxu0 0.0
    %101 = vmatprep.subr.mxu0 0.0
    %102 = vmatpush1.xpose.msra.mxu0 0.0
    %103 = vmatprep.subr.mxu0 0.0
    %104 = vmatpush1.xpose.msra.mxu0 0.0
    %105 = vmatprep.subr.mxu0 0.0
    %106 = vmatpush1.xpose.msra.mxu0 0.0
    %107 = vmatprep.subr.mxu0 0.0
    %108 = vmatpush1.xpose.msra.mxu0 0.0
    %109 = vmatprep.subr.mxu0 0.0
    %110 = vmatpush1.xpose.msra.mxu0 0.0
    %111 = vmatprep.subr.mxu0 0.0
    %112 = vmatpush1.xpose.msra.mxu0 0.0
    %113 = vmatprep.subr.mxu0 0.0
    %114 = vmatpush1.xpose.msra.mxu0 0.0
    %115 = vmatprep.subr.mxu0 0.0
    %116 = vmatpush1.xpose.msra.mxu0 0.0
    %117 = vmatprep.subr.mxu0 0.0
    %118 = vmatpush1.xpose.msra.mxu0 0.0
    %119 = vmatprep.subr.mxu0 0.0
    %120 = vmatpush1.xpose.msra.mxu0 0.0
    %121 = vmatprep.subr.mxu0 0.0
    %122 = vmatpush1.xpose.msra.mxu0 0.0
    %123 = vmatprep.subr.mxu0 0.0
    %124 = vmatpush1.xpose.msra.mxu0 0.0
    %125 = vmatprep.subr.mxu0 0.0
    %126 = vmatpush1.xpose.msra.mxu0 0.0
    %127 = vmatprep.subr.mxu0 0.0
    %128 = vmatpush1.xpose.msra.mxu0 0.0
    %129 = vmatprep.subr.mxu0 0.0
    %130 = vmatpush1.xpose.msra.mxu0 0.0
    %131 = vmatprep.subr.mxu0 0.0
    %132 = vmatpush1.xpose.msra.mxu0 0.0
    %133 = vmatprep.subr.mxu0 0.0
    %134 = vmatpush1.xpose.msra.mxu0 0.0
    %135 = vmatprep.mubr.f32.mxu0 0.0
    %136 = vmatmul.mubr.f32.gmra.mrb[0].mxu0 %v66
    %v137 = vpop.f32.mrb[0].mxu0
    %v138 = vadd.f32 0.0, %v137
    %v139 = vpop.f32.mrb[0].mxu0
    %140 = vdwg.mxu0
    %v142 = vsel %vm64, %v44, 0
    %v145 = vsel %vm64, %v63, 0
    %147 = vmatprep.subr.mxu0 0.0
    %148 = vmatpush1.xpose.msra.mxu0 %v145
    %149 = vmatprep.subr.mxu0 0.0
    %150 = vmatpush1.xpose.msra.mxu0 0.0
    %151 = vmatprep.subr.mxu0 0.0
    %152 = vmatpush1.xpose.msra.mxu0 0.0
    %153 = vmatprep.subr.mxu0 0.0
    %154 = vmatpush1.xpose.msra.mxu0 0.0
    %155 = vmatprep.subr.mxu0 0.0
    %156 = vmatpush1.xpose.msra.mxu0 0.0
    %157 = vmatprep.subr.mxu0 0.0
    %158 = vmatpush1.xpose.msra.mxu0 0.0
    %159 = vmatprep.subr.mxu0 0.0
    %160 = vmatpush1.xpose.msra.mxu0 0.0
    %161 = vmatprep.subr.mxu0 0.0
    %162 = vmatpush1.xpose.msra.mxu0 0.0
    %163 = vmatprep.subr.mxu0 0.0
    %164 = vmatpush1.xpose.msra.mxu0 0.0
    %165 = vmatprep.subr.mxu0 0.0
    %166 = vmatpush1.xpose.msra.mxu0 0.0
    %167 = vmatprep.subr.mxu0 0.0
    %168 = vmatpush1.xpose.msra.mxu0 0.0
    %169 = vmatprep.subr.mxu0 0.0
    %170 = vmatpush1.xpose.msra.mxu0 0.0
    %171 = vmatprep.subr.mxu0 0.0
    %172 = vmatpush1.xpose.msra.mxu0 0.0
    %173 = vmatprep.subr.mxu0 0.0
    %174 = vmatpush1.xpose.msra.mxu0 0.0
    %175 = vmatprep.subr.mxu0 0.0
    %176 = vmatpush1.xpose.msra.mxu0 0.0
    %177 = vmatprep.subr.mxu0 0.0
    %178 = vmatpush1.xpose.msra.mxu0 0.0
    %179 = vmatprep.subr.mxu0 0.0
    %180 = vmatpush1.xpose.msra.mxu0 0.0
    %181 = vmatprep.subr.mxu0 0.0
    %182 = vmatpush1.xpose.msra.mxu0 0.0
    %183 = vmatprep.subr.mxu0 0.0
    %184 = vmatpush1.xpose.msra.mxu0 0.0
    %185 = vmatprep.subr.mxu0 0.0
    %186 = vmatpush1.xpose.msra.mxu0 0.0
    %187 = vmatprep.subr.mxu0 0.0
    %188 = vmatpush1.xpose.msra.mxu0 0.0
    %189 = vmatprep.subr.mxu0 0.0
    %190 = vmatpush1.xpose.msra.mxu0 0.0
    %191 = vmatprep.subr.mxu0 0.0
    %192 = vmatpush1.xpose.msra.mxu0 0.0
    %193 = vmatprep.subr.mxu0 0.0
    %194 = vmatpush1.xpose.msra.mxu0 0.0
    %195 = vmatprep.subr.mxu0 0.0
    %196 = vmatpush1.xpose.msra.mxu0 0.0
    %197 = vmatprep.subr.mxu0 0.0
    %198 = vmatpush1.xpose.msra.mxu0 0.0
    %199 = vmatprep.subr.mxu0 0.0
    %200 = vmatpush1.xpose.msra.mxu0 0.0
    %201 = vmatprep.subr.mxu0 0.0
    %202 = vmatpush1.xpose.msra.mxu0 0.0
    %203 = vmatprep.subr.mxu0 0.0
    %204 = vmatpush1.xpose.msra.mxu0 0.0
    %205 = vmatprep.subr.mxu0 0.0
    %206 = vmatpush1.xpose.msra.mxu0 0.0
    %207 = vmatprep.subr.mxu0 0.0
    %208 = vmatpush1.xpose.msra.mxu0 0.0
    %209 = vmatprep.subr.mxu0 0.0
    %210 = vmatpush1.xpose.msra.mxu0 0.0
    %211 = vmatprep.mubr.f32.mxu0 0.0
    %212 = vmatmul.mubr.f32.gmra.mrb[0].mxu0 %v142
    %v213 = vpop.f32.mrb[0].mxu0
    %v214 = vadd.f32 0.0, %v213
    %v215 = vpop.f32.mrb[0].mxu0
    %216 = vdwg.mxu0
    %v217 = vmul.f32 %v138, 0.17677669
    %v218 = vmul.f32 %v214, 0.17677669
    %vm219 = vcmask 64512
    %v220 = vsel %vm219, %v217, -inf
    %221 = vmax.xlane.f32.xlu0 %v220
    %v222 = vpop.xlane.xlu0 %221
    %v223 = vsel %vm219, %v218, -inf
    %224 = vmax.xlane.f32.xlu0 %v223
    %v225 = vpop.xlane.xlu0 %224
    %v226 = vsub.f32 %v217, %v222
    %v227 = vsub.f32 %v218, %v225
    %v228 = vmul.f32 %v226, 1.442695
    %v229 = vpow.pop %v228
    %v230 = vmul.f32 %v227, 1.442695
    %v231 = vpow.pop %v230
    %v232 = vsel %vm219, %v229, 0.0
    %233 = vadd.xlane.f32.xlu0 %v232
    %v234 = vpop.xlane.xlu0 %233
    %v235 = vsel %vm219, %v231, 0.0
    %236 = vadd.xlane.f32.xlu0 %v235
    %v237 = vpop.xlane.xlu0 %236
    %v238 = vrcp.pop %v234
    %v239 = vrcp.pop %v237
    %v240 = vmul.f32 %v229, %v238
    %v241 = vmul.f32 %v231, %v239
    %v242 = vmul.f32 %v43, %v32
    %v243 = vmul.f32 %v44, %v32
    %v245 = vsel %vm64, %v242, 0
    %247 = vmatprep.subr.mxu0 0.0
    %248 = vmatpush1.xpose.msra.mxu0 %v245
    %249 = vmatprep.subr.mxu0 0.0
    %250 = vmatpush1.xpose.msra.mxu0 0.0
    %251 = vmatprep.subr.mxu0 0.0
    %252 = vmatpush1.xpose.msra.mxu0 0.0
    %253 = vmatprep.subr.mxu0 0.0
    %254 = vmatpush1.xpose.msra.mxu0 0.0
    %255 = vmatprep.subr.mxu0 0.0
    %256 = vmatpush1.xpose.msra.mxu0 0.0
    %257 = vmatprep.subr.mxu0 0.0
    %258 = vmatpush1.xpose.msra.mxu0 0.0
    %259 = vmatprep.subr.mxu0 0.0
    %260 = vmatpush1.xpose.msra.mxu0 0.0
    %261 = vmatprep.subr.mxu0 0.0
    %262 = vmatpush1.xpose.msra.mxu0 0.0
    %263 = vmatprep.subr.mxu0 0.0
    %264 = vmatpush1.xpose.msra.mxu0 0.0
    %265 = vmatprep.subr.mxu0 0.0
    %266 = vmatpush1.xpose.msra.mxu0 0.0
    %267 = vmatprep.subr.mxu0 0.0
    %268 = vmatpush1.xpose.msra.mxu0 0.0
    %269 = vmatprep.subr.mxu0 0.0
    %270 = vmatpush1.xpose.msra.mxu0 0.0
    %271 = vmatprep.subr.mxu0 0.0
    %272 = vmatpush1.xpose.msra.mxu0 0.0
    %273 = vmatprep.subr.mxu0 0.0
    %274 = vmatpush1.xpose.msra.mxu0 0.0
    %275 = vmatprep.subr.mxu0 0.0
    %276 = vmatpush1.xpose.msra.mxu0 0.0
    %277 = vmatprep.subr.mxu0 0.0
    %278 = vmatpush1.xpose.msra.mxu0 0.0
    %279 = vmatprep.subr.mxu0 0.0
    %280 = vmatpush1.xpose.msra.mxu0 0.0
    %281 = vmatprep.subr.mxu0 0.0
    %282 = vmatpush1.xpose.msra.mxu0 0.0
    %283 = vmatprep.subr.mxu0 0.0
    %284 = vmatpush1.xpose.msra.mxu0 0.0
    %285 = vmatprep.subr.mxu0 0.0
    %286 = vmatpush1.xpose.msra.mxu0 0.0
    %287 = vmatprep.subr.mxu0 0.0
    %288 = vmatpush1.xpose.msra.mxu0 0.0
    %289 = vmatprep.subr.mxu0 0.0
    %290 = vmatpush1.xpose.msra.mxu0 0.0
    %291 = vmatprep.subr.mxu0 0.0
    %292 = vmatpush1.xpose.msra.mxu0 0.0
    %293 = vmatprep.subr.mxu0 0.0
    %294 = vmatpush1.xpose.msra.mxu0 0.0
    %295 = vmatprep.subr.mxu0 0.0
    %296 = vmatpush1.xpose.msra.mxu0 0.0
    %297 = vmatprep.subr.mxu0 0.0
    %298 = vmatpush1.xpose.msra.mxu0 0.0
    %299 = vmatprep.subr.mxu0 0.0
    %300 = vmatpush1.xpose.msra.mxu0 0.0
    %301 = vmatprep.subr.mxu0 0.0
    %302 = vmatpush1.xpose.msra.mxu0 0.0
    %303 = vmatprep.subr.mxu0 0.0
    %304 = vmatpush1.xpose.msra.mxu0 0.0
    %305 = vmatprep.subr.mxu0 0.0
    %306 = vmatpush1.xpose.msra.mxu0 0.0
    %307 = vmatprep.subr.mxu0 0.0
    %308 = vmatpush1.xpose.msra.mxu0 0.0
    %309 = vmatprep.subr.mxu0 0.0
    %310 = vmatpush1.xpose.msra.mxu0 0.0
    %311 = vmatprep.mubr.f32.mxu0 0.0
    %312 = vmatmul.mubr.f32.gmra.mrb[0].mxu0 %v66
    %v313 = vpop.f32.mrb[0].mxu0
    %v314 = vadd.f32 0.0, %v313
    %v315 = vpop.f32.mrb[0].mxu0
    %316 = vdwg.mxu0
    %v318 = vsel %vm64, %v243, 0
    %320 = vmatprep.subr.mxu0 0.0
    %321 = vmatpush1.xpose.msra.mxu0 %v318
    %322 = vmatprep.subr.mxu0 0.0
    %323 = vmatpush1.xpose.msra.mxu0 0.0
    %324 = vmatprep.subr.mxu0 0.0
    %325 = vmatpush1.xpose.msra.mxu0 0.0
    %326 = vmatprep.subr.mxu0 0.0
    %327 = vmatpush1.xpose.msra.mxu0 0.0
    %328 = vmatprep.subr.mxu0 0.0
    %329 = vmatpush1.xpose.msra.mxu0 0.0
    %330 = vmatprep.subr.mxu0 0.0
    %331 = vmatpush1.xpose.msra.mxu0 0.0
    %332 = vmatprep.subr.mxu0 0.0
    %333 = vmatpush1.xpose.msra.mxu0 0.0
    %334 = vmatprep.subr.mxu0 0.0
    %335 = vmatpush1.xpose.msra.mxu0 0.0
    %336 = vmatprep.subr.mxu0 0.0
    %337 = vmatpush1.xpose.msra.mxu0 0.0
    %338 = vmatprep.subr.mxu0 0.0
    %339 = vmatpush1.xpose.msra.mxu0 0.0
    %340 = vmatprep.subr.mxu0 0.0
    %341 = vmatpush1.xpose.msra.mxu0 0.0
    %342 = vmatprep.subr.mxu0 0.0
    %343 = vmatpush1.xpose.msra.mxu0 0.0
    %344 = vmatprep.subr.mxu0 0.0
    %345 = vmatpush1.xpose.msra.mxu0 0.0
    %346 = vmatprep.subr.mxu0 0.0
    %347 = vmatpush1.xpose.msra.mxu0 0.0
    %348 = vmatprep.subr.mxu0 0.0
    %349 = vmatpush1.xpose.msra.mxu0 0.0
    %350 = vmatprep.subr.mxu0 0.0
    %351 = vmatpush1.xpose.msra.mxu0 0.0
    %352 = vmatprep.subr.mxu0 0.0
    %353 = vmatpush1.xpose.msra.mxu0 0.0
    %354 = vmatprep.subr.mxu0 0.0
    %355 = vmatpush1.xpose.msra.mxu0 0.0
    %356 = vmatprep.subr.mxu0 0.0
    %357 = vmatpush1.xpose.msra.mxu0 0.0
    %358 = vmatprep.subr.mxu0 0.0
    %359 = vmatpush1.xpose.msra.mxu0 0.0
    %360 = vmatprep.subr.mxu0 0.0
    %361 = vmatpush1.xpose.msra.mxu0 0.0
    %362 = vmatprep.subr.mxu0 0.0
    %363 = vmatpush1.xpose.msra.mxu0 0.0
    %364 = vmatprep.subr.mxu0 0.0
    %365 = vmatpush1.xpose.msra.mxu0 0.0
    %366 = vmatprep.subr.mxu0 0.0
    %367 = vmatpush1.xpose.msra.mxu0 0.0
    %368 = vmatprep.subr.mxu0 0.0
    %369 = vmatpush1.xpose.msra.mxu0 0.0
    %370 = vmatprep.subr.mxu0 0.0
    %371 = vmatpush1.xpose.msra.mxu0 0.0
    %372 = vmatprep.subr.mxu0 0.0
    %373 = vmatpush1.xpose.msra.mxu0 0.0
    %374 = vmatprep.subr.mxu0 0.0
    %375 = vmatpush1.xpose.msra.mxu0 0.0
    %376 = vmatprep.subr.mxu0 0.0
    %377 = vmatpush1.xpose.msra.mxu0 0.0
    %378 = vmatprep.subr.mxu0 0.0
    %379 = vmatpush1.xpose.msra.mxu0 0.0
    %380 = vmatprep.subr.mxu0 0.0
    %381 = vmatpush1.xpose.msra.mxu0 0.0
    %382 = vmatprep.subr.mxu0 0.0
    %383 = vmatpush1.xpose.msra.mxu0 0.0
    %384 = vmatprep.mubr.f32.mxu0 0.0
    %385 = vmatmul.mubr.f32.gmra.mrb[0].mxu0 %v142
    %v386 = vpop.f32.mrb[0].mxu0
    %v387 = vadd.f32 0.0, %v386
    %v388 = vpop.f32.mrb[0].mxu0
    %389 = vdwg.mxu0
    %v390 = vmul.f32 %v314, 0.17677669
    %v391 = vmul.f32 %v387, 0.17677669
    %v392 = vsel %vm219, %v390, -inf
    %393 = vmax.xlane.f32.xlu0 %v392
    %v394 = vpop.xlane.xlu0 %393
    %v395 = vsel %vm219, %v391, -inf
    %396 = vmax.xlane.f32.xlu0 %v395
    %v397 = vpop.xlane.xlu0 %396
    %v398 = vsub.f32 %v390, %v394
    %v399 = vsub.f32 %v391, %v397
    %v400 = vmul.f32 %v398, 1.442695
    %v401 = vpow.pop %v400
    %v402 = vmul.f32 %v399, 1.442695
    %v403 = vpow.pop %v402
    %v404 = vsel %vm219, %v401, 0.0
    %405 = vadd.xlane.f32.xlu0 %v404
    %v406 = vpop.xlane.xlu0 %405
    %v407 = vsel %vm219, %v403, 0.0
    %408 = vadd.xlane.f32.xlu0 %v407
    %v409 = vpop.xlane.xlu0 %408
    %v410 = vrcp.pop %v406
    %v411 = vrcp.pop %v409
    %v412 = vmul.f32 %v401, %v410
    %v413 = vmul.f32 %v403, %v411
    %v415 = vsel %vm219, %v412, 0
    %417 = vmatprep.subr.mxu0 0.0
    %418 = vmatpush1.msra.mxu0 %v242
    %419 = vmatprep.subr.mxu0 0.0
    %420 = vmatpush1.msra.mxu0 0.0
    %421 = vmatprep.subr.mxu0 0.0
    %422 = vmatpush1.msra.mxu0 0.0
    %423 = vmatprep.subr.mxu0 0.0
    %424 = vmatpush1.msra.mxu0 0.0
    %425 = vmatprep.subr.mxu0 0.0
    %426 = vmatpush1.msra.mxu0 0.0
    %427 = vmatprep.subr.mxu0 0.0
    %428 = vmatpush1.msra.mxu0 0.0
    %429 = vmatprep.subr.mxu0 0.0
    %430 = vmatpush1.msra.mxu0 0.0
    %431 = vmatprep.subr.mxu0 0.0
    %432 = vmatpush1.msra.mxu0 0.0
    %433 = vmatprep.subr.mxu0 0.0
    %434 = vmatpush1.msra.mxu0 0.0
    %435 = vmatprep.subr.mxu0 0.0
    %436 = vmatpush1.msra.mxu0 0.0
    %437 = vmatprep.subr.mxu0 0.0
    %438 = vmatpush1.msra.mxu0 0.0
    %439 = vmatprep.subr.mxu0 0.0
    %440 = vmatpush1.msra.mxu0 0.0
    %441 = vmatprep.subr.mxu0 0.0
    %442 = vmatpush1.msra.mxu0 0.0
    %443 = vmatprep.subr.mxu0 0.0
    %444 = vmatpush1.msra.mxu0 0.0
    %445 = vmatprep.subr.mxu0 0.0
    %446 = vmatpush1.msra.mxu0 0.0
    %447 = vmatprep.subr.mxu0 0.0
    %448 = vmatpush1.msra.mxu0 0.0
    %449 = vmatprep.subr.mxu0 0.0
    %450 = vmatpush1.msra.mxu0 0.0
    %451 = vmatprep.subr.mxu0 0.0
    %452 = vmatpush1.msra.mxu0 0.0
    %453 = vmatprep.subr.mxu0 0.0
    %454 = vmatpush1.msra.mxu0 0.0
    %455 = vmatprep.subr.mxu0 0.0
    %456 = vmatpush1.msra.mxu0 0.0
    %457 = vmatprep.subr.mxu0 0.0
    %458 = vmatpush1.msra.mxu0 0.0
    %459 = vmatprep.subr.mxu0 0.0
    %460 = vmatpush1.msra.mxu0 0.0
    %461 = vmatprep.subr.mxu0 0.0
    %462 = vmatpush1.msra.mxu0 0.0
    %463 = vmatprep.subr.mxu0 0.0
    %464 = vmatpush1.msra.mxu0 0.0
    %465 = vmatprep.subr.mxu0 0.0
    %466 = vmatpush1.msra.mxu0 0.0
    %467 = vmatprep.subr.mxu0 0.0
    %468 = vmatpush1.msra.mxu0 0.0
    %469 = vmatprep.subr.mxu0 0.0
    %470 = vmatpush1.msra.mxu0 0.0
    %471 = vmatprep.subr.mxu0 0.0
    %472 = vmatpush1.msra.mxu0 0.0
    %473 = vmatprep.subr.mxu0 0.0
    %474 = vmatpush1.msra.mxu0 0.0
    %475 = vmatprep.subr.mxu0 0.0
    %476 = vmatpush1.msra.mxu0 0.0
    %477 = vmatprep.subr.mxu0 0.0
    %478 = vmatpush1.msra.mxu0 0.0
    %479 = vmatprep.subr.mxu0 0.0
    %480 = vmatpush1.msra.mxu0 0.0
    %481 = vmatprep.mubr.f32.mxu0 0.0
    %482 = vmatmul.mubr.f32.gmra.mrb[0].mxu0 %v415
    %v483 = vpop.f32.mrb[0].mxu0
    %v484 = vadd.f32 0.0, %v483
    %v485 = vpop.f32.mrb[0].mxu0
    %486 = vdwg.mxu0
    %v488 = vsel %vm219, %v413, 0
    %490 = vmatprep.subr.mxu0 0.0
    %491 = vmatpush1.msra.mxu0 %v243
    %492 = vmatprep.subr.mxu0 0.0
    %493 = vmatpush1.msra.mxu0 0.0
    %494 = vmatprep.subr.mxu0 0.0
    %495 = vmatpush1.msra.mxu0 0.0
    %496 = vmatprep.subr.mxu0 0.0
    %497 = vmatpush1.msra.mxu0 0.0
    %498 = vmatprep.subr.mxu0 0.0
    %499 = vmatpush1.msra.mxu0 0.0
    %500 = vmatprep.subr.mxu0 0.0
    %501 = vmatpush1.msra.mxu0 0.0
    %502 = vmatprep.subr.mxu0 0.0
    %503 = vmatpush1.msra.mxu0 0.0
    %504 = vmatprep.subr.mxu0 0.0
    %505 = vmatpush1.msra.mxu0 0.0
    %506 = vmatprep.subr.mxu0 0.0
    %507 = vmatpush1.msra.mxu0 0.0
    %508 = vmatprep.subr.mxu0 0.0
    %509 = vmatpush1.msra.mxu0 0.0
    %510 = vmatprep.subr.mxu0 0.0
    %511 = vmatpush1.msra.mxu0 0.0
    %512 = vmatprep.subr.mxu0 0.0
    %513 = vmatpush1.msra.mxu0 0.0
    %514 = vmatprep.subr.mxu0 0.0
    %515 = vmatpush1.msra.mxu0 0.0
    %516 = vmatprep.subr.mxu0 0.0
    %517 = vmatpush1.msra.mxu0 0.0
    %518 = vmatprep.subr.mxu0 0.0
    %519 = vmatpush1.msra.mxu0 0.0
    %520 = vmatprep.subr.mxu0 0.0
    %521 = vmatpush1.msra.mxu0 0.0
    %522 = vmatprep.subr.mxu0 0.0
    %523 = vmatpush1.msra.mxu0 0.0
    %524 = vmatprep.subr.mxu0 0.0
    %525 = vmatpush1.msra.mxu0 0.0
    %526 = vmatprep.subr.mxu0 0.0
    %527 = vmatpush1.msra.mxu0 0.0
    %528 = vmatprep.subr.mxu0 0.0
    %529 = vmatpush1.msra.mxu0 0.0
    %530 = vmatprep.subr.mxu0 0.0
    %531 = vmatpush1.msra.mxu0 0.0
    %532 = vmatprep.subr.mxu0 0.0
    %533 = vmatpush1.msra.mxu0 0.0
    %534 = vmatprep.subr.mxu0 0.0
    %535 = vmatpush1.msra.mxu0 0.0
    %536 = vmatprep.subr.mxu0 0.0
    %537 = vmatpush1.msra.mxu0 0.0
    %538 = vmatprep.subr.mxu0 0.0
    %539 = vmatpush1.msra.mxu0 0.0
    %540 = vmatprep.subr.mxu0 0.0
    %541 = vmatpush1.msra.mxu0 0.0
    %542 = vmatprep.subr.mxu0 0.0
    %543 = vmatpush1.msra.mxu0 0.0
    %544 = vmatprep.subr.mxu0 0.0
    %545 = vmatpush1.msra.mxu0 0.0
    %546 = vmatprep.subr.mxu0 0.0
    %547 = vmatpush1.msra.mxu0 0.0
    %548 = vmatprep.subr.mxu0 0.0
    %549 = vmatpush1.msra.mxu0 0.0
    %550 = vmatprep.subr.mxu0 0.0
    %551 = vmatpush1.msra.mxu0 0.0
    %552 = vmatprep.subr.mxu0 0.0
    %553 = vmatpush1.msra.mxu0 0.0
    %554 = vmatprep.mubr.f32.mxu0 0.0
    %555 = vmatmul.mubr.f32.gmra.mrb[0].mxu0 %v488
    %v556 = vpop.f32.mrb[0].mxu0
    %v557 = vadd.f32 0.0, %v556
    %v558 = vpop.f32.mrb[0].mxu0
    %559 = vdwg.mxu0
    %v561 = vsel %vm219, %v240, 0
    %563 = vmatprep.subr.mxu0 0.0
    %564 = vmatpush1.msra.mxu0 %v62
    %565 = vmatprep.subr.mxu0 0.0
    %566 = vmatpush1.msra.mxu0 0.0
    %567 = vmatprep.subr.mxu0 0.0
    %568 = vmatpush1.msra.mxu0 0.0
    %569 = vmatprep.subr.mxu0 0.0
    %570 = vmatpush1.msra.mxu0 0.0
    %571 = vmatprep.subr.mxu0 0.0
    %572 = vmatpush1.msra.mxu0 0.0
    %573 = vmatprep.subr.mxu0 0.0
    %574 = vmatpush1.msra.mxu0 0.0
    %575 = vmatprep.subr.mxu0 0.0
    %576 = vmatpush1.msra.mxu0 0.0
    %577 = vmatprep.subr.mxu0 0.0
    %578 = vmatpush1.msra.mxu0 0.0
    %579 = vmatprep.subr.mxu0 0.0
    %580 = vmatpush1.msra.mxu0 0.0
    %581 = vmatprep.subr.mxu0 0.0
    %582 = vmatpush1.msra.mxu0 0.0
    %583 = vmatprep.subr.mxu0 0.0
    %584 = vmatpush1.msra.mxu0 0.0
    %585 = vmatprep.subr.mxu0 0.0
    %586 = vmatpush1.msra.mxu0 0.0
    %587 = vmatprep.subr.mxu0 0.0
    %588 = vmatpush1.msra.mxu0 0.0
    %589 = vmatprep.subr.mxu0 0.0
    %590 = vmatpush1.msra.mxu0 0.0
    %591 = vmatprep.subr.mxu0 0.0
    %592 = vmatpush1.msra.mxu0 0.0
    %593 = vmatprep.subr.mxu0 0.0
    %594 = vmatpush1.msra.mxu0 0.0
    %595 = vmatprep.subr.mxu0 0.0
    %596 = vmatpush1.msra.mxu0 0.0
    %597 = vmatprep.subr.mxu0 0.0
    %598 = vmatpush1.msra.mxu0 0.0
    %599 = vmatprep.subr.mxu0 0.0
    %600 = vmatpush1.msra.mxu0 0.0
    %601 = vmatprep.subr.mxu0 0.0
    %602 = vmatpush1.msra.mxu0 0.0
    %603 = vmatprep.subr.mxu0 0.0
    %604 = vmatpush1.msra.mxu0 0.0
    %605 = vmatprep.subr.mxu0 0.0
    %606 = vmatpush1.msra.mxu0 0.0
    %607 = vmatprep.subr.mxu0 0.0
    %608 = vmatpush1.msra.mxu0 0.0
    %609 = vmatprep.subr.mxu0 0.0
    %610 = vmatpush1.msra.mxu0 0.0
    %611 = vmatprep.subr.mxu0 0.0
    %612 = vmatpush1.msra.mxu0 0.0
    %613 = vmatprep.subr.mxu0 0.0
    %614 = vmatpush1.msra.mxu0 0.0
    %615 = vmatprep.subr.mxu0 0.0
    %616 = vmatpush1.msra.mxu0 0.0
    %617 = vmatprep.subr.mxu0 0.0
    %618 = vmatpush1.msra.mxu0 0.0
    %619 = vmatprep.subr.mxu0 0.0
    %620 = vmatpush1.msra.mxu0 0.0
    %621 = vmatprep.subr.mxu0 0.0
    %622 = vmatpush1.msra.mxu0 0.0
    %623 = vmatprep.subr.mxu0 0.0
    %624 = vmatpush1.msra.mxu0 0.0
    %625 = vmatprep.subr.mxu0 0.0
    %626 = vmatpush1.msra.mxu0 0.0
    %627 = vmatprep.mubr.f32.mxu0 0.0
    %628 = vmatmul.mubr.f32.gmra.mrb[0].mxu0 %v561
    %v629 = vpop.f32.mrb[0].mxu0
    %v630 = vadd.f32 %v484, %v629
    %v631 = vpop.f32.mrb[0].mxu0
    %632 = vdwg.mxu0
    %v634 = vsel %vm219, %v241, 0
    %636 = vmatprep.subr.mxu0 0.0
    %637 = vmatpush1.msra.mxu0 %v63
    %638 = vmatprep.subr.mxu0 0.0
    %639 = vmatpush1.msra.mxu0 0.0
    %640 = vmatprep.subr.mxu0 0.0
    %641 = vmatpush1.msra.mxu0 0.0
    %642 = vmatprep.subr.mxu0 0.0
    %643 = vmatpush1.msra.mxu0 0.0
    %644 = vmatprep.subr.mxu0 0.0
    %645 = vmatpush1.msra.mxu0 0.0
    %646 = vmatprep.subr.mxu0 0.0
    %647 = vmatpush1.msra.mxu0 0.0
    %648 = vmatprep.subr.mxu0 0.0
    %649 = vmatpush1.msra.mxu0 0.0
    %650 = vmatprep.subr.mxu0 0.0
    %651 = vmatpush1.msra.mxu0 0.0
    %652 = vmatprep.subr.mxu0 0.0
    %653 = vmatpush1.msra.mxu0 0.0
    %654 = vmatprep.subr.mxu0 0.0
    %655 = vmatpush1.msra.mxu0 0.0
    %656 = vmatprep.subr.mxu0 0.0
    %657 = vmatpush1.msra.mxu0 0.0
    %658 = vmatprep.subr.mxu0 0.0
    %659 = vmatpush1.msra.mxu0 0.0
    %660 = vmatprep.subr.mxu0 0.0
    %661 = vmatpush1.msra.mxu0 0.0
    %662 = vmatprep.subr.mxu0 0.0
    %663 = vmatpush1.msra.mxu0 0.0
    %664 = vmatprep.subr.mxu0 0.0
    %665 = vmatpush1.msra.mxu0 0.0
    %666 = vmatprep.subr.mxu0 0.0
    %667 = vmatpush1.msra.mxu0 0.0
    %668 = vmatprep.subr.mxu0 0.0
    %669 = vmatpush1.msra.mxu0 0.0
    %670 = vmatprep.subr.mxu0 0.0
    %671 = vmatpush1.msra.mxu0 0.0
    %672 = vmatprep.subr.mxu0 0.0
    %673 = vmatpush1.msra.mxu0 0.0
    %674 = vmatprep.subr.mxu0 0.0
    %675 = vmatpush1.msra.mxu0 0.0
    %676 = vmatprep.subr.mxu0 0.0
    %677 = vmatpush1.msra.mxu0 0.0
    %678 = vmatprep.subr.mxu0 0.0
    %679 = vmatpush1.msra.mxu0 0.0
    %680 = vmatprep.subr.mxu0 0.0
    %681 = vmatpush1.msra.mxu0 0.0
    %682 = vmatprep.subr.mxu0 0.0
    %683 = vmatpush1.msra.mxu0 0.0
    %684 = vmatprep.subr.mxu0 0.0
    %685 = vmatpush1.msra.mxu0 0.0
    %686 = vmatprep.subr.mxu0 0.0
    %687 = vmatpush1.msra.mxu0 0.0
    %688 = vmatprep.subr.mxu0 0.0
    %689 = vmatpush1.msra.mxu0 0.0
    %690 = vmatprep.subr.mxu0 0.0
    %691 = vmatpush1.msra.mxu0 0.0
    %692 = vmatprep.subr.mxu0 0.0
    %693 = vmatpush1.msra.mxu0 0.0
    %694 = vmatprep.subr.mxu0 0.0
    %695 = vmatpush1.msra.mxu0 0.0
    %696 = vmatprep.subr.mxu0 0.0
    %697 = vmatpush1.msra.mxu0 0.0
    %698 = vmatprep.subr.mxu0 0.0
    %699 = vmatpush1.msra.mxu0 0.0
    %700 = vmatprep.mubr.f32.mxu0 0.0
    %701 = vmatmul.mubr.f32.gmra.mrb[0].mxu0 %v634
    %v702 = vpop.f32.mrb[0].mxu0
    %v703 = vadd.f32 %v557, %v702
    %v704 = vpop.f32.mrb[0].mxu0
    %705 = vdwg.mxu0
    %v706 = vmul.f32 %v43, %v37
    %v707 = vmul.f32 %v44, %v37
    %v709 = vsel %vm64, %v706, 0
    %711 = vmatprep.subr.mxu0 0.0
    %712 = vmatpush1.xpose.msra.mxu0 %v709
    %713 = vmatprep.subr.mxu0 0.0
    %714 = vmatpush1.xpose.msra.mxu0 0.0
    %715 = vmatprep.subr.mxu0 0.0
    %716 = vmatpush1.xpose.msra.mxu0 0.0
    %717 = vmatprep.subr.mxu0 0.0
    %718 = vmatpush1.xpose.msra.mxu0 0.0
    %719 = vmatprep.subr.mxu0 0.0
    %720 = vmatpush1.xpose.msra.mxu0 0.0
    %721 = vmatprep.subr.mxu0 0.0
    %722 = vmatpush1.xpose.msra.mxu0 0.0
    %723 = vmatprep.subr.mxu0 0.0
    %724 = vmatpush1.xpose.msra.mxu0 0.0
    %725 = vmatprep.subr.mxu0 0.0
    %726 = vmatpush1.xpose.msra.mxu0 0.0
    %727 = vmatprep.subr.mxu0 0.0
    %728 = vmatpush1.xpose.msra.mxu0 0.0
    %729 = vmatprep.subr.mxu0 0.0
    %730 = vmatpush1.xpose.msra.mxu0 0.0
    %731 = vmatprep.subr.mxu0 0.0
    %732 = vmatpush1.xpose.msra.mxu0 0.0
    %733 = vmatprep.subr.mxu0 0.0
    %734 = vmatpush1.xpose.msra.mxu0 0.0
    %735 = vmatprep.subr.mxu0 0.0
    %736 = vmatpush1.xpose.msra.mxu0 0.0
    %737 = vmatprep.subr.mxu0 0.0
    %738 = vmatpush1.xpose.msra.mxu0 0.0
    %739 = vmatprep.subr.mxu0 0.0
    %740 = vmatpush1.xpose.msra.mxu0 0.0
    %741 = vmatprep.subr.mxu0 0.0
    %742 = vmatpush1.xpose.msra.mxu0 0.0
    %743 = vmatprep.subr.mxu0 0.0
    %744 = vmatpush1.xpose.msra.mxu0 0.0
    %745 = vmatprep.subr.mxu0 0.0
    %746 = vmatpush1.xpose.msra.mxu0 0.0
    %747 = vmatprep.subr.mxu0 0.0
    %748 = vmatpush1.xpose.msra.mxu0 0.0
    %749 = vmatprep.subr.mxu0 0.0
    %750 = vmatpush1.xpose.msra.mxu0 0.0
    %751 = vmatprep.subr.mxu0 0.0
    %752 = vmatpush1.xpose.msra.mxu0 0.0
    %753 = vmatprep.subr.mxu0 0.0
    %754 = vmatpush1.xpose.msra.mxu0 0.0
    %755 = vmatprep.subr.mxu0 0.0
    %756 = vmatpush1.xpose.msra.mxu0 0.0
    %757 = vmatprep.subr.mxu0 0.0
    %758 = vmatpush1.xpose.msra.mxu0 0.0
    %759 = vmatprep.subr.mxu0 0.0
    %760 = vmatpush1.xpose.msra.mxu0 0.0
    %761 = vmatprep.subr.mxu0 0.0
    %762 = vmatpush1.xpose.msra.mxu0 0.0
    %763 = vmatprep.subr.mxu0 0.0
    %764 = vmatpush1.xpose.msra.mxu0 0.0
    %765 = vmatprep.subr.mxu0 0.0
    %766 = vmatpush1.xpose.msra.mxu0 0.0
    %767 = vmatprep.subr.mxu0 0.0
    %768 = vmatpush1.xpose.msra.mxu0 0.0
    %769 = vmatprep.subr.mxu0 0.0
    %770 = vmatpush1.xpose.msra.mxu0 0.0
    %771 = vmatprep.subr.mxu0 0.0
    %772 = vmatpush1.xpose.msra.mxu0 0.0
    %773 = vmatprep.subr.mxu0 0.0
    %774 = vmatpush1.xpose.msra.mxu0 0.0
    %775 = vmatprep.mubr.f32.mxu0 0.0
    %776 = vmatmul.mubr.f32.gmra.mrb[0].mxu0 %v66
    %v777 = vpop.f32.mrb[0].mxu0
    %v778 = vadd.f32 0.0, %v777
    %v779 = vpop.f32.mrb[0].mxu0
    %780 = vdwg.mxu0
    %v782 = vsel %vm64, %v707, 0
    %784 = vmatprep.subr.mxu0 0.0
    %785 = vmatpush1.xpose.msra.mxu0 %v782
    %786 = vmatprep.subr.mxu0 0.0
    %787 = vmatpush1.xpose.msra.mxu0 0.0
    %788 = vmatprep.subr.mxu0 0.0
    %789 = vmatpush1.xpose.msra.mxu0 0.0
    %790 = vmatprep.subr.mxu0 0.0
    %791 = vmatpush1.xpose.msra.mxu0 0.0
    %792 = vmatprep.subr.mxu0 0.0
    %793 = vmatpush1.xpose.msra.mxu0 0.0
    %794 = vmatprep.subr.mxu0 0.0
    %795 = vmatpush1.xpose.msra.mxu0 0.0
    %796 = vmatprep.subr.mxu0 0.0
    %797 = vmatpush1.xpose.msra.mxu0 0.0
    %798 = vmatprep.subr.mxu0 0.0
    %799 = vmatpush1.xpose.msra.mxu0 0.0
    %800 = vmatprep.subr.mxu0 0.0
    %801 = vmatpush1.xpose.msra.mxu0 0.0
    %802 = vmatprep.subr.mxu0 0.0
    %803 = vmatpush1.xpose.msra.mxu0 0.0
    %804 = vmatprep.subr.mxu0 0.0
    %805 = vmatpush1.xpose.msra.mxu0 0.0
    %806 = vmatprep.subr.mxu0 0.0
    %807 = vmatpush1.xpose.msra.mxu0 0.0
    %808 = vmatprep.subr.mxu0 0.0
    %809 = vmatpush1.xpose.msra.mxu0 0.0
    %810 = vmatprep.subr.mxu0 0.0
    %811 = vmatpush1.xpose.msra.mxu0 0.0
    %812 = vmatprep.subr.mxu0 0.0
    %813 = vmatpush1.xpose.msra.mxu0 0.0
    %814 = vmatprep.subr.mxu0 0.0
    %815 = vmatpush1.xpose.msra.mxu0 0.0
    %816 = vmatprep.subr.mxu0 0.0
    %817 = vmatpush1.xpose.msra.mxu0 0.0
    %818 = vmatprep.subr.mxu0 0.0
    %819 = vmatpush1.xpose.msra.mxu0 0.0
    %820 = vmatprep.subr.mxu0 0.0
    %821 = vmatpush1.xpose.msra.mxu0 0.0
    %822 = vmatprep.subr.mxu0 0.0
    %823 = vmatpush1.xpose.msra.mxu0 0.0
    %824 = vmatprep.subr.mxu0 0.0
    %825 = vmatpush1.xpose.msra.mxu0 0.0
    %826 = vmatprep.subr.mxu0 0.0
    %827 = vmatpush1.xpose.msra.mxu0 0.0
    %828 = vmatprep.subr.mxu0 0.0
    %829 = vmatpush1.xpose.msra.mxu0 0.0
    %830 = vmatprep.subr.mxu0 0.0
    %831 = vmatpush1.xpose.msra.mxu0 0.0
    %832 = vmatprep.subr.mxu0 0.0
    %833 = vmatpush1.xpose.msra.mxu0 0.0
    %834 = vmatprep.subr.mxu0 0.0
    %835 = vmatpush1.xpose.msra.mxu0 0.0
    %836 = vmatprep.subr.mxu0 0.0
    %837 = vmatpush1.xpose.msra.mxu0 0.0
    %838 = vmatprep.subr.mxu0 0.0
    %839 = vmatpush1.xpose.msra.mxu0 0.0
    %840 = vmatprep.subr.mxu0 0.0
    %841 = vmatpush1.xpose.msra.mxu0 0.0
    %842 = vmatprep.subr.mxu0 0.0
    %843 = vmatpush1.xpose.msra.mxu0 0.0
    %844 = vmatprep.subr.mxu0 0.0
    %845 = vmatpush1.xpose.msra.mxu0 0.0
    %846 = vmatprep.subr.mxu0 0.0
    %847 = vmatpush1.xpose.msra.mxu0 0.0
    %848 = vmatprep.mubr.f32.mxu0 0.0
    %849 = vmatmul.mubr.f32.gmra.mrb[0].mxu0 %v142
    %v850 = vpop.f32.mrb[0].mxu0
    %v851 = vadd.f32 0.0, %v850
    %v852 = vpop.f32.mrb[0].mxu0
    %853 = vdwg.mxu0
    %v854 = vmul.f32 %v778, 0.17677669
    %v855 = vmul.f32 %v851, 0.17677669
    %v856 = vsel %vm219, %v854, -inf
    %857 = vmax.xlane.f32.xlu0 %v856
    %v858 = vpop.xlane.xlu0 %857
    %v859 = vsel %vm219, %v855, -inf
    %860 = vmax.xlane.f32.xlu0 %v859
    %v861 = vpop.xlane.xlu0 %860
    %v862 = vsub.f32 %v854, %v858
    %v863 = vsub.f32 %v855, %v861
    %v864 = vmul.f32 %v862, 1.442695
    %v865 = vpow.pop %v864
    %v866 = vmul.f32 %v863, 1.442695
    %v867 = vpow.pop %v866
    %v868 = vsel %vm219, %v865, 0.0
    %869 = vadd.xlane.f32.xlu0 %v868
    %v870 = vpop.xlane.xlu0 %869
    %v871 = vsel %vm219, %v867, 0.0
    %872 = vadd.xlane.f32.xlu0 %v871
    %v873 = vpop.xlane.xlu0 %872
    %v874 = vrcp.pop %v870
    %v875 = vrcp.pop %v873
    %v876 = vmul.f32 %v865, %v874
    %v877 = vmul.f32 %v867, %v875
    %v879 = vsel %vm219, %v876, 0
    %881 = vmatprep.subr.mxu0 0.0
    %882 = vmatpush1.msra.mxu0 %v706
    %883 = vmatprep.subr.mxu0 0.0
    %884 = vmatpush1.msra.mxu0 0.0
    %885 = vmatprep.subr.mxu0 0.0
    %886 = vmatpush1.msra.mxu0 0.0
    %887 = vmatprep.subr.mxu0 0.0
    %888 = vmatpush1.msra.mxu0 0.0
    %889 = vmatprep.subr.mxu0 0.0
    %890 = vmatpush1.msra.mxu0 0.0
    %891 = vmatprep.subr.mxu0 0.0
    %892 = vmatpush1.msra.mxu0 0.0
    %893 = vmatprep.subr.mxu0 0.0
    %894 = vmatpush1.msra.mxu0 0.0
    %895 = vmatprep.subr.mxu0 0.0
    %896 = vmatpush1.msra.mxu0 0.0
    %897 = vmatprep.subr.mxu0 0.0
    %898 = vmatpush1.msra.mxu0 0.0
    %899 = vmatprep.subr.mxu0 0.0
    %900 = vmatpush1.msra.mxu0 0.0
    %901 = vmatprep.subr.mxu0 0.0
    %902 = vmatpush1.msra.mxu0 0.0
    %903 = vmatprep.subr.mxu0 0.0
    %904 = vmatpush1.msra.mxu0 0.0
    %905 = vmatprep.subr.mxu0 0.0
    %906 = vmatpush1.msra.mxu0 0.0
    %907 = vmatprep.subr.mxu0 0.0
    %908 = vmatpush1.msra.mxu0 0.0
    %909 = vmatprep.subr.mxu0 0.0
    %910 = vmatpush1.msra.mxu0 0.0
    %911 = vmatprep.subr.mxu0 0.0
    %912 = vmatpush1.msra.mxu0 0.0
    %913 = vmatprep.subr.mxu0 0.0
    %914 = vmatpush1.msra.mxu0 0.0
    %915 = vmatprep.subr.mxu0 0.0
    %916 = vmatpush1.msra.mxu0 0.0
    %917 = vmatprep.subr.mxu0 0.0
    %918 = vmatpush1.msra.mxu0 0.0
    %919 = vmatprep.subr.mxu0 0.0
    %920 = vmatpush1.msra.mxu0 0.0
    %921 = vmatprep.subr.mxu0 0.0
    %922 = vmatpush1.msra.mxu0 0.0
    %923 = vmatprep.subr.mxu0 0.0
    %924 = vmatpush1.msra.mxu0 0.0
    %925 = vmatprep.subr.mxu0 0.0
    %926 = vmatpush1.msra.mxu0 0.0
    %927 = vmatprep.subr.mxu0 0.0
    %928 = vmatpush1.msra.mxu0 0.0
    %929 = vmatprep.subr.mxu0 0.0
    %930 = vmatpush1.msra.mxu0 0.0
    %931 = vmatprep.subr.mxu0 0.0
    %932 = vmatpush1.msra.mxu0 0.0
    %933 = vmatprep.subr.mxu0 0.0
    %934 = vmatpush1.msra.mxu0 0.0
    %935 = vmatprep.subr.mxu0 0.0
    %936 = vmatpush1.msra.mxu0 0.0
    %937 = vmatprep.subr.mxu0 0.0
    %938 = vmatpush1.msra.mxu0 0.0
    %939 = vmatprep.subr.mxu0 0.0
    %940 = vmatpush1.msra.mxu0 0.0
    %941 = vmatprep.subr.mxu0 0.0
    %942 = vmatpush1.msra.mxu0 0.0
    %943 = vmatprep.subr.mxu0 0.0
    %944 = vmatpush1.msra.mxu0 0.0
    %945 = vmatprep.mubr.f32.mxu0 0.0
    %946 = vmatmul.mubr.f32.gmra.mrb[0].mxu0 %v879
    %v947 = vpop.f32.mrb[0].mxu0
    %v948 = vadd.f32 0.0, %v947
    %v949 = vpop.f32.mrb[0].mxu0
    %950 = vdwg.mxu0
    %v952 = vsel %vm219, %v877, 0
    %954 = vmatprep.subr.mxu0 0.0
    %955 = vmatpush1.msra.mxu0 %v707
    %956 = vmatprep.subr.mxu0 0.0
    %957 = vmatpush1.msra.mxu0 0.0
    %958 = vmatprep.subr.mxu0 0.0
    %959 = vmatpush1.msra.mxu0 0.0
    %960 = vmatprep.subr.mxu0 0.0
    %961 = vmatpush1.msra.mxu0 0.0
    %962 = vmatprep.subr.mxu0 0.0
    %963 = vmatpush1.msra.mxu0 0.0
    %964 = vmatprep.subr.mxu0 0.0
    %965 = vmatpush1.msra.mxu0 0.0
    %966 = vmatprep.subr.mxu0 0.0
    %967 = vmatpush1.msra.mxu0 0.0
    %968 = vmatprep.subr.mxu0 0.0
    %969 = vmatpush1.msra.mxu0 0.0
    %970 = vmatprep.subr.mxu0 0.0
    %971 = vmatpush1.msra.mxu0 0.0
    %972 = vmatprep.subr.mxu0 0.0
    %973 = vmatpush1.msra.mxu0 0.0
    %974 = vmatprep.subr.mxu0 0.0
    %975 = vmatpush1.msra.mxu0 0.0
    %976 = vmatprep.subr.mxu0 0.0
    %977 = vmatpush1.msra.mxu0 0.0
    %978 = vmatprep.subr.mxu0 0.0
    %979 = vmatpush1.msra.mxu0 0.0
    %980 = vmatprep.subr.mxu0 0.0
    %981 = vmatpush1.msra.mxu0 0.0
    %982 = vmatprep.subr.mxu0 0.0
    %983 = vmatpush1.msra.mxu0 0.0
    %984 = vmatprep.subr.mxu0 0.0
    %985 = vmatpush1.msra.mxu0 0.0
    %986 = vmatprep.subr.mxu0 0.0
    %987 = vmatpush1.msra.mxu0 0.0
    %988 = vmatprep.subr.mxu0 0.0
    %989 = vmatpush1.msra.mxu0 0.0
    %990 = vmatprep.subr.mxu0 0.0
    %991 = vmatpush1.msra.mxu0 0.0
    %992 = vmatprep.subr.mxu0 0.0
    %993 = vmatpush1.msra.mxu0 0.0
    %994 = vmatprep.subr.mxu0 0.0
    %995 = vmatpush1.msra.mxu0 0.0
    %996 = vmatprep.subr.mxu0 0.0
    %997 = vmatpush1.msra.mxu0 0.0
    %998 = vmatprep.subr.mxu0 0.0
    %999 = vmatpush1.msra.mxu0 0.0
    %1000 = vmatprep.subr.mxu0 0.0
    %1001 = vmatpush1.msra.mxu0 0.0
    %1002 = vmatprep.subr.mxu0 0.0
    %1003 = vmatpush1.msra.mxu0 0.0
    %1004 = vmatprep.subr.mxu0 0.0
    %1005 = vmatpush1.msra.mxu0 0.0
    %1006 = vmatprep.subr.mxu0 0.0
    %1007 = vmatpush1.msra.mxu0 0.0
    %1008 = vmatprep.subr.mxu0 0.0
    %1009 = vmatpush1.msra.mxu0 0.0
    %1010 = vmatprep.subr.mxu0 0.0
    %1011 = vmatpush1.msra.mxu0 0.0
    %1012 = vmatprep.subr.mxu0 0.0
    %1013 = vmatpush1.msra.mxu0 0.0
    %1014 = vmatprep.subr.mxu0 0.0
    %1015 = vmatpush1.msra.mxu0 0.0
    %1016 = vmatprep.subr.mxu0 0.0
    %1017 = vmatpush1.msra.mxu0 0.0
    %1018 = vmatprep.mubr.f32.mxu0 0.0
    %1019 = vmatmul.mubr.f32.gmra.mrb[0].mxu0 %v952
    %v1020 = vpop.f32.mrb[0].mxu0
    %v1021 = vadd.f32 0.0, %v1020
    %v1022 = vpop.f32.mrb[0].mxu0
    %1023 = vdwg.mxu0
    %v1024 = vadd.f32 %v630, %v948
    %v1025 = vadd.f32 %v703, %v1021
    %v1026 = vmul.f32 %v43, %v42
    %v1027 = vmul.f32 %v44, %v42
    %v1029 = vsel %vm64, %v1026, 0
    %1031 = vmatprep.subr.mxu0 0.0
    %1032 = vmatpush1.xpose.msra.mxu0 %v1029
    %1033 = vmatprep.subr.mxu0 0.0
    %1034 = vmatpush1.xpose.msra.mxu0 0.0
    %1035 = vmatprep.subr.mxu0 0.0
    %1036 = vmatpush1.xpose.msra.mxu0 0.0
    %1037 = vmatprep.subr.mxu0 0.0
    %1038 = vmatpush1.xpose.msra.mxu0 0.0
    %1039 = vmatprep.subr.mxu0 0.0
    %1040 = vmatpush1.xpose.msra.mxu0 0.0
    %1041 = vmatprep.subr.mxu0 0.0
    %1042 = vmatpush1.xpose.msra.mxu0 0.0
    %1043 = vmatprep.subr.mxu0 0.0
    %1044 = vmatpush1.xpose.msra.mxu0 0.0
    %1045 = vmatprep.subr.mxu0 0.0
    %1046 = vmatpush1.xpose.msra.mxu0 0.0
    %1047 = vmatprep.subr.mxu0 0.0
    %1048 = vmatpush1.xpose.msra.mxu0 0.0
    %1049 = vmatprep.subr.mxu0 0.0
    %1050 = vmatpush1.xpose.msra.mxu0 0.0
    %1051 = vmatprep.subr.mxu0 0.0
    %1052 = vmatpush1.xpose.msra.mxu0 0.0
    %1053 = vmatprep.subr.mxu0 0.0
    %1054 = vmatpush1.xpose.msra.mxu0 0.0
    %1055 = vmatprep.subr.mxu0 0.0
    %1056 = vmatpush1.xpose.msra.mxu0 0.0
    %1057 = vmatprep.subr.mxu0 0.0
    %1058 = vmatpush1.xpose.msra.mxu0 0.0
    %1059 = vmatprep.subr.mxu0 0.0
    %1060 = vmatpush1.xpose.msra.mxu0 0.0
    %1061 = vmatprep.subr.mxu0 0.0
    %1062 = vmatpush1.xpose.msra.mxu0 0.0
    %1063 = vmatprep.subr.mxu0 0.0
    %1064 = vmatpush1.xpose.msra.mxu0 0.0
    %1065 = vmatprep.subr.mxu0 0.0
    %1066 = vmatpush1.xpose.msra.mxu0 0.0
    %1067 = vmatprep.subr.mxu0 0.0
    %1068 = vmatpush1.xpose.msra.mxu0 0.0
    %1069 = vmatprep.subr.mxu0 0.0
    %1070 = vmatpush1.xpose.msra.mxu0 0.0
    %1071 = vmatprep.subr.mxu0 0.0
    %1072 = vmatpush1.xpose.msra.mxu0 0.0
    %1073 = vmatprep.subr.mxu0 0.0
    %1074 = vmatpush1.xpose.msra.mxu0 0.0
    %1075 = vmatprep.subr.mxu0 0.0
    %1076 = vmatpush1.xpose.msra.mxu0 0.0
    %1077 = vmatprep.subr.mxu0 0.0
    %1078 = vmatpush1.xpose.msra.mxu0 0.0
    %1079 = vmatprep.subr.mxu0 0.0
    %1080 = vmatpush1.xpose.msra.mxu0 0.0
    %1081 = vmatprep.subr.mxu0 0.0
    %1082 = vmatpush1.xpose.msra.mxu0 0.0
    %1083 = vmatprep.subr.mxu0 0.0
    %1084 = vmatpush1.xpose.msra.mxu0 0.0
    %1085 = vmatprep.subr.mxu0 0.0
    %1086 = vmatpush1.xpose.msra.mxu0 0.0
    %1087 = vmatprep.subr.mxu0 0.0
    %1088 = vmatpush1.xpose.msra.mxu0 0.0
    %1089 = vmatprep.subr.mxu0 0.0
    %1090 = vmatpush1.xpose.msra.mxu0 0.0
    %1091 = vmatprep.subr.mxu0 0.0
    %1092 = vmatpush1.xpose.msra.mxu0 0.0
    %1093 = vmatprep.subr.mxu0 0.0
    %1094 = vmatpush1.xpose.msra.mxu0 0.0
    %1095 = vmatprep.mubr.f32.mxu0 0.0
    %1096 = vmatmul.mubr.f32.gmra.mrb[0].mxu0 %v66
    %v1097 = vpop.f32.mrb[0].mxu0
    %v1098 = vadd.f32 0.0, %v1097
    %v1099 = vpop.f32.mrb[0].mxu0
    %1100 = vdwg.mxu0
    %v1102 = vsel %vm64, %v1027, 0
    %1104 = vmatprep.subr.mxu0 0.0
    %1105 = vmatpush1.xpose.msra.mxu0 %v1102
    %1106 = vmatprep.subr.mxu0 0.0
    %1107 = vmatpush1.xpose.msra.mxu0 0.0
    %1108 = vmatprep.subr.mxu0 0.0
    %1109 = vmatpush1.xpose.msra.mxu0 0.0
    %1110 = vmatprep.subr.mxu0 0.0
    %1111 = vmatpush1.xpose.msra.mxu0 0.0
    %1112 = vmatprep.subr.mxu0 0.0
    %1113 = vmatpush1.xpose.msra.mxu0 0.0
    %1114 = vmatprep.subr.mxu0 0.0
    %1115 = vmatpush1.xpose.msra.mxu0 0.0
    %1116 = vmatprep.subr.mxu0 0.0
    %1117 = vmatpush1.xpose.msra.mxu0 0.0
    %1118 = vmatprep.subr.mxu0 0.0
    %1119 = vmatpush1.xpose.msra.mxu0 0.0
    %1120 = vmatprep.subr.mxu0 0.0
    %1121 = vmatpush1.xpose.msra.mxu0 0.0
    %1122 = vmatprep.subr.mxu0 0.0
    %1123 = vmatpush1.xpose.msra.mxu0 0.0
    %1124 = vmatprep.subr.mxu0 0.0
    %1125 = vmatpush1.xpose.msra.mxu0 0.0
    %1126 = vmatprep.subr.mxu0 0.0
    %1127 = vmatpush1.xpose.msra.mxu0 0.0
    %1128 = vmatprep.subr.mxu0 0.0
    %1129 = vmatpush1.xpose.msra.mxu0 0.0
    %1130 = vmatprep.subr.mxu0 0.0
    %1131 = vmatpush1.xpose.msra.mxu0 0.0
    %1132 = vmatprep.subr.mxu0 0.0
    %1133 = vmatpush1.xpose.msra.mxu0 0.0
    %1134 = vmatprep.subr.mxu0 0.0
    %1135 = vmatpush1.xpose.msra.mxu0 0.0
    %1136 = vmatprep.subr.mxu0 0.0
    %1137 = vmatpush1.xpose.msra.mxu0 0.0
    %1138 = vmatprep.subr.mxu0 0.0
    %1139 = vmatpush1.xpose.msra.mxu0 0.0
    %1140 = vmatprep.subr.mxu0 0.0
    %1141 = vmatpush1.xpose.msra.mxu0 0.0
    %1142 = vmatprep.subr.mxu0 0.0
    %1143 = vmatpush1.xpose.msra.mxu0 0.0
    %1144 = vmatprep.subr.mxu0 0.0
    %1145 = vmatpush1.xpose.msra.mxu0 0.0
    %1146 = vmatprep.subr.mxu0 0.0
    %1147 = vmatpush1.xpose.msra.mxu0 0.0
    %1148 = vmatprep.subr.mxu0 0.0
    %1149 = vmatpush1.xpose.msra.mxu0 0.0
    %1150 = vmatprep.subr.mxu0 0.0
    %1151 = vmatpush1.xpose.msra.mxu0 0.0
    %1152 = vmatprep.subr.mxu0 0.0
    %1153 = vmatpush1.xpose.msra.mxu0 0.0
    %1154 = vmatprep.subr.mxu0 0.0
    %1155 = vmatpush1.xpose.msra.mxu0 0.0
    %1156 = vmatprep.subr.mxu0 0.0
    %1157 = vmatpush1.xpose.msra.mxu0 0.0
    %1158 = vmatprep.subr.mxu0 0.0
    %1159 = vmatpush1.xpose.msra.mxu0 0.0
    %1160 = vmatprep.subr.mxu0 0.0
    %1161 = vmatpush1.xpose.msra.mxu0 0.0
    %1162 = vmatprep.subr.mxu0 0.0
    %1163 = vmatpush1.xpose.msra.mxu0 0.0
    %1164 = vmatprep.subr.mxu0 0.0
    %1165 = vmatpush1.xpose.msra.mxu0 0.0
    %1166 = vmatprep.subr.mxu0 0.0
    %1167 = vmatpush1.xpose.msra.mxu0 0.0
    %1168 = vmatprep.mubr.f32.mxu0 0.0
    %1169 = vmatmul.mubr.f32.gmra.mrb[0].mxu0 %v142
    %v1170 = vpop.f32.mrb[0].mxu0
    %v1171 = vadd.f32 0.0, %v1170
    %v1172 = vpop.f32.mrb[0].mxu0
    %1173 = vdwg.mxu0
    %v1174 = vmul.f32 %v1098, 0.17677669
    %v1175 = vmul.f32 %v1171, 0.17677669
    %v1176 = vsel %vm219, %v1174, -inf
    %1177 = vmax.xlane.f32.xlu0 %v1176
    %v1178 = vpop.xlane.xlu0 %1177
    %v1179 = vsel %vm219, %v1175, -inf
    %1180 = vmax.xlane.f32.xlu0 %v1179
    %v1181 = vpop.xlane.xlu0 %1180
    %v1182 = vsub.f32 %v1174, %v1178
    %v1183 = vsub.f32 %v1175, %v1181
    %v1184 = vmul.f32 %v1182, 1.442695
    %v1185 = vpow.pop %v1184
    %v1186 = vmul.f32 %v1183, 1.442695
    %v1187 = vpow.pop %v1186
    %v1188 = vsel %vm219, %v1185, 0.0
    %1189 = vadd.xlane.f32.xlu0 %v1188
    %v1190 = vpop.xlane.xlu0 %1189
    %v1191 = vsel %vm219, %v1187, 0.0
    %1192 = vadd.xlane.f32.xlu0 %v1191
    %v1193 = vpop.xlane.xlu0 %1192
    %v1194 = vrcp.pop %v1190
    %v1195 = vrcp.pop %v1193
    %v1196 = vmul.f32 %v1185, %v1194
    %v1197 = vmul.f32 %v1187, %v1195
    %v1199 = vsel %vm219, %v1196, 0
    %1201 = vmatprep.subr.mxu0 0.0
    %1202 = vmatpush1.msra.mxu0 %v1026
    %1203 = vmatprep.subr.mxu0 0.0
    %1204 = vmatpush1.msra.mxu0 0.0
    %1205 = vmatprep.subr.mxu0 0.0
    %1206 = vmatpush1.msra.mxu0 0.0
    %1207 = vmatprep.subr.mxu0 0.0
    %1208 = vmatpush1.msra.mxu0 0.0
    %1209 = vmatprep.subr.mxu0 0.0
    %1210 = vmatpush1.msra.mxu0 0.0
    %1211 = vmatprep.subr.mxu0 0.0
    %1212 = vmatpush1.msra.mxu0 0.0
    %1213 = vmatprep.subr.mxu0 0.0
    %1214 = vmatpush1.msra.mxu0 0.0
    %1215 = vmatprep.subr.mxu0 0.0
    %1216 = vmatpush1.msra.mxu0 0.0
    %1217 = vmatprep.subr.mxu0 0.0
    %1218 = vmatpush1.msra.mxu0 0.0
    %1219 = vmatprep.subr.mxu0 0.0
    %1220 = vmatpush1.msra.mxu0 0.0
    %1221 = vmatprep.subr.mxu0 0.0
    %1222 = vmatpush1.msra.mxu0 0.0
    %1223 = vmatprep.subr.mxu0 0.0
    %1224 = vmatpush1.msra.mxu0 0.0
    %1225 = vmatprep.subr.mxu0 0.0
    %1226 = vmatpush1.msra.mxu0 0.0
    %1227 = vmatprep.subr.mxu0 0.0
    %1228 = vmatpush1.msra.mxu0 0.0
    %1229 = vmatprep.subr.mxu0 0.0
    %1230 = vmatpush1.msra.mxu0 0.0
    %1231 = vmatprep.subr.mxu0 0.0
    %1232 = vmatpush1.msra.mxu0 0.0
    %1233 = vmatprep.subr.mxu0 0.0
    %1234 = vmatpush1.msra.mxu0 0.0
    %1235 = vmatprep.subr.mxu0 0.0
    %1236 = vmatpush1.msra.mxu0 0.0
    %1237 = vmatprep.subr.mxu0 0.0
    %1238 = vmatpush1.msra.mxu0 0.0
    %1239 = vmatprep.subr.mxu0 0.0
    %1240 = vmatpush1.msra.mxu0 0.0
    %1241 = vmatprep.subr.mxu0 0.0
    %1242 = vmatpush1.msra.mxu0 0.0
    %1243 = vmatprep.subr.mxu0 0.0
    %1244 = vmatpush1.msra.mxu0 0.0
    %1245 = vmatprep.subr.mxu0 0.0
    %1246 = vmatpush1.msra.mxu0 0.0
    %1247 = vmatprep.subr.mxu0 0.0
    %1248 = vmatpush1.msra.mxu0 0.0
    %1249 = vmatprep.subr.mxu0 0.0
    %1250 = vmatpush1.msra.mxu0 0.0
    %1251 = vmatprep.subr.mxu0 0.0
    %1252 = vmatpush1.msra.mxu0 0.0
    %1253 = vmatprep.subr.mxu0 0.0
    %1254 = vmatpush1.msra.mxu0 0.0
    %1255 = vmatprep.subr.mxu0 0.0
    %1256 = vmatpush1.msra.mxu0 0.0
    %1257 = vmatprep.subr.mxu0 0.0
    %1258 = vmatpush1.msra.mxu0 0.0
    %1259 = vmatprep.subr.mxu0 0.0
    %1260 = vmatpush1.msra.mxu0 0.0
    %1261 = vmatprep.subr.mxu0 0.0
    %1262 = vmatpush1.msra.mxu0 0.0
    %1263 = vmatprep.subr.mxu0 0.0
    %1264 = vmatpush1.msra.mxu0 0.0
    %1265 = vmatprep.mubr.f32.mxu0 0.0
    %1266 = vmatmul.mubr.f32.gmra.mrb[0].mxu0 %v1199
    %v1267 = vpop.f32.mrb[0].mxu0
    %v1268 = vadd.f32 0.0, %v1267
    %v1269 = vpop.f32.mrb[0].mxu0
    %1270 = vdwg.mxu0
    %v1272 = vsel %vm219, %v1197, 0
    %1274 = vmatprep.subr.mxu0 0.0
    %1275 = vmatpush1.msra.mxu0 %v1027
    %1276 = vmatprep.subr.mxu0 0.0
    %1277 = vmatpush1.msra.mxu0 0.0
    %1278 = vmatprep.subr.mxu0 0.0
    %1279 = vmatpush1.msra.mxu0 0.0
    %1280 = vmatprep.subr.mxu0 0.0
    %1281 = vmatpush1.msra.mxu0 0.0
    %1282 = vmatprep.subr.mxu0 0.0
    %1283 = vmatpush1.msra.mxu0 0.0
    %1284 = vmatprep.subr.mxu0 0.0
    %1285 = vmatpush1.msra.mxu0 0.0
    %1286 = vmatprep.subr.mxu0 0.0
    %1287 = vmatpush1.msra.mxu0 0.0
    %1288 = vmatprep.subr.mxu0 0.0
    %1289 = vmatpush1.msra.mxu0 0.0
    %1290 = vmatprep.subr.mxu0 0.0
    %1291 = vmatpush1.msra.mxu0 0.0
    %1292 = vmatprep.subr.mxu0 0.0
    %1293 = vmatpush1.msra.mxu0 0.0
    %1294 = vmatprep.subr.mxu0 0.0
    %1295 = vmatpush1.msra.mxu0 0.0
    %1296 = vmatprep.subr.mxu0 0.0
    %1297 = vmatpush1.msra.mxu0 0.0
    %1298 = vmatprep.subr.mxu0 0.0
    %1299 = vmatpush1.msra.mxu0 0.0
    %1300 = vmatprep.subr.mxu0 0.0
    %1301 = vmatpush1.msra.mxu0 0.0
    %1302 = vmatprep.subr.mxu0 0.0
    %1303 = vmatpush1.msra.mxu0 0.0
    %1304 = vmatprep.subr.mxu0 0.0
    %1305 = vmatpush1.msra.mxu0 0.0
    %1306 = vmatprep.subr.mxu0 0.0
    %1307 = vmatpush1.msra.mxu0 0.0
    %1308 = vmatprep.subr.mxu0 0.0
    %1309 = vmatpush1.msra.mxu0 0.0
    %1310 = vmatprep.subr.mxu0 0.0
    %1311 = vmatpush1.msra.mxu0 0.0
    %1312 = vmatprep.subr.mxu0 0.0
    %1313 = vmatpush1.msra.mxu0 0.0
    %1314 = vmatprep.subr.mxu0 0.0
    %1315 = vmatpush1.msra.mxu0 0.0
    %1316 = vmatprep.subr.mxu0 0.0
    %1317 = vmatpush1.msra.mxu0 0.0
    %1318 = vmatprep.subr.mxu0 0.0
    %1319 = vmatpush1.msra.mxu0 0.0
    %1320 = vmatprep.subr.mxu0 0.0
    %1321 = vmatpush1.msra.mxu0 0.0
    %1322 = vmatprep.subr.mxu0 0.0
    %1323 = vmatpush1.msra.mxu0 0.0
    %1324 = vmatprep.subr.mxu0 0.0
    %1325 = vmatpush1.msra.mxu0 0.0
    %1326 = vmatprep.subr.mxu0 0.0
    %1327 = vmatpush1.msra.mxu0 0.0
    %1328 = vmatprep.subr.mxu0 0.0
    %1329 = vmatpush1.msra.mxu0 0.0
    %1330 = vmatprep.subr.mxu0 0.0
    %1331 = vmatpush1.msra.mxu0 0.0
    %1332 = vmatprep.subr.mxu0 0.0
    %1333 = vmatpush1.msra.mxu0 0.0
    %1334 = vmatprep.subr.mxu0 0.0
    %1335 = vmatpush1.msra.mxu0 0.0
    %1336 = vmatprep.subr.mxu0 0.0
    %1337 = vmatpush1.msra.mxu0 0.0
    %1338 = vmatprep.mubr.f32.mxu0 0.0
    %1339 = vmatmul.mubr.f32.gmra.mrb[0].mxu0 %v1272
    %v1340 = vpop.f32.mrb[0].mxu0
    %v1341 = vadd.f32 0.0, %v1340
    %v1342 = vpop.f32.mrb[0].mxu0
    %1343 = vdwg.mxu0
    %v1344 = vadd.f32 %v1024, %v1268
    %v1345 = vadd.f32 %v1025, %v1341
    %v1346 = vlaneseq
    %v1347 = vshrl.u32 %v1346, 7
    %v1348 = vsub.s32 0, %v1347
    %v1349 = vrot.slane %v61, %v1348
    %v1351 = vsel %vm64, %v1344, 0
    %v1354 = vsel %vm64, %v1345, 0
    %1356 = vmatprep.subr.mxu0 0.0
    %1357 = vmatpush1.msra.mxu0 %v45
    %1358 = vmatprep.subr.mxu0 0.0
    %1359 = vmatpush1.msra.mxu0 %v46
    %1360 = vmatprep.subr.mxu0 0.0
    %1361 = vmatpush1.msra.mxu0 %v47
    %1362 = vmatprep.subr.mxu0 0.0
    %1363 = vmatpush1.msra.mxu0 %v48
    %1364 = vmatprep.subr.mxu0 0.0
    %1365 = vmatpush1.msra.mxu0 0.0
    %1366 = vmatprep.subr.mxu0 0.0
    %1367 = vmatpush1.msra.mxu0 0.0
    %1368 = vmatprep.subr.mxu0 0.0
    %1369 = vmatpush1.msra.mxu0 0.0
    %1370 = vmatprep.subr.mxu0 0.0
    %1371 = vmatpush1.msra.mxu0 0.0
    %1372 = vmatprep.subr.mxu0 0.0
    %1373 = vmatpush1.msra.mxu0 0.0
    %1374 = vmatprep.subr.mxu0 0.0
    %1375 = vmatpush1.msra.mxu0 0.0
    %1376 = vmatprep.subr.mxu0 0.0
    %1377 = vmatpush1.msra.mxu0 0.0
    %1378 = vmatprep.subr.mxu0 0.0
    %1379 = vmatpush1.msra.mxu0 0.0
    %1380 = vmatprep.subr.mxu0 0.0
    %1381 = vmatpush1.msra.mxu0 0.0
    %1382 = vmatprep.subr.mxu0 0.0
    %1383 = vmatpush1.msra.mxu0 0.0
    %1384 = vmatprep.subr.mxu0 0.0
    %1385 = vmatpush1.msra.mxu0 0.0
    %1386 = vmatprep.subr.mxu0 0.0
    %1387 = vmatpush1.msra.mxu0 0.0
    %1388 = vmatprep.subr.mxu0 0.0
    %1389 = vmatpush1.msra.mxu0 0.0
    %1390 = vmatprep.subr.mxu0 0.0
    %1391 = vmatpush1.msra.mxu0 0.0
    %1392 = vmatprep.subr.mxu0 0.0
    %1393 = vmatpush1.msra.mxu0 0.0
    %1394 = vmatprep.subr.mxu0 0.0
    %1395 = vmatpush1.msra.mxu0 0.0
    %1396 = vmatprep.subr.mxu0 0.0
    %1397 = vmatpush1.msra.mxu0 0.0
    %1398 = vmatprep.subr.mxu0 0.0
    %1399 = vmatpush1.msra.mxu0 0.0
    %1400 = vmatprep.subr.mxu0 0.0
    %1401 = vmatpush1.msra.mxu0 0.0
    %1402 = vmatprep.subr.mxu0 0.0
    %1403 = vmatpush1.msra.mxu0 0.0
    %1404 = vmatprep.subr.mxu0 0.0
    %1405 = vmatpush1.msra.mxu0 0.0
    %1406 = vmatprep.subr.mxu0 0.0
    %1407 = vmatpush1.msra.mxu0 0.0
    %1408 = vmatprep.subr.mxu0 0.0
    %1409 = vmatpush1.msra.mxu0 0.0
    %1410 = vmatprep.subr.mxu0 0.0
    %1411 = vmatpush1.msra.mxu0 0.0
    %1412 = vmatprep.subr.mxu0 0.0
    %1413 = vmatpush1.msra.mxu0 0.0
    %1414 = vmatprep.subr.mxu0 0.0
    %1415 = vmatpush1.msra.mxu0 0.0
    %1416 = vmatprep.subr.mxu0 0.0
    %1417 = vmatpush1.msra.mxu0 0.0
    %1418 = vmatprep.subr.mxu0 0.0
    %1419 = vmatpush1.msra.mxu0 0.0
    %1420 = vmatprep.mubr.f32.mxu0 0.0
    %1421 = vmatmul.mubr.f32.gmra.mrb[0].mxu0 %v1351
    %v1422 = vpop.f32.mrb[0].mxu0
    %v1423 = vadd.f32 %v1349, %v1422
    %v1424 = vpop.f32.mrb[0].mxu0
    %1425 = vmatprep.mubr.f32.mxu0 0.0
    %1426 = vmatmul.mubr.f32.gmra.mrb[0].mxu0 %v1354
    %v1427 = vpop.f32.mrb[0].mxu0
    %v1428 = vadd.f32 %v1349, %v1427
    %v1429 = vpop.f32.mrb[0].mxu0
    %1430 = vdwg.mxu0
    %v1431 = vadd.f32 %v1423, %v43
    %v1432 = vadd.f32 %v1428, %v44
    %v1433 = vsel %vm64, %v1431, 0.0
    %1434 = vadd.xlane.f32.xlu0 %v1433
    %v1435 = vpop.xlane.xlu0 %1434
    %v1436 = vsel %vm64, %v1432, 0.0
    %1437 = vadd.xlane.f32.xlu0 %v1436
    %v1438 = vpop.xlane.xlu0 %1437
    %v1439 = vrcp.pop 32.0
    %v1440 = vmul.f32 %v1435, %v1439
    %v1441 = vmul.f32 %v1438, %v1439
    %v1442 = vsub.f32 %v1431, %v1440
    %v1443 = vsub.f32 %v1432, %v1441
    %v1444 = vmul.f32 %v1442, %v1442
    %v1445 = vmul.f32 %v1443, %v1443
    %v1446 = vsel %vm64, %v1444, 0.0
    %1447 = vadd.xlane.f32.xlu0 %v1446
    %v1448 = vpop.xlane.xlu0 %1447
    %v1449 = vsel %vm64, %v1445, 0.0
    %1450 = vadd.xlane.f32.xlu0 %v1449
    %v1451 = vpop.xlane.xlu0 %1450
    %v1452 = vmul.f32 %v1448, %v1439
    %v1453 = vmul.f32 %v1451, %v1439
    %v1454 = vadd.f32 %v1452, 1e-05
    %v1455 = vadd.f32 %v1453, 1e-05
    %v1456 = vrsqrt.pop %v1454
    %v1457 = vrsqrt.pop %v1455
    %v1458 = vmul.f32 %v1442, %v1456
    %v1459 = vmul.f32 %v1443, %v1457
    %v1460 = vlaneseq
    %v1461 = vshrl.u32 %v1460, 7
    %v1462 = vsub.s32 1, %v1461
    %v1463 = vrot.slane %v61, %v1462
    %v1464 = vmul.f32 %v1458, %v1463
    %v1465 = vmul.f32 %v1459, %v1463
    %v1466 = vlaneseq
    %v1467 = vshrl.u32 %v1466, 7
    %v1468 = vsub.s32 2, %v1467
    %v1469 = vrot.slane %v61, %v1468
    %v1470 = vadd.f32 %v1464, %v1469
    %v1471 = vadd.f32 %v1465, %v1469
    %v1472 = vlaneseq
    %v1473 = vshrl.u32 %v1472, 7
    %v1474 = vsub.s32 3, %v1473
    %v1475 = vrot.slane %v61, %v1474
    %v1477 = vsel %vm64, %v1470, 0
    %v1480 = vsel %vm64, %v1471, 0
    %1482 = vmatprep.subr.mxu0 0.0
    %1483 = vmatpush1.msra.mxu0 %v49
    %1484 = vmatprep.subr.mxu0 0.0
    %1485 = vmatpush1.msra.mxu0 %v50
    %1486 = vmatprep.subr.mxu0 0.0
    %1487 = vmatpush1.msra.mxu0 %v51
    %1488 = vmatprep.subr.mxu0 0.0
    %1489 = vmatpush1.msra.mxu0 %v52
    %1490 = vmatprep.subr.mxu0 0.0
    %1491 = vmatpush1.msra.mxu0 0.0
    %1492 = vmatprep.subr.mxu0 0.0
    %1493 = vmatpush1.msra.mxu0 0.0
    %1494 = vmatprep.subr.mxu0 0.0
    %1495 = vmatpush1.msra.mxu0 0.0
    %1496 = vmatprep.subr.mxu0 0.0
    %1497 = vmatpush1.msra.mxu0 0.0
    %1498 = vmatprep.subr.mxu0 0.0
    %1499 = vmatpush1.msra.mxu0 0.0
    %1500 = vmatprep.subr.mxu0 0.0
    %1501 = vmatpush1.msra.mxu0 0.0
    %1502 = vmatprep.subr.mxu0 0.0
    %1503 = vmatpush1.msra.mxu0 0.0
    %1504 = vmatprep.subr.mxu0 0.0
    %1505 = vmatpush1.msra.mxu0 0.0
    %1506 = vmatprep.subr.mxu0 0.0
    %1507 = vmatpush1.msra.mxu0 0.0
    %1508 = vmatprep.subr.mxu0 0.0
    %1509 = vmatpush1.msra.mxu0 0.0
    %1510 = vmatprep.subr.mxu0 0.0
    %1511 = vmatpush1.msra.mxu0 0.0
    %1512 = vmatprep.subr.mxu0 0.0
    %1513 = vmatpush1.msra.mxu0 0.0
    %1514 = vmatprep.subr.mxu0 0.0
    %1515 = vmatpush1.msra.mxu0 0.0
    %1516 = vmatprep.subr.mxu0 0.0
    %1517 = vmatpush1.msra.mxu0 0.0
    %1518 = vmatprep.subr.mxu0 0.0
    %1519 = vmatpush1.msra.mxu0 0.0
    %1520 = vmatprep.subr.mxu0 0.0
    %1521 = vmatpush1.msra.mxu0 0.0
    %1522 = vmatprep.subr.mxu0 0.0
    %1523 = vmatpush1.msra.mxu0 0.0
    %1524 = vmatprep.subr.mxu0 0.0
    %1525 = vmatpush1.msra.mxu0 0.0
    %1526 = vmatprep.subr.mxu0 0.0
    %1527 = vmatpush1.msra.mxu0 0.0
    %1528 = vmatprep.subr.mxu0 0.0
    %1529 = vmatpush1.msra.mxu0 0.0
    %1530 = vmatprep.subr.mxu0 0.0
    %1531 = vmatpush1.msra.mxu0 0.0
    %1532 = vmatprep.subr.mxu0 0.0
    %1533 = vmatpush1.msra.mxu0 0.0
    %1534 = vmatprep.subr.mxu0 0.0
    %1535 = vmatpush1.msra.mxu0 0.0
    %1536 = vmatprep.subr.mxu0 0.0
    %1537 = vmatpush1.msra.mxu0 0.0
    %1538 = vmatprep.subr.mxu0 0.0
    %1539 = vmatpush1.msra.mxu0 0.0
    %1540 = vmatprep.subr.mxu0 0.0
    %1541 = vmatpush1.msra.mxu0 0.0
    %1542 = vmatprep.subr.mxu0 0.0
    %1543 = vmatpush1.msra.mxu0 0.0
    %1544 = vmatprep.subr.mxu0 0.0
    %1545 = vmatpush1.msra.mxu0 0.0
    %1546 = vmatprep.mubr.f32.mxu0 0.0
    %1547 = vmatmul.mubr.f32.gmra.mrb[0].mxu0 %v1477
    %v1548 = vpop.f32.mrb[0].mxu0
    %v1549 = vadd.f32 %v1475, %v1548
    %v1550 = vpop.f32.mrb[0].mxu0
    %1551 = vmatprep.mubr.f32.mxu0 0.0
    %1552 = vmatmul.mubr.f32.gmra.mrb[0].mxu0 %v1480
    %v1553 = vpop.f32.mrb[0].mxu0
    %v1554 = vadd.f32 %v1475, %v1553
    %v1555 = vpop.f32.mrb[0].mxu0
    %1556 = vdwg.mxu0
    %v1557 = vmax.f32 %v1549, 0.0
    %v1558 = vmax.f32 %v1554, 0.0
    %v1559 = vlaneseq
    %v1560 = vshrl.u32 %v1559, 7
    %v1561 = vsub.s32 4, %v1560
    %v1562 = vrot.slane %v61, %v1561
    %vm1563 = vcmask 523264
    %v1565 = vsel %vm1563, %v1557, 0
    %v1568 = vsel %vm1563, %v1558, 0
    %1570 = vmatprep.subr.mxu0 0.0
    %1571 = vmatpush1.msra.mxu0 %v53
    %1572 = vmatprep.subr.mxu0 0.0
    %1573 = vmatpush1.msra.mxu0 %v54
    %1574 = vmatprep.subr.mxu0 0.0
    %1575 = vmatpush1.msra.mxu0 %v55
    %1576 = vmatprep.subr.mxu0 0.0
    %1577 = vmatpush1.msra.mxu0 %v56
    %1578 = vmatprep.subr.mxu0 0.0
    %1579 = vmatpush1.msra.mxu0 %v57
    %1580 = vmatprep.subr.mxu0 0.0
    %1581 = vmatpush1.msra.mxu0 %v58
    %1582 = vmatprep.subr.mxu0 0.0
    %1583 = vmatpush1.msra.mxu0 %v59
    %1584 = vmatprep.subr.mxu0 0.0
    %1585 = vmatpush1.msra.mxu0 %v60
    %1586 = vmatprep.subr.mxu0 0.0
    %1587 = vmatpush1.msra.mxu0 0.0
    %1588 = vmatprep.subr.mxu0 0.0
    %1589 = vmatpush1.msra.mxu0 0.0
    %1590 = vmatprep.subr.mxu0 0.0
    %1591 = vmatpush1.msra.mxu0 0.0
    %1592 = vmatprep.subr.mxu0 0.0
    %1593 = vmatpush1.msra.mxu0 0.0
    %1594 = vmatprep.subr.mxu0 0.0
    %1595 = vmatpush1.msra.mxu0 0.0
    %1596 = vmatprep.subr.mxu0 0.0
    %1597 = vmatpush1.msra.mxu0 0.0
    %1598 = vmatprep.subr.mxu0 0.0
    %1599 = vmatpush1.msra.mxu0 0.0
    %1600 = vmatprep.subr.mxu0 0.0
    %1601 = vmatpush1.msra.mxu0 0.0
    %1602 = vmatprep.subr.mxu0 0.0
    %1603 = vmatpush1.msra.mxu0 0.0
    %1604 = vmatprep.subr.mxu0 0.0
    %1605 = vmatpush1.msra.mxu0 0.0
    %1606 = vmatprep.subr.mxu0 0.0
    %1607 = vmatpush1.msra.mxu0 0.0
    %1608 = vmatprep.subr.mxu0 0.0
    %1609 = vmatpush1.msra.mxu0 0.0
    %1610 = vmatprep.subr.mxu0 0.0
    %1611 = vmatpush1.msra.mxu0 0.0
    %1612 = vmatprep.subr.mxu0 0.0
    %1613 = vmatpush1.msra.mxu0 0.0
    %1614 = vmatprep.subr.mxu0 0.0
    %1615 = vmatpush1.msra.mxu0 0.0
    %1616 = vmatprep.subr.mxu0 0.0
    %1617 = vmatpush1.msra.mxu0 0.0
    %1618 = vmatprep.subr.mxu0 0.0
    %1619 = vmatpush1.msra.mxu0 0.0
    %1620 = vmatprep.subr.mxu0 0.0
    %1621 = vmatpush1.msra.mxu0 0.0
    %1622 = vmatprep.subr.mxu0 0.0
    %1623 = vmatpush1.msra.mxu0 0.0
    %1624 = vmatprep.subr.mxu0 0.0
    %1625 = vmatpush1.msra.mxu0 0.0
    %1626 = vmatprep.subr.mxu0 0.0
    %1627 = vmatpush1.msra.mxu0 0.0
    %1628 = vmatprep.subr.mxu0 0.0
    %1629 = vmatpush1.msra.mxu0 0.0
    %1630 = vmatprep.subr.mxu0 0.0
    %1631 = vmatpush1.msra.mxu0 0.0
    %1632 = vmatprep.subr.mxu0 0.0
    %1633 = vmatpush1.msra.mxu0 0.0
    %1634 = vmatprep.mubr.f32.mxu0 0.0
    %1635 = vmatmul.mubr.f32.gmra.mrb[0].mxu0 %v1565
    %v1636 = vpop.f32.mrb[0].mxu0
    %v1637 = vadd.f32 %v1562, %v1636
    %v1638 = vpop.f32.mrb[0].mxu0
    %1639 = vmatprep.mubr.f32.mxu0 0.0
    %1640 = vmatmul.mubr.f32.gmra.mrb[0].mxu0 %v1568
    %v1641 = vpop.f32.mrb[0].mxu0
    %v1642 = vadd.f32 %v1562, %v1641
    %v1643 = vpop.f32.mrb[0].mxu0
    %1644 = vdwg.mxu0
    %v1645 = vadd.f32 %v1637, %v1470
    %v1646 = vadd.f32 %v1642, %v1471
    %v1647 = vsel %vm64, %v1645, 0.0
    %1648 = vadd.xlane.f32.xlu0 %v1647
    %v1649 = vpop.xlane.xlu0 %1648
    %v1650 = vsel %vm64, %v1646, 0.0
    %1651 = vadd.xlane.f32.xlu0 %v1650
    %v1652 = vpop.xlane.xlu0 %1651
    %v1653 = vmul.f32 %v1649, %v1439
    %v1654 = vmul.f32 %v1652, %v1439
    %v1655 = vsub.f32 %v1645, %v1653
    %v1656 = vsub.f32 %v1646, %v1654
    %v1657 = vmul.f32 %v1655, %v1655
    %v1658 = vmul.f32 %v1656, %v1656
    %v1659 = vsel %vm64, %v1657, 0.0
    %1660 = vadd.xlane.f32.xlu0 %v1659
    %v1661 = vpop.xlane.xlu0 %1660
    %v1662 = vsel %vm64, %v1658, 0.0
    %1663 = vadd.xlane.f32.xlu0 %v1662
    %v1664 = vpop.xlane.xlu0 %1663
    %v1665 = vmul.f32 %v1661, %v1439
    %v1666 = vmul.f32 %v1664, %v1439
    %v1667 = vadd.f32 %v1665, 1e-05
    %v1668 = vadd.f32 %v1666, 1e-05
    %v1669 = vrsqrt.pop %v1667
    %v1670 = vrsqrt.pop %v1668
    %v1671 = vmul.f32 %v1655, %v1669
    %v1672 = vmul.f32 %v1656, %v1670
    %v1673 = vlaneseq
    %v1674 = vshrl.u32 %v1673, 7
    %v1675 = vsub.s32 5, %v1674
    %v1676 = vrot.slane %v61, %v1675
    %v1677 = vmul.f32 %v1671, %v1676
    %v1678 = vmul.f32 %v1672, %v1676
    %v1679 = vlaneseq
    %v1680 = vshrl.u32 %v1679, 7
    %v1681 = vsub.s32 6, %v1680
    %v1682 = vrot.slane %v61, %v1681
    %v1683 = vadd.f32 %v1677, %v1682
    %v1684 = vadd.f32 %v1678, %v1682
    %s1685 = scalar_lea.vmem %s2, 136
    %v1686 = vld [vmem:[%s1685] sm:$0xff]
    %v1687 = vld [vmem:[%s1685 + $0x8] sm:$0xff]
    %v1688 = vld [vmem:[%s1685 + $0x10] sm:$0xff]
    %v1689 = vld [vmem:[%s1685 + $0x18] sm:$0xff]
    %v1690 = vld [vmem:[%s1685 + $0x20] sm:$0xff]
    %v1691 = vld [vmem:[%s1685 + $0x28] sm:$0xff]
    %v1692 = vld [vmem:[%s1685 + $0x30] sm:$0xff]
    %v1693 = vld [vmem:[%s1685 + $0x38] sm:$0xff]
    %v1694 = vld [vmem:[%s1685 + $0x40] sm:$0xff]
    %v1695 = vld [vmem:[%s1685 + $0x48] sm:$0xff]
    %v1696 = vld [vmem:[%s1685 + $0x50] sm:$0xff]
    %v1697 = vld [vmem:[%s1685 + $0x58] sm:$0xff]
    %v1698 = vld [vmem:[%s1685 + $0x60] sm:$0xff]
    %v1699 = vld [vmem:[%s1685 + $0x68] sm:$0xff]
    %v1700 = vld [vmem:[%s1685 + $0x70] sm:$0xff]
    %v1701 = vld [vmem:[%s1685 + $0x78] sm:$0xff]
    %v1702 = vld [vmem:[%s1685 + $0x80] sm:$0x7f]
    %v1703 = vmul.f32 %v1683, %v27
    %v1704 = vmul.f32 %v1684, %v27
    %v1706 = vsel %vm64, %v1683, 0
    %v1709 = vsel %vm64, %v1703, 0
    %1711 = vmatprep.subr.mxu0 0.0
    %1712 = vmatpush1.xpose.msra.mxu0 %v1709
    %1713 = vmatprep.subr.mxu0 0.0
    %1714 = vmatpush1.xpose.msra.mxu0 0.0
    %1715 = vmatprep.subr.mxu0 0.0
    %1716 = vmatpush1.xpose.msra.mxu0 0.0
    %1717 = vmatprep.subr.mxu0 0.0
    %1718 = vmatpush1.xpose.msra.mxu0 0.0
    %1719 = vmatprep.subr.mxu0 0.0
    %1720 = vmatpush1.xpose.msra.mxu0 0.0
    %1721 = vmatprep.subr.mxu0 0.0
    %1722 = vmatpush1.xpose.msra.mxu0 0.0
    %1723 = vmatprep.subr.mxu0 0.0
    %1724 = vmatpush1.xpose.msra.mxu0 0.0
    %1725 = vmatprep.subr.mxu0 0.0
    %1726 = vmatpush1.xpose.msra.mxu0 0.0
    %1727 = vmatprep.subr.mxu0 0.0
    %1728 = vmatpush1.xpose.msra.mxu0 0.0
    %1729 = vmatprep.subr.mxu0 0.0
    %1730 = vmatpush1.xpose.msra.mxu0 0.0
    %1731 = vmatprep.subr.mxu0 0.0
    %1732 = vmatpush1.xpose.msra.mxu0 0.0
    %1733 = vmatprep.subr.mxu0 0.0
    %1734 = vmatpush1.xpose.msra.mxu0 0.0
    %1735 = vmatprep.subr.mxu0 0.0
    %1736 = vmatpush1.xpose.msra.mxu0 0.0
    %1737 = vmatprep.subr.mxu0 0.0
    %1738 = vmatpush1.xpose.msra.mxu0 0.0
    %1739 = vmatprep.subr.mxu0 0.0
    %1740 = vmatpush1.xpose.msra.mxu0 0.0
    %1741 = vmatprep.subr.mxu0 0.0
    %1742 = vmatpush1.xpose.msra.mxu0 0.0
    %1743 = vmatprep.subr.mxu0 0.0
    %1744 = vmatpush1.xpose.msra.mxu0 0.0
    %1745 = vmatprep.subr.mxu0 0.0
    %1746 = vmatpush1.xpose.msra.mxu0 0.0
    %1747 = vmatprep.subr.mxu0 0.0
    %1748 = vmatpush1.xpose.msra.mxu0 0.0
    %1749 = vmatprep.subr.mxu0 0.0
    %1750 = vmatpush1.xpose.msra.mxu0 0.0
    %1751 = vmatprep.subr.mxu0 0.0
    %1752 = vmatpush1.xpose.msra.mxu0 0.0
    %1753 = vmatprep.subr.mxu0 0.0
    %1754 = vmatpush1.xpose.msra.mxu0 0.0
    %1755 = vmatprep.subr.mxu0 0.0
    %1756 = vmatpush1.xpose.msra.mxu0 0.0
    %1757 = vmatprep.subr.mxu0 0.0
    %1758 = vmatpush1.xpose.msra.mxu0 0.0
    %1759 = vmatprep.subr.mxu0 0.0
    %1760 = vmatpush1.xpose.msra.mxu0 0.0
    %1761 = vmatprep.subr.mxu0 0.0
    %1762 = vmatpush1.xpose.msra.mxu0 0.0
    %1763 = vmatprep.subr.mxu0 0.0
    %1764 = vmatpush1.xpose.msra.mxu0 0.0
    %1765 = vmatprep.subr.mxu0 0.0
    %1766 = vmatpush1.xpose.msra.mxu0 0.0
    %1767 = vmatprep.subr.mxu0 0.0
    %1768 = vmatpush1.xpose.msra.mxu0 0.0
    %1769 = vmatprep.subr.mxu0 0.0
    %1770 = vmatpush1.xpose.msra.mxu0 0.0
    %1771 = vmatprep.subr.mxu0 0.0
    %1772 = vmatpush1.xpose.msra.mxu0 0.0
    %1773 = vmatprep.subr.mxu0 0.0
    %1774 = vmatpush1.xpose.msra.mxu0 0.0
    %1775 = vmatprep.mubr.f32.mxu0 0.0
    %1776 = vmatmul.mubr.f32.gmra.mrb[0].mxu0 %v1706
    %v1777 = vpop.f32.mrb[0].mxu0
    %v1778 = vadd.f32 0.0, %v1777
    %v1779 = vpop.f32.mrb[0].mxu0
    %1780 = vdwg.mxu0
    %v1782 = vsel %vm64, %v1684, 0
    %v1785 = vsel %vm64, %v1704, 0
    %1787 = vmatprep.subr.mxu0 0.0
    %1788 = vmatpush1.xpose.msra.mxu0 %v1785
    %1789 = vmatprep.subr.mxu0 0.0
    %1790 = vmatpush1.xpose.msra.mxu0 0.0
    %1791 = vmatprep.subr.mxu0 0.0
    %1792 = vmatpush1.xpose.msra.mxu0 0.0
    %1793 = vmatprep.subr.mxu0 0.0
    %1794 = vmatpush1.xpose.msra.mxu0 0.0
    %1795 = vmatprep.subr.mxu0 0.0
    %1796 = vmatpush1.xpose.msra.mxu0 0.0
    %1797 = vmatprep.subr.mxu0 0.0
    %1798 = vmatpush1.xpose.msra.mxu0 0.0
    %1799 = vmatprep.subr.mxu0 0.0
    %1800 = vmatpush1.xpose.msra.mxu0 0.0
    %1801 = vmatprep.subr.mxu0 0.0
    %1802 = vmatpush1.xpose.msra.mxu0 0.0
    %1803 = vmatprep.subr.mxu0 0.0
    %1804 = vmatpush1.xpose.msra.mxu0 0.0
    %1805 = vmatprep.subr.mxu0 0.0
    %1806 = vmatpush1.xpose.msra.mxu0 0.0
    %1807 = vmatprep.subr.mxu0 0.0
    %1808 = vmatpush1.xpose.msra.mxu0 0.0
    %1809 = vmatprep.subr.mxu0 0.0
    %1810 = vmatpush1.xpose.msra.mxu0 0.0
    %1811 = vmatprep.subr.mxu0 0.0
    %1812 = vmatpush1.xpose.msra.mxu0 0.0
    %1813 = vmatprep.subr.mxu0 0.0
    %1814 = vmatpush1.xpose.msra.mxu0 0.0
    %1815 = vmatprep.subr.mxu0 0.0
    %1816 = vmatpush1.xpose.msra.mxu0 0.0
    %1817 = vmatprep.subr.mxu0 0.0
    %1818 = vmatpush1.xpose.msra.mxu0 0.0
    %1819 = vmatprep.subr.mxu0 0.0
    %1820 = vmatpush1.xpose.msra.mxu0 0.0
    %1821 = vmatprep.subr.mxu0 0.0
    %1822 = vmatpush1.xpose.msra.mxu0 0.0
    %1823 = vmatprep.subr.mxu0 0.0
    %1824 = vmatpush1.xpose.msra.mxu0 0.0
    %1825 = vmatprep.subr.mxu0 0.0
    %1826 = vmatpush1.xpose.msra.mxu0 0.0
    %1827 = vmatprep.subr.mxu0 0.0
    %1828 = vmatpush1.xpose.msra.mxu0 0.0
    %1829 = vmatprep.subr.mxu0 0.0
    %1830 = vmatpush1.xpose.msra.mxu0 0.0
    %1831 = vmatprep.subr.mxu0 0.0
    %1832 = vmatpush1.xpose.msra.mxu0 0.0
    %1833 = vmatprep.subr.mxu0 0.0
    %1834 = vmatpush1.xpose.msra.mxu0 0.0
    %1835 = vmatprep.subr.mxu0 0.0
    %1836 = vmatpush1.xpose.msra.mxu0 0.0
    %1837 = vmatprep.subr.mxu0 0.0
    %1838 = vmatpush1.xpose.msra.mxu0 0.0
    %1839 = vmatprep.subr.mxu0 0.0
    %1840 = vmatpush1.xpose.msra.mxu0 0.0
    %1841 = vmatprep.subr.mxu0 0.0
    %1842 = vmatpush1.xpose.msra.mxu0 0.0
    %1843 = vmatprep.subr.mxu0 0.0
    %1844 = vmatpush1.xpose.msra.mxu0 0.0
    %1845 = vmatprep.subr.mxu0 0.0
    %1846 = vmatpush1.xpose.msra.mxu0 0.0
    %1847 = vmatprep.subr.mxu0 0.0
    %1848 = vmatpush1.xpose.msra.mxu0 0.0
    %1849 = vmatprep.subr.mxu0 0.0
    %1850 = vmatpush1.xpose.msra.mxu0 0.0
    %1851 = vmatprep.mubr.f32.mxu0 0.0
    %1852 = vmatmul.mubr.f32.gmra.mrb[0].mxu0 %v1782
    %v1853 = vpop.f32.mrb[0].mxu0
    %v1854 = vadd.f32 0.0, %v1853
    %v1855 = vpop.f32.mrb[0].mxu0
    %1856 = vdwg.mxu0
    %v1857 = vmul.f32 %v1778, 0.17677669
    %v1858 = vmul.f32 %v1854, 0.17677669
    %v1859 = vsel %vm219, %v1857, -inf
    %1860 = vmax.xlane.f32.xlu0 %v1859
    %v1861 = vpop.xlane.xlu0 %1860
    %v1862 = vsel %vm219, %v1858, -inf
    %1863 = vmax.xlane.f32.xlu0 %v1862
    %v1864 = vpop.xlane.xlu0 %1863
    %v1865 = vsub.f32 %v1857, %v1861
    %v1866 = vsub.f32 %v1858, %v1864
    %v1867 = vmul.f32 %v1865, 1.442695
    %v1868 = vpow.pop %v1867
    %v1869 = vmul.f32 %v1866, 1.442695
    %v1870 = vpow.pop %v1869
    %v1871 = vsel %vm219, %v1868, 0.0
    %1872 = vadd.xlane.f32.xlu0 %v1871
    %v1873 = vpop.xlane.xlu0 %1872
    %v1874 = vsel %vm219, %v1870, 0.0
    %1875 = vadd.xlane.f32.xlu0 %v1874
    %v1876 = vpop.xlane.xlu0 %1875
    %v1877 = vrcp.pop %v1873
    %v1878 = vrcp.pop %v1876
    %v1879 = vmul.f32 %v1868, %v1877
    %v1880 = vmul.f32 %v1870, %v1878
    %v1881 = vmul.f32 %v1683, %v32
    %v1882 = vmul.f32 %v1684, %v32
    %v1884 = vsel %vm64, %v1881, 0
    %1886 = vmatprep.subr.mxu0 0.0
    %1887 = vmatpush1.xpose.msra.mxu0 %v1884
    %1888 = vmatprep.subr.mxu0 0.0
    %1889 = vmatpush1.xpose.msra.mxu0 0.0
    %1890 = vmatprep.subr.mxu0 0.0
    %1891 = vmatpush1.xpose.msra.mxu0 0.0
    %1892 = vmatprep.subr.mxu0 0.0
    %1893 = vmatpush1.xpose.msra.mxu0 0.0
    %1894 = vmatprep.subr.mxu0 0.0
    %1895 = vmatpush1.xpose.msra.mxu0 0.0
    %1896 = vmatprep.subr.mxu0 0.0
    %1897 = vmatpush1.xpose.msra.mxu0 0.0
    %1898 = vmatprep.subr.mxu0 0.0
    %1899 = vmatpush1.xpose.msra.mxu0 0.0
    %1900 = vmatprep.subr.mxu0 0.0
    %1901 = vmatpush1.xpose.msra.mxu0 0.0
    %1902 = vmatprep.subr.mxu0 0.0
    %1903 = vmatpush1.xpose.msra.mxu0 0.0
    %1904 = vmatprep.subr.mxu0 0.0
    %1905 = vmatpush1.xpose.msra.mxu0 0.0
    %1906 = vmatprep.subr.mxu0 0.0
    %1907 = vmatpush1.xpose.msra.mxu0 0.0
    %1908 = vmatprep.subr.mxu0 0.0
    %1909 = vmatpush1.xpose.msra.mxu0 0.0
    %1910 = vmatprep.subr.mxu0 0.0
    %1911 = vmatpush1.xpose.msra.mxu0 0.0
    %1912 = vmatprep.subr.mxu0 0.0
    %1913 = vmatpush1.xpose.msra.mxu0 0.0
    %1914 = vmatprep.subr.mxu0 0.0
    %1915 = vmatpush1.xpose.msra.mxu0 0.0
    %1916 = vmatprep.subr.mxu0 0.0
    %1917 = vmatpush1.xpose.msra.mxu0 0.0
    %1918 = vmatprep.subr.mxu0 0.0
    %1919 = vmatpush1.xpose.msra.mxu0 0.0
    %1920 = vmatprep.subr.mxu0 0.0
    %1921 = vmatpush1.xpose.msra.mxu0 0.0
    %1922 = vmatprep.subr.mxu0 0.0
    %1923 = vmatpush1.xpose.msra.mxu0 0.0
    %1924 = vmatprep.subr.mxu0 0.0
    %1925 = vmatpush1.xpose.msra.mxu0 0.0
    %1926 = vmatprep.subr.mxu0 0.0
    %1927 = vmatpush1.xpose.msra.mxu0 0.0
    %1928 = vmatprep.subr.mxu0 0.0
    %1929 = vmatpush1.xpose.msra.mxu0 0.0
    %1930 = vmatprep.subr.mxu0 0.0
    %1931 = vmatpush1.xpose.msra.mxu0 0.0
    %1932 = vmatprep.subr.mxu0 0.0
    %1933 = vmatpush1.xpose.msra.mxu0 0.0
    %1934 = vmatprep.subr.mxu0 0.0
    %1935 = vmatpush1.xpose.msra.mxu0 0.0
    %1936 = vmatprep.subr.mxu0 0.0
    %1937 = vmatpush1.xpose.msra.mxu0 0.0
    %1938 = vmatprep.subr.mxu0 0.0
    %1939 = vmatpush1.xpose.msra.mxu0 0.0
    %1940 = vmatprep.subr.mxu0 0.0
    %1941 = vmatpush1.xpose.msra.mxu0 0.0
    %1942 = vmatprep.subr.mxu0 0.0
    %1943 = vmatpush1.xpose.msra.mxu0 0.0
    %1944 = vmatprep.subr.mxu0 0.0
    %1945 = vmatpush1.xpose.msra.mxu0 0.0
    %1946 = vmatprep.subr.mxu0 0.0
    %1947 = vmatpush1.xpose.msra.mxu0 0.0
    %1948 = vmatprep.subr.mxu0 0.0
    %1949 = vmatpush1.xpose.msra.mxu0 0.0
    %1950 = vmatprep.mubr.f32.mxu0 0.0
    %1951 = vmatmul.mubr.f32.gmra.mrb[0].mxu0 %v1706
    %v1952 = vpop.f32.mrb[0].mxu0
    %v1953 = vadd.f32 0.0, %v1952
    %v1954 = vpop.f32.mrb[0].mxu0
    %1955 = vdwg.mxu0
    %v1957 = vsel %vm64, %v1882, 0
    %1959 = vmatprep.subr.mxu0 0.0
    %1960 = vmatpush1.xpose.msra.mxu0 %v1957
    %1961 = vmatprep.subr.mxu0 0.0
    %1962 = vmatpush1.xpose.msra.mxu0 0.0
    %1963 = vmatprep.subr.mxu0 0.0
    %1964 = vmatpush1.xpose.msra.mxu0 0.0
    %1965 = vmatprep.subr.mxu0 0.0
    %1966 = vmatpush1.xpose.msra.mxu0 0.0
    %1967 = vmatprep.subr.mxu0 0.0
    %1968 = vmatpush1.xpose.msra.mxu0 0.0
    %1969 = vmatprep.subr.mxu0 0.0
    %1970 = vmatpush1.xpose.msra.mxu0 0.0
    %1971 = vmatprep.subr.mxu0 0.0
    %1972 = vmatpush1.xpose.msra.mxu0 0.0
    %1973 = vmatprep.subr.mxu0 0.0
    %1974 = vmatpush1.xpose.msra.mxu0 0.0
    %1975 = vmatprep.subr.mxu0 0.0
    %1976 = vmatpush1.xpose.msra.mxu0 0.0
    %1977 = vmatprep.subr.mxu0 0.0
    %1978 = vmatpush1.xpose.msra.mxu0 0.0
    %1979 = vmatprep.subr.mxu0 0.0
    %1980 = vmatpush1.xpose.msra.mxu0 0.0
    %1981 = vmatprep.subr.mxu0 0.0
    %1982 = vmatpush1.xpose.msra.mxu0 0.0
    %1983 = vmatprep.subr.mxu0 0.0
    %1984 = vmatpush1.xpose.msra.mxu0 0.0
    %1985 = vmatprep.subr.mxu0 0.0
    %1986 = vmatpush1.xpose.msra.mxu0 0.0
    %1987 = vmatprep.subr.mxu0 0.0
    %1988 = vmatpush1.xpose.msra.mxu0 0.0
    %1989 = vmatprep.subr.mxu0 0.0
    %1990 = vmatpush1.xpose.msra.mxu0 0.0
    %1991 = vmatprep.subr.mxu0 0.0
    %1992 = vmatpush1.xpose.msra.mxu0 0.0
    %1993 = vmatprep.subr.mxu0 0.0
    %1994 = vmatpush1.xpose.msra.mxu0 0.0
    %1995 = vmatprep.subr.mxu0 0.0
    %1996 = vmatpush1.xpose.msra.mxu0 0.0
    %1997 = vmatprep.subr.mxu0 0.0
    %1998 = vmatpush1.xpose.msra.mxu0 0.0
    %1999 = vmatprep.subr.mxu0 0.0
    %2000 = vmatpush1.xpose.msra.mxu0 0.0
    %2001 = vmatprep.subr.mxu0 0.0
    %2002 = vmatpush1.xpose.msra.mxu0 0.0
    %2003 = vmatprep.subr.mxu0 0.0
    %2004 = vmatpush1.xpose.msra.mxu0 0.0
    %2005 = vmatprep.subr.mxu0 0.0
    %2006 = vmatpush1.xpose.msra.mxu0 0.0
    %2007 = vmatprep.subr.mxu0 0.0
    %2008 = vmatpush1.xpose.msra.mxu0 0.0
    %2009 = vmatprep.subr.mxu0 0.0
    %2010 = vmatpush1.xpose.msra.mxu0 0.0
    %2011 = vmatprep.subr.mxu0 0.0
    %2012 = vmatpush1.xpose.msra.mxu0 0.0
    %2013 = vmatprep.subr.mxu0 0.0
    %2014 = vmatpush1.xpose.msra.mxu0 0.0
    %2015 = vmatprep.subr.mxu0 0.0
    %2016 = vmatpush1.xpose.msra.mxu0 0.0
    %2017 = vmatprep.subr.mxu0 0.0
    %2018 = vmatpush1.xpose.msra.mxu0 0.0
    %2019 = vmatprep.subr.mxu0 0.0
    %2020 = vmatpush1.xpose.msra.mxu0 0.0
    %2021 = vmatprep.subr.mxu0 0.0
    %2022 = vmatpush1.xpose.msra.mxu0 0.0
    %2023 = vmatprep.mubr.f32.mxu0 0.0
    %2024 = vmatmul.mubr.f32.gmra.mrb[0].mxu0 %v1782
    %v2025 = vpop.f32.mrb[0].mxu0
    %v2026 = vadd.f32 0.0, %v2025
    %v2027 = vpop.f32.mrb[0].mxu0
    %2028 = vdwg.mxu0
    %v2029 = vmul.f32 %v1953, 0.17677669
    %v2030 = vmul.f32 %v2026, 0.17677669
    %v2031 = vsel %vm219, %v2029, -inf
    %2032 = vmax.xlane.f32.xlu0 %v2031
    %v2033 = vpop.xlane.xlu0 %2032
    %v2034 = vsel %vm219, %v2030, -inf
    %2035 = vmax.xlane.f32.xlu0 %v2034
    %v2036 = vpop.xlane.xlu0 %2035
    %v2037 = vsub.f32 %v2029, %v2033
    %v2038 = vsub.f32 %v2030, %v2036
    %v2039 = vmul.f32 %v2037, 1.442695
    %v2040 = vpow.pop %v2039
    %v2041 = vmul.f32 %v2038, 1.442695
    %v2042 = vpow.pop %v2041
    %v2043 = vsel %vm219, %v2040, 0.0
    %2044 = vadd.xlane.f32.xlu0 %v2043
    %v2045 = vpop.xlane.xlu0 %2044
    %v2046 = vsel %vm219, %v2042, 0.0
    %2047 = vadd.xlane.f32.xlu0 %v2046
    %v2048 = vpop.xlane.xlu0 %2047
    %v2049 = vrcp.pop %v2045
    %v2050 = vrcp.pop %v2048
    %v2051 = vmul.f32 %v2040, %v2049
    %v2052 = vmul.f32 %v2042, %v2050
    %v2054 = vsel %vm219, %v2051, 0
    %2056 = vmatprep.subr.mxu0 0.0
    %2057 = vmatpush1.msra.mxu0 %v1881
    %2058 = vmatprep.subr.mxu0 0.0
    %2059 = vmatpush1.msra.mxu0 0.0
    %2060 = vmatprep.subr.mxu0 0.0
    %2061 = vmatpush1.msra.mxu0 0.0
    %2062 = vmatprep.subr.mxu0 0.0
    %2063 = vmatpush1.msra.mxu0 0.0
    %2064 = vmatprep.subr.mxu0 0.0
    %2065 = vmatpush1.msra.mxu0 0.0
    %2066 = vmatprep.subr.mxu0 0.0
    %2067 = vmatpush1.msra.mxu0 0.0
    %2068 = vmatprep.subr.mxu0 0.0
    %2069 = vmatpush1.msra.mxu0 0.0
    %2070 = vmatprep.subr.mxu0 0.0
    %2071 = vmatpush1.msra.mxu0 0.0
    %2072 = vmatprep.subr.mxu0 0.0
    %2073 = vmatpush1.msra.mxu0 0.0
    %2074 = vmatprep.subr.mxu0 0.0
    %2075 = vmatpush1.msra.mxu0 0.0
    %2076 = vmatprep.subr.mxu0 0.0
    %2077 = vmatpush1.msra.mxu0 0.0
    %2078 = vmatprep.subr.mxu0 0.0
    %2079 = vmatpush1.msra.mxu0 0.0
    %2080 = vmatprep.subr.mxu0 0.0
    %2081 = vmatpush1.msra.mxu0 0.0
    %2082 = vmatprep.subr.mxu0 0.0
    %2083 = vmatpush1.msra.mxu0 0.0
    %2084 = vmatprep.subr.mxu0 0.0
    %2085 = vmatpush1.msra.mxu0 0.0
    %2086 = vmatprep.subr.mxu0 0.0
    %2087 = vmatpush1.msra.mxu0 0.0
    %2088 = vmatprep.subr.mxu0 0.0
    %2089 = vmatpush1.msra.mxu0 0.0
    %2090 = vmatprep.subr.mxu0 0.0
    %2091 = vmatpush1.msra.mxu0 0.0
    %2092 = vmatprep.subr.mxu0 0.0
    %2093 = vmatpush1.msra.mxu0 0.0
    %2094 = vmatprep.subr.mxu0 0.0
    %2095 = vmatpush1.msra.mxu0 0.0
    %2096 = vmatprep.subr.mxu0 0.0
    %2097 = vmatpush1.msra.mxu0 0.0
    %2098 = vmatprep.subr.mxu0 0.0
    %2099 = vmatpush1.msra.mxu0 0.0
    %2100 = vmatprep.subr.mxu0 0.0
    %2101 = vmatpush1.msra.mxu0 0.0
    %2102 = vmatprep.subr.mxu0 0.0
    %2103 = vmatpush1.msra.mxu0 0.0
    %2104 = vmatprep.subr.mxu0 0.0
    %2105 = vmatpush1.msra.mxu0 0.0
    %2106 = vmatprep.subr.mxu0 0.0
    %2107 = vmatpush1.msra.mxu0 0.0
    %2108 = vmatprep.subr.mxu0 0.0
    %2109 = vmatpush1.msra.mxu0 0.0
    %2110 = vmatprep.subr.mxu0 0.0
    %2111 = vmatpush1.msra.mxu0 0.0
    %2112 = vmatprep.subr.mxu0 0.0
    %2113 = vmatpush1.msra.mxu0 0.0
    %2114 = vmatprep.subr.mxu0 0.0
    %2115 = vmatpush1.msra.mxu0 0.0
    %2116 = vmatprep.subr.mxu0 0.0
    %2117 = vmatpush1.msra.mxu0 0.0
    %2118 = vmatprep.subr.mxu0 0.0
    %2119 = vmatpush1.msra.mxu0 0.0
    %2120 = vmatprep.mubr.f32.mxu0 0.0
    %2121 = vmatmul.mubr.f32.gmra.mrb[0].mxu0 %v2054
    %v2122 = vpop.f32.mrb[0].mxu0
    %v2123 = vadd.f32 0.0, %v2122
    %v2124 = vpop.f32.mrb[0].mxu0
    %2125 = vdwg.mxu0
    %v2127 = vsel %vm219, %v2052, 0
    %2129 = vmatprep.subr.mxu0 0.0
    %2130 = vmatpush1.msra.mxu0 %v1882
    %2131 = vmatprep.subr.mxu0 0.0
    %2132 = vmatpush1.msra.mxu0 0.0
    %2133 = vmatprep.subr.mxu0 0.0
    %2134 = vmatpush1.msra.mxu0 0.0
    %2135 = vmatprep.subr.mxu0 0.0
    %2136 = vmatpush1.msra.mxu0 0.0
    %2137 = vmatprep.subr.mxu0 0.0
    %2138 = vmatpush1.msra.mxu0 0.0
    %2139 = vmatprep.subr.mxu0 0.0
    %2140 = vmatpush1.msra.mxu0 0.0
    %2141 = vmatprep.subr.mxu0 0.0
    %2142 = vmatpush1.msra.mxu0 0.0
    %2143 = vmatprep.subr.mxu0 0.0
    %2144 = vmatpush1.msra.mxu0 0.0
    %2145 = vmatprep.subr.mxu0 0.0
    %2146 = vmatpush1.msra.mxu0 0.0
    %2147 = vmatprep.subr.mxu0 0.0
    %2148 = vmatpush1.msra.mxu0 0.0
    %2149 = vmatprep.subr.mxu0 0.0
    %2150 = vmatpush1.msra.mxu0 0.0
    %2151 = vmatprep.subr.mxu0 0.0
    %2152 = vmatpush1.msra.mxu0 0.0
    %2153 = vmatprep.subr.mxu0 0.0
    %2154 = vmatpush1.msra.mxu0 0.0
    %2155 = vmatprep.subr.mxu0 0.0
    %2156 = vmatpush1.msra.mxu0 0.0
    %2157 = vmatprep.subr.mxu0 0.0
    %2158 = vmatpush1.msra.mxu0 0.0
    %2159 = vmatprep.subr.mxu0 0.0
    %2160 = vmatpush1.msra.mxu0 0.0
    %2161 = vmatprep.subr.mxu0 0.0
    %2162 = vmatpush1.msra.mxu0 0.0
    %2163 = vmatprep.subr.mxu0 0.0
    %2164 = vmatpush1.msra.mxu0 0.0
    %2165 = vmatprep.subr.mxu0 0.0
    %2166 = vmatpush1.msra.mxu0 0.0
    %2167 = vmatprep.subr.mxu0 0.0
    %2168 = vmatpush1.msra.mxu0 0.0
    %2169 = vmatprep.subr.mxu0 0.0
    %2170 = vmatpush1.msra.mxu0 0.0
    %2171 = vmatprep.subr.mxu0 0.0
    %2172 = vmatpush1.msra.mxu0 0.0
    %2173 = vmatprep.subr.mxu0 0.0
    %2174 = vmatpush1.msra.mxu0 0.0
    %2175 = vmatprep.subr.mxu0 0.0
    %2176 = vmatpush1.msra.mxu0 0.0
    %2177 = vmatprep.subr.mxu0 0.0
    %2178 = vmatpush1.msra.mxu0 0.0
    %2179 = vmatprep.subr.mxu0 0.0
    %2180 = vmatpush1.msra.mxu0 0.0
    %2181 = vmatprep.subr.mxu0 0.0
    %2182 = vmatpush1.msra.mxu0 0.0
    %2183 = vmatprep.subr.mxu0 0.0
    %2184 = vmatpush1.msra.mxu0 0.0
    %2185 = vmatprep.subr.mxu0 0.0
    %2186 = vmatpush1.msra.mxu0 0.0
    %2187 = vmatprep.subr.mxu0 0.0
    %2188 = vmatpush1.msra.mxu0 0.0
    %2189 = vmatprep.subr.mxu0 0.0
    %2190 = vmatpush1.msra.mxu0 0.0
    %2191 = vmatprep.subr.mxu0 0.0
    %2192 = vmatpush1.msra.mxu0 0.0
    %2193 = vmatprep.mubr.f32.mxu0 0.0
    %2194 = vmatmul.mubr.f32.gmra.mrb[0].mxu0 %v2127
    %v2195 = vpop.f32.mrb[0].mxu0
    %v2196 = vadd.f32 0.0, %v2195
    %v2197 = vpop.f32.mrb[0].mxu0
    %2198 = vdwg.mxu0
    %v2200 = vsel %vm219, %v1879, 0
    %2202 = vmatprep.subr.mxu0 0.0
    %2203 = vmatpush1.msra.mxu0 %v1703
    %2204 = vmatprep.subr.mxu0 0.0
    %2205 = vmatpush1.msra.mxu0 0.0
    %2206 = vmatprep.subr.mxu0 0.0
    %2207 = vmatpush1.msra.mxu0 0.0
    %2208 = vmatprep.subr.mxu0 0.0
    %2209 = vmatpush1.msra.mxu0 0.0
    %2210 = vmatprep.subr.mxu0 0.0
    %2211 = vmatpush1.msra.mxu0 0.0
    %2212 = vmatprep.subr.mxu0 0.0
    %2213 = vmatpush1.msra.mxu0 0.0
    %2214 = vmatprep.subr.mxu0 0.0
    %2215 = vmatpush1.msra.mxu0 0.0
    %2216 = vmatprep.subr.mxu0 0.0
    %2217 = vmatpush1.msra.mxu0 0.0
    %2218 = vmatprep.subr.mxu0 0.0
    %2219 = vmatpush1.msra.mxu0 0.0
    %2220 = vmatprep.subr.mxu0 0.0
    %2221 = vmatpush1.msra.mxu0 0.0
    %2222 = vmatprep.subr.mxu0 0.0
    %2223 = vmatpush1.msra.mxu0 0.0
    %2224 = vmatprep.subr.mxu0 0.0
    %2225 = vmatpush1.msra.mxu0 0.0
    %2226 = vmatprep.subr.mxu0 0.0
    %2227 = vmatpush1.msra.mxu0 0.0
    %2228 = vmatprep.subr.mxu0 0.0
    %2229 = vmatpush1.msra.mxu0 0.0
    %2230 = vmatprep.subr.mxu0 0.0
    %2231 = vmatpush1.msra.mxu0 0.0
    %2232 = vmatprep.subr.mxu0 0.0
    %2233 = vmatpush1.msra.mxu0 0.0
    %2234 = vmatprep.subr.mxu0 0.0
    %2235 = vmatpush1.msra.mxu0 0.0
    %2236 = vmatprep.subr.mxu0 0.0
    %2237 = vmatpush1.msra.mxu0 0.0
    %2238 = vmatprep.subr.mxu0 0.0
    %2239 = vmatpush1.msra.mxu0 0.0
    %2240 = vmatprep.subr.mxu0 0.0
    %2241 = vmatpush1.msra.mxu0 0.0
    %2242 = vmatprep.subr.mxu0 0.0
    %2243 = vmatpush1.msra.mxu0 0.0
    %2244 = vmatprep.subr.mxu0 0.0
    %2245 = vmatpush1.msra.mxu0 0.0
    %2246 = vmatprep.subr.mxu0 0.0
    %2247 = vmatpush1.msra.mxu0 0.0
    %2248 = vmatprep.subr.mxu0 0.0
    %2249 = vmatpush1.msra.mxu0 0.0
    %2250 = vmatprep.subr.mxu0 0.0
    %2251 = vmatpush1.msra.mxu0 0.0
    %2252 = vmatprep.subr.mxu0 0.0
    %2253 = vmatpush1.msra.mxu0 0.0
    %2254 = vmatprep.subr.mxu0 0.0
    %2255 = vmatpush1.msra.mxu0 0.0
    %2256 = vmatprep.subr.mxu0 0.0
    %2257 = vmatpush1.msra.mxu0 0.0
    %2258 = vmatprep.subr.mxu0 0.0
    %2259 = vmatpush1.msra.mxu0 0.0
    %2260 = vmatprep.subr.mxu0 0.0
    %2261 = vmatpush1.msra.mxu0 0.0
    %2262 = vmatprep.subr.mxu0 0.0
    %2263 = vmatpush1.msra.mxu0 0.0
    %2264 = vmatprep.subr.mxu0 0.0
    %2265 = vmatpush1.msra.mxu0 0.0
    %2266 = vmatprep.mubr.f32.mxu0 0.0
    %2267 = vmatmul.mubr.f32.gmra.mrb[0].mxu0 %v2200
    %v2268 = vpop.f32.mrb[0].mxu0
    %v2269 = vadd.f32 %v2123, %v2268
    %v2270 = vpop.f32.mrb[0].mxu0
    %2271 = vdwg.mxu0
    %v2273 = vsel %vm219, %v1880, 0
    %2275 = vmatprep.subr.mxu0 0.0
    %2276 = vmatpush1.msra.mxu0 %v1704
    %2277 = vmatprep.subr.mxu0 0.0
    %2278 = vmatpush1.msra.mxu0 0.0
    %2279 = vmatprep.subr.mxu0 0.0
    %2280 = vmatpush1.msra.mxu0 0.0
    %2281 = vmatprep.subr.mxu0 0.0
    %2282 = vmatpush1.msra.mxu0 0.0
    %2283 = vmatprep.subr.mxu0 0.0
    %2284 = vmatpush1.msra.mxu0 0.0
    %2285 = vmatprep.subr.mxu0 0.0
    %2286 = vmatpush1.msra.mxu0 0.0
    %2287 = vmatprep.subr.mxu0 0.0
    %2288 = vmatpush1.msra.mxu0 0.0
    %2289 = vmatprep.subr.mxu0 0.0
    %2290 = vmatpush1.msra.mxu0 0.0
    %2291 = vmatprep.subr.mxu0 0.0
    %2292 = vmatpush1.msra.mxu0 0.0
    %2293 = vmatprep.subr.mxu0 0.0
    %2294 = vmatpush1.msra.mxu0 0.0
    %2295 = vmatprep.subr.mxu0 0.0
    %2296 = vmatpush1.msra.mxu0 0.0
    %2297 = vmatprep.subr.mxu0 0.0
    %2298 = vmatpush1.msra.mxu0 0.0
    %2299 = vmatprep.subr.mxu0 0.0
    %2300 = vmatpush1.msra.mxu0 0.0
    %2301 = vmatprep.subr.mxu0 0.0
    %2302 = vmatpush1.msra.mxu0 0.0
    %2303 = vmatprep.subr.mxu0 0.0
    %2304 = vmatpush1.msra.mxu0 0.0
    %2305 = vmatprep.subr.mxu0 0.0
    %2306 = vmatpush1.msra.mxu0 0.0
    %2307 = vmatprep.subr.mxu0 0.0
    %2308 = vmatpush1.msra.mxu0 0.0
    %2309 = vmatprep.subr.mxu0 0.0
    %2310 = vmatpush1.msra.mxu0 0.0
    %2311 = vmatprep.subr.mxu0 0.0
    %2312 = vmatpush1.msra.mxu0 0.0
    %2313 = vmatprep.subr.mxu0 0.0
    %2314 = vmatpush1.msra.mxu0 0.0
    %2315 = vmatprep.subr.mxu0 0.0
    %2316 = vmatpush1.msra.mxu0 0.0
    %2317 = vmatprep.subr.mxu0 0.0
    %2318 = vmatpush1.msra.mxu0 0.0
    %2319 = vmatprep.subr.mxu0 0.0
    %2320 = vmatpush1.msra.mxu0 0.0
    %2321 = vmatprep.subr.mxu0 0.0
    %2322 = vmatpush1.msra.mxu0 0.0
    %2323 = vmatprep.subr.mxu0 0.0
    %2324 = vmatpush1.msra.mxu0 0.0
    %2325 = vmatprep.subr.mxu0 0.0
    %2326 = vmatpush1.msra.mxu0 0.0
    %2327 = vmatprep.subr.mxu0 0.0
    %2328 = vmatpush1.msra.mxu0 0.0
    %2329 = vmatprep.subr.mxu0 0.0
    %2330 = vmatpush1.msra.mxu0 0.0
    %2331 = vmatprep.subr.mxu0 0.0
    %2332 = vmatpush1.msra.mxu0 0.0
    %2333 = vmatprep.subr.mxu0 0.0
    %2334 = vmatpush1.msra.mxu0 0.0
    %2335 = vmatprep.subr.mxu0 0.0
    %2336 = vmatpush1.msra.mxu0 0.0
    %2337 = vmatprep.subr.mxu0 0.0
    %2338 = vmatpush1.msra.mxu0 0.0
    %2339 = vmatprep.mubr.f32.mxu0 0.0
    %2340 = vmatmul.mubr.f32.gmra.mrb[0].mxu0 %v2273
    %v2341 = vpop.f32.mrb[0].mxu0
    %v2342 = vadd.f32 %v2196, %v2341
    %v2343 = vpop.f32.mrb[0].mxu0
    %2344 = vdwg.mxu0
    %v2345 = vmul.f32 %v1683, %v37
    %v2346 = vmul.f32 %v1684, %v37
    %v2348 = vsel %vm64, %v2345, 0
    %2350 = vmatprep.subr.mxu0 0.0
    %2351 = vmatpush1.xpose.msra.mxu0 %v2348
    %2352 = vmatprep.subr.mxu0 0.0
    %2353 = vmatpush1.xpose.msra.mxu0 0.0
    %2354 = vmatprep.subr.mxu0 0.0
    %2355 = vmatpush1.xpose.msra.mxu0 0.0
    %2356 = vmatprep.subr.mxu0 0.0
    %2357 = vmatpush1.xpose.msra.mxu0 0.0
    %2358 = vmatprep.subr.mxu0 0.0
    %2359 = vmatpush1.xpose.msra.mxu0 0.0
    %2360 = vmatprep.subr.mxu0 0.0
    %2361 = vmatpush1.xpose.msra.mxu0 0.0
    %2362 = vmatprep.subr.mxu0 0.0
    %2363 = vmatpush1.xpose.msra.mxu0 0.0
    %2364 = vmatprep.subr.mxu0 0.0
    %2365 = vmatpush1.xpose.msra.mxu0 0.0
    %2366 = vmatprep.subr.mxu0 0.0
    %2367 = vmatpush1.xpose.msra.mxu0 0.0
    %2368 = vmatprep.subr.mxu0 0.0
    %2369 = vmatpush1.xpose.msra.mxu0 0.0
    %2370 = vmatprep.subr.mxu0 0.0
    %2371 = vmatpush1.xpose.msra.mxu0 0.0
    %2372 = vmatprep.subr.mxu0 0.0
    %2373 = vmatpush1.xpose.msra.mxu0 0.0
    %2374 = vmatprep.subr.mxu0 0.0
    %2375 = vmatpush1.xpose.msra.mxu0 0.0
    %2376 = vmatprep.subr.mxu0 0.0
    %2377 = vmatpush1.xpose.msra.mxu0 0.0
    %2378 = vmatprep.subr.mxu0 0.0
    %2379 = vmatpush1.xpose.msra.mxu0 0.0
    %2380 = vmatprep.subr.mxu0 0.0
    %2381 = vmatpush1.xpose.msra.mxu0 0.0
    %2382 = vmatprep.subr.mxu0 0.0
    %2383 = vmatpush1.xpose.msra.mxu0 0.0
    %2384 = vmatprep.subr.mxu0 0.0
    %2385 = vmatpush1.xpose.msra.mxu0 0.0
    %2386 = vmatprep.subr.mxu0 0.0
    %2387 = vmatpush1.xpose.msra.mxu0 0.0
    %2388 = vmatprep.subr.mxu0 0.0
    %2389 = vmatpush1.xpose.msra.mxu0 0.0
    %2390 = vmatprep.subr.mxu0 0.0
    %2391 = vmatpush1.xpose.msra.mxu0 0.0
    %2392 = vmatprep.subr.mxu0 0.0
    %2393 = vmatpush1.xpose.msra.mxu0 0.0
    %2394 = vmatprep.subr.mxu0 0.0
    %2395 = vmatpush1.xpose.msra.mxu0 0.0
    %2396 = vmatprep.subr.mxu0 0.0
    %2397 = vmatpush1.xpose.msra.mxu0 0.0
    %2398 = vmatprep.subr.mxu0 0.0
    %2399 = vmatpush1.xpose.msra.mxu0 0.0
    %2400 = vmatprep.subr.mxu0 0.0
    %2401 = vmatpush1.xpose.msra.mxu0 0.0
    %2402 = vmatprep.subr.mxu0 0.0
    %2403 = vmatpush1.xpose.msra.mxu0 0.0
    %2404 = vmatprep.subr.mxu0 0.0
    %2405 = vmatpush1.xpose.msra.mxu0 0.0
    %2406 = vmatprep.subr.mxu0 0.0
    %2407 = vmatpush1.xpose.msra.mxu0 0.0
    %2408 = vmatprep.subr.mxu0 0.0
    %2409 = vmatpush1.xpose.msra.mxu0 0.0
    %2410 = vmatprep.subr.mxu0 0.0
    %2411 = vmatpush1.xpose.msra.mxu0 0.0
    %2412 = vmatprep.subr.mxu0 0.0
    %2413 = vmatpush1.xpose.msra.mxu0 0.0
    %2414 = vmatprep.mubr.f32.mxu0 0.0
    %2415 = vmatmul.mubr.f32.gmra.mrb[0].mxu0 %v1706
    %v2416 = vpop.f32.mrb[0].mxu0
    %v2417 = vadd.f32 0.0, %v2416
    %v2418 = vpop.f32.mrb[0].mxu0
    %2419 = vdwg.mxu0
    %v2421 = vsel %vm64, %v2346, 0
    %2423 = vmatprep.subr.mxu0 0.0
    %2424 = vmatpush1.xpose.msra.mxu0 %v2421
    %2425 = vmatprep.subr.mxu0 0.0
    %2426 = vmatpush1.xpose.msra.mxu0 0.0
    %2427 = vmatprep.subr.mxu0 0.0
    %2428 = vmatpush1.xpose.msra.mxu0 0.0
    %2429 = vmatprep.subr.mxu0 0.0
    %2430 = vmatpush1.xpose.msra.mxu0 0.0
    %2431 = vmatprep.subr.mxu0 0.0
    %2432 = vmatpush1.xpose.msra.mxu0 0.0
    %2433 = vmatprep.subr.mxu0 0.0
    %2434 = vmatpush1.xpose.msra.mxu0 0.0
    %2435 = vmatprep.subr.mxu0 0.0
    %2436 = vmatpush1.xpose.msra.mxu0 0.0
    %2437 = vmatprep.subr.mxu0 0.0
    %2438 = vmatpush1.xpose.msra.mxu0 0.0
    %2439 = vmatprep.subr.mxu0 0.0
    %2440 = vmatpush1.xpose.msra.mxu0 0.0
    %2441 = vmatprep.subr.mxu0 0.0
    %2442 = vmatpush1.xpose.msra.mxu0 0.0
    %2443 = vmatprep.subr.mxu0 0.0
    %2444 = vmatpush1.xpose.msra.mxu0 0.0
    %2445 = vmatprep.subr.mxu0 0.0
    %2446 = vmatpush1.xpose.msra.mxu0 0.0
    %2447 = vmatprep.subr.mxu0 0.0
    %2448 = vmatpush1.xpose.msra.mxu0 0.0
    %2449 = vmatprep.subr.mxu0 0.0
    %2450 = vmatpush1.xpose.msra.mxu0 0.0
    %2451 = vmatprep.subr.mxu0 0.0
    %2452 = vmatpush1.xpose.msra.mxu0 0.0
    %2453 = vmatprep.subr.mxu0 0.0
    %2454 = vmatpush1.xpose.msra.mxu0 0.0
    %2455 = vmatprep.subr.mxu0 0.0
    %2456 = vmatpush1.xpose.msra.mxu0 0.0
    %2457 = vmatprep.subr.mxu0 0.0
    %2458 = vmatpush1.xpose.msra.mxu0 0.0
    %2459 = vmatprep.subr.mxu0 0.0
    %2460 = vmatpush1.xpose.msra.mxu0 0.0
    %2461 = vmatprep.subr.mxu0 0.0
    %2462 = vmatpush1.xpose.msra.mxu0 0.0
    %2463 = vmatprep.subr.mxu0 0.0
    %2464 = vmatpush1.xpose.msra.mxu0 0.0
    %2465 = vmatprep.subr.mxu0 0.0
    %2466 = vmatpush1.xpose.msra.mxu0 0.0
    %2467 = vmatprep.subr.mxu0 0.0
    %2468 = vmatpush1.xpose.msra.mxu0 0.0
    %2469 = vmatprep.subr.mxu0 0.0
    %2470 = vmatpush1.xpose.msra.mxu0 0.0
    %2471 = vmatprep.subr.mxu0 0.0
    %2472 = vmatpush1.xpose.msra.mxu0 0.0
    %2473 = vmatprep.subr.mxu0 0.0
    %2474 = vmatpush1.xpose.msra.mxu0 0.0
    %2475 = vmatprep.subr.mxu0 0.0
    %2476 = vmatpush1.xpose.msra.mxu0 0.0
    %2477 = vmatprep.subr.mxu0 0.0
    %2478 = vmatpush1.xpose.msra.mxu0 0.0
    %2479 = vmatprep.subr.mxu0 0.0
    %2480 = vmatpush1.xpose.msra.mxu0 0.0
    %2481 = vmatprep.subr.mxu0 0.0
    %2482 = vmatpush1.xpose.msra.mxu0 0.0
    %2483 = vmatprep.subr.mxu0 0.0
    %2484 = vmatpush1.xpose.msra.mxu0 0.0
    %2485 = vmatprep.subr.mxu0 0.0
    %2486 = vmatpush1.xpose.msra.mxu0 0.0
    %2487 = vmatprep.mubr.f32.mxu0 0.0
    %2488 = vmatmul.mubr.f32.gmra.mrb[0].mxu0 %v1782
    %v2489 = vpop.f32.mrb[0].mxu0
    %v2490 = vadd.f32 0.0, %v2489
    %v2491 = vpop.f32.mrb[0].mxu0
    %2492 = vdwg.mxu0
    %v2493 = vmul.f32 %v2417, 0.17677669
    %v2494 = vmul.f32 %v2490, 0.17677669
    %v2495 = vsel %vm219, %v2493, -inf
    %2496 = vmax.xlane.f32.xlu0 %v2495
    %v2497 = vpop.xlane.xlu0 %2496
    %v2498 = vsel %vm219, %v2494, -inf
    %2499 = vmax.xlane.f32.xlu0 %v2498
    %v2500 = vpop.xlane.xlu0 %2499
    %v2501 = vsub.f32 %v2493, %v2497
    %v2502 = vsub.f32 %v2494, %v2500
    %v2503 = vmul.f32 %v2501, 1.442695
    %v2504 = vpow.pop %v2503
    %v2505 = vmul.f32 %v2502, 1.442695
    %v2506 = vpow.pop %v2505
    %v2507 = vsel %vm219, %v2504, 0.0
    %2508 = vadd.xlane.f32.xlu0 %v2507
    %v2509 = vpop.xlane.xlu0 %2508
    %v2510 = vsel %vm219, %v2506, 0.0
    %2511 = vadd.xlane.f32.xlu0 %v2510
    %v2512 = vpop.xlane.xlu0 %2511
    %v2513 = vrcp.pop %v2509
    %v2514 = vrcp.pop %v2512
    %v2515 = vmul.f32 %v2504, %v2513
    %v2516 = vmul.f32 %v2506, %v2514
    %v2518 = vsel %vm219, %v2515, 0
    %2520 = vmatprep.subr.mxu0 0.0
    %2521 = vmatpush1.msra.mxu0 %v2345
    %2522 = vmatprep.subr.mxu0 0.0
    %2523 = vmatpush1.msra.mxu0 0.0
    %2524 = vmatprep.subr.mxu0 0.0
    %2525 = vmatpush1.msra.mxu0 0.0
    %2526 = vmatprep.subr.mxu0 0.0
    %2527 = vmatpush1.msra.mxu0 0.0
    %2528 = vmatprep.subr.mxu0 0.0
    %2529 = vmatpush1.msra.mxu0 0.0
    %2530 = vmatprep.subr.mxu0 0.0
    %2531 = vmatpush1.msra.mxu0 0.0
    %2532 = vmatprep.subr.mxu0 0.0
    %2533 = vmatpush1.msra.mxu0 0.0
    %2534 = vmatprep.subr.mxu0 0.0
    %2535 = vmatpush1.msra.mxu0 0.0
    %2536 = vmatprep.subr.mxu0 0.0
    %2537 = vmatpush1.msra.mxu0 0.0
    %2538 = vmatprep.subr.mxu0 0.0
    %2539 = vmatpush1.msra.mxu0 0.0
    %2540 = vmatprep.subr.mxu0 0.0
    %2541 = vmatpush1.msra.mxu0 0.0
    %2542 = vmatprep.subr.mxu0 0.0
    %2543 = vmatpush1.msra.mxu0 0.0
    %2544 = vmatprep.subr.mxu0 0.0
    %2545 = vmatpush1.msra.mxu0 0.0
    %2546 = vmatprep.subr.mxu0 0.0
    %2547 = vmatpush1.msra.mxu0 0.0
    %2548 = vmatprep.subr.mxu0 0.0
    %2549 = vmatpush1.msra.mxu0 0.0
    %2550 = vmatprep.subr.mxu0 0.0
    %2551 = vmatpush1.msra.mxu0 0.0
    %2552 = vmatprep.subr.mxu0 0.0
    %2553 = vmatpush1.msra.mxu0 0.0
    %2554 = vmatprep.subr.mxu0 0.0
    %2555 = vmatpush1.msra.mxu0 0.0
    %2556 = vmatprep.subr.mxu0 0.0
    %2557 = vmatpush1.msra.mxu0 0.0
    %2558 = vmatprep.subr.mxu0 0.0
    %2559 = vmatpush1.msra.mxu0 0.0
    %2560 = vmatprep.subr.mxu0 0.0
    %2561 = vmatpush1.msra.mxu0 0.0
    %2562 = vmatprep.subr.mxu0 0.0
    %2563 = vmatpush1.msra.mxu0 0.0
    %2564 = vmatprep.subr.mxu0 0.0
    %2565 = vmatpush1.msra.mxu0 0.0
    %2566 = vmatprep.subr.mxu0 0.0
    %2567 = vmatpush1.msra.mxu0 0.0
    %2568 = vmatprep.subr.mxu0 0.0
    %2569 = vmatpush1.msra.mxu0 0.0
    %2570 = vmatprep.subr.mxu0 0.0
    %2571 = vmatpush1.msra.mxu0 0.0
    %2572 = vmatprep.subr.mxu0 0.0
    %2573 = vmatpush1.msra.mxu0 0.0
    %2574 = vmatprep.subr.mxu0 0.0
    %2575 = vmatpush1.msra.mxu0 0.0
    %2576 = vmatprep.subr.mxu0 0.0
    %2577 = vmatpush1.msra.mxu0 0.0
    %2578 = vmatprep.subr.mxu0 0.0
    %2579 = vmatpush1.msra.mxu0 0.0
    %2580 = vmatprep.subr.mxu0 0.0
    %2581 = vmatpush1.msra.mxu0 0.0
    %2582 = vmatprep.subr.mxu0 0.0
    %2583 = vmatpush1.msra.mxu0 0.0
    %2584 = vmatprep.mubr.f32.mxu0 0.0
    %2585 = vmatmul.mubr.f32.gmra.mrb[0].mxu0 %v2518
    %v2586 = vpop.f32.mrb[0].mxu0
    %v2587 = vadd.f32 0.0, %v2586
    %v2588 = vpop.f32.mrb[0].mxu0
    %2589 = vdwg.mxu0
    %v2591 = vsel %vm219, %v2516, 0
    %2593 = vmatprep.subr.mxu0 0.0
    %2594 = vmatpush1.msra.mxu0 %v2346
    %2595 = vmatprep.subr.mxu0 0.0
    %2596 = vmatpush1.msra.mxu0 0.0
    %2597 = vmatprep.subr.mxu0 0.0
    %2598 = vmatpush1.msra.mxu0 0.0
    %2599 = vmatprep.subr.mxu0 0.0
    %2600 = vmatpush1.msra.mxu0 0.0
    %2601 = vmatprep.subr.mxu0 0.0
    %2602 = vmatpush1.msra.mxu0 0.0
    %2603 = vmatprep.subr.mxu0 0.0
    %2604 = vmatpush1.msra.mxu0 0.0
    %2605 = vmatprep.subr.mxu0 0.0
    %2606 = vmatpush1.msra.mxu0 0.0
    %2607 = vmatprep.subr.mxu0 0.0
    %2608 = vmatpush1.msra.mxu0 0.0
    %2609 = vmatprep.subr.mxu0 0.0
    %2610 = vmatpush1.msra.mxu0 0.0
    %2611 = vmatprep.subr.mxu0 0.0
    %2612 = vmatpush1.msra.mxu0 0.0
    %2613 = vmatprep.subr.mxu0 0.0
    %2614 = vmatpush1.msra.mxu0 0.0
    %2615 = vmatprep.subr.mxu0 0.0
    %2616 = vmatpush1.msra.mxu0 0.0
    %2617 = vmatprep.subr.mxu0 0.0
    %2618 = vmatpush1.msra.mxu0 0.0
    %2619 = vmatprep.subr.mxu0 0.0
    %2620 = vmatpush1.msra.mxu0 0.0
    %2621 = vmatprep.subr.mxu0 0.0
    %2622 = vmatpush1.msra.mxu0 0.0
    %2623 = vmatprep.subr.mxu0 0.0
    %2624 = vmatpush1.msra.mxu0 0.0
    %2625 = vmatprep.subr.mxu0 0.0
    %2626 = vmatpush1.msra.mxu0 0.0
    %2627 = vmatprep.subr.mxu0 0.0
    %2628 = vmatpush1.msra.mxu0 0.0
    %2629 = vmatprep.subr.mxu0 0.0
    %2630 = vmatpush1.msra.mxu0 0.0
    %2631 = vmatprep.subr.mxu0 0.0
    %2632 = vmatpush1.msra.mxu0 0.0
    %2633 = vmatprep.subr.mxu0 0.0
    %2634 = vmatpush1.msra.mxu0 0.0
    %2635 = vmatprep.subr.mxu0 0.0
    %2636 = vmatpush1.msra.mxu0 0.0
    %2637 = vmatprep.subr.mxu0 0.0
    %2638 = vmatpush1.msra.mxu0 0.0
    %2639 = vmatprep.subr.mxu0 0.0
    %2640 = vmatpush1.msra.mxu0 0.0
    %2641 = vmatprep.subr.mxu0 0.0
    %2642 = vmatpush1.msra.mxu0 0.0
    %2643 = vmatprep.subr.mxu0 0.0
    %2644 = vmatpush1.msra.mxu0 0.0
    %2645 = vmatprep.subr.mxu0 0.0
    %2646 = vmatpush1.msra.mxu0 0.0
    %2647 = vmatprep.subr.mxu0 0.0
    %2648 = vmatpush1.msra.mxu0 0.0
    %2649 = vmatprep.subr.mxu0 0.0
    %2650 = vmatpush1.msra.mxu0 0.0
    %2651 = vmatprep.subr.mxu0 0.0
    %2652 = vmatpush1.msra.mxu0 0.0
    %2653 = vmatprep.subr.mxu0 0.0
    %2654 = vmatpush1.msra.mxu0 0.0
    %2655 = vmatprep.subr.mxu0 0.0
    %2656 = vmatpush1.msra.mxu0 0.0
    %2657 = vmatprep.mubr.f32.mxu0 0.0
    %2658 = vmatmul.mubr.f32.gmra.mrb[0].mxu0 %v2591
    %v2659 = vpop.f32.mrb[0].mxu0
    %v2660 = vadd.f32 0.0, %v2659
    %v2661 = vpop.f32.mrb[0].mxu0
    %2662 = vdwg.mxu0
    %v2663 = vadd.f32 %v2269, %v2587
    %v2664 = vadd.f32 %v2342, %v2660
    %v2665 = vmul.f32 %v1683, %v42
    %v2666 = vmul.f32 %v1684, %v42
    %v2668 = vsel %vm64, %v2665, 0
    %2670 = vmatprep.subr.mxu0 0.0
    %2671 = vmatpush1.xpose.msra.mxu0 %v2668
    %2672 = vmatprep.subr.mxu0 0.0
    %2673 = vmatpush1.xpose.msra.mxu0 0.0
    %2674 = vmatprep.subr.mxu0 0.0
    %2675 = vmatpush1.xpose.msra.mxu0 0.0
    %2676 = vmatprep.subr.mxu0 0.0
    %2677 = vmatpush1.xpose.msra.mxu0 0.0
    %2678 = vmatprep.subr.mxu0 0.0
    %2679 = vmatpush1.xpose.msra.mxu0 0.0
    %2680 = vmatprep.subr.mxu0 0.0
    %2681 = vmatpush1.xpose.msra.mxu0 0.0
    %2682 = vmatprep.subr.mxu0 0.0
    %2683 = vmatpush1.xpose.msra.mxu0 0.0
    %2684 = vmatprep.subr.mxu0 0.0
    %2685 = vmatpush1.xpose.msra.mxu0 0.0
    %2686 = vmatprep.subr.mxu0 0.0
    %2687 = vmatpush1.xpose.msra.mxu0 0.0
    %2688 = vmatprep.subr.mxu0 0.0
    %2689 = vmatpush1.xpose.msra.mxu0 0.0
    %2690 = vmatprep.subr.mxu0 0.0
    %2691 = vmatpush1.xpose.msra.mxu0 0.0
    %2692 = vmatprep.subr.mxu0 0.0
    %2693 = vmatpush1.xpose.msra.mxu0 0.0
    %2694 = vmatprep.subr.mxu0 0.0
    %2695 = vmatpush1.xpose.msra.mxu0 0.0
    %2696 = vmatprep.subr.mxu0 0.0
    %2697 = vmatpush1.xpose.msra.mxu0 0.0
    %2698 = vmatprep.subr.mxu0 0.0
    %2699 = vmatpush1.xpose.msra.mxu0 0.0
    %2700 = vmatprep.subr.mxu0 0.0
    %2701 = vmatpush1.xpose.msra.mxu0 0.0
    %2702 = vmatprep.subr.mxu0 0.0
    %2703 = vmatpush1.xpose.msra.mxu0 0.0
    %2704 = vmatprep.subr.mxu0 0.0
    %2705 = vmatpush1.xpose.msra.mxu0 0.0
    %2706 = vmatprep.subr.mxu0 0.0
    %2707 = vmatpush1.xpose.msra.mxu0 0.0
    %2708 = vmatprep.subr.mxu0 0.0
    %2709 = vmatpush1.xpose.msra.mxu0 0.0
    %2710 = vmatprep.subr.mxu0 0.0
    %2711 = vmatpush1.xpose.msra.mxu0 0.0
    %2712 = vmatprep.subr.mxu0 0.0
    %2713 = vmatpush1.xpose.msra.mxu0 0.0
    %2714 = vmatprep.subr.mxu0 0.0
    %2715 = vmatpush1.xpose.msra.mxu0 0.0
    %2716 = vmatprep.subr.mxu0 0.0
    %2717 = vmatpush1.xpose.msra.mxu0 0.0
    %2718 = vmatprep.subr.mxu0 0.0
    %2719 = vmatpush1.xpose.msra.mxu0 0.0
    %2720 = vmatprep.subr.mxu0 0.0
    %2721 = vmatpush1.xpose.msra.mxu0 0.0
    %2722 = vmatprep.subr.mxu0 0.0
    %2723 = vmatpush1.xpose.msra.mxu0 0.0
    %2724 = vmatprep.subr.mxu0 0.0
    %2725 = vmatpush1.xpose.msra.mxu0 0.0
    %2726 = vmatprep.subr.mxu0 0.0
    %2727 = vmatpush1.xpose.msra.mxu0 0.0
    %2728 = vmatprep.subr.mxu0 0.0
    %2729 = vmatpush1.xpose.msra.mxu0 0.0
    %2730 = vmatprep.subr.mxu0 0.0
    %2731 = vmatpush1.xpose.msra.mxu0 0.0
    %2732 = vmatprep.subr.mxu0 0.0
    %2733 = vmatpush1.xpose.msra.mxu0 0.0
    %2734 = vmatprep.mubr.f32.mxu0 0.0
    %2735 = vmatmul.mubr.f32.gmra.mrb[0].mxu0 %v1706
    %v2736 = vpop.f32.mrb[0].mxu0
    %v2737 = vadd.f32 0.0, %v2736
    %v2738 = vpop.f32.mrb[0].mxu0
    %2739 = vdwg.mxu0
    %v2741 = vsel %vm64, %v2666, 0
    %2743 = vmatprep.subr.mxu0 0.0
    %2744 = vmatpush1.xpose.msra.mxu0 %v2741
    %2745 = vmatprep.subr.mxu0 0.0
    %2746 = vmatpush1.xpose.msra.mxu0 0.0
    %2747 = vmatprep.subr.mxu0 0.0
    %2748 = vmatpush1.xpose.msra.mxu0 0.0
    %2749 = vmatprep.subr.mxu0 0.0
    %2750 = vmatpush1.xpose.msra.mxu0 0.0
    %2751 = vmatprep.subr.mxu0 0.0
    %2752 = vmatpush1.xpose.msra.mxu0 0.0
    %2753 = vmatprep.subr.mxu0 0.0
    %2754 = vmatpush1.xpose.msra.mxu0 0.0
    %2755 = vmatprep.subr.mxu0 0.0
    %2756 = vmatpush1.xpose.msra.mxu0 0.0
    %2757 = vmatprep.subr.mxu0 0.0
    %2758 = vmatpush1.xpose.msra.mxu0 0.0
    %2759 = vmatprep.subr.mxu0 0.0
    %2760 = vmatpush1.xpose.msra.mxu0 0.0
    %2761 = vmatprep.subr.mxu0 0.0
    %2762 = vmatpush1.xpose.msra.mxu0 0.0
    %2763 = vmatprep.subr.mxu0 0.0
    %2764 = vmatpush1.xpose.msra.mxu0 0.0
    %2765 = vmatprep.subr.mxu0 0.0
    %2766 = vmatpush1.xpose.msra.mxu0 0.0
    %2767 = vmatprep.subr.mxu0 0.0
    %2768 = vmatpush1.xpose.msra.mxu0 0.0
    %2769 = vmatprep.subr.mxu0 0.0
    %2770 = vmatpush1.xpose.msra.mxu0 0.0
    %2771 = vmatprep.subr.mxu0 0.0
    %2772 = vmatpush1.xpose.msra.mxu0 0.0
    %2773 = vmatprep.subr.mxu0 0.0
    %2774 = vmatpush1.xpose.msra.mxu0 0.0
    %2775 = vmatprep.subr.mxu0 0.0
    %2776 = vmatpush1.xpose.msra.mxu0 0.0
    %2777 = vmatprep.subr.mxu0 0.0
    %2778 = vmatpush1.xpose.msra.mxu0 0.0
    %2779 = vmatprep.subr.mxu0 0.0
    %2780 = vmatpush1.xpose.msra.mxu0 0.0
    %2781 = vmatprep.subr.mxu0 0.0
    %2782 = vmatpush1.xpose.msra.mxu0 0.0
    %2783 = vmatprep.subr.mxu0 0.0
    %2784 = vmatpush1.xpose.msra.mxu0 0.0
    %2785 = vmatprep.subr.mxu0 0.0
    %2786 = vmatpush1.xpose.msra.mxu0 0.0
    %2787 = vmatprep.subr.mxu0 0.0
    %2788 = vmatpush1.xpose.msra.mxu0 0.0
    %2789 = vmatprep.subr.mxu0 0.0
    %2790 = vmatpush1.xpose.msra.mxu0 0.0
    %2791 = vmatprep.subr.mxu0 0.0
    %2792 = vmatpush1.xpose.msra.mxu0 0.0
    %2793 = vmatprep.subr.mxu0 0.0
    %2794 = vmatpush1.xpose.msra.mxu0 0.0
    %2795 = vmatprep.subr.mxu0 0.0
    %2796 = vmatpush1.xpose.msra.mxu0 0.0
    %2797 = vmatprep.subr.mxu0 0.0
    %2798 = vmatpush1.xpose.msra.mxu0 0.0
    %2799 = vmatprep.subr.mxu0 0.0
    %2800 = vmatpush1.xpose.msra.mxu0 0.0
    %2801 = vmatprep.subr.mxu0 0.0
    %2802 = vmatpush1.xpose.msra.mxu0 0.0
    %2803 = vmatprep.subr.mxu0 0.0
    %2804 = vmatpush1.xpose.msra.mxu0 0.0
    %2805 = vmatprep.subr.mxu0 0.0
    %2806 = vmatpush1.xpose.msra.mxu0 0.0
    %2807 = vmatprep.mubr.f32.mxu0 0.0
    %2808 = vmatmul.mubr.f32.gmra.mrb[0].mxu0 %v1782
    %v2809 = vpop.f32.mrb[0].mxu0
    %v2810 = vadd.f32 0.0, %v2809
    %v2811 = vpop.f32.mrb[0].mxu0
    %2812 = vdwg.mxu0
    %v2813 = vmul.f32 %v2737, 0.17677669
    %v2814 = vmul.f32 %v2810, 0.17677669
    %v2815 = vsel %vm219, %v2813, -inf
    %2816 = vmax.xlane.f32.xlu0 %v2815
    %v2817 = vpop.xlane.xlu0 %2816
    %v2818 = vsel %vm219, %v2814, -inf
    %2819 = vmax.xlane.f32.xlu0 %v2818
    %v2820 = vpop.xlane.xlu0 %2819
    %v2821 = vsub.f32 %v2813, %v2817
    %v2822 = vsub.f32 %v2814, %v2820
    %v2823 = vmul.f32 %v2821, 1.442695
    %v2824 = vpow.pop %v2823
    %v2825 = vmul.f32 %v2822, 1.442695
    %v2826 = vpow.pop %v2825
    %v2827 = vsel %vm219, %v2824, 0.0
    %2828 = vadd.xlane.f32.xlu0 %v2827
    %v2829 = vpop.xlane.xlu0 %2828
    %v2830 = vsel %vm219, %v2826, 0.0
    %2831 = vadd.xlane.f32.xlu0 %v2830
    %v2832 = vpop.xlane.xlu0 %2831
    %v2833 = vrcp.pop %v2829
    %v2834 = vrcp.pop %v2832
    %v2835 = vmul.f32 %v2824, %v2833
    %v2836 = vmul.f32 %v2826, %v2834
    %v2838 = vsel %vm219, %v2835, 0
    %2840 = vmatprep.subr.mxu0 0.0
    %2841 = vmatpush1.msra.mxu0 %v2665
    %2842 = vmatprep.subr.mxu0 0.0
    %2843 = vmatpush1.msra.mxu0 0.0
    %2844 = vmatprep.subr.mxu0 0.0
    %2845 = vmatpush1.msra.mxu0 0.0
    %2846 = vmatprep.subr.mxu0 0.0
    %2847 = vmatpush1.msra.mxu0 0.0
    %2848 = vmatprep.subr.mxu0 0.0
    %2849 = vmatpush1.msra.mxu0 0.0
    %2850 = vmatprep.subr.mxu0 0.0
    %2851 = vmatpush1.msra.mxu0 0.0
    %2852 = vmatprep.subr.mxu0 0.0
    %2853 = vmatpush1.msra.mxu0 0.0
    %2854 = vmatprep.subr.mxu0 0.0
    %2855 = vmatpush1.msra.mxu0 0.0
    %2856 = vmatprep.subr.mxu0 0.0
    %2857 = vmatpush1.msra.mxu0 0.0
    %2858 = vmatprep.subr.mxu0 0.0
    %2859 = vmatpush1.msra.mxu0 0.0
    %2860 = vmatprep.subr.mxu0 0.0
    %2861 = vmatpush1.msra.mxu0 0.0
    %2862 = vmatprep.subr.mxu0 0.0
    %2863 = vmatpush1.msra.mxu0 0.0
    %2864 = vmatprep.subr.mxu0 0.0
    %2865 = vmatpush1.msra.mxu0 0.0
    %2866 = vmatprep.subr.mxu0 0.0
    %2867 = vmatpush1.msra.mxu0 0.0
    %2868 = vmatprep.subr.mxu0 0.0
    %2869 = vmatpush1.msra.mxu0 0.0
    %2870 = vmatprep.subr.mxu0 0.0
    %2871 = vmatpush1.msra.mxu0 0.0
    %2872 = vmatprep.subr.mxu0 0.0
    %2873 = vmatpush1.msra.mxu0 0.0
    %2874 = vmatprep.subr.mxu0 0.0
    %2875 = vmatpush1.msra.mxu0 0.0
    %2876 = vmatprep.subr.mxu0 0.0
    %2877 = vmatpush1.msra.mxu0 0.0
    %2878 = vmatprep.subr.mxu0 0.0
    %2879 = vmatpush1.msra.mxu0 0.0
    %2880 = vmatprep.subr.mxu0 0.0
    %2881 = vmatpush1.msra.mxu0 0.0
    %2882 = vmatprep.subr.mxu0 0.0
    %2883 = vmatpush1.msra.mxu0 0.0
    %2884 = vmatprep.subr.mxu0 0.0
    %2885 = vmatpush1.msra.mxu0 0.0
    %2886 = vmatprep.subr.mxu0 0.0
    %2887 = vmatpush1.msra.mxu0 0.0
    %2888 = vmatprep.subr.mxu0 0.0
    %2889 = vmatpush1.msra.mxu0 0.0
    %2890 = vmatprep.subr.mxu0 0.0
    %2891 = vmatpush1.msra.mxu0 0.0
    %2892 = vmatprep.subr.mxu0 0.0
    %2893 = vmatpush1.msra.mxu0 0.0
    %2894 = vmatprep.subr.mxu0 0.0
    %2895 = vmatpush1.msra.mxu0 0.0
    %2896 = vmatprep.subr.mxu0 0.0
    %2897 = vmatpush1.msra.mxu0 0.0
    %2898 = vmatprep.subr.mxu0 0.0
    %2899 = vmatpush1.msra.mxu0 0.0
    %2900 = vmatprep.subr.mxu0 0.0
    %2901 = vmatpush1.msra.mxu0 0.0
    %2902 = vmatprep.subr.mxu0 0.0
    %2903 = vmatpush1.msra.mxu0 0.0
    %2904 = vmatprep.mubr.f32.mxu0 0.0
    %2905 = vmatmul.mubr.f32.gmra.mrb[0].mxu0 %v2838
    %v2906 = vpop.f32.mrb[0].mxu0
    %v2907 = vadd.f32 0.0, %v2906
    %v2908 = vpop.f32.mrb[0].mxu0
    %2909 = vdwg.mxu0
    %v2911 = vsel %vm219, %v2836, 0
    %2913 = vmatprep.subr.mxu0 0.0
    %2914 = vmatpush1.msra.mxu0 %v2666
    %2915 = vmatprep.subr.mxu0 0.0
    %2916 = vmatpush1.msra.mxu0 0.0
    %2917 = vmatprep.subr.mxu0 0.0
    %2918 = vmatpush1.msra.mxu0 0.0
    %2919 = vmatprep.subr.mxu0 0.0
    %2920 = vmatpush1.msra.mxu0 0.0
    %2921 = vmatprep.subr.mxu0 0.0
    %2922 = vmatpush1.msra.mxu0 0.0
    %2923 = vmatprep.subr.mxu0 0.0
    %2924 = vmatpush1.msra.mxu0 0.0
    %2925 = vmatprep.subr.mxu0 0.0
    %2926 = vmatpush1.msra.mxu0 0.0
    %2927 = vmatprep.subr.mxu0 0.0
    %2928 = vmatpush1.msra.mxu0 0.0
    %2929 = vmatprep.subr.mxu0 0.0
    %2930 = vmatpush1.msra.mxu0 0.0
    %2931 = vmatprep.subr.mxu0 0.0
    %2932 = vmatpush1.msra.mxu0 0.0
    %2933 = vmatprep.subr.mxu0 0.0
    %2934 = vmatpush1.msra.mxu0 0.0
    %2935 = vmatprep.subr.mxu0 0.0
    %2936 = vmatpush1.msra.mxu0 0.0
    %2937 = vmatprep.subr.mxu0 0.0
    %2938 = vmatpush1.msra.mxu0 0.0
    %2939 = vmatprep.subr.mxu0 0.0
    %2940 = vmatpush1.msra.mxu0 0.0
    %2941 = vmatprep.subr.mxu0 0.0
    %2942 = vmatpush1.msra.mxu0 0.0
    %2943 = vmatprep.subr.mxu0 0.0
    %2944 = vmatpush1.msra.mxu0 0.0
    %2945 = vmatprep.subr.mxu0 0.0
    %2946 = vmatpush1.msra.mxu0 0.0
    %2947 = vmatprep.subr.mxu0 0.0
    %2948 = vmatpush1.msra.mxu0 0.0
    %2949 = vmatprep.subr.mxu0 0.0
    %2950 = vmatpush1.msra.mxu0 0.0
    %2951 = vmatprep.subr.mxu0 0.0
    %2952 = vmatpush1.msra.mxu0 0.0
    %2953 = vmatprep.subr.mxu0 0.0
    %2954 = vmatpush1.msra.mxu0 0.0
    %2955 = vmatprep.subr.mxu0 0.0
    %2956 = vmatpush1.msra.mxu0 0.0
    %2957 = vmatprep.subr.mxu0 0.0
    %2958 = vmatpush1.msra.mxu0 0.0
    %2959 = vmatprep.subr.mxu0 0.0
    %2960 = vmatpush1.msra.mxu0 0.0
    %2961 = vmatprep.subr.mxu0 0.0
    %2962 = vmatpush1.msra.mxu0 0.0
    %2963 = vmatprep.subr.mxu0 0.0
    %2964 = vmatpush1.msra.mxu0 0.0
    %2965 = vmatprep.subr.mxu0 0.0
    %2966 = vmatpush1.msra.mxu0 0.0
    %2967 = vmatprep.subr.mxu0 0.0
    %2968 = vmatpush1.msra.mxu0 0.0
    %2969 = vmatprep.subr.mxu0 0.0
    %2970 = vmatpush1.msra.mxu0 0.0
    %2971 = vmatprep.subr.mxu0 0.0
    %2972 = vmatpush1.msra.mxu0 0.0
    %2973 = vmatprep.subr.mxu0 0.0
    %2974 = vmatpush1.msra.mxu0 0.0
    %2975 = vmatprep.subr.mxu0 0.0
    %2976 = vmatpush1.msra.mxu0 0.0
    %2977 = vmatprep.mubr.f32.mxu0 0.0
    %2978 = vmatmul.mubr.f32.gmra.mrb[0].mxu0 %v2911
    %v2979 = vpop.f32.mrb[0].mxu0
    %v2980 = vadd.f32 0.0, %v2979
    %v2981 = vpop.f32.mrb[0].mxu0
    %2982 = vdwg.mxu0
    %v2983 = vadd.f32 %v2663, %v2907
    %v2984 = vadd.f32 %v2664, %v2980
    %v2985 = vlaneseq
    %v2986 = vshrl.u32 %v2985, 7
    %v2987 = vsub.s32 0, %v2986
    %v2988 = vrot.slane %v1702, %v2987
    %v2990 = vsel %vm64, %v2983, 0
    %v2993 = vsel %vm64, %v2984, 0
    %2995 = vmatprep.subr.mxu0 0.0
    %2996 = vmatpush1.msra.mxu0 %v1686
    %2997 = vmatprep.subr.mxu0 0.0
    %2998 = vmatpush1.msra.mxu0 %v1687
    %2999 = vmatprep.subr.mxu0 0.0
    %3000 = vmatpush1.msra.mxu0 %v1688
    %3001 = vmatprep.subr.mxu0 0.0
    %3002 = vmatpush1.msra.mxu0 %v1689
    %3003 = vmatprep.subr.mxu0 0.0
    %3004 = vmatpush1.msra.mxu0 0.0
    %3005 = vmatprep.subr.mxu0 0.0
    %3006 = vmatpush1.msra.mxu0 0.0
    %3007 = vmatprep.subr.mxu0 0.0
    %3008 = vmatpush1.msra.mxu0 0.0
    %3009 = vmatprep.subr.mxu0 0.0
    %3010 = vmatpush1.msra.mxu0 0.0
    %3011 = vmatprep.subr.mxu0 0.0
    %3012 = vmatpush1.msra.mxu0 0.0
    %3013 = vmatprep.subr.mxu0 0.0
    %3014 = vmatpush1.msra.mxu0 0.0
    %3015 = vmatprep.subr.mxu0 0.0
    %3016 = vmatpush1.msra.mxu0 0.0
    %3017 = vmatprep.subr.mxu0 0.0
    %3018 = vmatpush1.msra.mxu0 0.0
    %3019 = vmatprep.subr.mxu0 0.0
    %3020 = vmatpush1.msra.mxu0 0.0
    %3021 = vmatprep.subr.mxu0 0.0
    %3022 = vmatpush1.msra.mxu0 0.0
    %3023 = vmatprep.subr.mxu0 0.0
    %3024 = vmatpush1.msra.mxu0 0.0
    %3025 = vmatprep.subr.mxu0 0.0
    %3026 = vmatpush1.msra.mxu0 0.0
    %3027 = vmatprep.subr.mxu0 0.0
    %3028 = vmatpush1.msra.mxu0 0.0
    %3029 = vmatprep.subr.mxu0 0.0
    %3030 = vmatpush1.msra.mxu0 0.0
    %3031 = vmatprep.subr.mxu0 0.0
    %3032 = vmatpush1.msra.mxu0 0.0
    %3033 = vmatprep.subr.mxu0 0.0
    %3034 = vmatpush1.msra.mxu0 0.0
    %3035 = vmatprep.subr.mxu0 0.0
    %3036 = vmatpush1.msra.mxu0 0.0
    %3037 = vmatprep.subr.mxu0 0.0
    %3038 = vmatpush1.msra.mxu0 0.0
    %3039 = vmatprep.subr.mxu0 0.0
    %3040 = vmatpush1.msra.mxu0 0.0
    %3041 = vmatprep.subr.mxu0 0.0
    %3042 = vmatpush1.msra.mxu0 0.0
    %3043 = vmatprep.subr.mxu0 0.0
    %3044 = vmatpush1.msra.mxu0 0.0
    %3045 = vmatprep.subr.mxu0 0.0
    %3046 = vmatpush1.msra.mxu0 0.0
    %3047 = vmatprep.subr.mxu0 0.0
    %3048 = vmatpush1.msra.mxu0 0.0
    %3049 = vmatprep.subr.mxu0 0.0
    %3050 = vmatpush1.msra.mxu0 0.0
    %3051 = vmatprep.subr.mxu0 0.0
    %3052 = vmatpush1.msra.mxu0 0.0
    %3053 = vmatprep.subr.mxu0 0.0
    %3054 = vmatpush1.msra.mxu0 0.0
    %3055 = vmatprep.subr.mxu0 0.0
    %3056 = vmatpush1.msra.mxu0 0.0
    %3057 = vmatprep.subr.mxu0 0.0
    %3058 = vmatpush1.msra.mxu0 0.0
    %3059 = vmatprep.mubr.f32.mxu0 0.0
    %3060 = vmatmul.mubr.f32.gmra.mrb[0].mxu0 %v2990
    %v3061 = vpop.f32.mrb[0].mxu0
    %v3062 = vadd.f32 %v2988, %v3061
    %v3063 = vpop.f32.mrb[0].mxu0
    %3064 = vmatprep.mubr.f32.mxu0 0.0
    %3065 = vmatmul.mubr.f32.gmra.mrb[0].mxu0 %v2993
    %v3066 = vpop.f32.mrb[0].mxu0
    %v3067 = vadd.f32 %v2988, %v3066
    %v3068 = vpop.f32.mrb[0].mxu0
    %3069 = vdwg.mxu0
    %v3070 = vadd.f32 %v3062, %v1683
    %v3071 = vadd.f32 %v3067, %v1684
    %v3072 = vsel %vm64, %v3070, 0.0
    %3073 = vadd.xlane.f32.xlu0 %v3072
    %v3074 = vpop.xlane.xlu0 %3073
    %v3075 = vsel %vm64, %v3071, 0.0
    %3076 = vadd.xlane.f32.xlu0 %v3075
    %v3077 = vpop.xlane.xlu0 %3076
    %v3078 = vmul.f32 %v3074, %v1439
    %v3079 = vmul.f32 %v3077, %v1439
    %v3080 = vsub.f32 %v3070, %v3078
    %v3081 = vsub.f32 %v3071, %v3079
    %v3082 = vmul.f32 %v3080, %v3080
    %v3083 = vmul.f32 %v3081, %v3081
    %v3084 = vsel %vm64, %v3082, 0.0
    %3085 = vadd.xlane.f32.xlu0 %v3084
    %v3086 = vpop.xlane.xlu0 %3085
    %v3087 = vsel %vm64, %v3083, 0.0
    %3088 = vadd.xlane.f32.xlu0 %v3087
    %v3089 = vpop.xlane.xlu0 %3088
    %v3090 = vmul.f32 %v3086, %v1439
    %v3091 = vmul.f32 %v3089, %v1439
    %v3092 = vadd.f32 %v3090, 1e-05
    %v3093 = vadd.f32 %v3091, 1e-05
    %v3094 = vrsqrt.pop %v3092
    %v3095 = vrsqrt.pop %v3093
    %v3096 = vmul.f32 %v3080, %v3094
    %v3097 = vmul.f32 %v3081, %v3095
    %v3098 = vlaneseq
    %v3099 = vshrl.u32 %v3098, 7
    %v3100 = vsub.s32 1, %v3099
    %v3101 = vrot.slane %v1702, %v3100
    %v3102 = vmul.f32 %v3096, %v3101
    %v3103 = vmul.f32 %v3097, %v3101
    %v3104 = vlaneseq
    %v3105 = vshrl.u32 %v3104, 7
    %v3106 = vsub.s32 2, %v3105
    %v3107 = vrot.slane %v1702, %v3106
    %v3108 = vadd.f32 %v3102, %v3107
    %v3109 = vadd.f32 %v3103, %v3107
    %v3110 = vlaneseq
    %v3111 = vshrl.u32 %v3110, 7
    %v3112 = vsub.s32 3, %v3111
    %v3113 = vrot.slane %v1702, %v3112
    %v3115 = vsel %vm64, %v3108, 0
    %v3118 = vsel %vm64, %v3109, 0
    %3120 = vmatprep.subr.mxu0 0.0
    %3121 = vmatpush1.msra.mxu0 %v1690
    %3122 = vmatprep.subr.mxu0 0.0
    %3123 = vmatpush1.msra.mxu0 %v1691
    %3124 = vmatprep.subr.mxu0 0.0
    %3125 = vmatpush1.msra.mxu0 %v1692
    %3126 = vmatprep.subr.mxu0 0.0
    %3127 = vmatpush1.msra.mxu0 %v1693
    %3128 = vmatprep.subr.mxu0 0.0
    %3129 = vmatpush1.msra.mxu0 0.0
    %3130 = vmatprep.subr.mxu0 0.0
    %3131 = vmatpush1.msra.mxu0 0.0
    %3132 = vmatprep.subr.mxu0 0.0
    %3133 = vmatpush1.msra.mxu0 0.0
    %3134 = vmatprep.subr.mxu0 0.0
    %3135 = vmatpush1.msra.mxu0 0.0
    %3136 = vmatprep.subr.mxu0 0.0
    %3137 = vmatpush1.msra.mxu0 0.0
    %3138 = vmatprep.subr.mxu0 0.0
    %3139 = vmatpush1.msra.mxu0 0.0
    %3140 = vmatprep.subr.mxu0 0.0
    %3141 = vmatpush1.msra.mxu0 0.0
    %3142 = vmatprep.subr.mxu0 0.0
    %3143 = vmatpush1.msra.mxu0 0.0
    %3144 = vmatprep.subr.mxu0 0.0
    %3145 = vmatpush1.msra.mxu0 0.0
    %3146 = vmatprep.subr.mxu0 0.0
    %3147 = vmatpush1.msra.mxu0 0.0
    %3148 = vmatprep.subr.mxu0 0.0
    %3149 = vmatpush1.msra.mxu0 0.0
    %3150 = vmatprep.subr.mxu0 0.0
    %3151 = vmatpush1.msra.mxu0 0.0
    %3152 = vmatprep.subr.mxu0 0.0
    %3153 = vmatpush1.msra.mxu0 0.0
    %3154 = vmatprep.subr.mxu0 0.0
    %3155 = vmatpush1.msra.mxu0 0.0
    %3156 = vmatprep.subr.mxu0 0.0
    %3157 = vmatpush1.msra.mxu0 0.0
    %3158 = vmatprep.subr.mxu0 0.0
    %3159 = vmatpush1.msra.mxu0 0.0
    %3160 = vmatprep.subr.mxu0 0.0
    %3161 = vmatpush1.msra.mxu0 0.0
    %3162 = vmatprep.subr.mxu0 0.0
    %3163 = vmatpush1.msra.mxu0 0.0
    %3164 = vmatprep.subr.mxu0 0.0
    %3165 = vmatpush1.msra.mxu0 0.0
    %3166 = vmatprep.subr.mxu0 0.0
    %3167 = vmatpush1.msra.mxu0 0.0
    %3168 = vmatprep.subr.mxu0 0.0
    %3169 = vmatpush1.msra.mxu0 0.0
    %3170 = vmatprep.subr.mxu0 0.0
    %3171 = vmatpush1.msra.mxu0 0.0
    %3172 = vmatprep.subr.mxu0 0.0
    %3173 = vmatpush1.msra.mxu0 0.0
    %3174 = vmatprep.subr.mxu0 0.0
    %3175 = vmatpush1.msra.mxu0 0.0
    %3176 = vmatprep.subr.mxu0 0.0
    %3177 = vmatpush1.msra.mxu0 0.0
    %3178 = vmatprep.subr.mxu0 0.0
    %3179 = vmatpush1.msra.mxu0 0.0
    %3180 = vmatprep.subr.mxu0 0.0
    %3181 = vmatpush1.msra.mxu0 0.0
    %3182 = vmatprep.subr.mxu0 0.0
    %3183 = vmatpush1.msra.mxu0 0.0
    %3184 = vmatprep.mubr.f32.mxu0 0.0
    %3185 = vmatmul.mubr.f32.gmra.mrb[0].mxu0 %v3115
    %v3186 = vpop.f32.mrb[0].mxu0
    %v3187 = vadd.f32 %v3113, %v3186
    %v3188 = vpop.f32.mrb[0].mxu0
    %3189 = vmatprep.mubr.f32.mxu0 0.0
    %3190 = vmatmul.mubr.f32.gmra.mrb[0].mxu0 %v3118
    %v3191 = vpop.f32.mrb[0].mxu0
    %v3192 = vadd.f32 %v3113, %v3191
    %v3193 = vpop.f32.mrb[0].mxu0
    %3194 = vdwg.mxu0
    %v3195 = vmax.f32 %v3187, 0.0
    %v3196 = vmax.f32 %v3192, 0.0
    %v3197 = vlaneseq
    %v3198 = vshrl.u32 %v3197, 7
    %v3199 = vsub.s32 4, %v3198
    %v3200 = vrot.slane %v1702, %v3199
    %v3202 = vsel %vm1563, %v3195, 0
    %v3205 = vsel %vm1563, %v3196, 0
    %3207 = vmatprep.subr.mxu0 0.0
    %3208 = vmatpush1.msra.mxu0 %v1694
    %3209 = vmatprep.subr.mxu0 0.0
    %3210 = vmatpush1.msra.mxu0 %v1695
    %3211 = vmatprep.subr.mxu0 0.0
    %3212 = vmatpush1.msra.mxu0 %v1696
    %3213 = vmatprep.subr.mxu0 0.0
    %3214 = vmatpush1.msra.mxu0 %v1697
    %3215 = vmatprep.subr.mxu0 0.0
    %3216 = vmatpush1.msra.mxu0 %v1698
    %3217 = vmatprep.subr.mxu0 0.0
    %3218 = vmatpush1.msra.mxu0 %v1699
    %3219 = vmatprep.subr.mxu0 0.0
    %3220 = vmatpush1.msra.mxu0 %v1700
    %3221 = vmatprep.subr.mxu0 0.0
    %3222 = vmatpush1.msra.mxu0 %v1701
    %3223 = vmatprep.subr.mxu0 0.0
    %3224 = vmatpush1.msra.mxu0 0.0
    %3225 = vmatprep.subr.mxu0 0.0
    %3226 = vmatpush1.msra.mxu0 0.0
    %3227 = vmatprep.subr.mxu0 0.0
    %3228 = vmatpush1.msra.mxu0 0.0
    %3229 = vmatprep.subr.mxu0 0.0
    %3230 = vmatpush1.msra.mxu0 0.0
    %3231 = vmatprep.subr.mxu0 0.0
    %3232 = vmatpush1.msra.mxu0 0.0
    %3233 = vmatprep.subr.mxu0 0.0
    %3234 = vmatpush1.msra.mxu0 0.0
    %3235 = vmatprep.subr.mxu0 0.0
    %3236 = vmatpush1.msra.mxu0 0.0
    %3237 = vmatprep.subr.mxu0 0.0
    %3238 = vmatpush1.msra.mxu0 0.0
    %3239 = vmatprep.subr.mxu0 0.0
    %3240 = vmatpush1.msra.mxu0 0.0
    %3241 = vmatprep.subr.mxu0 0.0
    %3242 = vmatpush1.msra.mxu0 0.0
    %3243 = vmatprep.subr.mxu0 0.0
    %3244 = vmatpush1.msra.mxu0 0.0
    %3245 = vmatprep.subr.mxu0 0.0
    %3246 = vmatpush1.msra.mxu0 0.0
    %3247 = vmatprep.subr.mxu0 0.0
    %3248 = vmatpush1.msra.mxu0 0.0
    %3249 = vmatprep.subr.mxu0 0.0
    %3250 = vmatpush1.msra.mxu0 0.0
    %3251 = vmatprep.subr.mxu0 0.0
    %3252 = vmatpush1.msra.mxu0 0.0
    %3253 = vmatprep.subr.mxu0 0.0
    %3254 = vmatpush1.msra.mxu0 0.0
    %3255 = vmatprep.subr.mxu0 0.0
    %3256 = vmatpush1.msra.mxu0 0.0
    %3257 = vmatprep.subr.mxu0 0.0
    %3258 = vmatpush1.msra.mxu0 0.0
    %3259 = vmatprep.subr.mxu0 0.0
    %3260 = vmatpush1.msra.mxu0 0.0
    %3261 = vmatprep.subr.mxu0 0.0
    %3262 = vmatpush1.msra.mxu0 0.0
    %3263 = vmatprep.subr.mxu0 0.0
    %3264 = vmatpush1.msra.mxu0 0.0
    %3265 = vmatprep.subr.mxu0 0.0
    %3266 = vmatpush1.msra.mxu0 0.0
    %3267 = vmatprep.subr.mxu0 0.0
    %3268 = vmatpush1.msra.mxu0 0.0
    %3269 = vmatprep.subr.mxu0 0.0
    %3270 = vmatpush1.msra.mxu0 0.0
    %3271 = vmatprep.mubr.f32.mxu0 0.0
    %3272 = vmatmul.mubr.f32.gmra.mrb[0].mxu0 %v3202
    %v3273 = vpop.f32.mrb[0].mxu0
    %v3274 = vadd.f32 %v3200, %v3273
    %v3275 = vpop.f32.mrb[0].mxu0
    %3276 = vmatprep.mubr.f32.mxu0 0.0
    %3277 = vmatmul.mubr.f32.gmra.mrb[0].mxu0 %v3205
    %v3278 = vpop.f32.mrb[0].mxu0
    %v3279 = vadd.f32 %v3200, %v3278
    %v3280 = vpop.f32.mrb[0].mxu0
    %3281 = vdwg.mxu0
    %v3282 = vadd.f32 %v3274, %v3108
    %v3283 = vadd.f32 %v3279, %v3109
    %v3284 = vsel %vm64, %v3282, 0.0
    %3285 = vadd.xlane.f32.xlu0 %v3284
    %v3286 = vpop.xlane.xlu0 %3285
    %v3287 = vsel %vm64, %v3283, 0.0
    %3288 = vadd.xlane.f32.xlu0 %v3287
    %v3289 = vpop.xlane.xlu0 %3288
    %v3290 = vmul.f32 %v3286, %v1439
    %v3291 = vmul.f32 %v3289, %v1439
    %v3292 = vsub.f32 %v3282, %v3290
    %v3293 = vsub.f32 %v3283, %v3291
    %v3294 = vmul.f32 %v3292, %v3292
    %v3295 = vmul.f32 %v3293, %v3293
    %v3296 = vsel %vm64, %v3294, 0.0
    %3297 = vadd.xlane.f32.xlu0 %v3296
    %v3298 = vpop.xlane.xlu0 %3297
    %v3299 = vsel %vm64, %v3295, 0.0
    %3300 = vadd.xlane.f32.xlu0 %v3299
    %v3301 = vpop.xlane.xlu0 %3300
    %v3302 = vmul.f32 %v3298, %v1439
    %v3303 = vmul.f32 %v3301, %v1439
    %v3304 = vadd.f32 %v3302, 1e-05
    %v3305 = vadd.f32 %v3303, 1e-05
    %v3306 = vrsqrt.pop %v3304
    %v3307 = vrsqrt.pop %v3305
    %v3308 = vmul.f32 %v3292, %v3306
    %v3309 = vmul.f32 %v3293, %v3307
    %v3310 = vlaneseq
    %v3311 = vshrl.u32 %v3310, 7
    %v3312 = vsub.s32 5, %v3311
    %v3313 = vrot.slane %v1702, %v3312
    %v3314 = vmul.f32 %v3308, %v3313
    %v3315 = vmul.f32 %v3309, %v3313
    %v3316 = vlaneseq
    %v3317 = vshrl.u32 %v3316, 7
    %v3318 = vsub.s32 6, %v3317
    %v3319 = vrot.slane %v1702, %v3318
    %v3320 = vadd.f32 %v3314, %v3319
    %v3321 = vadd.f32 %v3315, %v3319
    %v3322 = vld [vmem:[%s1] sm:$0xff]
    %v3323 = vld [vmem:[%s1 + $0x8] sm:$0xff]
    %v3324 = vld [vmem:[%s3] sm:$0xff]
    %v3325 = vld [vmem:[%s3 + $0x8] sm:$0xff]
    %v3326 = vld [vmem:[%s3 + $0x10] sm:$0xff]
    %v3327 = vld [vmem:[%s3 + $0x18] sm:$0xff]
    %v3328 = vld [vmem:[%s3 + $0x20] sm:$0xff]
    %v3329 = vld [vmem:[%s3 + $0x28] sm:$0xff]
    %v3330 = vld [vmem:[%s3 + $0x30] sm:$0xff]
    %v3331 = vld [vmem:[%s3 + $0x38] sm:$0xff]
    %v3332 = vld [vmem:[%s3 + $0x40] sm:$0xff]
    %v3333 = vld [vmem:[%s3 + $0x48] sm:$0xff]
    %v3334 = vld [vmem:[%s3 + $0x50] sm:$0xff]
    %v3335 = vld [vmem:[%s3 + $0x58] sm:$0xff]
    %v3336 = vld [vmem:[%s3 + $0x60] sm:$0xff]
    %v3337 = vld [vmem:[%s3 + $0x68] sm:$0xff]
    %v3338 = vld [vmem:[%s3 + $0x70] sm:$0xff]
    %v3339 = vld [vmem:[%s3 + $0x78] sm:$0xff]
    %v3340 = vld [vmem:[%s3 + $0x80] sm:$0x7f]
    %v3341 = vmul.f32 %v3320, %v27
    %v3342 = vmul.f32 %v3321, %v27
    %v3344 = vsel %vm64, %v3322, 0
    %v3347 = vsel %vm64, %v3341, 0
    %3349 = vmatprep.subr.mxu0 0.0
    %3350 = vmatpush1.xpose.msra.mxu0 %v3347
    %3351 = vmatprep.subr.mxu0 0.0
    %3352 = vmatpush1.xpose.msra.mxu0 0.0
    %3353 = vmatprep.subr.mxu0 0.0
    %3354 = vmatpush1.xpose.msra.mxu0 0.0
    %3355 = vmatprep.subr.mxu0 0.0
    %3356 = vmatpush1.xpose.msra.mxu0 0.0
    %3357 = vmatprep.subr.mxu0 0.0
    %3358 = vmatpush1.xpose.msra.mxu0 0.0
    %3359 = vmatprep.subr.mxu0 0.0
    %3360 = vmatpush1.xpose.msra.mxu0 0.0
    %3361 = vmatprep.subr.mxu0 0.0
    %3362 = vmatpush1.xpose.msra.mxu0 0.0
    %3363 = vmatprep.subr.mxu0 0.0
    %3364 = vmatpush1.xpose.msra.mxu0 0.0
    %3365 = vmatprep.subr.mxu0 0.0
    %3366 = vmatpush1.xpose.msra.mxu0 0.0
    %3367 = vmatprep.subr.mxu0 0.0
    %3368 = vmatpush1.xpose.msra.mxu0 0.0
    %3369 = vmatprep.subr.mxu0 0.0
    %3370 = vmatpush1.xpose.msra.mxu0 0.0
    %3371 = vmatprep.subr.mxu0 0.0
    %3372 = vmatpush1.xpose.msra.mxu0 0.0
    %3373 = vmatprep.subr.mxu0 0.0
    %3374 = vmatpush1.xpose.msra.mxu0 0.0
    %3375 = vmatprep.subr.mxu0 0.0
    %3376 = vmatpush1.xpose.msra.mxu0 0.0
    %3377 = vmatprep.subr.mxu0 0.0
    %3378 = vmatpush1.xpose.msra.mxu0 0.0
    %3379 = vmatprep.subr.mxu0 0.0
    %3380 = vmatpush1.xpose.msra.mxu0 0.0
    %3381 = vmatprep.subr.mxu0 0.0
    %3382 = vmatpush1.xpose.msra.mxu0 0.0
    %3383 = vmatprep.subr.mxu0 0.0
    %3384 = vmatpush1.xpose.msra.mxu0 0.0
    %3385 = vmatprep.subr.mxu0 0.0
    %3386 = vmatpush1.xpose.msra.mxu0 0.0
    %3387 = vmatprep.subr.mxu0 0.0
    %3388 = vmatpush1.xpose.msra.mxu0 0.0
    %3389 = vmatprep.subr.mxu0 0.0
    %3390 = vmatpush1.xpose.msra.mxu0 0.0
    %3391 = vmatprep.subr.mxu0 0.0
    %3392 = vmatpush1.xpose.msra.mxu0 0.0
    %3393 = vmatprep.subr.mxu0 0.0
    %3394 = vmatpush1.xpose.msra.mxu0 0.0
    %3395 = vmatprep.subr.mxu0 0.0
    %3396 = vmatpush1.xpose.msra.mxu0 0.0
    %3397 = vmatprep.subr.mxu0 0.0
    %3398 = vmatpush1.xpose.msra.mxu0 0.0
    %3399 = vmatprep.subr.mxu0 0.0
    %3400 = vmatpush1.xpose.msra.mxu0 0.0
    %3401 = vmatprep.subr.mxu0 0.0
    %3402 = vmatpush1.xpose.msra.mxu0 0.0
    %3403 = vmatprep.subr.mxu0 0.0
    %3404 = vmatpush1.xpose.msra.mxu0 0.0
    %3405 = vmatprep.subr.mxu0 0.0
    %3406 = vmatpush1.xpose.msra.mxu0 0.0
    %3407 = vmatprep.subr.mxu0 0.0
    %3408 = vmatpush1.xpose.msra.mxu0 0.0
    %3409 = vmatprep.subr.mxu0 0.0
    %3410 = vmatpush1.xpose.msra.mxu0 0.0
    %3411 = vmatprep.subr.mxu0 0.0
    %3412 = vmatpush1.xpose.msra.mxu0 0.0
    %3413 = vmatprep.mubr.f32.mxu0 0.0
    %3414 = vmatmul.mubr.f32.gmra.mrb[0].mxu0 %v3344
    %v3415 = vpop.f32.mrb[0].mxu0
    %v3416 = vadd.f32 0.0, %v3415
    %v3417 = vpop.f32.mrb[0].mxu0
    %3418 = vdwg.mxu0
    %v3420 = vsel %vm64, %v3323, 0
    %v3423 = vsel %vm64, %v3342, 0
    %3425 = vmatprep.subr.mxu0 0.0
    %3426 = vmatpush1.xpose.msra.mxu0 %v3423
    %3427 = vmatprep.subr.mxu0 0.0
    %3428 = vmatpush1.xpose.msra.mxu0 0.0
    %3429 = vmatprep.subr.mxu0 0.0
    %3430 = vmatpush1.xpose.msra.mxu0 0.0
    %3431 = vmatprep.subr.mxu0 0.0
    %3432 = vmatpush1.xpose.msra.mxu0 0.0
    %3433 = vmatprep.subr.mxu0 0.0
    %3434 = vmatpush1.xpose.msra.mxu0 0.0
    %3435 = vmatprep.subr.mxu0 0.0
    %3436 = vmatpush1.xpose.msra.mxu0 0.0
    %3437 = vmatprep.subr.mxu0 0.0
    %3438 = vmatpush1.xpose.msra.mxu0 0.0
    %3439 = vmatprep.subr.mxu0 0.0
    %3440 = vmatpush1.xpose.msra.mxu0 0.0
    %3441 = vmatprep.subr.mxu0 0.0
    %3442 = vmatpush1.xpose.msra.mxu0 0.0
    %3443 = vmatprep.subr.mxu0 0.0
    %3444 = vmatpush1.xpose.msra.mxu0 0.0
    %3445 = vmatprep.subr.mxu0 0.0
    %3446 = vmatpush1.xpose.msra.mxu0 0.0
    %3447 = vmatprep.subr.mxu0 0.0
    %3448 = vmatpush1.xpose.msra.mxu0 0.0
    %3449 = vmatprep.subr.mxu0 0.0
    %3450 = vmatpush1.xpose.msra.mxu0 0.0
    %3451 = vmatprep.subr.mxu0 0.0
    %3452 = vmatpush1.xpose.msra.mxu0 0.0
    %3453 = vmatprep.subr.mxu0 0.0
    %3454 = vmatpush1.xpose.msra.mxu0 0.0
    %3455 = vmatprep.subr.mxu0 0.0
    %3456 = vmatpush1.xpose.msra.mxu0 0.0
    %3457 = vmatprep.subr.mxu0 0.0
    %3458 = vmatpush1.xpose.msra.mxu0 0.0
    %3459 = vmatprep.subr.mxu0 0.0
    %3460 = vmatpush1.xpose.msra.mxu0 0.0
    %3461 = vmatprep.subr.mxu0 0.0
    %3462 = vmatpush1.xpose.msra.mxu0 0.0
    %3463 = vmatprep.subr.mxu0 0.0
    %3464 = vmatpush1.xpose.msra.mxu0 0.0
    %3465 = vmatprep.subr.mxu0 0.0
    %3466 = vmatpush1.xpose.msra.mxu0 0.0
    %3467 = vmatprep.subr.mxu0 0.0
    %3468 = vmatpush1.xpose.msra.mxu0 0.0
    %3469 = vmatprep.subr.mxu0 0.0
    %3470 = vmatpush1.xpose.msra.mxu0 0.0
    %3471 = vmatprep.subr.mxu0 0.0
    %3472 = vmatpush1.xpose.msra.mxu0 0.0
    %3473 = vmatprep.subr.mxu0 0.0
    %3474 = vmatpush1.xpose.msra.mxu0 0.0
    %3475 = vmatprep.subr.mxu0 0.0
    %3476 = vmatpush1.xpose.msra.mxu0 0.0
    %3477 = vmatprep.subr.mxu0 0.0
    %3478 = vmatpush1.xpose.msra.mxu0 0.0
    %3479 = vmatprep.subr.mxu0 0.0
    %3480 = vmatpush1.xpose.msra.mxu0 0.0
    %3481 = vmatprep.subr.mxu0 0.0
    %3482 = vmatpush1.xpose.msra.mxu0 0.0
    %3483 = vmatprep.subr.mxu0 0.0
    %3484 = vmatpush1.xpose.msra.mxu0 0.0
    %3485 = vmatprep.subr.mxu0 0.0
    %3486 = vmatpush1.xpose.msra.mxu0 0.0
    %3487 = vmatprep.subr.mxu0 0.0
    %3488 = vmatpush1.xpose.msra.mxu0 0.0
    %3489 = vmatprep.mubr.f32.mxu0 0.0
    %3490 = vmatmul.mubr.f32.gmra.mrb[0].mxu0 %v3420
    %v3491 = vpop.f32.mrb[0].mxu0
    %v3492 = vadd.f32 0.0, %v3491
    %v3493 = vpop.f32.mrb[0].mxu0
    %3494 = vdwg.mxu0
    %v3495 = vmul.f32 %v3416, 0.17677669
    %v3496 = vmul.f32 %v3492, 0.17677669
    %v3497 = vsel %vm219, %v3495, -inf
    %3498 = vmax.xlane.f32.xlu0 %v3497
    %v3499 = vpop.xlane.xlu0 %3498
    %v3500 = vsel %vm219, %v3496, -inf
    %3501 = vmax.xlane.f32.xlu0 %v3500
    %v3502 = vpop.xlane.xlu0 %3501
    %v3503 = vsub.f32 %v3495, %v3499
    %v3504 = vsub.f32 %v3496, %v3502
    %v3505 = vmul.f32 %v3503, 1.442695
    %v3506 = vpow.pop %v3505
    %v3507 = vmul.f32 %v3504, 1.442695
    %v3508 = vpow.pop %v3507
    %v3509 = vsel %vm219, %v3506, 0.0
    %3510 = vadd.xlane.f32.xlu0 %v3509
    %v3511 = vpop.xlane.xlu0 %3510
    %v3512 = vsel %vm219, %v3508, 0.0
    %3513 = vadd.xlane.f32.xlu0 %v3512
    %v3514 = vpop.xlane.xlu0 %3513
    %v3515 = vrcp.pop %v3511
    %v3516 = vrcp.pop %v3514
    %v3517 = vmul.f32 %v3506, %v3515
    %v3518 = vmul.f32 %v3508, %v3516
    %v3519 = vmul.f32 %v3322, %v27
    %v3520 = vmul.f32 %v3323, %v27
    %v3521 = vmul.f32 %v3320, %v32
    %v3522 = vmul.f32 %v3321, %v32
    %v3524 = vsel %vm64, %v3521, 0
    %3526 = vmatprep.subr.mxu0 0.0
    %3527 = vmatpush1.xpose.msra.mxu0 %v3524
    %3528 = vmatprep.subr.mxu0 0.0
    %3529 = vmatpush1.xpose.msra.mxu0 0.0
    %3530 = vmatprep.subr.mxu0 0.0
    %3531 = vmatpush1.xpose.msra.mxu0 0.0
    %3532 = vmatprep.subr.mxu0 0.0
    %3533 = vmatpush1.xpose.msra.mxu0 0.0
    %3534 = vmatprep.subr.mxu0 0.0
    %3535 = vmatpush1.xpose.msra.mxu0 0.0
    %3536 = vmatprep.subr.mxu0 0.0
    %3537 = vmatpush1.xpose.msra.mxu0 0.0
    %3538 = vmatprep.subr.mxu0 0.0
    %3539 = vmatpush1.xpose.msra.mxu0 0.0
    %3540 = vmatprep.subr.mxu0 0.0
    %3541 = vmatpush1.xpose.msra.mxu0 0.0
    %3542 = vmatprep.subr.mxu0 0.0
    %3543 = vmatpush1.xpose.msra.mxu0 0.0
    %3544 = vmatprep.subr.mxu0 0.0
    %3545 = vmatpush1.xpose.msra.mxu0 0.0
    %3546 = vmatprep.subr.mxu0 0.0
    %3547 = vmatpush1.xpose.msra.mxu0 0.0
    %3548 = vmatprep.subr.mxu0 0.0
    %3549 = vmatpush1.xpose.msra.mxu0 0.0
    %3550 = vmatprep.subr.mxu0 0.0
    %3551 = vmatpush1.xpose.msra.mxu0 0.0
    %3552 = vmatprep.subr.mxu0 0.0
    %3553 = vmatpush1.xpose.msra.mxu0 0.0
    %3554 = vmatprep.subr.mxu0 0.0
    %3555 = vmatpush1.xpose.msra.mxu0 0.0
    %3556 = vmatprep.subr.mxu0 0.0
    %3557 = vmatpush1.xpose.msra.mxu0 0.0
    %3558 = vmatprep.subr.mxu0 0.0
    %3559 = vmatpush1.xpose.msra.mxu0 0.0
    %3560 = vmatprep.subr.mxu0 0.0
    %3561 = vmatpush1.xpose.msra.mxu0 0.0
    %3562 = vmatprep.subr.mxu0 0.0
    %3563 = vmatpush1.xpose.msra.mxu0 0.0
    %3564 = vmatprep.subr.mxu0 0.0
    %3565 = vmatpush1.xpose.msra.mxu0 0.0
    %3566 = vmatprep.subr.mxu0 0.0
    %3567 = vmatpush1.xpose.msra.mxu0 0.0
    %3568 = vmatprep.subr.mxu0 0.0
    %3569 = vmatpush1.xpose.msra.mxu0 0.0
    %3570 = vmatprep.subr.mxu0 0.0
    %3571 = vmatpush1.xpose.msra.mxu0 0.0
    %3572 = vmatprep.subr.mxu0 0.0
    %3573 = vmatpush1.xpose.msra.mxu0 0.0
    %3574 = vmatprep.subr.mxu0 0.0
    %3575 = vmatpush1.xpose.msra.mxu0 0.0
    %3576 = vmatprep.subr.mxu0 0.0
    %3577 = vmatpush1.xpose.msra.mxu0 0.0
    %3578 = vmatprep.subr.mxu0 0.0
    %3579 = vmatpush1.xpose.msra.mxu0 0.0
    %3580 = vmatprep.subr.mxu0 0.0
    %3581 = vmatpush1.xpose.msra.mxu0 0.0
    %3582 = vmatprep.subr.mxu0 0.0
    %3583 = vmatpush1.xpose.msra.mxu0 0.0
    %3584 = vmatprep.subr.mxu0 0.0
    %3585 = vmatpush1.xpose.msra.mxu0 0.0
    %3586 = vmatprep.subr.mxu0 0.0
    %3587 = vmatpush1.xpose.msra.mxu0 0.0
    %3588 = vmatprep.subr.mxu0 0.0
    %3589 = vmatpush1.xpose.msra.mxu0 0.0
    %3590 = vmatprep.mubr.f32.mxu0 0.0
    %3591 = vmatmul.mubr.f32.gmra.mrb[0].mxu0 %v3344
    %v3592 = vpop.f32.mrb[0].mxu0
    %v3593 = vadd.f32 0.0, %v3592
    %v3594 = vpop.f32.mrb[0].mxu0
    %3595 = vdwg.mxu0
    %v3597 = vsel %vm64, %v3522, 0
    %3599 = vmatprep.subr.mxu0 0.0
    %3600 = vmatpush1.xpose.msra.mxu0 %v3597
    %3601 = vmatprep.subr.mxu0 0.0
    %3602 = vmatpush1.xpose.msra.mxu0 0.0
    %3603 = vmatprep.subr.mxu0 0.0
    %3604 = vmatpush1.xpose.msra.mxu0 0.0
    %3605 = vmatprep.subr.mxu0 0.0
    %3606 = vmatpush1.xpose.msra.mxu0 0.0
    %3607 = vmatprep.subr.mxu0 0.0
    %3608 = vmatpush1.xpose.msra.mxu0 0.0
    %3609 = vmatprep.subr.mxu0 0.0
    %3610 = vmatpush1.xpose.msra.mxu0 0.0
    %3611 = vmatprep.subr.mxu0 0.0
    %3612 = vmatpush1.xpose.msra.mxu0 0.0
    %3613 = vmatprep.subr.mxu0 0.0
    %3614 = vmatpush1.xpose.msra.mxu0 0.0
    %3615 = vmatprep.subr.mxu0 0.0
    %3616 = vmatpush1.xpose.msra.mxu0 0.0
    %3617 = vmatprep.subr.mxu0 0.0
    %3618 = vmatpush1.xpose.msra.mxu0 0.0
    %3619 = vmatprep.subr.mxu0 0.0
    %3620 = vmatpush1.xpose.msra.mxu0 0.0
    %3621 = vmatprep.subr.mxu0 0.0
    %3622 = vmatpush1.xpose.msra.mxu0 0.0
    %3623 = vmatprep.subr.mxu0 0.0
    %3624 = vmatpush1.xpose.msra.mxu0 0.0
    %3625 = vmatprep.subr.mxu0 0.0
    %3626 = vmatpush1.xpose.msra.mxu0 0.0
    %3627 = vmatprep.subr.mxu0 0.0
    %3628 = vmatpush1.xpose.msra.mxu0 0.0
    %3629 = vmatprep.subr.mxu0 0.0
    %3630 = vmatpush1.xpose.msra.mxu0 0.0
    %3631 = vmatprep.subr.mxu0 0.0
    %3632 = vmatpush1.xpose.msra.mxu0 0.0
    %3633 = vmatprep.subr.mxu0 0.0
    %3634 = vmatpush1.xpose.msra.mxu0 0.0
    %3635 = vmatprep.subr.mxu0 0.0
    %3636 = vmatpush1.xpose.msra.mxu0 0.0
    %3637 = vmatprep.subr.mxu0 0.0
    %3638 = vmatpush1.xpose.msra.mxu0 0.0
    %3639 = vmatprep.subr.mxu0 0.0
    %3640 = vmatpush1.xpose.msra.mxu0 0.0
    %3641 = vmatprep.subr.mxu0 0.0
    %3642 = vmatpush1.xpose.msra.mxu0 0.0
    %3643 = vmatprep.subr.mxu0 0.0
    %3644 = vmatpush1.xpose.msra.mxu0 0.0
    %3645 = vmatprep.subr.mxu0 0.0
    %3646 = vmatpush1.xpose.msra.mxu0 0.0
    %3647 = vmatprep.subr.mxu0 0.0
    %3648 = vmatpush1.xpose.msra.mxu0 0.0
    %3649 = vmatprep.subr.mxu0 0.0
    %3650 = vmatpush1.xpose.msra.mxu0 0.0
    %3651 = vmatprep.subr.mxu0 0.0
    %3652 = vmatpush1.xpose.msra.mxu0 0.0
    %3653 = vmatprep.subr.mxu0 0.0
    %3654 = vmatpush1.xpose.msra.mxu0 0.0
    %3655 = vmatprep.subr.mxu0 0.0
    %3656 = vmatpush1.xpose.msra.mxu0 0.0
    %3657 = vmatprep.subr.mxu0 0.0
    %3658 = vmatpush1.xpose.msra.mxu0 0.0
    %3659 = vmatprep.subr.mxu0 0.0
    %3660 = vmatpush1.xpose.msra.mxu0 0.0
    %3661 = vmatprep.subr.mxu0 0.0
    %3662 = vmatpush1.xpose.msra.mxu0 0.0
    %3663 = vmatprep.mubr.f32.mxu0 0.0
    %3664 = vmatmul.mubr.f32.gmra.mrb[0].mxu0 %v3420
    %v3665 = vpop.f32.mrb[0].mxu0
    %v3666 = vadd.f32 0.0, %v3665
    %v3667 = vpop.f32.mrb[0].mxu0
    %3668 = vdwg.mxu0
    %v3669 = vmul.f32 %v3593, 0.17677669
    %v3670 = vmul.f32 %v3666, 0.17677669
    %v3671 = vsel %vm219, %v3669, -inf
    %3672 = vmax.xlane.f32.xlu0 %v3671
    %v3673 = vpop.xlane.xlu0 %3672
    %v3674 = vsel %vm219, %v3670, -inf
    %3675 = vmax.xlane.f32.xlu0 %v3674
    %v3676 = vpop.xlane.xlu0 %3675
    %v3677 = vsub.f32 %v3669, %v3673
    %v3678 = vsub.f32 %v3670, %v3676
    %v3679 = vmul.f32 %v3677, 1.442695
    %v3680 = vpow.pop %v3679
    %v3681 = vmul.f32 %v3678, 1.442695
    %v3682 = vpow.pop %v3681
    %v3683 = vsel %vm219, %v3680, 0.0
    %3684 = vadd.xlane.f32.xlu0 %v3683
    %v3685 = vpop.xlane.xlu0 %3684
    %v3686 = vsel %vm219, %v3682, 0.0
    %3687 = vadd.xlane.f32.xlu0 %v3686
    %v3688 = vpop.xlane.xlu0 %3687
    %v3689 = vrcp.pop %v3685
    %v3690 = vrcp.pop %v3688
    %v3691 = vmul.f32 %v3680, %v3689
    %v3692 = vmul.f32 %v3682, %v3690
    %v3693 = vmul.f32 %v3322, %v32
    %v3694 = vmul.f32 %v3323, %v32
    %v3696 = vsel %vm219, %v3691, 0
    %3698 = vmatprep.subr.mxu0 0.0
    %3699 = vmatpush1.msra.mxu0 %v3693
    %3700 = vmatprep.subr.mxu0 0.0
    %3701 = vmatpush1.msra.mxu0 0.0
    %3702 = vmatprep.subr.mxu0 0.0
    %3703 = vmatpush1.msra.mxu0 0.0
    %3704 = vmatprep.subr.mxu0 0.0
    %3705 = vmatpush1.msra.mxu0 0.0
    %3706 = vmatprep.subr.mxu0 0.0
    %3707 = vmatpush1.msra.mxu0 0.0
    %3708 = vmatprep.subr.mxu0 0.0
    %3709 = vmatpush1.msra.mxu0 0.0
    %3710 = vmatprep.subr.mxu0 0.0
    %3711 = vmatpush1.msra.mxu0 0.0
    %3712 = vmatprep.subr.mxu0 0.0
    %3713 = vmatpush1.msra.mxu0 0.0
    %3714 = vmatprep.subr.mxu0 0.0
    %3715 = vmatpush1.msra.mxu0 0.0
    %3716 = vmatprep.subr.mxu0 0.0
    %3717 = vmatpush1.msra.mxu0 0.0
    %3718 = vmatprep.subr.mxu0 0.0
    %3719 = vmatpush1.msra.mxu0 0.0
    %3720 = vmatprep.subr.mxu0 0.0
    %3721 = vmatpush1.msra.mxu0 0.0
    %3722 = vmatprep.subr.mxu0 0.0
    %3723 = vmatpush1.msra.mxu0 0.0
    %3724 = vmatprep.subr.mxu0 0.0
    %3725 = vmatpush1.msra.mxu0 0.0
    %3726 = vmatprep.subr.mxu0 0.0
    %3727 = vmatpush1.msra.mxu0 0.0
    %3728 = vmatprep.subr.mxu0 0.0
    %3729 = vmatpush1.msra.mxu0 0.0
    %3730 = vmatprep.subr.mxu0 0.0
    %3731 = vmatpush1.msra.mxu0 0.0
    %3732 = vmatprep.subr.mxu0 0.0
    %3733 = vmatpush1.msra.mxu0 0.0
    %3734 = vmatprep.subr.mxu0 0.0
    %3735 = vmatpush1.msra.mxu0 0.0
    %3736 = vmatprep.subr.mxu0 0.0
    %3737 = vmatpush1.msra.mxu0 0.0
    %3738 = vmatprep.subr.mxu0 0.0
    %3739 = vmatpush1.msra.mxu0 0.0
    %3740 = vmatprep.subr.mxu0 0.0
    %3741 = vmatpush1.msra.mxu0 0.0
    %3742 = vmatprep.subr.mxu0 0.0
    %3743 = vmatpush1.msra.mxu0 0.0
    %3744 = vmatprep.subr.mxu0 0.0
    %3745 = vmatpush1.msra.mxu0 0.0
    %3746 = vmatprep.subr.mxu0 0.0
    %3747 = vmatpush1.msra.mxu0 0.0
    %3748 = vmatprep.subr.mxu0 0.0
    %3749 = vmatpush1.msra.mxu0 0.0
    %3750 = vmatprep.subr.mxu0 0.0
    %3751 = vmatpush1.msra.mxu0 0.0
    %3752 = vmatprep.subr.mxu0 0.0
    %3753 = vmatpush1.msra.mxu0 0.0
    %3754 = vmatprep.subr.mxu0 0.0
    %3755 = vmatpush1.msra.mxu0 0.0
    %3756 = vmatprep.subr.mxu0 0.0
    %3757 = vmatpush1.msra.mxu0 0.0
    %3758 = vmatprep.subr.mxu0 0.0
    %3759 = vmatpush1.msra.mxu0 0.0
    %3760 = vmatprep.subr.mxu0 0.0
    %3761 = vmatpush1.msra.mxu0 0.0
    %3762 = vmatprep.mubr.f32.mxu0 0.0
    %3763 = vmatmul.mubr.f32.gmra.mrb[0].mxu0 %v3696
    %v3764 = vpop.f32.mrb[0].mxu0
    %v3765 = vadd.f32 0.0, %v3764
    %v3766 = vpop.f32.mrb[0].mxu0
    %3767 = vdwg.mxu0
    %v3769 = vsel %vm219, %v3692, 0
    %3771 = vmatprep.subr.mxu0 0.0
    %3772 = vmatpush1.msra.mxu0 %v3694
    %3773 = vmatprep.subr.mxu0 0.0
    %3774 = vmatpush1.msra.mxu0 0.0
    %3775 = vmatprep.subr.mxu0 0.0
    %3776 = vmatpush1.msra.mxu0 0.0
    %3777 = vmatprep.subr.mxu0 0.0
    %3778 = vmatpush1.msra.mxu0 0.0
    %3779 = vmatprep.subr.mxu0 0.0
    %3780 = vmatpush1.msra.mxu0 0.0
    %3781 = vmatprep.subr.mxu0 0.0
    %3782 = vmatpush1.msra.mxu0 0.0
    %3783 = vmatprep.subr.mxu0 0.0
    %3784 = vmatpush1.msra.mxu0 0.0
    %3785 = vmatprep.subr.mxu0 0.0
    %3786 = vmatpush1.msra.mxu0 0.0
    %3787 = vmatprep.subr.mxu0 0.0
    %3788 = vmatpush1.msra.mxu0 0.0
    %3789 = vmatprep.subr.mxu0 0.0
    %3790 = vmatpush1.msra.mxu0 0.0
    %3791 = vmatprep.subr.mxu0 0.0
    %3792 = vmatpush1.msra.mxu0 0.0
    %3793 = vmatprep.subr.mxu0 0.0
    %3794 = vmatpush1.msra.mxu0 0.0
    %3795 = vmatprep.subr.mxu0 0.0
    %3796 = vmatpush1.msra.mxu0 0.0
    %3797 = vmatprep.subr.mxu0 0.0
    %3798 = vmatpush1.msra.mxu0 0.0
    %3799 = vmatprep.subr.mxu0 0.0
    %3800 = vmatpush1.msra.mxu0 0.0
    %3801 = vmatprep.subr.mxu0 0.0
    %3802 = vmatpush1.msra.mxu0 0.0
    %3803 = vmatprep.subr.mxu0 0.0
    %3804 = vmatpush1.msra.mxu0 0.0
    %3805 = vmatprep.subr.mxu0 0.0
    %3806 = vmatpush1.msra.mxu0 0.0
    %3807 = vmatprep.subr.mxu0 0.0
    %3808 = vmatpush1.msra.mxu0 0.0
    %3809 = vmatprep.subr.mxu0 0.0
    %3810 = vmatpush1.msra.mxu0 0.0
    %3811 = vmatprep.subr.mxu0 0.0
    %3812 = vmatpush1.msra.mxu0 0.0
    %3813 = vmatprep.subr.mxu0 0.0
    %3814 = vmatpush1.msra.mxu0 0.0
    %3815 = vmatprep.subr.mxu0 0.0
    %3816 = vmatpush1.msra.mxu0 0.0
    %3817 = vmatprep.subr.mxu0 0.0
    %3818 = vmatpush1.msra.mxu0 0.0
    %3819 = vmatprep.subr.mxu0 0.0
    %3820 = vmatpush1.msra.mxu0 0.0
    %3821 = vmatprep.subr.mxu0 0.0
    %3822 = vmatpush1.msra.mxu0 0.0
    %3823 = vmatprep.subr.mxu0 0.0
    %3824 = vmatpush1.msra.mxu0 0.0
    %3825 = vmatprep.subr.mxu0 0.0
    %3826 = vmatpush1.msra.mxu0 0.0
    %3827 = vmatprep.subr.mxu0 0.0
    %3828 = vmatpush1.msra.mxu0 0.0
    %3829 = vmatprep.subr.mxu0 0.0
    %3830 = vmatpush1.msra.mxu0 0.0
    %3831 = vmatprep.subr.mxu0 0.0
    %3832 = vmatpush1.msra.mxu0 0.0
    %3833 = vmatprep.subr.mxu0 0.0
    %3834 = vmatpush1.msra.mxu0 0.0
    %3835 = vmatprep.mubr.f32.mxu0 0.0
    %3836 = vmatmul.mubr.f32.gmra.mrb[0].mxu0 %v3769
    %v3837 = vpop.f32.mrb[0].mxu0
    %v3838 = vadd.f32 0.0, %v3837
    %v3839 = vpop.f32.mrb[0].mxu0
    %3840 = vdwg.mxu0
    %v3842 = vsel %vm219, %v3517, 0
    %3844 = vmatprep.subr.mxu0 0.0
    %3845 = vmatpush1.msra.mxu0 %v3519
    %3846 = vmatprep.subr.mxu0 0.0
    %3847 = vmatpush1.msra.mxu0 0.0
    %3848 = vmatprep.subr.mxu0 0.0
    %3849 = vmatpush1.msra.mxu0 0.0
    %3850 = vmatprep.subr.mxu0 0.0
    %3851 = vmatpush1.msra.mxu0 0.0
    %3852 = vmatprep.subr.mxu0 0.0
    %3853 = vmatpush1.msra.mxu0 0.0
    %3854 = vmatprep.subr.mxu0 0.0
    %3855 = vmatpush1.msra.mxu0 0.0
    %3856 = vmatprep.subr.mxu0 0.0
    %3857 = vmatpush1.msra.mxu0 0.0
    %3858 = vmatprep.subr.mxu0 0.0
    %3859 = vmatpush1.msra.mxu0 0.0
    %3860 = vmatprep.subr.mxu0 0.0
    %3861 = vmatpush1.msra.mxu0 0.0
    %3862 = vmatprep.subr.mxu0 0.0
    %3863 = vmatpush1.msra.mxu0 0.0
    %3864 = vmatprep.subr.mxu0 0.0
    %3865 = vmatpush1.msra.mxu0 0.0
    %3866 = vmatprep.subr.mxu0 0.0
    %3867 = vmatpush1.msra.mxu0 0.0
    %3868 = vmatprep.subr.mxu0 0.0
    %3869 = vmatpush1.msra.mxu0 0.0
    %3870 = vmatprep.subr.mxu0 0.0
    %3871 = vmatpush1.msra.mxu0 0.0
    %3872 = vmatprep.subr.mxu0 0.0
    %3873 = vmatpush1.msra.mxu0 0.0
    %3874 = vmatprep.subr.mxu0 0.0
    %3875 = vmatpush1.msra.mxu0 0.0
    %3876 = vmatprep.subr.mxu0 0.0
    %3877 = vmatpush1.msra.mxu0 0.0
    %3878 = vmatprep.subr.mxu0 0.0
    %3879 = vmatpush1.msra.mxu0 0.0
    %3880 = vmatprep.subr.mxu0 0.0
    %3881 = vmatpush1.msra.mxu0 0.0
    %3882 = vmatprep.subr.mxu0 0.0
    %3883 = vmatpush1.msra.mxu0 0.0
    %3884 = vmatprep.subr.mxu0 0.0
    %3885 = vmatpush1.msra.mxu0 0.0
    %3886 = vmatprep.subr.mxu0 0.0
    %3887 = vmatpush1.msra.mxu0 0.0
    %3888 = vmatprep.subr.mxu0 0.0
    %3889 = vmatpush1.msra.mxu0 0.0
    %3890 = vmatprep.subr.mxu0 0.0
    %3891 = vmatpush1.msra.mxu0 0.0
    %3892 = vmatprep.subr.mxu0 0.0
    %3893 = vmatpush1.msra.mxu0 0.0
    %3894 = vmatprep.subr.mxu0 0.0
    %3895 = vmatpush1.msra.mxu0 0.0
    %3896 = vmatprep.subr.mxu0 0.0
    %3897 = vmatpush1.msra.mxu0 0.0
    %3898 = vmatprep.subr.mxu0 0.0
    %3899 = vmatpush1.msra.mxu0 0.0
    %3900 = vmatprep.subr.mxu0 0.0
    %3901 = vmatpush1.msra.mxu0 0.0
    %3902 = vmatprep.subr.mxu0 0.0
    %3903 = vmatpush1.msra.mxu0 0.0
    %3904 = vmatprep.subr.mxu0 0.0
    %3905 = vmatpush1.msra.mxu0 0.0
    %3906 = vmatprep.subr.mxu0 0.0
    %3907 = vmatpush1.msra.mxu0 0.0
    %3908 = vmatprep.mubr.f32.mxu0 0.0
    %3909 = vmatmul.mubr.f32.gmra.mrb[0].mxu0 %v3842
    %v3910 = vpop.f32.mrb[0].mxu0
    %v3911 = vadd.f32 %v3765, %v3910
    %v3912 = vpop.f32.mrb[0].mxu0
    %3913 = vdwg.mxu0
    %v3915 = vsel %vm219, %v3518, 0
    %3917 = vmatprep.subr.mxu0 0.0
    %3918 = vmatpush1.msra.mxu0 %v3520
    %3919 = vmatprep.subr.mxu0 0.0
    %3920 = vmatpush1.msra.mxu0 0.0
    %3921 = vmatprep.subr.mxu0 0.0
    %3922 = vmatpush1.msra.mxu0 0.0
    %3923 = vmatprep.subr.mxu0 0.0
    %3924 = vmatpush1.msra.mxu0 0.0
    %3925 = vmatprep.subr.mxu0 0.0
    %3926 = vmatpush1.msra.mxu0 0.0
    %3927 = vmatprep.subr.mxu0 0.0
    %3928 = vmatpush1.msra.mxu0 0.0
    %3929 = vmatprep.subr.mxu0 0.0
    %3930 = vmatpush1.msra.mxu0 0.0
    %3931 = vmatprep.subr.mxu0 0.0
    %3932 = vmatpush1.msra.mxu0 0.0
    %3933 = vmatprep.subr.mxu0 0.0
    %3934 = vmatpush1.msra.mxu0 0.0
    %3935 = vmatprep.subr.mxu0 0.0
    %3936 = vmatpush1.msra.mxu0 0.0
    %3937 = vmatprep.subr.mxu0 0.0
    %3938 = vmatpush1.msra.mxu0 0.0
    %3939 = vmatprep.subr.mxu0 0.0
    %3940 = vmatpush1.msra.mxu0 0.0
    %3941 = vmatprep.subr.mxu0 0.0
    %3942 = vmatpush1.msra.mxu0 0.0
    %3943 = vmatprep.subr.mxu0 0.0
    %3944 = vmatpush1.msra.mxu0 0.0
    %3945 = vmatprep.subr.mxu0 0.0
    %3946 = vmatpush1.msra.mxu0 0.0
    %3947 = vmatprep.subr.mxu0 0.0
    %3948 = vmatpush1.msra.mxu0 0.0
    %3949 = vmatprep.subr.mxu0 0.0
    %3950 = vmatpush1.msra.mxu0 0.0
    %3951 = vmatprep.subr.mxu0 0.0
    %3952 = vmatpush1.msra.mxu0 0.0
    %3953 = vmatprep.subr.mxu0 0.0
    %3954 = vmatpush1.msra.mxu0 0.0
    %3955 = vmatprep.subr.mxu0 0.0
    %3956 = vmatpush1.msra.mxu0 0.0
    %3957 = vmatprep.subr.mxu0 0.0
    %3958 = vmatpush1.msra.mxu0 0.0
    %3959 = vmatprep.subr.mxu0 0.0
    %3960 = vmatpush1.msra.mxu0 0.0
    %3961 = vmatprep.subr.mxu0 0.0
    %3962 = vmatpush1.msra.mxu0 0.0
    %3963 = vmatprep.subr.mxu0 0.0
    %3964 = vmatpush1.msra.mxu0 0.0
    %3965 = vmatprep.subr.mxu0 0.0
    %3966 = vmatpush1.msra.mxu0 0.0
    %3967 = vmatprep.subr.mxu0 0.0
    %3968 = vmatpush1.msra.mxu0 0.0
    %3969 = vmatprep.subr.mxu0 0.0
    %3970 = vmatpush1.msra.mxu0 0.0
    %3971 = vmatprep.subr.mxu0 0.0
    %3972 = vmatpush1.msra.mxu0 0.0
    %3973 = vmatprep.subr.mxu0 0.0
    %3974 = vmatpush1.msra.mxu0 0.0
    %3975 = vmatprep.subr.mxu0 0.0
    %3976 = vmatpush1.msra.mxu0 0.0
    %3977 = vmatprep.subr.mxu0 0.0
    %3978 = vmatpush1.msra.mxu0 0.0
    %3979 = vmatprep.subr.mxu0 0.0
    %3980 = vmatpush1.msra.mxu0 0.0
    %3981 = vmatprep.mubr.f32.mxu0 0.0
    %3982 = vmatmul.mubr.f32.gmra.mrb[0].mxu0 %v3915
    %v3983 = vpop.f32.mrb[0].mxu0
    %v3984 = vadd.f32 %v3838, %v3983
    %v3985 = vpop.f32.mrb[0].mxu0
    %3986 = vdwg.mxu0
    %v3987 = vmul.f32 %v3320, %v37
    %v3988 = vmul.f32 %v3321, %v37
    %v3990 = vsel %vm64, %v3987, 0
    %3992 = vmatprep.subr.mxu0 0.0
    %3993 = vmatpush1.xpose.msra.mxu0 %v3990
    %3994 = vmatprep.subr.mxu0 0.0
    %3995 = vmatpush1.xpose.msra.mxu0 0.0
    %3996 = vmatprep.subr.mxu0 0.0
    %3997 = vmatpush1.xpose.msra.mxu0 0.0
    %3998 = vmatprep.subr.mxu0 0.0
    %3999 = vmatpush1.xpose.msra.mxu0 0.0
    %4000 = vmatprep.subr.mxu0 0.0
    %4001 = vmatpush1.xpose.msra.mxu0 0.0
    %4002 = vmatprep.subr.mxu0 0.0
    %4003 = vmatpush1.xpose.msra.mxu0 0.0
    %4004 = vmatprep.subr.mxu0 0.0
    %4005 = vmatpush1.xpose.msra.mxu0 0.0
    %4006 = vmatprep.subr.mxu0 0.0
    %4007 = vmatpush1.xpose.msra.mxu0 0.0
    %4008 = vmatprep.subr.mxu0 0.0
    %4009 = vmatpush1.xpose.msra.mxu0 0.0
    %4010 = vmatprep.subr.mxu0 0.0
    %4011 = vmatpush1.xpose.msra.mxu0 0.0
    %4012 = vmatprep.subr.mxu0 0.0
    %4013 = vmatpush1.xpose.msra.mxu0 0.0
    %4014 = vmatprep.subr.mxu0 0.0
    %4015 = vmatpush1.xpose.msra.mxu0 0.0
    %4016 = vmatprep.subr.mxu0 0.0
    %4017 = vmatpush1.xpose.msra.mxu0 0.0
    %4018 = vmatprep.subr.mxu0 0.0
    %4019 = vmatpush1.xpose.msra.mxu0 0.0
    %4020 = vmatprep.subr.mxu0 0.0
    %4021 = vmatpush1.xpose.msra.mxu0 0.0
    %4022 = vmatprep.subr.mxu0 0.0
    %4023 = vmatpush1.xpose.msra.mxu0 0.0
    %4024 = vmatprep.subr.mxu0 0.0
    %4025 = vmatpush1.xpose.msra.mxu0 0.0
    %4026 = vmatprep.subr.mxu0 0.0
    %4027 = vmatpush1.xpose.msra.mxu0 0.0
    %4028 = vmatprep.subr.mxu0 0.0
    %4029 = vmatpush1.xpose.msra.mxu0 0.0
    %4030 = vmatprep.subr.mxu0 0.0
    %4031 = vmatpush1.xpose.msra.mxu0 0.0
    %4032 = vmatprep.subr.mxu0 0.0
    %4033 = vmatpush1.xpose.msra.mxu0 0.0
    %4034 = vmatprep.subr.mxu0 0.0
    %4035 = vmatpush1.xpose.msra.mxu0 0.0
    %4036 = vmatprep.subr.mxu0 0.0
    %4037 = vmatpush1.xpose.msra.mxu0 0.0
    %4038 = vmatprep.subr.mxu0 0.0
    %4039 = vmatpush1.xpose.msra.mxu0 0.0
    %4040 = vmatprep.subr.mxu0 0.0
    %4041 = vmatpush1.xpose.msra.mxu0 0.0
    %4042 = vmatprep.subr.mxu0 0.0
    %4043 = vmatpush1.xpose.msra.mxu0 0.0
    %4044 = vmatprep.subr.mxu0 0.0
    %4045 = vmatpush1.xpose.msra.mxu0 0.0
    %4046 = vmatprep.subr.mxu0 0.0
    %4047 = vmatpush1.xpose.msra.mxu0 0.0
    %4048 = vmatprep.subr.mxu0 0.0
    %4049 = vmatpush1.xpose.msra.mxu0 0.0
    %4050 = vmatprep.subr.mxu0 0.0
    %4051 = vmatpush1.xpose.msra.mxu0 0.0
    %4052 = vmatprep.subr.mxu0 0.0
    %4053 = vmatpush1.xpose.msra.mxu0 0.0
    %4054 = vmatprep.subr.mxu0 0.0
    %4055 = vmatpush1.xpose.msra.mxu0 0.0
    %4056 = vmatprep.mubr.f32.mxu0 0.0
    %4057 = vmatmul.mubr.f32.gmra.mrb[0].mxu0 %v3344
    %v4058 = vpop.f32.mrb[0].mxu0
    %v4059 = vadd.f32 0.0, %v4058
    %v4060 = vpop.f32.mrb[0].mxu0
    %4061 = vdwg.mxu0
    %v4063 = vsel %vm64, %v3988, 0
    %4065 = vmatprep.subr.mxu0 0.0
    %4066 = vmatpush1.xpose.msra.mxu0 %v4063
    %4067 = vmatprep.subr.mxu0 0.0
    %4068 = vmatpush1.xpose.msra.mxu0 0.0
    %4069 = vmatprep.subr.mxu0 0.0
    %4070 = vmatpush1.xpose.msra.mxu0 0.0
    %4071 = vmatprep.subr.mxu0 0.0
    %4072 = vmatpush1.xpose.msra.mxu0 0.0
    %4073 = vmatprep.subr.mxu0 0.0
    %4074 = vmatpush1.xpose.msra.mxu0 0.0
    %4075 = vmatprep.subr.mxu0 0.0
    %4076 = vmatpush1.xpose.msra.mxu0 0.0
    %4077 = vmatprep.subr.mxu0 0.0
    %4078 = vmatpush1.xpose.msra.mxu0 0.0
    %4079 = vmatprep.subr.mxu0 0.0
    %4080 = vmatpush1.xpose.msra.mxu0 0.0
    %4081 = vmatprep.subr.mxu0 0.0
    %4082 = vmatpush1.xpose.msra.mxu0 0.0
    %4083 = vmatprep.subr.mxu0 0.0
    %4084 = vmatpush1.xpose.msra.mxu0 0.0
    %4085 = vmatprep.subr.mxu0 0.0
    %4086 = vmatpush1.xpose.msra.mxu0 0.0
    %4087 = vmatprep.subr.mxu0 0.0
    %4088 = vmatpush1.xpose.msra.mxu0 0.0
    %4089 = vmatprep.subr.mxu0 0.0
    %4090 = vmatpush1.xpose.msra.mxu0 0.0
    %4091 = vmatprep.subr.mxu0 0.0
    %4092 = vmatpush1.xpose.msra.mxu0 0.0
    %4093 = vmatprep.subr.mxu0 0.0
    %4094 = vmatpush1.xpose.msra.mxu0 0.0
    %4095 = vmatprep.subr.mxu0 0.0
    %4096 = vmatpush1.xpose.msra.mxu0 0.0
    %4097 = vmatprep.subr.mxu0 0.0
    %4098 = vmatpush1.xpose.msra.mxu0 0.0
    %4099 = vmatprep.subr.mxu0 0.0
    %4100 = vmatpush1.xpose.msra.mxu0 0.0
    %4101 = vmatprep.subr.mxu0 0.0
    %4102 = vmatpush1.xpose.msra.mxu0 0.0
    %4103 = vmatprep.subr.mxu0 0.0
    %4104 = vmatpush1.xpose.msra.mxu0 0.0
    %4105 = vmatprep.subr.mxu0 0.0
    %4106 = vmatpush1.xpose.msra.mxu0 0.0
    %4107 = vmatprep.subr.mxu0 0.0
    %4108 = vmatpush1.xpose.msra.mxu0 0.0
    %4109 = vmatprep.subr.mxu0 0.0
    %4110 = vmatpush1.xpose.msra.mxu0 0.0
    %4111 = vmatprep.subr.mxu0 0.0
    %4112 = vmatpush1.xpose.msra.mxu0 0.0
    %4113 = vmatprep.subr.mxu0 0.0
    %4114 = vmatpush1.xpose.msra.mxu0 0.0
    %4115 = vmatprep.subr.mxu0 0.0
    %4116 = vmatpush1.xpose.msra.mxu0 0.0
    %4117 = vmatprep.subr.mxu0 0.0
    %4118 = vmatpush1.xpose.msra.mxu0 0.0
    %4119 = vmatprep.subr.mxu0 0.0
    %4120 = vmatpush1.xpose.msra.mxu0 0.0
    %4121 = vmatprep.subr.mxu0 0.0
    %4122 = vmatpush1.xpose.msra.mxu0 0.0
    %4123 = vmatprep.subr.mxu0 0.0
    %4124 = vmatpush1.xpose.msra.mxu0 0.0
    %4125 = vmatprep.subr.mxu0 0.0
    %4126 = vmatpush1.xpose.msra.mxu0 0.0
    %4127 = vmatprep.subr.mxu0 0.0
    %4128 = vmatpush1.xpose.msra.mxu0 0.0
    %4129 = vmatprep.mubr.f32.mxu0 0.0
    %4130 = vmatmul.mubr.f32.gmra.mrb[0].mxu0 %v3420
    %v4131 = vpop.f32.mrb[0].mxu0
    %v4132 = vadd.f32 0.0, %v4131
    %v4133 = vpop.f32.mrb[0].mxu0
    %4134 = vdwg.mxu0
    %v4135 = vmul.f32 %v4059, 0.17677669
    %v4136 = vmul.f32 %v4132, 0.17677669
    %v4137 = vsel %vm219, %v4135, -inf
    %4138 = vmax.xlane.f32.xlu0 %v4137
    %v4139 = vpop.xlane.xlu0 %4138
    %v4140 = vsel %vm219, %v4136, -inf
    %4141 = vmax.xlane.f32.xlu0 %v4140
    %v4142 = vpop.xlane.xlu0 %4141
    %v4143 = vsub.f32 %v4135, %v4139
    %v4144 = vsub.f32 %v4136, %v4142
    %v4145 = vmul.f32 %v4143, 1.442695
    %v4146 = vpow.pop %v4145
    %v4147 = vmul.f32 %v4144, 1.442695
    %v4148 = vpow.pop %v4147
    %v4149 = vsel %vm219, %v4146, 0.0
    %4150 = vadd.xlane.f32.xlu0 %v4149
    %v4151 = vpop.xlane.xlu0 %4150
    %v4152 = vsel %vm219, %v4148, 0.0
    %4153 = vadd.xlane.f32.xlu0 %v4152
    %v4154 = vpop.xlane.xlu0 %4153
    %v4155 = vrcp.pop %v4151
    %v4156 = vrcp.pop %v4154
    %v4157 = vmul.f32 %v4146, %v4155
    %v4158 = vmul.f32 %v4148, %v4156
    %v4159 = vmul.f32 %v3322, %v37
    %v4160 = vmul.f32 %v3323, %v37
    %v4162 = vsel %vm219, %v4157, 0
    %4164 = vmatprep.subr.mxu0 0.0
    %4165 = vmatpush1.msra.mxu0 %v4159
    %4166 = vmatprep.subr.mxu0 0.0
    %4167 = vmatpush1.msra.mxu0 0.0
    %4168 = vmatprep.subr.mxu0 0.0
    %4169 = vmatpush1.msra.mxu0 0.0
    %4170 = vmatprep.subr.mxu0 0.0
    %4171 = vmatpush1.msra.mxu0 0.0
    %4172 = vmatprep.subr.mxu0 0.0
    %4173 = vmatpush1.msra.mxu0 0.0
    %4174 = vmatprep.subr.mxu0 0.0
    %4175 = vmatpush1.msra.mxu0 0.0
    %4176 = vmatprep.subr.mxu0 0.0
    %4177 = vmatpush1.msra.mxu0 0.0
    %4178 = vmatprep.subr.mxu0 0.0
    %4179 = vmatpush1.msra.mxu0 0.0
    %4180 = vmatprep.subr.mxu0 0.0
    %4181 = vmatpush1.msra.mxu0 0.0
    %4182 = vmatprep.subr.mxu0 0.0
    %4183 = vmatpush1.msra.mxu0 0.0
    %4184 = vmatprep.subr.mxu0 0.0
    %4185 = vmatpush1.msra.mxu0 0.0
    %4186 = vmatprep.subr.mxu0 0.0
    %4187 = vmatpush1.msra.mxu0 0.0
    %4188 = vmatprep.subr.mxu0 0.0
    %4189 = vmatpush1.msra.mxu0 0.0
    %4190 = vmatprep.subr.mxu0 0.0
    %4191 = vmatpush1.msra.mxu0 0.0
    %4192 = vmatprep.subr.mxu0 0.0
    %4193 = vmatpush1.msra.mxu0 0.0
    %4194 = vmatprep.subr.mxu0 0.0
    %4195 = vmatpush1.msra.mxu0 0.0
    %4196 = vmatprep.subr.mxu0 0.0
    %4197 = vmatpush1.msra.mxu0 0.0
    %4198 = vmatprep.subr.mxu0 0.0
    %4199 = vmatpush1.msra.mxu0 0.0
    %4200 = vmatprep.subr.mxu0 0.0
    %4201 = vmatpush1.msra.mxu0 0.0
    %4202 = vmatprep.subr.mxu0 0.0
    %4203 = vmatpush1.msra.mxu0 0.0
    %4204 = vmatprep.subr.mxu0 0.0
    %4205 = vmatpush1.msra.mxu0 0.0
    %4206 = vmatprep.subr.mxu0 0.0
    %4207 = vmatpush1.msra.mxu0 0.0
    %4208 = vmatprep.subr.mxu0 0.0
    %4209 = vmatpush1.msra.mxu0 0.0
    %4210 = vmatprep.subr.mxu0 0.0
    %4211 = vmatpush1.msra.mxu0 0.0
    %4212 = vmatprep.subr.mxu0 0.0
    %4213 = vmatpush1.msra.mxu0 0.0
    %4214 = vmatprep.subr.mxu0 0.0
    %4215 = vmatpush1.msra.mxu0 0.0
    %4216 = vmatprep.subr.mxu0 0.0
    %4217 = vmatpush1.msra.mxu0 0.0
    %4218 = vmatprep.subr.mxu0 0.0
    %4219 = vmatpush1.msra.mxu0 0.0
    %4220 = vmatprep.subr.mxu0 0.0
    %4221 = vmatpush1.msra.mxu0 0.0
    %4222 = vmatprep.subr.mxu0 0.0
    %4223 = vmatpush1.msra.mxu0 0.0
    %4224 = vmatprep.subr.mxu0 0.0
    %4225 = vmatpush1.msra.mxu0 0.0
    %4226 = vmatprep.subr.mxu0 0.0
    %4227 = vmatpush1.msra.mxu0 0.0
    %4228 = vmatprep.mubr.f32.mxu0 0.0
    %4229 = vmatmul.mubr.f32.gmra.mrb[0].mxu0 %v4162
    %v4230 = vpop.f32.mrb[0].mxu0
    %v4231 = vadd.f32 0.0, %v4230
    %v4232 = vpop.f32.mrb[0].mxu0
    %4233 = vdwg.mxu0
    %v4235 = vsel %vm219, %v4158, 0
    %4237 = vmatprep.subr.mxu0 0.0
    %4238 = vmatpush1.msra.mxu0 %v4160
    %4239 = vmatprep.subr.mxu0 0.0
    %4240 = vmatpush1.msra.mxu0 0.0
    %4241 = vmatprep.subr.mxu0 0.0
    %4242 = vmatpush1.msra.mxu0 0.0
    %4243 = vmatprep.subr.mxu0 0.0
    %4244 = vmatpush1.msra.mxu0 0.0
    %4245 = vmatprep.subr.mxu0 0.0
    %4246 = vmatpush1.msra.mxu0 0.0
    %4247 = vmatprep.subr.mxu0 0.0
    %4248 = vmatpush1.msra.mxu0 0.0
    %4249 = vmatprep.subr.mxu0 0.0
    %4250 = vmatpush1.msra.mxu0 0.0
    %4251 = vmatprep.subr.mxu0 0.0
    %4252 = vmatpush1.msra.mxu0 0.0
    %4253 = vmatprep.subr.mxu0 0.0
    %4254 = vmatpush1.msra.mxu0 0.0
    %4255 = vmatprep.subr.mxu0 0.0
    %4256 = vmatpush1.msra.mxu0 0.0
    %4257 = vmatprep.subr.mxu0 0.0
    %4258 = vmatpush1.msra.mxu0 0.0
    %4259 = vmatprep.subr.mxu0 0.0
    %4260 = vmatpush1.msra.mxu0 0.0
    %4261 = vmatprep.subr.mxu0 0.0
    %4262 = vmatpush1.msra.mxu0 0.0
    %4263 = vmatprep.subr.mxu0 0.0
    %4264 = vmatpush1.msra.mxu0 0.0
    %4265 = vmatprep.subr.mxu0 0.0
    %4266 = vmatpush1.msra.mxu0 0.0
    %4267 = vmatprep.subr.mxu0 0.0
    %4268 = vmatpush1.msra.mxu0 0.0
    %4269 = vmatprep.subr.mxu0 0.0
    %4270 = vmatpush1.msra.mxu0 0.0
    %4271 = vmatprep.subr.mxu0 0.0
    %4272 = vmatpush1.msra.mxu0 0.0
    %4273 = vmatprep.subr.mxu0 0.0
    %4274 = vmatpush1.msra.mxu0 0.0
    %4275 = vmatprep.subr.mxu0 0.0
    %4276 = vmatpush1.msra.mxu0 0.0
    %4277 = vmatprep.subr.mxu0 0.0
    %4278 = vmatpush1.msra.mxu0 0.0
    %4279 = vmatprep.subr.mxu0 0.0
    %4280 = vmatpush1.msra.mxu0 0.0
    %4281 = vmatprep.subr.mxu0 0.0
    %4282 = vmatpush1.msra.mxu0 0.0
    %4283 = vmatprep.subr.mxu0 0.0
    %4284 = vmatpush1.msra.mxu0 0.0
    %4285 = vmatprep.subr.mxu0 0.0
    %4286 = vmatpush1.msra.mxu0 0.0
    %4287 = vmatprep.subr.mxu0 0.0
    %4288 = vmatpush1.msra.mxu0 0.0
    %4289 = vmatprep.subr.mxu0 0.0
    %4290 = vmatpush1.msra.mxu0 0.0
    %4291 = vmatprep.subr.mxu0 0.0
    %4292 = vmatpush1.msra.mxu0 0.0
    %4293 = vmatprep.subr.mxu0 0.0
    %4294 = vmatpush1.msra.mxu0 0.0
    %4295 = vmatprep.subr.mxu0 0.0
    %4296 = vmatpush1.msra.mxu0 0.0
    %4297 = vmatprep.subr.mxu0 0.0
    %4298 = vmatpush1.msra.mxu0 0.0
    %4299 = vmatprep.subr.mxu0 0.0
    %4300 = vmatpush1.msra.mxu0 0.0
    %4301 = vmatprep.mubr.f32.mxu0 0.0
    %4302 = vmatmul.mubr.f32.gmra.mrb[0].mxu0 %v4235
    %v4303 = vpop.f32.mrb[0].mxu0
    %v4304 = vadd.f32 0.0, %v4303
    %v4305 = vpop.f32.mrb[0].mxu0
    %4306 = vdwg.mxu0
    %v4307 = vadd.f32 %v3911, %v4231
    %v4308 = vadd.f32 %v3984, %v4304
    %v4309 = vmul.f32 %v3320, %v42
    %v4310 = vmul.f32 %v3321, %v42
    %v4312 = vsel %vm64, %v4309, 0
    %4314 = vmatprep.subr.mxu0 0.0
    %4315 = vmatpush1.xpose.msra.mxu0 %v4312
    %4316 = vmatprep.subr.mxu0 0.0
    %4317 = vmatpush1.xpose.msra.mxu0 0.0
    %4318 = vmatprep.subr.mxu0 0.0
    %4319 = vmatpush1.xpose.msra.mxu0 0.0
    %4320 = vmatprep.subr.mxu0 0.0
    %4321 = vmatpush1.xpose.msra.mxu0 0.0
    %4322 = vmatprep.subr.mxu0 0.0
    %4323 = vmatpush1.xpose.msra.mxu0 0.0
    %4324 = vmatprep.subr.mxu0 0.0
    %4325 = vmatpush1.xpose.msra.mxu0 0.0
    %4326 = vmatprep.subr.mxu0 0.0
    %4327 = vmatpush1.xpose.msra.mxu0 0.0
    %4328 = vmatprep.subr.mxu0 0.0
    %4329 = vmatpush1.xpose.msra.mxu0 0.0
    %4330 = vmatprep.subr.mxu0 0.0
    %4331 = vmatpush1.xpose.msra.mxu0 0.0
    %4332 = vmatprep.subr.mxu0 0.0
    %4333 = vmatpush1.xpose.msra.mxu0 0.0
    %4334 = vmatprep.subr.mxu0 0.0
    %4335 = vmatpush1.xpose.msra.mxu0 0.0
    %4336 = vmatprep.subr.mxu0 0.0
    %4337 = vmatpush1.xpose.msra.mxu0 0.0
    %4338 = vmatprep.subr.mxu0 0.0
    %4339 = vmatpush1.xpose.msra.mxu0 0.0
    %4340 = vmatprep.subr.mxu0 0.0
    %4341 = vmatpush1.xpose.msra.mxu0 0.0
    %4342 = vmatprep.subr.mxu0 0.0
    %4343 = vmatpush1.xpose.msra.mxu0 0.0
    %4344 = vmatprep.subr.mxu0 0.0
    %4345 = vmatpush1.xpose.msra.mxu0 0.0
    %4346 = vmatprep.subr.mxu0 0.0
    %4347 = vmatpush1.xpose.msra.mxu0 0.0
    %4348 = vmatprep.subr.mxu0 0.0
    %4349 = vmatpush1.xpose.msra.mxu0 0.0
    %4350 = vmatprep.subr.mxu0 0.0
    %4351 = vmatpush1.xpose.msra.mxu0 0.0
    %4352 = vmatprep.subr.mxu0 0.0
    %4353 = vmatpush1.xpose.msra.mxu0 0.0
    %4354 = vmatprep.subr.mxu0 0.0
    %4355 = vmatpush1.xpose.msra.mxu0 0.0
    %4356 = vmatprep.subr.mxu0 0.0
    %4357 = vmatpush1.xpose.msra.mxu0 0.0
    %4358 = vmatprep.subr.mxu0 0.0
    %4359 = vmatpush1.xpose.msra.mxu0 0.0
    %4360 = vmatprep.subr.mxu0 0.0
    %4361 = vmatpush1.xpose.msra.mxu0 0.0
    %4362 = vmatprep.subr.mxu0 0.0
    %4363 = vmatpush1.xpose.msra.mxu0 0.0
    %4364 = vmatprep.subr.mxu0 0.0
    %4365 = vmatpush1.xpose.msra.mxu0 0.0
    %4366 = vmatprep.subr.mxu0 0.0
    %4367 = vmatpush1.xpose.msra.mxu0 0.0
    %4368 = vmatprep.subr.mxu0 0.0
    %4369 = vmatpush1.xpose.msra.mxu0 0.0
    %4370 = vmatprep.subr.mxu0 0.0
    %4371 = vmatpush1.xpose.msra.mxu0 0.0
    %4372 = vmatprep.subr.mxu0 0.0
    %4373 = vmatpush1.xpose.msra.mxu0 0.0
    %4374 = vmatprep.subr.mxu0 0.0
    %4375 = vmatpush1.xpose.msra.mxu0 0.0
    %4376 = vmatprep.subr.mxu0 0.0
    %4377 = vmatpush1.xpose.msra.mxu0 0.0
    %4378 = vmatprep.mubr.f32.mxu0 0.0
    %4379 = vmatmul.mubr.f32.gmra.mrb[0].mxu0 %v3344
    %v4380 = vpop.f32.mrb[0].mxu0
    %v4381 = vadd.f32 0.0, %v4380
    %v4382 = vpop.f32.mrb[0].mxu0
    %4383 = vdwg.mxu0
    %v4385 = vsel %vm64, %v4310, 0
    %4387 = vmatprep.subr.mxu0 0.0
    %4388 = vmatpush1.xpose.msra.mxu0 %v4385
    %4389 = vmatprep.subr.mxu0 0.0
    %4390 = vmatpush1.xpose.msra.mxu0 0.0
    %4391 = vmatprep.subr.mxu0 0.0
    %4392 = vmatpush1.xpose.msra.mxu0 0.0
    %4393 = vmatprep.subr.mxu0 0.0
    %4394 = vmatpush1.xpose.msra.mxu0 0.0
    %4395 = vmatprep.subr.mxu0 0.0
    %4396 = vmatpush1.xpose.msra.mxu0 0.0
    %4397 = vmatprep.subr.mxu0 0.0
    %4398 = vmatpush1.xpose.msra.mxu0 0.0
    %4399 = vmatprep.subr.mxu0 0.0
    %4400 = vmatpush1.xpose.msra.mxu0 0.0
    %4401 = vmatprep.subr.mxu0 0.0
    %4402 = vmatpush1.xpose.msra.mxu0 0.0
    %4403 = vmatprep.subr.mxu0 0.0
    %4404 = vmatpush1.xpose.msra.mxu0 0.0
    %4405 = vmatprep.subr.mxu0 0.0
    %4406 = vmatpush1.xpose.msra.mxu0 0.0
    %4407 = vmatprep.subr.mxu0 0.0
    %4408 = vmatpush1.xpose.msra.mxu0 0.0
    %4409 = vmatprep.subr.mxu0 0.0
    %4410 = vmatpush1.xpose.msra.mxu0 0.0
    %4411 = vmatprep.subr.mxu0 0.0
    %4412 = vmatpush1.xpose.msra.mxu0 0.0
    %4413 = vmatprep.subr.mxu0 0.0
    %4414 = vmatpush1.xpose.msra.mxu0 0.0
    %4415 = vmatprep.subr.mxu0 0.0
    %4416 = vmatpush1.xpose.msra.mxu0 0.0
    %4417 = vmatprep.subr.mxu0 0.0
    %4418 = vmatpush1.xpose.msra.mxu0 0.0
    %4419 = vmatprep.subr.mxu0 0.0
    %4420 = vmatpush1.xpose.msra.mxu0 0.0
    %4421 = vmatprep.subr.mxu0 0.0
    %4422 = vmatpush1.xpose.msra.mxu0 0.0
    %4423 = vmatprep.subr.mxu0 0.0
    %4424 = vmatpush1.xpose.msra.mxu0 0.0
    %4425 = vmatprep.subr.mxu0 0.0
    %4426 = vmatpush1.xpose.msra.mxu0 0.0
    %4427 = vmatprep.subr.mxu0 0.0
    %4428 = vmatpush1.xpose.msra.mxu0 0.0
    %4429 = vmatprep.subr.mxu0 0.0
    %4430 = vmatpush1.xpose.msra.mxu0 0.0
    %4431 = vmatprep.subr.mxu0 0.0
    %4432 = vmatpush1.xpose.msra.mxu0 0.0
    %4433 = vmatprep.subr.mxu0 0.0
    %4434 = vmatpush1.xpose.msra.mxu0 0.0
    %4435 = vmatprep.subr.mxu0 0.0
    %4436 = vmatpush1.xpose.msra.mxu0 0.0
    %4437 = vmatprep.subr.mxu0 0.0
    %4438 = vmatpush1.xpose.msra.mxu0 0.0
    %4439 = vmatprep.subr.mxu0 0.0
    %4440 = vmatpush1.xpose.msra.mxu0 0.0
    %4441 = vmatprep.subr.mxu0 0.0
    %4442 = vmatpush1.xpose.msra.mxu0 0.0
    %4443 = vmatprep.subr.mxu0 0.0
    %4444 = vmatpush1.xpose.msra.mxu0 0.0
    %4445 = vmatprep.subr.mxu0 0.0
    %4446 = vmatpush1.xpose.msra.mxu0 0.0
    %4447 = vmatprep.subr.mxu0 0.0
    %4448 = vmatpush1.xpose.msra.mxu0 0.0
    %4449 = vmatprep.subr.mxu0 0.0
    %4450 = vmatpush1.xpose.msra.mxu0 0.0
    %4451 = vmatprep.mubr.f32.mxu0 0.0
    %4452 = vmatmul.mubr.f32.gmra.mrb[0].mxu0 %v3420
    %v4453 = vpop.f32.mrb[0].mxu0
    %v4454 = vadd.f32 0.0, %v4453
    %v4455 = vpop.f32.mrb[0].mxu0
    %4456 = vdwg.mxu0
    %v4457 = vmul.f32 %v4381, 0.17677669
    %v4458 = vmul.f32 %v4454, 0.17677669
    %v4459 = vsel %vm219, %v4457, -inf
    %4460 = vmax.xlane.f32.xlu0 %v4459
    %v4461 = vpop.xlane.xlu0 %4460
    %v4462 = vsel %vm219, %v4458, -inf
    %4463 = vmax.xlane.f32.xlu0 %v4462
    %v4464 = vpop.xlane.xlu0 %4463
    %v4465 = vsub.f32 %v4457, %v4461
    %v4466 = vsub.f32 %v4458, %v4464
    %v4467 = vmul.f32 %v4465, 1.442695
    %v4468 = vpow.pop %v4467
    %v4469 = vmul.f32 %v4466, 1.442695
    %v4470 = vpow.pop %v4469
    %v4471 = vsel %vm219, %v4468, 0.0
    %4472 = vadd.xlane.f32.xlu0 %v4471
    %v4473 = vpop.xlane.xlu0 %4472
    %v4474 = vsel %vm219, %v4470, 0.0
    %4475 = vadd.xlane.f32.xlu0 %v4474
    %v4476 = vpop.xlane.xlu0 %4475
    %v4477 = vrcp.pop %v4473
    %v4478 = vrcp.pop %v4476
    %v4479 = vmul.f32 %v4468, %v4477
    %v4480 = vmul.f32 %v4470, %v4478
    %v4481 = vmul.f32 %v3322, %v42
    %v4482 = vmul.f32 %v3323, %v42
    %v4484 = vsel %vm219, %v4479, 0
    %4486 = vmatprep.subr.mxu0 0.0
    %4487 = vmatpush1.msra.mxu0 %v4481
    %4488 = vmatprep.subr.mxu0 0.0
    %4489 = vmatpush1.msra.mxu0 0.0
    %4490 = vmatprep.subr.mxu0 0.0
    %4491 = vmatpush1.msra.mxu0 0.0
    %4492 = vmatprep.subr.mxu0 0.0
    %4493 = vmatpush1.msra.mxu0 0.0
    %4494 = vmatprep.subr.mxu0 0.0
    %4495 = vmatpush1.msra.mxu0 0.0
    %4496 = vmatprep.subr.mxu0 0.0
    %4497 = vmatpush1.msra.mxu0 0.0
    %4498 = vmatprep.subr.mxu0 0.0
    %4499 = vmatpush1.msra.mxu0 0.0
    %4500 = vmatprep.subr.mxu0 0.0
    %4501 = vmatpush1.msra.mxu0 0.0
    %4502 = vmatprep.subr.mxu0 0.0
    %4503 = vmatpush1.msra.mxu0 0.0
    %4504 = vmatprep.subr.mxu0 0.0
    %4505 = vmatpush1.msra.mxu0 0.0
    %4506 = vmatprep.subr.mxu0 0.0
    %4507 = vmatpush1.msra.mxu0 0.0
    %4508 = vmatprep.subr.mxu0 0.0
    %4509 = vmatpush1.msra.mxu0 0.0
    %4510 = vmatprep.subr.mxu0 0.0
    %4511 = vmatpush1.msra.mxu0 0.0
    %4512 = vmatprep.subr.mxu0 0.0
    %4513 = vmatpush1.msra.mxu0 0.0
    %4514 = vmatprep.subr.mxu0 0.0
    %4515 = vmatpush1.msra.mxu0 0.0
    %4516 = vmatprep.subr.mxu0 0.0
    %4517 = vmatpush1.msra.mxu0 0.0
    %4518 = vmatprep.subr.mxu0 0.0
    %4519 = vmatpush1.msra.mxu0 0.0
    %4520 = vmatprep.subr.mxu0 0.0
    %4521 = vmatpush1.msra.mxu0 0.0
    %4522 = vmatprep.subr.mxu0 0.0
    %4523 = vmatpush1.msra.mxu0 0.0
    %4524 = vmatprep.subr.mxu0 0.0
    %4525 = vmatpush1.msra.mxu0 0.0
    %4526 = vmatprep.subr.mxu0 0.0
    %4527 = vmatpush1.msra.mxu0 0.0
    %4528 = vmatprep.subr.mxu0 0.0
    %4529 = vmatpush1.msra.mxu0 0.0
    %4530 = vmatprep.subr.mxu0 0.0
    %4531 = vmatpush1.msra.mxu0 0.0
    %4532 = vmatprep.subr.mxu0 0.0
    %4533 = vmatpush1.msra.mxu0 0.0
    %4534 = vmatprep.subr.mxu0 0.0
    %4535 = vmatpush1.msra.mxu0 0.0
    %4536 = vmatprep.subr.mxu0 0.0
    %4537 = vmatpush1.msra.mxu0 0.0
    %4538 = vmatprep.subr.mxu0 0.0
    %4539 = vmatpush1.msra.mxu0 0.0
    %4540 = vmatprep.subr.mxu0 0.0
    %4541 = vmatpush1.msra.mxu0 0.0
    %4542 = vmatprep.subr.mxu0 0.0
    %4543 = vmatpush1.msra.mxu0 0.0
    %4544 = vmatprep.subr.mxu0 0.0
    %4545 = vmatpush1.msra.mxu0 0.0
    %4546 = vmatprep.subr.mxu0 0.0
    %4547 = vmatpush1.msra.mxu0 0.0
    %4548 = vmatprep.subr.mxu0 0.0
    %4549 = vmatpush1.msra.mxu0 0.0
    %4550 = vmatprep.mubr.f32.mxu0 0.0
    %4551 = vmatmul.mubr.f32.gmra.mrb[0].mxu0 %v4484
    %v4552 = vpop.f32.mrb[0].mxu0
    %v4553 = vadd.f32 0.0, %v4552
    %v4554 = vpop.f32.mrb[0].mxu0
    %4555 = vdwg.mxu0
    %v4557 = vsel %vm219, %v4480, 0
    %4559 = vmatprep.subr.mxu0 0.0
    %4560 = vmatpush1.msra.mxu0 %v4482
    %4561 = vmatprep.subr.mxu0 0.0
    %4562 = vmatpush1.msra.mxu0 0.0
    %4563 = vmatprep.subr.mxu0 0.0
    %4564 = vmatpush1.msra.mxu0 0.0
    %4565 = vmatprep.subr.mxu0 0.0
    %4566 = vmatpush1.msra.mxu0 0.0
    %4567 = vmatprep.subr.mxu0 0.0
    %4568 = vmatpush1.msra.mxu0 0.0
    %4569 = vmatprep.subr.mxu0 0.0
    %4570 = vmatpush1.msra.mxu0 0.0
    %4571 = vmatprep.subr.mxu0 0.0
    %4572 = vmatpush1.msra.mxu0 0.0
    %4573 = vmatprep.subr.mxu0 0.0
    %4574 = vmatpush1.msra.mxu0 0.0
    %4575 = vmatprep.subr.mxu0 0.0
    %4576 = vmatpush1.msra.mxu0 0.0
    %4577 = vmatprep.subr.mxu0 0.0
    %4578 = vmatpush1.msra.mxu0 0.0
    %4579 = vmatprep.subr.mxu0 0.0
    %4580 = vmatpush1.msra.mxu0 0.0
    %4581 = vmatprep.subr.mxu0 0.0
    %4582 = vmatpush1.msra.mxu0 0.0
    %4583 = vmatprep.subr.mxu0 0.0
    %4584 = vmatpush1.msra.mxu0 0.0
    %4585 = vmatprep.subr.mxu0 0.0
    %4586 = vmatpush1.msra.mxu0 0.0
    %4587 = vmatprep.subr.mxu0 0.0
    %4588 = vmatpush1.msra.mxu0 0.0
    %4589 = vmatprep.subr.mxu0 0.0
    %4590 = vmatpush1.msra.mxu0 0.0
    %4591 = vmatprep.subr.mxu0 0.0
    %4592 = vmatpush1.msra.mxu0 0.0
    %4593 = vmatprep.subr.mxu0 0.0
    %4594 = vmatpush1.msra.mxu0 0.0
    %4595 = vmatprep.subr.mxu0 0.0
    %4596 = vmatpush1.msra.mxu0 0.0
    %4597 = vmatprep.subr.mxu0 0.0
    %4598 = vmatpush1.msra.mxu0 0.0
    %4599 = vmatprep.subr.mxu0 0.0
    %4600 = vmatpush1.msra.mxu0 0.0
    %4601 = vmatprep.subr.mxu0 0.0
    %4602 = vmatpush1.msra.mxu0 0.0
    %4603 = vmatprep.subr.mxu0 0.0
    %4604 = vmatpush1.msra.mxu0 0.0
    %4605 = vmatprep.subr.mxu0 0.0
    %4606 = vmatpush1.msra.mxu0 0.0
    %4607 = vmatprep.subr.mxu0 0.0
    %4608 = vmatpush1.msra.mxu0 0.0
    %4609 = vmatprep.subr.mxu0 0.0
    %4610 = vmatpush1.msra.mxu0 0.0
    %4611 = vmatprep.subr.mxu0 0.0
    %4612 = vmatpush1.msra.mxu0 0.0
    %4613 = vmatprep.subr.mxu0 0.0
    %4614 = vmatpush1.msra.mxu0 0.0
    %4615 = vmatprep.subr.mxu0 0.0
    %4616 = vmatpush1.msra.mxu0 0.0
    %4617 = vmatprep.subr.mxu0 0.0
    %4618 = vmatpush1.msra.mxu0 0.0
    %4619 = vmatprep.subr.mxu0 0.0
    %4620 = vmatpush1.msra.mxu0 0.0
    %4621 = vmatprep.subr.mxu0 0.0
    %4622 = vmatpush1.msra.mxu0 0.0
    %4623 = vmatprep.mubr.f32.mxu0 0.0
    %4624 = vmatmul.mubr.f32.gmra.mrb[0].mxu0 %v4557
    %v4625 = vpop.f32.mrb[0].mxu0
    %v4626 = vadd.f32 0.0, %v4625
    %v4627 = vpop.f32.mrb[0].mxu0
    %4628 = vdwg.mxu0
    %v4629 = vadd.f32 %v4307, %v4553
    %v4630 = vadd.f32 %v4308, %v4626
    %v4631 = vlaneseq
    %v4632 = vshrl.u32 %v4631, 7
    %v4633 = vsub.s32 0, %v4632
    %v4634 = vrot.slane %v3340, %v4633
    %v4636 = vsel %vm64, %v4629, 0
    %v4639 = vsel %vm64, %v4630, 0
    %4641 = vmatprep.subr.mxu0 0.0
    %4642 = vmatpush1.msra.mxu0 %v3324
    %4643 = vmatprep.subr.mxu0 0.0
    %4644 = vmatpush1.msra.mxu0 %v3325
    %4645 = vmatprep.subr.mxu0 0.0
    %4646 = vmatpush1.msra.mxu0 %v3326
    %4647 = vmatprep.subr.mxu0 0.0
    %4648 = vmatpush1.msra.mxu0 %v3327
    %4649 = vmatprep.subr.mxu0 0.0
    %4650 = vmatpush1.msra.mxu0 0.0
    %4651 = vmatprep.subr.mxu0 0.0
    %4652 = vmatpush1.msra.mxu0 0.0
    %4653 = vmatprep.subr.mxu0 0.0
    %4654 = vmatpush1.msra.mxu0 0.0
    %4655 = vmatprep.subr.mxu0 0.0
    %4656 = vmatpush1.msra.mxu0 0.0
    %4657 = vmatprep.subr.mxu0 0.0
    %4658 = vmatpush1.msra.mxu0 0.0
    %4659 = vmatprep.subr.mxu0 0.0
    %4660 = vmatpush1.msra.mxu0 0.0
    %4661 = vmatprep.subr.mxu0 0.0
    %4662 = vmatpush1.msra.mxu0 0.0
    %4663 = vmatprep.subr.mxu0 0.0
    %4664 = vmatpush1.msra.mxu0 0.0
    %4665 = vmatprep.subr.mxu0 0.0
    %4666 = vmatpush1.msra.mxu0 0.0
    %4667 = vmatprep.subr.mxu0 0.0
    %4668 = vmatpush1.msra.mxu0 0.0
    %4669 = vmatprep.subr.mxu0 0.0
    %4670 = vmatpush1.msra.mxu0 0.0
    %4671 = vmatprep.subr.mxu0 0.0
    %4672 = vmatpush1.msra.mxu0 0.0
    %4673 = vmatprep.subr.mxu0 0.0
    %4674 = vmatpush1.msra.mxu0 0.0
    %4675 = vmatprep.subr.mxu0 0.0
    %4676 = vmatpush1.msra.mxu0 0.0
    %4677 = vmatprep.subr.mxu0 0.0
    %4678 = vmatpush1.msra.mxu0 0.0
    %4679 = vmatprep.subr.mxu0 0.0
    %4680 = vmatpush1.msra.mxu0 0.0
    %4681 = vmatprep.subr.mxu0 0.0
    %4682 = vmatpush1.msra.mxu0 0.0
    %4683 = vmatprep.subr.mxu0 0.0
    %4684 = vmatpush1.msra.mxu0 0.0
    %4685 = vmatprep.subr.mxu0 0.0
    %4686 = vmatpush1.msra.mxu0 0.0
    %4687 = vmatprep.subr.mxu0 0.0
    %4688 = vmatpush1.msra.mxu0 0.0
    %4689 = vmatprep.subr.mxu0 0.0
    %4690 = vmatpush1.msra.mxu0 0.0
    %4691 = vmatprep.subr.mxu0 0.0
    %4692 = vmatpush1.msra.mxu0 0.0
    %4693 = vmatprep.subr.mxu0 0.0
    %4694 = vmatpush1.msra.mxu0 0.0
    %4695 = vmatprep.subr.mxu0 0.0
    %4696 = vmatpush1.msra.mxu0 0.0
    %4697 = vmatprep.subr.mxu0 0.0
    %4698 = vmatpush1.msra.mxu0 0.0
    %4699 = vmatprep.subr.mxu0 0.0
    %4700 = vmatpush1.msra.mxu0 0.0
    %4701 = vmatprep.subr.mxu0 0.0
    %4702 = vmatpush1.msra.mxu0 0.0
    %4703 = vmatprep.subr.mxu0 0.0
    %4704 = vmatpush1.msra.mxu0 0.0
    %4705 = vmatprep.mubr.f32.mxu0 0.0
    %4706 = vmatmul.mubr.f32.gmra.mrb[0].mxu0 %v4636
    %v4707 = vpop.f32.mrb[0].mxu0
    %v4708 = vadd.f32 %v4634, %v4707
    %v4709 = vpop.f32.mrb[0].mxu0
    %4710 = vmatprep.mubr.f32.mxu0 0.0
    %4711 = vmatmul.mubr.f32.gmra.mrb[0].mxu0 %v4639
    %v4712 = vpop.f32.mrb[0].mxu0
    %v4713 = vadd.f32 %v4634, %v4712
    %v4714 = vpop.f32.mrb[0].mxu0
    %4715 = vdwg.mxu0
    %v4716 = vadd.f32 %v4708, %v3322
    %v4717 = vadd.f32 %v4713, %v3323
    %v4718 = vsel %vm64, %v4716, 0.0
    %4719 = vadd.xlane.f32.xlu0 %v4718
    %v4720 = vpop.xlane.xlu0 %4719
    %v4721 = vsel %vm64, %v4717, 0.0
    %4722 = vadd.xlane.f32.xlu0 %v4721
    %v4723 = vpop.xlane.xlu0 %4722
    %v4724 = vmul.f32 %v4720, %v1439
    %v4725 = vmul.f32 %v4723, %v1439
    %v4726 = vsub.f32 %v4716, %v4724
    %v4727 = vsub.f32 %v4717, %v4725
    %v4728 = vmul.f32 %v4726, %v4726
    %v4729 = vmul.f32 %v4727, %v4727
    %v4730 = vsel %vm64, %v4728, 0.0
    %4731 = vadd.xlane.f32.xlu0 %v4730
    %v4732 = vpop.xlane.xlu0 %4731
    %v4733 = vsel %vm64, %v4729, 0.0
    %4734 = vadd.xlane.f32.xlu0 %v4733
    %v4735 = vpop.xlane.xlu0 %4734
    %v4736 = vmul.f32 %v4732, %v1439
    %v4737 = vmul.f32 %v4735, %v1439
    %v4738 = vadd.f32 %v4736, 1e-05
    %v4739 = vadd.f32 %v4737, 1e-05
    %v4740 = vrsqrt.pop %v4738
    %v4741 = vrsqrt.pop %v4739
    %v4742 = vmul.f32 %v4726, %v4740
    %v4743 = vmul.f32 %v4727, %v4741
    %v4744 = vlaneseq
    %v4745 = vshrl.u32 %v4744, 7
    %v4746 = vsub.s32 1, %v4745
    %v4747 = vrot.slane %v3340, %v4746
    %v4748 = vmul.f32 %v4742, %v4747
    %v4749 = vmul.f32 %v4743, %v4747
    %v4750 = vlaneseq
    %v4751 = vshrl.u32 %v4750, 7
    %v4752 = vsub.s32 2, %v4751
    %v4753 = vrot.slane %v3340, %v4752
    %v4754 = vadd.f32 %v4748, %v4753
    %v4755 = vadd.f32 %v4749, %v4753
    %v4756 = vlaneseq
    %v4757 = vshrl.u32 %v4756, 7
    %v4758 = vsub.s32 3, %v4757
    %v4759 = vrot.slane %v3340, %v4758
    %v4761 = vsel %vm64, %v4754, 0
    %v4764 = vsel %vm64, %v4755, 0
    %4766 = vmatprep.subr.mxu0 0.0
    %4767 = vmatpush1.msra.mxu0 %v3328
    %4768 = vmatprep.subr.mxu0 0.0
    %4769 = vmatpush1.msra.mxu0 %v3329
    %4770 = vmatprep.subr.mxu0 0.0
    %4771 = vmatpush1.msra.mxu0 %v3330
    %4772 = vmatprep.subr.mxu0 0.0
    %4773 = vmatpush1.msra.mxu0 %v3331
    %4774 = vmatprep.subr.mxu0 0.0
    %4775 = vmatpush1.msra.mxu0 0.0
    %4776 = vmatprep.subr.mxu0 0.0
    %4777 = vmatpush1.msra.mxu0 0.0
    %4778 = vmatprep.subr.mxu0 0.0
    %4779 = vmatpush1.msra.mxu0 0.0
    %4780 = vmatprep.subr.mxu0 0.0
    %4781 = vmatpush1.msra.mxu0 0.0
    %4782 = vmatprep.subr.mxu0 0.0
    %4783 = vmatpush1.msra.mxu0 0.0
    %4784 = vmatprep.subr.mxu0 0.0
    %4785 = vmatpush1.msra.mxu0 0.0
    %4786 = vmatprep.subr.mxu0 0.0
    %4787 = vmatpush1.msra.mxu0 0.0
    %4788 = vmatprep.subr.mxu0 0.0
    %4789 = vmatpush1.msra.mxu0 0.0
    %4790 = vmatprep.subr.mxu0 0.0
    %4791 = vmatpush1.msra.mxu0 0.0
    %4792 = vmatprep.subr.mxu0 0.0
    %4793 = vmatpush1.msra.mxu0 0.0
    %4794 = vmatprep.subr.mxu0 0.0
    %4795 = vmatpush1.msra.mxu0 0.0
    %4796 = vmatprep.subr.mxu0 0.0
    %4797 = vmatpush1.msra.mxu0 0.0
    %4798 = vmatprep.subr.mxu0 0.0
    %4799 = vmatpush1.msra.mxu0 0.0
    %4800 = vmatprep.subr.mxu0 0.0
    %4801 = vmatpush1.msra.mxu0 0.0
    %4802 = vmatprep.subr.mxu0 0.0
    %4803 = vmatpush1.msra.mxu0 0.0
    %4804 = vmatprep.subr.mxu0 0.0
    %4805 = vmatpush1.msra.mxu0 0.0
    %4806 = vmatprep.subr.mxu0 0.0
    %4807 = vmatpush1.msra.mxu0 0.0
    %4808 = vmatprep.subr.mxu0 0.0
    %4809 = vmatpush1.msra.mxu0 0.0
    %4810 = vmatprep.subr.mxu0 0.0
    %4811 = vmatpush1.msra.mxu0 0.0
    %4812 = vmatprep.subr.mxu0 0.0
    %4813 = vmatpush1.msra.mxu0 0.0
    %4814 = vmatprep.subr.mxu0 0.0
    %4815 = vmatpush1.msra.mxu0 0.0
    %4816 = vmatprep.subr.mxu0 0.0
    %4817 = vmatpush1.msra.mxu0 0.0
    %4818 = vmatprep.subr.mxu0 0.0
    %4819 = vmatpush1.msra.mxu0 0.0
    %4820 = vmatprep.subr.mxu0 0.0
    %4821 = vmatpush1.msra.mxu0 0.0
    %4822 = vmatprep.subr.mxu0 0.0
    %4823 = vmatpush1.msra.mxu0 0.0
    %4824 = vmatprep.subr.mxu0 0.0
    %4825 = vmatpush1.msra.mxu0 0.0
    %4826 = vmatprep.subr.mxu0 0.0
    %4827 = vmatpush1.msra.mxu0 0.0
    %4828 = vmatprep.subr.mxu0 0.0
    %4829 = vmatpush1.msra.mxu0 0.0
    %4830 = vmatprep.mubr.f32.mxu0 0.0
    %4831 = vmatmul.mubr.f32.gmra.mrb[0].mxu0 %v4761
    %v4832 = vpop.f32.mrb[0].mxu0
    %v4833 = vadd.f32 %v4759, %v4832
    %v4834 = vpop.f32.mrb[0].mxu0
    %4835 = vmatprep.mubr.f32.mxu0 0.0
    %4836 = vmatmul.mubr.f32.gmra.mrb[0].mxu0 %v4764
    %v4837 = vpop.f32.mrb[0].mxu0
    %v4838 = vadd.f32 %v4759, %v4837
    %v4839 = vpop.f32.mrb[0].mxu0
    %4840 = vdwg.mxu0
    %v4841 = vmax.f32 %v4833, 0.0
    %v4842 = vmax.f32 %v4838, 0.0
    %v4843 = vlaneseq
    %v4844 = vshrl.u32 %v4843, 7
    %v4845 = vsub.s32 4, %v4844
    %v4846 = vrot.slane %v3340, %v4845
    %v4848 = vsel %vm1563, %v4841, 0
    %v4851 = vsel %vm1563, %v4842, 0
    %4853 = vmatprep.subr.mxu0 0.0
    %4854 = vmatpush1.msra.mxu0 %v3332
    %4855 = vmatprep.subr.mxu0 0.0
    %4856 = vmatpush1.msra.mxu0 %v3333
    %4857 = vmatprep.subr.mxu0 0.0
    %4858 = vmatpush1.msra.mxu0 %v3334
    %4859 = vmatprep.subr.mxu0 0.0
    %4860 = vmatpush1.msra.mxu0 %v3335
    %4861 = vmatprep.subr.mxu0 0.0
    %4862 = vmatpush1.msra.mxu0 %v3336
    %4863 = vmatprep.subr.mxu0 0.0
    %4864 = vmatpush1.msra.mxu0 %v3337
    %4865 = vmatprep.subr.mxu0 0.0
    %4866 = vmatpush1.msra.mxu0 %v3338
    %4867 = vmatprep.subr.mxu0 0.0
    %4868 = vmatpush1.msra.mxu0 %v3339
    %4869 = vmatprep.subr.mxu0 0.0
    %4870 = vmatpush1.msra.mxu0 0.0
    %4871 = vmatprep.subr.mxu0 0.0
    %4872 = vmatpush1.msra.mxu0 0.0
    %4873 = vmatprep.subr.mxu0 0.0
    %4874 = vmatpush1.msra.mxu0 0.0
    %4875 = vmatprep.subr.mxu0 0.0
    %4876 = vmatpush1.msra.mxu0 0.0
    %4877 = vmatprep.subr.mxu0 0.0
    %4878 = vmatpush1.msra.mxu0 0.0
    %4879 = vmatprep.subr.mxu0 0.0
    %4880 = vmatpush1.msra.mxu0 0.0
    %4881 = vmatprep.subr.mxu0 0.0
    %4882 = vmatpush1.msra.mxu0 0.0
    %4883 = vmatprep.subr.mxu0 0.0
    %4884 = vmatpush1.msra.mxu0 0.0
    %4885 = vmatprep.subr.mxu0 0.0
    %4886 = vmatpush1.msra.mxu0 0.0
    %4887 = vmatprep.subr.mxu0 0.0
    %4888 = vmatpush1.msra.mxu0 0.0
    %4889 = vmatprep.subr.mxu0 0.0
    %4890 = vmatpush1.msra.mxu0 0.0
    %4891 = vmatprep.subr.mxu0 0.0
    %4892 = vmatpush1.msra.mxu0 0.0
    %4893 = vmatprep.subr.mxu0 0.0
    %4894 = vmatpush1.msra.mxu0 0.0
    %4895 = vmatprep.subr.mxu0 0.0
    %4896 = vmatpush1.msra.mxu0 0.0
    %4897 = vmatprep.subr.mxu0 0.0
    %4898 = vmatpush1.msra.mxu0 0.0
    %4899 = vmatprep.subr.mxu0 0.0
    %4900 = vmatpush1.msra.mxu0 0.0
    %4901 = vmatprep.subr.mxu0 0.0
    %4902 = vmatpush1.msra.mxu0 0.0
    %4903 = vmatprep.subr.mxu0 0.0
    %4904 = vmatpush1.msra.mxu0 0.0
    %4905 = vmatprep.subr.mxu0 0.0
    %4906 = vmatpush1.msra.mxu0 0.0
    %4907 = vmatprep.subr.mxu0 0.0
    %4908 = vmatpush1.msra.mxu0 0.0
    %4909 = vmatprep.subr.mxu0 0.0
    %4910 = vmatpush1.msra.mxu0 0.0
    %4911 = vmatprep.subr.mxu0 0.0
    %4912 = vmatpush1.msra.mxu0 0.0
    %4913 = vmatprep.subr.mxu0 0.0
    %4914 = vmatpush1.msra.mxu0 0.0
    %4915 = vmatprep.subr.mxu0 0.0
    %4916 = vmatpush1.msra.mxu0 0.0
    %4917 = vmatprep.mubr.f32.mxu0 0.0
    %4918 = vmatmul.mubr.f32.gmra.mrb[0].mxu0 %v4848
    %v4919 = vpop.f32.mrb[0].mxu0
    %v4920 = vadd.f32 %v4846, %v4919
    %v4921 = vpop.f32.mrb[0].mxu0
    %4922 = vmatprep.mubr.f32.mxu0 0.0
    %4923 = vmatmul.mubr.f32.gmra.mrb[0].mxu0 %v4851
    %v4924 = vpop.f32.mrb[0].mxu0
    %v4925 = vadd.f32 %v4846, %v4924
    %v4926 = vpop.f32.mrb[0].mxu0
    %4927 = vdwg.mxu0
    %v4928 = vadd.f32 %v4920, %v4754
    %v4929 = vadd.f32 %v4925, %v4755
    %v4930 = vsel %vm64, %v4928, 0.0
    %4931 = vadd.xlane.f32.xlu0 %v4930
    %v4932 = vpop.xlane.xlu0 %4931
    %v4933 = vsel %vm64, %v4929, 0.0
    %4934 = vadd.xlane.f32.xlu0 %v4933
    %v4935 = vpop.xlane.xlu0 %4934
    %v4936 = vmul.f32 %v4932, %v1439
    %v4937 = vmul.f32 %v4935, %v1439
    %v4938 = vsub.f32 %v4928, %v4936
    %v4939 = vsub.f32 %v4929, %v4937
    %v4940 = vmul.f32 %v4938, %v4938
    %v4941 = vmul.f32 %v4939, %v4939
    %v4942 = vsel %vm64, %v4940, 0.0
    %4943 = vadd.xlane.f32.xlu0 %v4942
    %v4944 = vpop.xlane.xlu0 %4943
    %v4945 = vsel %vm64, %v4941, 0.0
    %4946 = vadd.xlane.f32.xlu0 %v4945
    %v4947 = vpop.xlane.xlu0 %4946
    %v4948 = vmul.f32 %v4944, %v1439
    %v4949 = vmul.f32 %v4947, %v1439
    %v4950 = vadd.f32 %v4948, 1e-05
    %v4951 = vadd.f32 %v4949, 1e-05
    %v4952 = vrsqrt.pop %v4950
    %v4953 = vrsqrt.pop %v4951
    %v4954 = vmul.f32 %v4938, %v4952
    %v4955 = vmul.f32 %v4939, %v4953
    %v4956 = vlaneseq
    %v4957 = vshrl.u32 %v4956, 7
    %v4958 = vsub.s32 5, %v4957
    %v4959 = vrot.slane %v3340, %v4958
    %v4960 = vmul.f32 %v4954, %v4959
    %v4961 = vmul.f32 %v4955, %v4959
    %v4962 = vlaneseq
    %v4963 = vshrl.u32 %v4962, 7
    %v4964 = vsub.s32 6, %v4963
    %v4965 = vrot.slane %v3340, %v4964
    %v4966 = vadd.f32 %v4960, %v4965
    %v4967 = vadd.f32 %v4961, %v4965
    %s4968 = scalar_lea.vmem %s3, 136
    %v4969 = vld [vmem:[%s4968] sm:$0xff]
    %v4970 = vld [vmem:[%s4968 + $0x8] sm:$0xff]
    %v4971 = vld [vmem:[%s4968 + $0x10] sm:$0xff]
    %v4972 = vld [vmem:[%s4968 + $0x18] sm:$0xff]
    %v4973 = vld [vmem:[%s4968 + $0x20] sm:$0xff]
    %v4974 = vld [vmem:[%s4968 + $0x28] sm:$0xff]
    %v4975 = vld [vmem:[%s4968 + $0x30] sm:$0xff]
    %v4976 = vld [vmem:[%s4968 + $0x38] sm:$0xff]
    %v4977 = vld [vmem:[%s4968 + $0x40] sm:$0xff]
    %v4978 = vld [vmem:[%s4968 + $0x48] sm:$0xff]
    %v4979 = vld [vmem:[%s4968 + $0x50] sm:$0xff]
    %v4980 = vld [vmem:[%s4968 + $0x58] sm:$0xff]
    %v4981 = vld [vmem:[%s4968 + $0x60] sm:$0xff]
    %v4982 = vld [vmem:[%s4968 + $0x68] sm:$0xff]
    %v4983 = vld [vmem:[%s4968 + $0x70] sm:$0xff]
    %v4984 = vld [vmem:[%s4968 + $0x78] sm:$0xff]
    %v4985 = vld [vmem:[%s4968 + $0x80] sm:$0x7f]
    %v4987 = vsel %vm64, %v4966, 0
    %4989 = vmatprep.subr.mxu0 0.0
    %4990 = vmatpush1.xpose.msra.mxu0 %v3347
    %4991 = vmatprep.subr.mxu0 0.0
    %4992 = vmatpush1.xpose.msra.mxu0 0.0
    %4993 = vmatprep.subr.mxu0 0.0
    %4994 = vmatpush1.xpose.msra.mxu0 0.0
    %4995 = vmatprep.subr.mxu0 0.0
    %4996 = vmatpush1.xpose.msra.mxu0 0.0
    %4997 = vmatprep.subr.mxu0 0.0
    %4998 = vmatpush1.xpose.msra.mxu0 0.0
    %4999 = vmatprep.subr.mxu0 0.0
    %5000 = vmatpush1.xpose.msra.mxu0 0.0
    %5001 = vmatprep.subr.mxu0 0.0
    %5002 = vmatpush1.xpose.msra.mxu0 0.0
    %5003 = vmatprep.subr.mxu0 0.0
    %5004 = vmatpush1.xpose.msra.mxu0 0.0
    %5005 = vmatprep.subr.mxu0 0.0
    %5006 = vmatpush1.xpose.msra.mxu0 0.0
    %5007 = vmatprep.subr.mxu0 0.0
    %5008 = vmatpush1.xpose.msra.mxu0 0.0
    %5009 = vmatprep.subr.mxu0 0.0
    %5010 = vmatpush1.xpose.msra.mxu0 0.0
    %5011 = vmatprep.subr.mxu0 0.0
    %5012 = vmatpush1.xpose.msra.mxu0 0.0
    %5013 = vmatprep.subr.mxu0 0.0
    %5014 = vmatpush1.xpose.msra.mxu0 0.0
    %5015 = vmatprep.subr.mxu0 0.0
    %5016 = vmatpush1.xpose.msra.mxu0 0.0
    %5017 = vmatprep.subr.mxu0 0.0
    %5018 = vmatpush1.xpose.msra.mxu0 0.0
    %5019 = vmatprep.subr.mxu0 0.0
    %5020 = vmatpush1.xpose.msra.mxu0 0.0
    %5021 = vmatprep.subr.mxu0 0.0
    %5022 = vmatpush1.xpose.msra.mxu0 0.0
    %5023 = vmatprep.subr.mxu0 0.0
    %5024 = vmatpush1.xpose.msra.mxu0 0.0
    %5025 = vmatprep.subr.mxu0 0.0
    %5026 = vmatpush1.xpose.msra.mxu0 0.0
    %5027 = vmatprep.subr.mxu0 0.0
    %5028 = vmatpush1.xpose.msra.mxu0 0.0
    %5029 = vmatprep.subr.mxu0 0.0
    %5030 = vmatpush1.xpose.msra.mxu0 0.0
    %5031 = vmatprep.subr.mxu0 0.0
    %5032 = vmatpush1.xpose.msra.mxu0 0.0
    %5033 = vmatprep.subr.mxu0 0.0
    %5034 = vmatpush1.xpose.msra.mxu0 0.0
    %5035 = vmatprep.subr.mxu0 0.0
    %5036 = vmatpush1.xpose.msra.mxu0 0.0
    %5037 = vmatprep.subr.mxu0 0.0
    %5038 = vmatpush1.xpose.msra.mxu0 0.0
    %5039 = vmatprep.subr.mxu0 0.0
    %5040 = vmatpush1.xpose.msra.mxu0 0.0
    %5041 = vmatprep.subr.mxu0 0.0
    %5042 = vmatpush1.xpose.msra.mxu0 0.0
    %5043 = vmatprep.subr.mxu0 0.0
    %5044 = vmatpush1.xpose.msra.mxu0 0.0
    %5045 = vmatprep.subr.mxu0 0.0
    %5046 = vmatpush1.xpose.msra.mxu0 0.0
    %5047 = vmatprep.subr.mxu0 0.0
    %5048 = vmatpush1.xpose.msra.mxu0 0.0
    %5049 = vmatprep.subr.mxu0 0.0
    %5050 = vmatpush1.xpose.msra.mxu0 0.0
    %5051 = vmatprep.subr.mxu0 0.0
    %5052 = vmatpush1.xpose.msra.mxu0 0.0
    %5053 = vmatprep.mubr.f32.mxu0 0.0
    %5054 = vmatmul.mubr.f32.gmra.mrb[0].mxu0 %v4987
    %v5055 = vpop.f32.mrb[0].mxu0
    %v5056 = vadd.f32 0.0, %v5055
    %v5057 = vpop.f32.mrb[0].mxu0
    %5058 = vdwg.mxu0
    %v5060 = vsel %vm64, %v4967, 0
    %5062 = vmatprep.subr.mxu0 0.0
    %5063 = vmatpush1.xpose.msra.mxu0 %v3423
    %5064 = vmatprep.subr.mxu0 0.0
    %5065 = vmatpush1.xpose.msra.mxu0 0.0
    %5066 = vmatprep.subr.mxu0 0.0
    %5067 = vmatpush1.xpose.msra.mxu0 0.0
    %5068 = vmatprep.subr.mxu0 0.0
    %5069 = vmatpush1.xpose.msra.mxu0 0.0
    %5070 = vmatprep.subr.mxu0 0.0
    %5071 = vmatpush1.xpose.msra.mxu0 0.0
    %5072 = vmatprep.subr.mxu0 0.0
    %5073 = vmatpush1.xpose.msra.mxu0 0.0
    %5074 = vmatprep.subr.mxu0 0.0
    %5075 = vmatpush1.xpose.msra.mxu0 0.0
    %5076 = vmatprep.subr.mxu0 0.0
    %5077 = vmatpush1.xpose.msra.mxu0 0.0
    %5078 = vmatprep.subr.mxu0 0.0
    %5079 = vmatpush1.xpose.msra.mxu0 0.0
    %5080 = vmatprep.subr.mxu0 0.0
    %5081 = vmatpush1.xpose.msra.mxu0 0.0
    %5082 = vmatprep.subr.mxu0 0.0
    %5083 = vmatpush1.xpose.msra.mxu0 0.0
    %5084 = vmatprep.subr.mxu0 0.0
    %5085 = vmatpush1.xpose.msra.mxu0 0.0
    %5086 = vmatprep.subr.mxu0 0.0
    %5087 = vmatpush1.xpose.msra.mxu0 0.0
    %5088 = vmatprep.subr.mxu0 0.0
    %5089 = vmatpush1.xpose.msra.mxu0 0.0
    %5090 = vmatprep.subr.mxu0 0.0
    %5091 = vmatpush1.xpose.msra.mxu0 0.0
    %5092 = vmatprep.subr.mxu0 0.0
    %5093 = vmatpush1.xpose.msra.mxu0 0.0
    %5094 = vmatprep.subr.mxu0 0.0
    %5095 = vmatpush1.xpose.msra.mxu0 0.0
    %5096 = vmatprep.subr.mxu0 0.0
    %5097 = vmatpush1.xpose.msra.mxu0 0.0
    %5098 = vmatprep.subr.mxu0 0.0
    %5099 = vmatpush1.xpose.msra.mxu0 0.0
    %5100 = vmatprep.subr.mxu0 0.0
    %5101 = vmatpush1.xpose.msra.mxu0 0.0
    %5102 = vmatprep.subr.mxu0 0.0
    %5103 = vmatpush1.xpose.msra.mxu0 0.0
    %5104 = vmatprep.subr.mxu0 0.0
    %5105 = vmatpush1.xpose.msra.mxu0 0.0
    %5106 = vmatprep.subr.mxu0 0.0
    %5107 = vmatpush1.xpose.msra.mxu0 0.0
    %5108 = vmatprep.subr.mxu0 0.0
    %5109 = vmatpush1.xpose.msra.mxu0 0.0
    %5110 = vmatprep.subr.mxu0 0.0
    %5111 = vmatpush1.xpose.msra.mxu0 0.0
    %5112 = vmatprep.subr.mxu0 0.0
    %5113 = vmatpush1.xpose.msra.mxu0 0.0
    %5114 = vmatprep.subr.mxu0 0.0
    %5115 = vmatpush1.xpose.msra.mxu0 0.0
    %5116 = vmatprep.subr.mxu0 0.0
    %5117 = vmatpush1.xpose.msra.mxu0 0.0
    %5118 = vmatprep.subr.mxu0 0.0
    %5119 = vmatpush1.xpose.msra.mxu0 0.0
    %5120 = vmatprep.subr.mxu0 0.0
    %5121 = vmatpush1.xpose.msra.mxu0 0.0
    %5122 = vmatprep.subr.mxu0 0.0
    %5123 = vmatpush1.xpose.msra.mxu0 0.0
    %5124 = vmatprep.subr.mxu0 0.0
    %5125 = vmatpush1.xpose.msra.mxu0 0.0
    %5126 = vmatprep.mubr.f32.mxu0 0.0
    %5127 = vmatmul.mubr.f32.gmra.mrb[0].mxu0 %v5060
    %v5128 = vpop.f32.mrb[0].mxu0
    %v5129 = vadd.f32 0.0, %v5128
    %v5130 = vpop.f32.mrb[0].mxu0
    %5131 = vdwg.mxu0
    %v5132 = vmul.f32 %v5056, 0.17677669
    %v5133 = vmul.f32 %v5129, 0.17677669
    %v5134 = vsel %vm219, %v5132, -inf
    %5135 = vmax.xlane.f32.xlu0 %v5134
    %v5136 = vpop.xlane.xlu0 %5135
    %v5137 = vsel %vm219, %v5133, -inf
    %5138 = vmax.xlane.f32.xlu0 %v5137
    %v5139 = vpop.xlane.xlu0 %5138
    %v5140 = vsub.f32 %v5132, %v5136
    %v5141 = vsub.f32 %v5133, %v5139
    %v5142 = vmul.f32 %v5140, 1.442695
    %v5143 = vpow.pop %v5142
    %v5144 = vmul.f32 %v5141, 1.442695
    %v5145 = vpow.pop %v5144
    %v5146 = vsel %vm219, %v5143, 0.0
    %5147 = vadd.xlane.f32.xlu0 %v5146
    %v5148 = vpop.xlane.xlu0 %5147
    %v5149 = vsel %vm219, %v5145, 0.0
    %5150 = vadd.xlane.f32.xlu0 %v5149
    %v5151 = vpop.xlane.xlu0 %5150
    %v5152 = vrcp.pop %v5148
    %v5153 = vrcp.pop %v5151
    %v5154 = vmul.f32 %v5143, %v5152
    %v5155 = vmul.f32 %v5145, %v5153
    %v5156 = vmul.f32 %v4966, %v27
    %v5157 = vmul.f32 %v4967, %v27
    %5158 = vmatprep.subr.mxu0 0.0
    %5159 = vmatpush1.xpose.msra.mxu0 %v3524
    %5160 = vmatprep.subr.mxu0 0.0
    %5161 = vmatpush1.xpose.msra.mxu0 0.0
    %5162 = vmatprep.subr.mxu0 0.0
    %5163 = vmatpush1.xpose.msra.mxu0 0.0
    %5164 = vmatprep.subr.mxu0 0.0
    %5165 = vmatpush1.xpose.msra.mxu0 0.0
    %5166 = vmatprep.subr.mxu0 0.0
    %5167 = vmatpush1.xpose.msra.mxu0 0.0
    %5168 = vmatprep.subr.mxu0 0.0
    %5169 = vmatpush1.xpose.msra.mxu0 0.0
    %5170 = vmatprep.subr.mxu0 0.0
    %5171 = vmatpush1.xpose.msra.mxu0 0.0
    %5172 = vmatprep.subr.mxu0 0.0
    %5173 = vmatpush1.xpose.msra.mxu0 0.0
    %5174 = vmatprep.subr.mxu0 0.0
    %5175 = vmatpush1.xpose.msra.mxu0 0.0
    %5176 = vmatprep.subr.mxu0 0.0
    %5177 = vmatpush1.xpose.msra.mxu0 0.0
    %5178 = vmatprep.subr.mxu0 0.0
    %5179 = vmatpush1.xpose.msra.mxu0 0.0
    %5180 = vmatprep.subr.mxu0 0.0
    %5181 = vmatpush1.xpose.msra.mxu0 0.0
    %5182 = vmatprep.subr.mxu0 0.0
    %5183 = vmatpush1.xpose.msra.mxu0 0.0
    %5184 = vmatprep.subr.mxu0 0.0
    %5185 = vmatpush1.xpose.msra.mxu0 0.0
    %5186 = vmatprep.subr.mxu0 0.0
    %5187 = vmatpush1.xpose.msra.mxu0 0.0
    %5188 = vmatprep.subr.mxu0 0.0
    %5189 = vmatpush1.xpose.msra.mxu0 0.0
    %5190 = vmatprep.subr.mxu0 0.0
    %5191 = vmatpush1.xpose.msra.mxu0 0.0
    %5192 = vmatprep.subr.mxu0 0.0
    %5193 = vmatpush1.xpose.msra.mxu0 0.0
    %5194 = vmatprep.subr.mxu0 0.0
    %5195 = vmatpush1.xpose.msra.mxu0 0.0
    %5196 = vmatprep.subr.mxu0 0.0
    %5197 = vmatpush1.xpose.msra.mxu0 0.0
    %5198 = vmatprep.subr.mxu0 0.0
    %5199 = vmatpush1.xpose.msra.mxu0 0.0
    %5200 = vmatprep.subr.mxu0 0.0
    %5201 = vmatpush1.xpose.msra.mxu0 0.0
    %5202 = vmatprep.subr.mxu0 0.0
    %5203 = vmatpush1.xpose.msra.mxu0 0.0
    %5204 = vmatprep.subr.mxu0 0.0
    %5205 = vmatpush1.xpose.msra.mxu0 0.0
    %5206 = vmatprep.subr.mxu0 0.0
    %5207 = vmatpush1.xpose.msra.mxu0 0.0
    %5208 = vmatprep.subr.mxu0 0.0
    %5209 = vmatpush1.xpose.msra.mxu0 0.0
    %5210 = vmatprep.subr.mxu0 0.0
    %5211 = vmatpush1.xpose.msra.mxu0 0.0
    %5212 = vmatprep.subr.mxu0 0.0
    %5213 = vmatpush1.xpose.msra.mxu0 0.0
    %5214 = vmatprep.subr.mxu0 0.0
    %5215 = vmatpush1.xpose.msra.mxu0 0.0
    %5216 = vmatprep.subr.mxu0 0.0
    %5217 = vmatpush1.xpose.msra.mxu0 0.0
    %5218 = vmatprep.subr.mxu0 0.0
    %5219 = vmatpush1.xpose.msra.mxu0 0.0
    %5220 = vmatprep.subr.mxu0 0.0
    %5221 = vmatpush1.xpose.msra.mxu0 0.0
    %5222 = vmatprep.mubr.f32.mxu0 0.0
    %5223 = vmatmul.mubr.f32.gmra.mrb[0].mxu0 %v4987
    %v5224 = vpop.f32.mrb[0].mxu0
    %v5225 = vadd.f32 0.0, %v5224
    %v5226 = vpop.f32.mrb[0].mxu0
    %5227 = vdwg.mxu0
    %5228 = vmatprep.subr.mxu0 0.0
    %5229 = vmatpush1.xpose.msra.mxu0 %v3597
    %5230 = vmatprep.subr.mxu0 0.0
    %5231 = vmatpush1.xpose.msra.mxu0 0.0
    %5232 = vmatprep.subr.mxu0 0.0
    %5233 = vmatpush1.xpose.msra.mxu0 0.0
    %5234 = vmatprep.subr.mxu0 0.0
    %5235 = vmatpush1.xpose.msra.mxu0 0.0
    %5236 = vmatprep.subr.mxu0 0.0
    %5237 = vmatpush1.xpose.msra.mxu0 0.0
    %5238 = vmatprep.subr.mxu0 0.0
    %5239 = vmatpush1.xpose.msra.mxu0 0.0
    %5240 = vmatprep.subr.mxu0 0.0
    %5241 = vmatpush1.xpose.msra.mxu0 0.0
    %5242 = vmatprep.subr.mxu0 0.0
    %5243 = vmatpush1.xpose.msra.mxu0 0.0
    %5244 = vmatprep.subr.mxu0 0.0
    %5245 = vmatpush1.xpose.msra.mxu0 0.0
    %5246 = vmatprep.subr.mxu0 0.0
    %5247 = vmatpush1.xpose.msra.mxu0 0.0
    %5248 = vmatprep.subr.mxu0 0.0
    %5249 = vmatpush1.xpose.msra.mxu0 0.0
    %5250 = vmatprep.subr.mxu0 0.0
    %5251 = vmatpush1.xpose.msra.mxu0 0.0
    %5252 = vmatprep.subr.mxu0 0.0
    %5253 = vmatpush1.xpose.msra.mxu0 0.0
    %5254 = vmatprep.subr.mxu0 0.0
    %5255 = vmatpush1.xpose.msra.mxu0 0.0
    %5256 = vmatprep.subr.mxu0 0.0
    %5257 = vmatpush1.xpose.msra.mxu0 0.0
    %5258 = vmatprep.subr.mxu0 0.0
    %5259 = vmatpush1.xpose.msra.mxu0 0.0
    %5260 = vmatprep.subr.mxu0 0.0
    %5261 = vmatpush1.xpose.msra.mxu0 0.0
    %5262 = vmatprep.subr.mxu0 0.0
    %5263 = vmatpush1.xpose.msra.mxu0 0.0
    %5264 = vmatprep.subr.mxu0 0.0
    %5265 = vmatpush1.xpose.msra.mxu0 0.0
    %5266 = vmatprep.subr.mxu0 0.0
    %5267 = vmatpush1.xpose.msra.mxu0 0.0
    %5268 = vmatprep.subr.mxu0 0.0
    %5269 = vmatpush1.xpose.msra.mxu0 0.0
    %5270 = vmatprep.subr.mxu0 0.0
    %5271 = vmatpush1.xpose.msra.mxu0 0.0
    %5272 = vmatprep.subr.mxu0 0.0
    %5273 = vmatpush1.xpose.msra.mxu0 0.0
    %5274 = vmatprep.subr.mxu0 0.0
    %5275 = vmatpush1.xpose.msra.mxu0 0.0
    %5276 = vmatprep.subr.mxu0 0.0
    %5277 = vmatpush1.xpose.msra.mxu0 0.0
    %5278 = vmatprep.subr.mxu0 0.0
    %5279 = vmatpush1.xpose.msra.mxu0 0.0
    %5280 = vmatprep.subr.mxu0 0.0
    %5281 = vmatpush1.xpose.msra.mxu0 0.0
    %5282 = vmatprep.subr.mxu0 0.0
    %5283 = vmatpush1.xpose.msra.mxu0 0.0
    %5284 = vmatprep.subr.mxu0 0.0
    %5285 = vmatpush1.xpose.msra.mxu0 0.0
    %5286 = vmatprep.subr.mxu0 0.0
    %5287 = vmatpush1.xpose.msra.mxu0 0.0
    %5288 = vmatprep.subr.mxu0 0.0
    %5289 = vmatpush1.xpose.msra.mxu0 0.0
    %5290 = vmatprep.subr.mxu0 0.0
    %5291 = vmatpush1.xpose.msra.mxu0 0.0
    %5292 = vmatprep.mubr.f32.mxu0 0.0
    %5293 = vmatmul.mubr.f32.gmra.mrb[0].mxu0 %v5060
    %v5294 = vpop.f32.mrb[0].mxu0
    %v5295 = vadd.f32 0.0, %v5294
    %v5296 = vpop.f32.mrb[0].mxu0
    %5297 = vdwg.mxu0
    %v5298 = vmul.f32 %v5225, 0.17677669
    %v5299 = vmul.f32 %v5295, 0.17677669
    %v5300 = vsel %vm219, %v5298, -inf
    %5301 = vmax.xlane.f32.xlu0 %v5300
    %v5302 = vpop.xlane.xlu0 %5301
    %v5303 = vsel %vm219, %v5299, -inf
    %5304 = vmax.xlane.f32.xlu0 %v5303
    %v5305 = vpop.xlane.xlu0 %5304
    %v5306 = vsub.f32 %v5298, %v5302
    %v5307 = vsub.f32 %v5299, %v5305
    %v5308 = vmul.f32 %v5306, 1.442695
    %v5309 = vpow.pop %v5308
    %v5310 = vmul.f32 %v5307, 1.442695
    %v5311 = vpow.pop %v5310
    %v5312 = vsel %vm219, %v5309, 0.0
    %5313 = vadd.xlane.f32.xlu0 %v5312
    %v5314 = vpop.xlane.xlu0 %5313
    %v5315 = vsel %vm219, %v5311, 0.0
    %5316 = vadd.xlane.f32.xlu0 %v5315
    %v5317 = vpop.xlane.xlu0 %5316
    %v5318 = vrcp.pop %v5314
    %v5319 = vrcp.pop %v5317
    %v5320 = vmul.f32 %v5309, %v5318
    %v5321 = vmul.f32 %v5311, %v5319
    %v5322 = vmul.f32 %v4966, %v32
    %v5323 = vmul.f32 %v4967, %v32
    %v5325 = vsel %vm219, %v5320, 0
    %5327 = vmatprep.subr.mxu0 0.0
    %5328 = vmatpush1.msra.mxu0 %v5322
    %5329 = vmatprep.subr.mxu0 0.0
    %5330 = vmatpush1.msra.mxu0 0.0
    %5331 = vmatprep.subr.mxu0 0.0
    %5332 = vmatpush1.msra.mxu0 0.0
    %5333 = vmatprep.subr.mxu0 0.0
    %5334 = vmatpush1.msra.mxu0 0.0
    %5335 = vmatprep.subr.mxu0 0.0
    %5336 = vmatpush1.msra.mxu0 0.0
    %5337 = vmatprep.subr.mxu0 0.0
    %5338 = vmatpush1.msra.mxu0 0.0
    %5339 = vmatprep.subr.mxu0 0.0
    %5340 = vmatpush1.msra.mxu0 0.0
    %5341 = vmatprep.subr.mxu0 0.0
    %5342 = vmatpush1.msra.mxu0 0.0
    %5343 = vmatprep.subr.mxu0 0.0
    %5344 = vmatpush1.msra.mxu0 0.0
    %5345 = vmatprep.subr.mxu0 0.0
    %5346 = vmatpush1.msra.mxu0 0.0
    %5347 = vmatprep.subr.mxu0 0.0
    %5348 = vmatpush1.msra.mxu0 0.0
    %5349 = vmatprep.subr.mxu0 0.0
    %5350 = vmatpush1.msra.mxu0 0.0
    %5351 = vmatprep.subr.mxu0 0.0
    %5352 = vmatpush1.msra.mxu0 0.0
    %5353 = vmatprep.subr.mxu0 0.0
    %5354 = vmatpush1.msra.mxu0 0.0
    %5355 = vmatprep.subr.mxu0 0.0
    %5356 = vmatpush1.msra.mxu0 0.0
    %5357 = vmatprep.subr.mxu0 0.0
    %5358 = vmatpush1.msra.mxu0 0.0
    %5359 = vmatprep.subr.mxu0 0.0
    %5360 = vmatpush1.msra.mxu0 0.0
    %5361 = vmatprep.subr.mxu0 0.0
    %5362 = vmatpush1.msra.mxu0 0.0
    %5363 = vmatprep.subr.mxu0 0.0
    %5364 = vmatpush1.msra.mxu0 0.0
    %5365 = vmatprep.subr.mxu0 0.0
    %5366 = vmatpush1.msra.mxu0 0.0
    %5367 = vmatprep.subr.mxu0 0.0
    %5368 = vmatpush1.msra.mxu0 0.0
    %5369 = vmatprep.subr.mxu0 0.0
    %5370 = vmatpush1.msra.mxu0 0.0
    %5371 = vmatprep.subr.mxu0 0.0
    %5372 = vmatpush1.msra.mxu0 0.0
    %5373 = vmatprep.subr.mxu0 0.0
    %5374 = vmatpush1.msra.mxu0 0.0
    %5375 = vmatprep.subr.mxu0 0.0
    %5376 = vmatpush1.msra.mxu0 0.0
    %5377 = vmatprep.subr.mxu0 0.0
    %5378 = vmatpush1.msra.mxu0 0.0
    %5379 = vmatprep.subr.mxu0 0.0
    %5380 = vmatpush1.msra.mxu0 0.0
    %5381 = vmatprep.subr.mxu0 0.0
    %5382 = vmatpush1.msra.mxu0 0.0
    %5383 = vmatprep.subr.mxu0 0.0
    %5384 = vmatpush1.msra.mxu0 0.0
    %5385 = vmatprep.subr.mxu0 0.0
    %5386 = vmatpush1.msra.mxu0 0.0
    %5387 = vmatprep.subr.mxu0 0.0
    %5388 = vmatpush1.msra.mxu0 0.0
    %5389 = vmatprep.subr.mxu0 0.0
    %5390 = vmatpush1.msra.mxu0 0.0
    %5391 = vmatprep.mubr.f32.mxu0 0.0
    %5392 = vmatmul.mubr.f32.gmra.mrb[0].mxu0 %v5325
    %v5393 = vpop.f32.mrb[0].mxu0
    %v5394 = vadd.f32 0.0, %v5393
    %v5395 = vpop.f32.mrb[0].mxu0
    %5396 = vdwg.mxu0
    %v5398 = vsel %vm219, %v5321, 0
    %5400 = vmatprep.subr.mxu0 0.0
    %5401 = vmatpush1.msra.mxu0 %v5323
    %5402 = vmatprep.subr.mxu0 0.0
    %5403 = vmatpush1.msra.mxu0 0.0
    %5404 = vmatprep.subr.mxu0 0.0
    %5405 = vmatpush1.msra.mxu0 0.0
    %5406 = vmatprep.subr.mxu0 0.0
    %5407 = vmatpush1.msra.mxu0 0.0
    %5408 = vmatprep.subr.mxu0 0.0
    %5409 = vmatpush1.msra.mxu0 0.0
    %5410 = vmatprep.subr.mxu0 0.0
    %5411 = vmatpush1.msra.mxu0 0.0
    %5412 = vmatprep.subr.mxu0 0.0
    %5413 = vmatpush1.msra.mxu0 0.0
    %5414 = vmatprep.subr.mxu0 0.0
    %5415 = vmatpush1.msra.mxu0 0.0
    %5416 = vmatprep.subr.mxu0 0.0
    %5417 = vmatpush1.msra.mxu0 0.0
    %5418 = vmatprep.subr.mxu0 0.0
    %5419 = vmatpush1.msra.mxu0 0.0
    %5420 = vmatprep.subr.mxu0 0.0
    %5421 = vmatpush1.msra.mxu0 0.0
    %5422 = vmatprep.subr.mxu0 0.0
    %5423 = vmatpush1.msra.mxu0 0.0
    %5424 = vmatprep.subr.mxu0 0.0
    %5425 = vmatpush1.msra.mxu0 0.0
    %5426 = vmatprep.subr.mxu0 0.0
    %5427 = vmatpush1.msra.mxu0 0.0
    %5428 = vmatprep.subr.mxu0 0.0
    %5429 = vmatpush1.msra.mxu0 0.0
    %5430 = vmatprep.subr.mxu0 0.0
    %5431 = vmatpush1.msra.mxu0 0.0
    %5432 = vmatprep.subr.mxu0 0.0
    %5433 = vmatpush1.msra.mxu0 0.0
    %5434 = vmatprep.subr.mxu0 0.0
    %5435 = vmatpush1.msra.mxu0 0.0
    %5436 = vmatprep.subr.mxu0 0.0
    %5437 = vmatpush1.msra.mxu0 0.0
    %5438 = vmatprep.subr.mxu0 0.0
    %5439 = vmatpush1.msra.mxu0 0.0
    %5440 = vmatprep.subr.mxu0 0.0
    %5441 = vmatpush1.msra.mxu0 0.0
    %5442 = vmatprep.subr.mxu0 0.0
    %5443 = vmatpush1.msra.mxu0 0.0
    %5444 = vmatprep.subr.mxu0 0.0
    %5445 = vmatpush1.msra.mxu0 0.0
    %5446 = vmatprep.subr.mxu0 0.0
    %5447 = vmatpush1.msra.mxu0 0.0
    %5448 = vmatprep.subr.mxu0 0.0
    %5449 = vmatpush1.msra.mxu0 0.0
    %5450 = vmatprep.subr.mxu0 0.0
    %5451 = vmatpush1.msra.mxu0 0.0
    %5452 = vmatprep.subr.mxu0 0.0
    %5453 = vmatpush1.msra.mxu0 0.0
    %5454 = vmatprep.subr.mxu0 0.0
    %5455 = vmatpush1.msra.mxu0 0.0
    %5456 = vmatprep.subr.mxu0 0.0
    %5457 = vmatpush1.msra.mxu0 0.0
    %5458 = vmatprep.subr.mxu0 0.0
    %5459 = vmatpush1.msra.mxu0 0.0
    %5460 = vmatprep.subr.mxu0 0.0
    %5461 = vmatpush1.msra.mxu0 0.0
    %5462 = vmatprep.subr.mxu0 0.0
    %5463 = vmatpush1.msra.mxu0 0.0
    %5464 = vmatprep.mubr.f32.mxu0 0.0
    %5465 = vmatmul.mubr.f32.gmra.mrb[0].mxu0 %v5398
    %v5466 = vpop.f32.mrb[0].mxu0
    %v5467 = vadd.f32 0.0, %v5466
    %v5468 = vpop.f32.mrb[0].mxu0
    %5469 = vdwg.mxu0
    %v5471 = vsel %vm219, %v5154, 0
    %5473 = vmatprep.subr.mxu0 0.0
    %5474 = vmatpush1.msra.mxu0 %v5156
    %5475 = vmatprep.subr.mxu0 0.0
    %5476 = vmatpush1.msra.mxu0 0.0
    %5477 = vmatprep.subr.mxu0 0.0
    %5478 = vmatpush1.msra.mxu0 0.0
    %5479 = vmatprep.subr.mxu0 0.0
    %5480 = vmatpush1.msra.mxu0 0.0
    %5481 = vmatprep.subr.mxu0 0.0
    %5482 = vmatpush1.msra.mxu0 0.0
    %5483 = vmatprep.subr.mxu0 0.0
    %5484 = vmatpush1.msra.mxu0 0.0
    %5485 = vmatprep.subr.mxu0 0.0
    %5486 = vmatpush1.msra.mxu0 0.0
    %5487 = vmatprep.subr.mxu0 0.0
    %5488 = vmatpush1.msra.mxu0 0.0
    %5489 = vmatprep.subr.mxu0 0.0
    %5490 = vmatpush1.msra.mxu0 0.0
    %5491 = vmatprep.subr.mxu0 0.0
    %5492 = vmatpush1.msra.mxu0 0.0
    %5493 = vmatprep.subr.mxu0 0.0
    %5494 = vmatpush1.msra.mxu0 0.0
    %5495 = vmatprep.subr.mxu0 0.0
    %5496 = vmatpush1.msra.mxu0 0.0
    %5497 = vmatprep.subr.mxu0 0.0
    %5498 = vmatpush1.msra.mxu0 0.0
    %5499 = vmatprep.subr.mxu0 0.0
    %5500 = vmatpush1.msra.mxu0 0.0
    %5501 = vmatprep.subr.mxu0 0.0
    %5502 = vmatpush1.msra.mxu0 0.0
    %5503 = vmatprep.subr.mxu0 0.0
    %5504 = vmatpush1.msra.mxu0 0.0
    %5505 = vmatprep.subr.mxu0 0.0
    %5506 = vmatpush1.msra.mxu0 0.0
    %5507 = vmatprep.subr.mxu0 0.0
    %5508 = vmatpush1.msra.mxu0 0.0
    %5509 = vmatprep.subr.mxu0 0.0
    %5510 = vmatpush1.msra.mxu0 0.0
    %5511 = vmatprep.subr.mxu0 0.0
    %5512 = vmatpush1.msra.mxu0 0.0
    %5513 = vmatprep.subr.mxu0 0.0
    %5514 = vmatpush1.msra.mxu0 0.0
    %5515 = vmatprep.subr.mxu0 0.0
    %5516 = vmatpush1.msra.mxu0 0.0
    %5517 = vmatprep.subr.mxu0 0.0
    %5518 = vmatpush1.msra.mxu0 0.0
    %5519 = vmatprep.subr.mxu0 0.0
    %5520 = vmatpush1.msra.mxu0 0.0
    %5521 = vmatprep.subr.mxu0 0.0
    %5522 = vmatpush1.msra.mxu0 0.0
    %5523 = vmatprep.subr.mxu0 0.0
    %5524 = vmatpush1.msra.mxu0 0.0
    %5525 = vmatprep.subr.mxu0 0.0
    %5526 = vmatpush1.msra.mxu0 0.0
    %5527 = vmatprep.subr.mxu0 0.0
    %5528 = vmatpush1.msra.mxu0 0.0
    %5529 = vmatprep.subr.mxu0 0.0
    %5530 = vmatpush1.msra.mxu0 0.0
    %5531 = vmatprep.subr.mxu0 0.0
    %5532 = vmatpush1.msra.mxu0 0.0
    %5533 = vmatprep.subr.mxu0 0.0
    %5534 = vmatpush1.msra.mxu0 0.0
    %5535 = vmatprep.subr.mxu0 0.0
    %5536 = vmatpush1.msra.mxu0 0.0
    %5537 = vmatprep.mubr.f32.mxu0 0.0
    %5538 = vmatmul.mubr.f32.gmra.mrb[0].mxu0 %v5471
    %v5539 = vpop.f32.mrb[0].mxu0
    %v5540 = vadd.f32 %v5394, %v5539
    %v5541 = vpop.f32.mrb[0].mxu0
    %5542 = vdwg.mxu0
    %v5544 = vsel %vm219, %v5155, 0
    %5546 = vmatprep.subr.mxu0 0.0
    %5547 = vmatpush1.msra.mxu0 %v5157
    %5548 = vmatprep.subr.mxu0 0.0
    %5549 = vmatpush1.msra.mxu0 0.0
    %5550 = vmatprep.subr.mxu0 0.0
    %5551 = vmatpush1.msra.mxu0 0.0
    %5552 = vmatprep.subr.mxu0 0.0
    %5553 = vmatpush1.msra.mxu0 0.0
    %5554 = vmatprep.subr.mxu0 0.0
    %5555 = vmatpush1.msra.mxu0 0.0
    %5556 = vmatprep.subr.mxu0 0.0
    %5557 = vmatpush1.msra.mxu0 0.0
    %5558 = vmatprep.subr.mxu0 0.0
    %5559 = vmatpush1.msra.mxu0 0.0
    %5560 = vmatprep.subr.mxu0 0.0
    %5561 = vmatpush1.msra.mxu0 0.0
    %5562 = vmatprep.subr.mxu0 0.0
    %5563 = vmatpush1.msra.mxu0 0.0
    %5564 = vmatprep.subr.mxu0 0.0
    %5565 = vmatpush1.msra.mxu0 0.0
    %5566 = vmatprep.subr.mxu0 0.0
    %5567 = vmatpush1.msra.mxu0 0.0
    %5568 = vmatprep.subr.mxu0 0.0
    %5569 = vmatpush1.msra.mxu0 0.0
    %5570 = vmatprep.subr.mxu0 0.0
    %5571 = vmatpush1.msra.mxu0 0.0
    %5572 = vmatprep.subr.mxu0 0.0
    %5573 = vmatpush1.msra.mxu0 0.0
    %5574 = vmatprep.subr.mxu0 0.0
    %5575 = vmatpush1.msra.mxu0 0.0
    %5576 = vmatprep.subr.mxu0 0.0
    %5577 = vmatpush1.msra.mxu0 0.0
    %5578 = vmatprep.subr.mxu0 0.0
    %5579 = vmatpush1.msra.mxu0 0.0
    %5580 = vmatprep.subr.mxu0 0.0
    %5581 = vmatpush1.msra.mxu0 0.0
    %5582 = vmatprep.subr.mxu0 0.0
    %5583 = vmatpush1.msra.mxu0 0.0
    %5584 = vmatprep.subr.mxu0 0.0
    %5585 = vmatpush1.msra.mxu0 0.0
    %5586 = vmatprep.subr.mxu0 0.0
    %5587 = vmatpush1.msra.mxu0 0.0
    %5588 = vmatprep.subr.mxu0 0.0
    %5589 = vmatpush1.msra.mxu0 0.0
    %5590 = vmatprep.subr.mxu0 0.0
    %5591 = vmatpush1.msra.mxu0 0.0
    %5592 = vmatprep.subr.mxu0 0.0
    %5593 = vmatpush1.msra.mxu0 0.0
    %5594 = vmatprep.subr.mxu0 0.0
    %5595 = vmatpush1.msra.mxu0 0.0
    %5596 = vmatprep.subr.mxu0 0.0
    %5597 = vmatpush1.msra.mxu0 0.0
    %5598 = vmatprep.subr.mxu0 0.0
    %5599 = vmatpush1.msra.mxu0 0.0
    %5600 = vmatprep.subr.mxu0 0.0
    %5601 = vmatpush1.msra.mxu0 0.0
    %5602 = vmatprep.subr.mxu0 0.0
    %5603 = vmatpush1.msra.mxu0 0.0
    %5604 = vmatprep.subr.mxu0 0.0
    %5605 = vmatpush1.msra.mxu0 0.0
    %5606 = vmatprep.subr.mxu0 0.0
    %5607 = vmatpush1.msra.mxu0 0.0
    %5608 = vmatprep.subr.mxu0 0.0
    %5609 = vmatpush1.msra.mxu0 0.0
    %5610 = vmatprep.mubr.f32.mxu0 0.0
    %5611 = vmatmul.mubr.f32.gmra.mrb[0].mxu0 %v5544
    %v5612 = vpop.f32.mrb[0].mxu0
    %v5613 = vadd.f32 %v5467, %v5612
    %v5614 = vpop.f32.mrb[0].mxu0
    %5615 = vdwg.mxu0
    %5616 = vmatprep.subr.mxu0 0.0
    %5617 = vmatpush1.xpose.msra.mxu0 %v3990
    %5618 = vmatprep.subr.mxu0 0.0
    %5619 = vmatpush1.xpose.msra.mxu0 0.0
    %5620 = vmatprep.subr.mxu0 0.0
    %5621 = vmatpush1.xpose.msra.mxu0 0.0
    %5622 = vmatprep.subr.mxu0 0.0
    %5623 = vmatpush1.xpose.msra.mxu0 0.0
    %5624 = vmatprep.subr.mxu0 0.0
    %5625 = vmatpush1.xpose.msra.mxu0 0.0
    %5626 = vmatprep.subr.mxu0 0.0
    %5627 = vmatpush1.xpose.msra.mxu0 0.0
    %5628 = vmatprep.subr.mxu0 0.0
    %5629 = vmatpush1.xpose.msra.mxu0 0.0
    %5630 = vmatprep.subr.mxu0 0.0
    %5631 = vmatpush1.xpose.msra.mxu0 0.0
    %5632 = vmatprep.subr.mxu0 0.0
    %5633 = vmatpush1.xpose.msra.mxu0 0.0
    %5634 = vmatprep.subr.mxu0 0.0
    %5635 = vmatpush1.xpose.msra.mxu0 0.0
    %5636 = vmatprep.subr.mxu0 0.0
    %5637 = vmatpush1.xpose.msra.mxu0 0.0
    %5638 = vmatprep.subr.mxu0 0.0
    %5639 = vmatpush1.xpose.msra.mxu0 0.0
    %5640 = vmatprep.subr.mxu0 0.0
    %5641 = vmatpush1.xpose.msra.mxu0 0.0
    %5642 = vmatprep.subr.mxu0 0.0
    %5643 = vmatpush1.xpose.msra.mxu0 0.0
    %5644 = vmatprep.subr.mxu0 0.0
    %5645 = vmatpush1.xpose.msra.mxu0 0.0
    %5646 = vmatprep.subr.mxu0 0.0
    %5647 = vmatpush1.xpose.msra.mxu0 0.0
    %5648 = vmatprep.subr.mxu0 0.0
    %5649 = vmatpush1.xpose.msra.mxu0 0.0
    %5650 = vmatprep.subr.mxu0 0.0
    %5651 = vmatpush1.xpose.msra.mxu0 0.0
    %5652 = vmatprep.subr.mxu0 0.0
    %5653 = vmatpush1.xpose.msra.mxu0 0.0
    %5654 = vmatprep.subr.mxu0 0.0
    %5655 = vmatpush1.xpose.msra.mxu0 0.0
    %5656 = vmatprep.subr.mxu0 0.0
    %5657 = vmatpush1.xpose.msra.mxu0 0.0
    %5658 = vmatprep.subr.mxu0 0.0
    %5659 = vmatpush1.xpose.msra.mxu0 0.0
    %5660 = vmatprep.subr.mxu0 0.0
    %5661 = vmatpush1.xpose.msra.mxu0 0.0
    %5662 = vmatprep.subr.mxu0 0.0
    %5663 = vmatpush1.xpose.msra.mxu0 0.0
    %5664 = vmatprep.subr.mxu0 0.0
    %5665 = vmatpush1.xpose.msra.mxu0 0.0
    %5666 = vmatprep.subr.mxu0 0.0
    %5667 = vmatpush1.xpose.msra.mxu0 0.0
    %5668 = vmatprep.subr.mxu0 0.0
    %5669 = vmatpush1.xpose.msra.mxu0 0.0
    %5670 = vmatprep.subr.mxu0 0.0
    %5671 = vmatpush1.xpose.msra.mxu0 0.0
    %5672 = vmatprep.subr.mxu0 0.0
    %5673 = vmatpush1.xpose.msra.mxu0 0.0
    %5674 = vmatprep.subr.mxu0 0.0
    %5675 = vmatpush1.xpose.msra.mxu0 0.0
    %5676 = vmatprep.subr.mxu0 0.0
    %5677 = vmatpush1.xpose.msra.mxu0 0.0
    %5678 = vmatprep.subr.mxu0 0.0
    %5679 = vmatpush1.xpose.msra.mxu0 0.0
    %5680 = vmatprep.mubr.f32.mxu0 0.0
    %5681 = vmatmul.mubr.f32.gmra.mrb[0].mxu0 %v4987
    %v5682 = vpop.f32.mrb[0].mxu0
    %v5683 = vadd.f32 0.0, %v5682
    %v5684 = vpop.f32.mrb[0].mxu0
    %5685 = vdwg.mxu0
    %5686 = vmatprep.subr.mxu0 0.0
    %5687 = vmatpush1.xpose.msra.mxu0 %v4063
    %5688 = vmatprep.subr.mxu0 0.0
    %5689 = vmatpush1.xpose.msra.mxu0 0.0
    %5690 = vmatprep.subr.mxu0 0.0
    %5691 = vmatpush1.xpose.msra.mxu0 0.0
    %5692 = vmatprep.subr.mxu0 0.0
    %5693 = vmatpush1.xpose.msra.mxu0 0.0
    %5694 = vmatprep.subr.mxu0 0.0
    %5695 = vmatpush1.xpose.msra.mxu0 0.0
    %5696 = vmatprep.subr.mxu0 0.0
    %5697 = vmatpush1.xpose.msra.mxu0 0.0
    %5698 = vmatprep.subr.mxu0 0.0
    %5699 = vmatpush1.xpose.msra.mxu0 0.0
    %5700 = vmatprep.subr.mxu0 0.0
    %5701 = vmatpush1.xpose.msra.mxu0 0.0
    %5702 = vmatprep.subr.mxu0 0.0
    %5703 = vmatpush1.xpose.msra.mxu0 0.0
    %5704 = vmatprep.subr.mxu0 0.0
    %5705 = vmatpush1.xpose.msra.mxu0 0.0
    %5706 = vmatprep.subr.mxu0 0.0
    %5707 = vmatpush1.xpose.msra.mxu0 0.0
    %5708 = vmatprep.subr.mxu0 0.0
    %5709 = vmatpush1.xpose.msra.mxu0 0.0
    %5710 = vmatprep.subr.mxu0 0.0
    %5711 = vmatpush1.xpose.msra.mxu0 0.0
    %5712 = vmatprep.subr.mxu0 0.0
    %5713 = vmatpush1.xpose.msra.mxu0 0.0
    %5714 = vmatprep.subr.mxu0 0.0
    %5715 = vmatpush1.xpose.msra.mxu0 0.0
    %5716 = vmatprep.subr.mxu0 0.0
    %5717 = vmatpush1.xpose.msra.mxu0 0.0
    %5718 = vmatprep.subr.mxu0 0.0
    %5719 = vmatpush1.xpose.msra.mxu0 0.0
    %5720 = vmatprep.subr.mxu0 0.0
    %5721 = vmatpush1.xpose.msra.mxu0 0.0
    %5722 = vmatprep.subr.mxu0 0.0
    %5723 = vmatpush1.xpose.msra.mxu0 0.0
    %5724 = vmatprep.subr.mxu0 0.0
    %5725 = vmatpush1.xpose.msra.mxu0 0.0
    %5726 = vmatprep.subr.mxu0 0.0
    %5727 = vmatpush1.xpose.msra.mxu0 0.0
    %5728 = vmatprep.subr.mxu0 0.0
    %5729 = vmatpush1.xpose.msra.mxu0 0.0
    %5730 = vmatprep.subr.mxu0 0.0
    %5731 = vmatpush1.xpose.msra.mxu0 0.0
    %5732 = vmatprep.subr.mxu0 0.0
    %5733 = vmatpush1.xpose.msra.mxu0 0.0
    %5734 = vmatprep.subr.mxu0 0.0
    %5735 = vmatpush1.xpose.msra.mxu0 0.0
    %5736 = vmatprep.subr.mxu0 0.0
    %5737 = vmatpush1.xpose.msra.mxu0 0.0
    %5738 = vmatprep.subr.mxu0 0.0
    %5739 = vmatpush1.xpose.msra.mxu0 0.0
    %5740 = vmatprep.subr.mxu0 0.0
    %5741 = vmatpush1.xpose.msra.mxu0 0.0
    %5742 = vmatprep.subr.mxu0 0.0
    %5743 = vmatpush1.xpose.msra.mxu0 0.0
    %5744 = vmatprep.subr.mxu0 0.0
    %5745 = vmatpush1.xpose.msra.mxu0 0.0
    %5746 = vmatprep.subr.mxu0 0.0
    %5747 = vmatpush1.xpose.msra.mxu0 0.0
    %5748 = vmatprep.subr.mxu0 0.0
    %5749 = vmatpush1.xpose.msra.mxu0 0.0
    %5750 = vmatprep.mubr.f32.mxu0 0.0
    %5751 = vmatmul.mubr.f32.gmra.mrb[0].mxu0 %v5060
    %v5752 = vpop.f32.mrb[0].mxu0
    %v5753 = vadd.f32 0.0, %v5752
    %v5754 = vpop.f32.mrb[0].mxu0
    %5755 = vdwg.mxu0
    %v5756 = vmul.f32 %v5683, 0.17677669
    %v5757 = vmul.f32 %v5753, 0.17677669
    %v5758 = vsel %vm219, %v5756, -inf
    %5759 = vmax.xlane.f32.xlu0 %v5758
    %v5760 = vpop.xlane.xlu0 %5759
    %v5761 = vsel %vm219, %v5757, -inf
    %5762 = vmax.xlane.f32.xlu0 %v5761
    %v5763 = vpop.xlane.xlu0 %5762
    %v5764 = vsub.f32 %v5756, %v5760
    %v5765 = vsub.f32 %v5757, %v5763
    %v5766 = vmul.f32 %v5764, 1.442695
    %v5767 = vpow.pop %v5766
    %v5768 = vmul.f32 %v5765, 1.442695
    %v5769 = vpow.pop %v5768
    %v5770 = vsel %vm219, %v5767, 0.0
    %5771 = vadd.xlane.f32.xlu0 %v5770
    %v5772 = vpop.xlane.xlu0 %5771
    %v5773 = vsel %vm219, %v5769, 0.0
    %5774 = vadd.xlane.f32.xlu0 %v5773
    %v5775 = vpop.xlane.xlu0 %5774
    %v5776 = vrcp.pop %v5772
    %v5777 = vrcp.pop %v5775
    %v5778 = vmul.f32 %v5767, %v5776
    %v5779 = vmul.f32 %v5769, %v5777
    %v5780 = vmul.f32 %v4966, %v37
    %v5781 = vmul.f32 %v4967, %v37
    %v5783 = vsel %vm219, %v5778, 0
    %5785 = vmatprep.subr.mxu0 0.0
    %5786 = vmatpush1.msra.mxu0 %v5780
    %5787 = vmatprep.subr.mxu0 0.0
    %5788 = vmatpush1.msra.mxu0 0.0
    %5789 = vmatprep.subr.mxu0 0.0
    %5790 = vmatpush1.msra.mxu0 0.0
    %5791 = vmatprep.subr.mxu0 0.0
    %5792 = vmatpush1.msra.mxu0 0.0
    %5793 = vmatprep.subr.mxu0 0.0
    %5794 = vmatpush1.msra.mxu0 0.0
    %5795 = vmatprep.subr.mxu0 0.0
    %5796 = vmatpush1.msra.mxu0 0.0
    %5797 = vmatprep.subr.mxu0 0.0
    %5798 = vmatpush1.msra.mxu0 0.0
    %5799 = vmatprep.subr.mxu0 0.0
    %5800 = vmatpush1.msra.mxu0 0.0
    %5801 = vmatprep.subr.mxu0 0.0
    %5802 = vmatpush1.msra.mxu0 0.0
    %5803 = vmatprep.subr.mxu0 0.0
    %5804 = vmatpush1.msra.mxu0 0.0
    %5805 = vmatprep.subr.mxu0 0.0
    %5806 = vmatpush1.msra.mxu0 0.0
    %5807 = vmatprep.subr.mxu0 0.0
    %5808 = vmatpush1.msra.mxu0 0.0
    %5809 = vmatprep.subr.mxu0 0.0
    %5810 = vmatpush1.msra.mxu0 0.0
    %5811 = vmatprep.subr.mxu0 0.0
    %5812 = vmatpush1.msra.mxu0 0.0
    %5813 = vmatprep.subr.mxu0 0.0
    %5814 = vmatpush1.msra.mxu0 0.0
    %5815 = vmatprep.subr.mxu0 0.0
    %5816 = vmatpush1.msra.mxu0 0.0
    %5817 = vmatprep.subr.mxu0 0.0
    %5818 = vmatpush1.msra.mxu0 0.0
    %5819 = vmatprep.subr.mxu0 0.0
    %5820 = vmatpush1.msra.mxu0 0.0
    %5821 = vmatprep.subr.mxu0 0.0
    %5822 = vmatpush1.msra.mxu0 0.0
    %5823 = vmatprep.subr.mxu0 0.0
    %5824 = vmatpush1.msra.mxu0 0.0
    %5825 = vmatprep.subr.mxu0 0.0
    %5826 = vmatpush1.msra.mxu0 0.0
    %5827 = vmatprep.subr.mxu0 0.0
    %5828 = vmatpush1.msra.mxu0 0.0
    %5829 = vmatprep.subr.mxu0 0.0
    %5830 = vmatpush1.msra.mxu0 0.0
    %5831 = vmatprep.subr.mxu0 0.0
    %5832 = vmatpush1.msra.mxu0 0.0
    %5833 = vmatprep.subr.mxu0 0.0
    %5834 = vmatpush1.msra.mxu0 0.0
    %5835 = vmatprep.subr.mxu0 0.0
    %5836 = vmatpush1.msra.mxu0 0.0
    %5837 = vmatprep.subr.mxu0 0.0
    %5838 = vmatpush1.msra.mxu0 0.0
    %5839 = vmatprep.subr.mxu0 0.0
    %5840 = vmatpush1.msra.mxu0 0.0
    %5841 = vmatprep.subr.mxu0 0.0
    %5842 = vmatpush1.msra.mxu0 0.0
    %5843 = vmatprep.subr.mxu0 0.0
    %5844 = vmatpush1.msra.mxu0 0.0
    %5845 = vmatprep.subr.mxu0 0.0
    %5846 = vmatpush1.msra.mxu0 0.0
    %5847 = vmatprep.subr.mxu0 0.0
    %5848 = vmatpush1.msra.mxu0 0.0
    %5849 = vmatprep.mubr.f32.mxu0 0.0
    %5850 = vmatmul.mubr.f32.gmra.mrb[0].mxu0 %v5783
    %v5851 = vpop.f32.mrb[0].mxu0
    %v5852 = vadd.f32 0.0, %v5851
    %v5853 = vpop.f32.mrb[0].mxu0
    %5854 = vdwg.mxu0
    %v5856 = vsel %vm219, %v5779, 0
    %5858 = vmatprep.subr.mxu0 0.0
    %5859 = vmatpush1.msra.mxu0 %v5781
    %5860 = vmatprep.subr.mxu0 0.0
    %5861 = vmatpush1.msra.mxu0 0.0
    %5862 = vmatprep.subr.mxu0 0.0
    %5863 = vmatpush1.msra.mxu0 0.0
    %5864 = vmatprep.subr.mxu0 0.0
    %5865 = vmatpush1.msra.mxu0 0.0
    %5866 = vmatprep.subr.mxu0 0.0
    %5867 = vmatpush1.msra.mxu0 0.0
    %5868 = vmatprep.subr.mxu0 0.0
    %5869 = vmatpush1.msra.mxu0 0.0
    %5870 = vmatprep.subr.mxu0 0.0
    %5871 = vmatpush1.msra.mxu0 0.0
    %5872 = vmatprep.subr.mxu0 0.0
    %5873 = vmatpush1.msra.mxu0 0.0
    %5874 = vmatprep.subr.mxu0 0.0
    %5875 = vmatpush1.msra.mxu0 0.0
    %5876 = vmatprep.subr.mxu0 0.0
    %5877 = vmatpush1.msra.mxu0 0.0
    %5878 = vmatprep.subr.mxu0 0.0
    %5879 = vmatpush1.msra.mxu0 0.0
    %5880 = vmatprep.subr.mxu0 0.0
    %5881 = vmatpush1.msra.mxu0 0.0
    %5882 = vmatprep.subr.mxu0 0.0
    %5883 = vmatpush1.msra.mxu0 0.0
    %5884 = vmatprep.subr.mxu0 0.0
    %5885 = vmatpush1.msra.mxu0 0.0
    %5886 = vmatprep.subr.mxu0 0.0
    %5887 = vmatpush1.msra.mxu0 0.0
    %5888 = vmatprep.subr.mxu0 0.0
    %5889 = vmatpush1.msra.mxu0 0.0
    %5890 = vmatprep.subr.mxu0 0.0
    %5891 = vmatpush1.msra.mxu0 0.0
    %5892 = vmatprep.subr.mxu0 0.0
    %5893 = vmatpush1.msra.mxu0 0.0
    %5894 = vmatprep.subr.mxu0 0.0
    %5895 = vmatpush1.msra.mxu0 0.0
    %5896 = vmatprep.subr.mxu0 0.0
    %5897 = vmatpush1.msra.mxu0 0.0
    %5898 = vmatprep.subr.mxu0 0.0
    %5899 = vmatpush1.msra.mxu0 0.0
    %5900 = vmatprep.subr.mxu0 0.0
    %5901 = vmatpush1.msra.mxu0 0.0
    %5902 = vmatprep.subr.mxu0 0.0
    %5903 = vmatpush1.msra.mxu0 0.0
    %5904 = vmatprep.subr.mxu0 0.0
    %5905 = vmatpush1.msra.mxu0 0.0
    %5906 = vmatprep.subr.mxu0 0.0
    %5907 = vmatpush1.msra.mxu0 0.0
    %5908 = vmatprep.subr.mxu0 0.0
    %5909 = vmatpush1.msra.mxu0 0.0
    %5910 = vmatprep.subr.mxu0 0.0
    %5911 = vmatpush1.msra.mxu0 0.0
    %5912 = vmatprep.subr.mxu0 0.0
    %5913 = vmatpush1.msra.mxu0 0.0
    %5914 = vmatprep.subr.mxu0 0.0
    %5915 = vmatpush1.msra.mxu0 0.0
    %5916 = vmatprep.subr.mxu0 0.0
    %5917 = vmatpush1.msra.mxu0 0.0
    %5918 = vmatprep.subr.mxu0 0.0
    %5919 = vmatpush1.msra.mxu0 0.0
    %5920 = vmatprep.subr.mxu0 0.0
    %5921 = vmatpush1.msra.mxu0 0.0
    %5922 = vmatprep.mubr.f32.mxu0 0.0
    %5923 = vmatmul.mubr.f32.gmra.mrb[0].mxu0 %v5856
    %v5924 = vpop.f32.mrb[0].mxu0
    %v5925 = vadd.f32 0.0, %v5924
    %v5926 = vpop.f32.mrb[0].mxu0
    %5927 = vdwg.mxu0
    %v5928 = vadd.f32 %v5540, %v5852
    %v5929 = vadd.f32 %v5613, %v5925
    %5930 = vmatprep.subr.mxu0 0.0
    %5931 = vmatpush1.xpose.msra.mxu0 %v4312
    %5932 = vmatprep.subr.mxu0 0.0
    %5933 = vmatpush1.xpose.msra.mxu0 0.0
    %5934 = vmatprep.subr.mxu0 0.0
    %5935 = vmatpush1.xpose.msra.mxu0 0.0
    %5936 = vmatprep.subr.mxu0 0.0
    %5937 = vmatpush1.xpose.msra.mxu0 0.0
    %5938 = vmatprep.subr.mxu0 0.0
    %5939 = vmatpush1.xpose.msra.mxu0 0.0
    %5940 = vmatprep.subr.mxu0 0.0
    %5941 = vmatpush1.xpose.msra.mxu0 0.0
    %5942 = vmatprep.subr.mxu0 0.0
    %5943 = vmatpush1.xpose.msra.mxu0 0.0
    %5944 = vmatprep.subr.mxu0 0.0
    %5945 = vmatpush1.xpose.msra.mxu0 0.0
    %5946 = vmatprep.subr.mxu0 0.0
    %5947 = vmatpush1.xpose.msra.mxu0 0.0
    %5948 = vmatprep.subr.mxu0 0.0
    %5949 = vmatpush1.xpose.msra.mxu0 0.0
    %5950 = vmatprep.subr.mxu0 0.0
    %5951 = vmatpush1.xpose.msra.mxu0 0.0
    %5952 = vmatprep.subr.mxu0 0.0
    %5953 = vmatpush1.xpose.msra.mxu0 0.0
    %5954 = vmatprep.subr.mxu0 0.0
    %5955 = vmatpush1.xpose.msra.mxu0 0.0
    %5956 = vmatprep.subr.mxu0 0.0
    %5957 = vmatpush1.xpose.msra.mxu0 0.0
    %5958 = vmatprep.subr.mxu0 0.0
    %5959 = vmatpush1.xpose.msra.mxu0 0.0
    %5960 = vmatprep.subr.mxu0 0.0
    %5961 = vmatpush1.xpose.msra.mxu0 0.0
    %5962 = vmatprep.subr.mxu0 0.0
    %5963 = vmatpush1.xpose.msra.mxu0 0.0
    %5964 = vmatprep.subr.mxu0 0.0
    %5965 = vmatpush1.xpose.msra.mxu0 0.0
    %5966 = vmatprep.subr.mxu0 0.0
    %5967 = vmatpush1.xpose.msra.mxu0 0.0
    %5968 = vmatprep.subr.mxu0 0.0
    %5969 = vmatpush1.xpose.msra.mxu0 0.0
    %5970 = vmatprep.subr.mxu0 0.0
    %5971 = vmatpush1.xpose.msra.mxu0 0.0
    %5972 = vmatprep.subr.mxu0 0.0
    %5973 = vmatpush1.xpose.msra.mxu0 0.0
    %5974 = vmatprep.subr.mxu0 0.0
    %5975 = vmatpush1.xpose.msra.mxu0 0.0
    %5976 = vmatprep.subr.mxu0 0.0
    %5977 = vmatpush1.xpose.msra.mxu0 0.0
    %5978 = vmatprep.subr.mxu0 0.0
    %5979 = vmatpush1.xpose.msra.mxu0 0.0
    %5980 = vmatprep.subr.mxu0 0.0
    %5981 = vmatpush1.xpose.msra.mxu0 0.0
    %5982 = vmatprep.subr.mxu0 0.0
    %5983 = vmatpush1.xpose.msra.mxu0 0.0
    %5984 = vmatprep.subr.mxu0 0.0
    %5985 = vmatpush1.xpose.msra.mxu0 0.0
    %5986 = vmatprep.subr.mxu0 0.0
    %5987 = vmatpush1.xpose.msra.mxu0 0.0
    %5988 = vmatprep.subr.mxu0 0.0
    %5989 = vmatpush1.xpose.msra.mxu0 0.0
    %5990 = vmatprep.subr.mxu0 0.0
    %5991 = vmatpush1.xpose.msra.mxu0 0.0
    %5992 = vmatprep.subr.mxu0 0.0
    %5993 = vmatpush1.xpose.msra.mxu0 0.0
    %5994 = vmatprep.mubr.f32.mxu0 0.0
    %5995 = vmatmul.mubr.f32.gmra.mrb[0].mxu0 %v4987
    %v5996 = vpop.f32.mrb[0].mxu0
    %v5997 = vadd.f32 0.0, %v5996
    %v5998 = vpop.f32.mrb[0].mxu0
    %5999 = vdwg.mxu0
    %6000 = vmatprep.subr.mxu0 0.0
    %6001 = vmatpush1.xpose.msra.mxu0 %v4385
    %6002 = vmatprep.subr.mxu0 0.0
    %6003 = vmatpush1.xpose.msra.mxu0 0.0
    %6004 = vmatprep.subr.mxu0 0.0
    %6005 = vmatpush1.xpose.msra.mxu0 0.0
    %6006 = vmatprep.subr.mxu0 0.0
    %6007 = vmatpush1.xpose.msra.mxu0 0.0
    %6008 = vmatprep.subr.mxu0 0.0
    %6009 = vmatpush1.xpose.msra.mxu0 0.0
    %6010 = vmatprep.subr.mxu0 0.0
    %6011 = vmatpush1.xpose.msra.mxu0 0.0
    %6012 = vmatprep.subr.mxu0 0.0
    %6013 = vmatpush1.xpose.msra.mxu0 0.0
    %6014 = vmatprep.subr.mxu0 0.0
    %6015 = vmatpush1.xpose.msra.mxu0 0.0
    %6016 = vmatprep.subr.mxu0 0.0
    %6017 = vmatpush1.xpose.msra.mxu0 0.0
    %6018 = vmatprep.subr.mxu0 0.0
    %6019 = vmatpush1.xpose.msra.mxu0 0.0
    %6020 = vmatprep.subr.mxu0 0.0
    %6021 = vmatpush1.xpose.msra.mxu0 0.0
    %6022 = vmatprep.subr.mxu0 0.0
    %6023 = vmatpush1.xpose.msra.mxu0 0.0
    %6024 = vmatprep.subr.mxu0 0.0
    %6025 = vmatpush1.xpose.msra.mxu0 0.0
    %6026 = vmatprep.subr.mxu0 0.0
    %6027 = vmatpush1.xpose.msra.mxu0 0.0
    %6028 = vmatprep.subr.mxu0 0.0
    %6029 = vmatpush1.xpose.msra.mxu0 0.0
    %6030 = vmatprep.subr.mxu0 0.0
    %6031 = vmatpush1.xpose.msra.mxu0 0.0
    %6032 = vmatprep.subr.mxu0 0.0
    %6033 = vmatpush1.xpose.msra.mxu0 0.0
    %6034 = vmatprep.subr.mxu0 0.0
    %6035 = vmatpush1.xpose.msra.mxu0 0.0
    %6036 = vmatprep.subr.mxu0 0.0
    %6037 = vmatpush1.xpose.msra.mxu0 0.0
    %6038 = vmatprep.subr.mxu0 0.0
    %6039 = vmatpush1.xpose.msra.mxu0 0.0
    %6040 = vmatprep.subr.mxu0 0.0
    %6041 = vmatpush1.xpose.msra.mxu0 0.0
    %6042 = vmatprep.subr.mxu0 0.0
    %6043 = vmatpush1.xpose.msra.mxu0 0.0
    %6044 = vmatprep.subr.mxu0 0.0
    %6045 = vmatpush1.xpose.msra.mxu0 0.0
    %6046 = vmatprep.subr.mxu0 0.0
    %6047 = vmatpush1.xpose.msra.mxu0 0.0
    %6048 = vmatprep.subr.mxu0 0.0
    %6049 = vmatpush1.xpose.msra.mxu0 0.0
    %6050 = vmatprep.subr.mxu0 0.0
    %6051 = vmatpush1.xpose.msra.mxu0 0.0
    %6052 = vmatprep.subr.mxu0 0.0
    %6053 = vmatpush1.xpose.msra.mxu0 0.0
    %6054 = vmatprep.subr.mxu0 0.0
    %6055 = vmatpush1.xpose.msra.mxu0 0.0
    %6056 = vmatprep.subr.mxu0 0.0
    %6057 = vmatpush1.xpose.msra.mxu0 0.0
    %6058 = vmatprep.subr.mxu0 0.0
    %6059 = vmatpush1.xpose.msra.mxu0 0.0
    %6060 = vmatprep.subr.mxu0 0.0
    %6061 = vmatpush1.xpose.msra.mxu0 0.0
    %6062 = vmatprep.subr.mxu0 0.0
    %6063 = vmatpush1.xpose.msra.mxu0 0.0
    %6064 = vmatprep.mubr.f32.mxu0 0.0
    %6065 = vmatmul.mubr.f32.gmra.mrb[0].mxu0 %v5060
    %v6066 = vpop.f32.mrb[0].mxu0
    %v6067 = vadd.f32 0.0, %v6066
    %v6068 = vpop.f32.mrb[0].mxu0
    %6069 = vdwg.mxu0
    %v6070 = vmul.f32 %v5997, 0.17677669
    %v6071 = vmul.f32 %v6067, 0.17677669
    %v6072 = vsel %vm219, %v6070, -inf
    %6073 = vmax.xlane.f32.xlu0 %v6072
    %v6074 = vpop.xlane.xlu0 %6073
    %v6075 = vsel %vm219, %v6071, -inf
    %6076 = vmax.xlane.f32.xlu0 %v6075
    %v6077 = vpop.xlane.xlu0 %6076
    %v6078 = vsub.f32 %v6070, %v6074
    %v6079 = vsub.f32 %v6071, %v6077
    %v6080 = vmul.f32 %v6078, 1.442695
    %v6081 = vpow.pop %v6080
    %v6082 = vmul.f32 %v6079, 1.442695
    %v6083 = vpow.pop %v6082
    %v6084 = vsel %vm219, %v6081, 0.0
    %6085 = vadd.xlane.f32.xlu0 %v6084
    %v6086 = vpop.xlane.xlu0 %6085
    %v6087 = vsel %vm219, %v6083, 0.0
    %6088 = vadd.xlane.f32.xlu0 %v6087
    %v6089 = vpop.xlane.xlu0 %6088
    %v6090 = vrcp.pop %v6086
    %v6091 = vrcp.pop %v6089
    %v6092 = vmul.f32 %v6081, %v6090
    %v6093 = vmul.f32 %v6083, %v6091
    %v6094 = vmul.f32 %v4966, %v42
    %v6095 = vmul.f32 %v4967, %v42
    %v6097 = vsel %vm219, %v6092, 0
    %6099 = vmatprep.subr.mxu0 0.0
    %6100 = vmatpush1.msra.mxu0 %v6094
    %6101 = vmatprep.subr.mxu0 0.0
    %6102 = vmatpush1.msra.mxu0 0.0
    %6103 = vmatprep.subr.mxu0 0.0
    %6104 = vmatpush1.msra.mxu0 0.0
    %6105 = vmatprep.subr.mxu0 0.0
    %6106 = vmatpush1.msra.mxu0 0.0
    %6107 = vmatprep.subr.mxu0 0.0
    %6108 = vmatpush1.msra.mxu0 0.0
    %6109 = vmatprep.subr.mxu0 0.0
    %6110 = vmatpush1.msra.mxu0 0.0
    %6111 = vmatprep.subr.mxu0 0.0
    %6112 = vmatpush1.msra.mxu0 0.0
    %6113 = vmatprep.subr.mxu0 0.0
    %6114 = vmatpush1.msra.mxu0 0.0
    %6115 = vmatprep.subr.mxu0 0.0
    %6116 = vmatpush1.msra.mxu0 0.0
    %6117 = vmatprep.subr.mxu0 0.0
    %6118 = vmatpush1.msra.mxu0 0.0
    %6119 = vmatprep.subr.mxu0 0.0
    %6120 = vmatpush1.msra.mxu0 0.0
    %6121 = vmatprep.subr.mxu0 0.0
    %6122 = vmatpush1.msra.mxu0 0.0
    %6123 = vmatprep.subr.mxu0 0.0
    %6124 = vmatpush1.msra.mxu0 0.0
    %6125 = vmatprep.subr.mxu0 0.0
    %6126 = vmatpush1.msra.mxu0 0.0
    %6127 = vmatprep.subr.mxu0 0.0
    %6128 = vmatpush1.msra.mxu0 0.0
    %6129 = vmatprep.subr.mxu0 0.0
    %6130 = vmatpush1.msra.mxu0 0.0
    %6131 = vmatprep.subr.mxu0 0.0
    %6132 = vmatpush1.msra.mxu0 0.0
    %6133 = vmatprep.subr.mxu0 0.0
    %6134 = vmatpush1.msra.mxu0 0.0
    %6135 = vmatprep.subr.mxu0 0.0
    %6136 = vmatpush1.msra.mxu0 0.0
    %6137 = vmatprep.subr.mxu0 0.0
    %6138 = vmatpush1.msra.mxu0 0.0
    %6139 = vmatprep.subr.mxu0 0.0
    %6140 = vmatpush1.msra.mxu0 0.0
    %6141 = vmatprep.subr.mxu0 0.0
    %6142 = vmatpush1.msra.mxu0 0.0
    %6143 = vmatprep.subr.mxu0 0.0
    %6144 = vmatpush1.msra.mxu0 0.0
    %6145 = vmatprep.subr.mxu0 0.0
    %6146 = vmatpush1.msra.mxu0 0.0
    %6147 = vmatprep.subr.mxu0 0.0
    %6148 = vmatpush1.msra.mxu0 0.0
    %6149 = vmatprep.subr.mxu0 0.0
    %6150 = vmatpush1.msra.mxu0 0.0
    %6151 = vmatprep.subr.mxu0 0.0
    %6152 = vmatpush1.msra.mxu0 0.0
    %6153 = vmatprep.subr.mxu0 0.0
    %6154 = vmatpush1.msra.mxu0 0.0
    %6155 = vmatprep.subr.mxu0 0.0
    %6156 = vmatpush1.msra.mxu0 0.0
    %6157 = vmatprep.subr.mxu0 0.0
    %6158 = vmatpush1.msra.mxu0 0.0
    %6159 = vmatprep.subr.mxu0 0.0
    %6160 = vmatpush1.msra.mxu0 0.0
    %6161 = vmatprep.subr.mxu0 0.0
    %6162 = vmatpush1.msra.mxu0 0.0
    %6163 = vmatprep.mubr.f32.mxu0 0.0
    %6164 = vmatmul.mubr.f32.gmra.mrb[0].mxu0 %v6097
    %v6165 = vpop.f32.mrb[0].mxu0
    %v6166 = vadd.f32 0.0, %v6165
    %v6167 = vpop.f32.mrb[0].mxu0
    %6168 = vdwg.mxu0
    %v6170 = vsel %vm219, %v6093, 0
    %6172 = vmatprep.subr.mxu0 0.0
    %6173 = vmatpush1.msra.mxu0 %v6095
    %6174 = vmatprep.subr.mxu0 0.0
    %6175 = vmatpush1.msra.mxu0 0.0
    %6176 = vmatprep.subr.mxu0 0.0
    %6177 = vmatpush1.msra.mxu0 0.0
    %6178 = vmatprep.subr.mxu0 0.0
    %6179 = vmatpush1.msra.mxu0 0.0
    %6180 = vmatprep.subr.mxu0 0.0
    %6181 = vmatpush1.msra.mxu0 0.0
    %6182 = vmatprep.subr.mxu0 0.0
    %6183 = vmatpush1.msra.mxu0 0.0
    %6184 = vmatprep.subr.mxu0 0.0
    %6185 = vmatpush1.msra.mxu0 0.0
    %6186 = vmatprep.subr.mxu0 0.0
    %6187 = vmatpush1.msra.mxu0 0.0
    %6188 = vmatprep.subr.mxu0 0.0
    %6189 = vmatpush1.msra.mxu0 0.0
    %6190 = vmatprep.subr.mxu0 0.0
    %6191 = vmatpush1.msra.mxu0 0.0
    %6192 = vmatprep.subr.mxu0 0.0
    %6193 = vmatpush1.msra.mxu0 0.0
    %6194 = vmatprep.subr.mxu0 0.0
    %6195 = vmatpush1.msra.mxu0 0.0
    %6196 = vmatprep.subr.mxu0 0.0
    %6197 = vmatpush1.msra.mxu0 0.0
    %6198 = vmatprep.subr.mxu0 0.0
    %6199 = vmatpush1.msra.mxu0 0.0
    %6200 = vmatprep.subr.mxu0 0.0
    %6201 = vmatpush1.msra.mxu0 0.0
    %6202 = vmatprep.subr.mxu0 0.0
    %6203 = vmatpush1.msra.mxu0 0.0
    %6204 = vmatprep.subr.mxu0 0.0
    %6205 = vmatpush1.msra.mxu0 0.0
    %6206 = vmatprep.subr.mxu0 0.0
    %6207 = vmatpush1.msra.mxu0 0.0
    %6208 = vmatprep.subr.mxu0 0.0
    %6209 = vmatpush1.msra.mxu0 0.0
    %6210 = vmatprep.subr.mxu0 0.0
    %6211 = vmatpush1.msra.mxu0 0.0
    %6212 = vmatprep.subr.mxu0 0.0
    %6213 = vmatpush1.msra.mxu0 0.0
    %6214 = vmatprep.subr.mxu0 0.0
    %6215 = vmatpush1.msra.mxu0 0.0
    %6216 = vmatprep.subr.mxu0 0.0
    %6217 = vmatpush1.msra.mxu0 0.0
    %6218 = vmatprep.subr.mxu0 0.0
    %6219 = vmatpush1.msra.mxu0 0.0
    %6220 = vmatprep.subr.mxu0 0.0
    %6221 = vmatpush1.msra.mxu0 0.0
    %6222 = vmatprep.subr.mxu0 0.0
    %6223 = vmatpush1.msra.mxu0 0.0
    %6224 = vmatprep.subr.mxu0 0.0
    %6225 = vmatpush1.msra.mxu0 0.0
    %6226 = vmatprep.subr.mxu0 0.0
    %6227 = vmatpush1.msra.mxu0 0.0
    %6228 = vmatprep.subr.mxu0 0.0
    %6229 = vmatpush1.msra.mxu0 0.0
    %6230 = vmatprep.subr.mxu0 0.0
    %6231 = vmatpush1.msra.mxu0 0.0
    %6232 = vmatprep.subr.mxu0 0.0
    %6233 = vmatpush1.msra.mxu0 0.0
    %6234 = vmatprep.subr.mxu0 0.0
    %6235 = vmatpush1.msra.mxu0 0.0
    %6236 = vmatprep.mubr.f32.mxu0 0.0
    %6237 = vmatmul.mubr.f32.gmra.mrb[0].mxu0 %v6170
    %v6238 = vpop.f32.mrb[0].mxu0
    %v6239 = vadd.f32 0.0, %v6238
    %v6240 = vpop.f32.mrb[0].mxu0
    %6241 = vdwg.mxu0
    %v6242 = vadd.f32 %v5928, %v6166
    %v6243 = vadd.f32 %v5929, %v6239
    %v6244 = vlaneseq
    %v6245 = vshrl.u32 %v6244, 7
    %v6246 = vsub.s32 0, %v6245
    %v6247 = vrot.slane %v4985, %v6246
    %v6249 = vsel %vm64, %v6242, 0
    %v6252 = vsel %vm64, %v6243, 0
    %6254 = vmatprep.subr.mxu0 0.0
    %6255 = vmatpush1.msra.mxu0 %v4969
    %6256 = vmatprep.subr.mxu0 0.0
    %6257 = vmatpush1.msra.mxu0 %v4970
    %6258 = vmatprep.subr.mxu0 0.0
    %6259 = vmatpush1.msra.mxu0 %v4971
    %6260 = vmatprep.subr.mxu0 0.0
    %6261 = vmatpush1.msra.mxu0 %v4972
    %6262 = vmatprep.subr.mxu0 0.0
    %6263 = vmatpush1.msra.mxu0 0.0
    %6264 = vmatprep.subr.mxu0 0.0
    %6265 = vmatpush1.msra.mxu0 0.0
    %6266 = vmatprep.subr.mxu0 0.0
    %6267 = vmatpush1.msra.mxu0 0.0
    %6268 = vmatprep.subr.mxu0 0.0
    %6269 = vmatpush1.msra.mxu0 0.0
    %6270 = vmatprep.subr.mxu0 0.0
    %6271 = vmatpush1.msra.mxu0 0.0
    %6272 = vmatprep.subr.mxu0 0.0
    %6273 = vmatpush1.msra.mxu0 0.0
    %6274 = vmatprep.subr.mxu0 0.0
    %6275 = vmatpush1.msra.mxu0 0.0
    %6276 = vmatprep.subr.mxu0 0.0
    %6277 = vmatpush1.msra.mxu0 0.0
    %6278 = vmatprep.subr.mxu0 0.0
    %6279 = vmatpush1.msra.mxu0 0.0
    %6280 = vmatprep.subr.mxu0 0.0
    %6281 = vmatpush1.msra.mxu0 0.0
    %6282 = vmatprep.subr.mxu0 0.0
    %6283 = vmatpush1.msra.mxu0 0.0
    %6284 = vmatprep.subr.mxu0 0.0
    %6285 = vmatpush1.msra.mxu0 0.0
    %6286 = vmatprep.subr.mxu0 0.0
    %6287 = vmatpush1.msra.mxu0 0.0
    %6288 = vmatprep.subr.mxu0 0.0
    %6289 = vmatpush1.msra.mxu0 0.0
    %6290 = vmatprep.subr.mxu0 0.0
    %6291 = vmatpush1.msra.mxu0 0.0
    %6292 = vmatprep.subr.mxu0 0.0
    %6293 = vmatpush1.msra.mxu0 0.0
    %6294 = vmatprep.subr.mxu0 0.0
    %6295 = vmatpush1.msra.mxu0 0.0
    %6296 = vmatprep.subr.mxu0 0.0
    %6297 = vmatpush1.msra.mxu0 0.0
    %6298 = vmatprep.subr.mxu0 0.0
    %6299 = vmatpush1.msra.mxu0 0.0
    %6300 = vmatprep.subr.mxu0 0.0
    %6301 = vmatpush1.msra.mxu0 0.0
    %6302 = vmatprep.subr.mxu0 0.0
    %6303 = vmatpush1.msra.mxu0 0.0
    %6304 = vmatprep.subr.mxu0 0.0
    %6305 = vmatpush1.msra.mxu0 0.0
    %6306 = vmatprep.subr.mxu0 0.0
    %6307 = vmatpush1.msra.mxu0 0.0
    %6308 = vmatprep.subr.mxu0 0.0
    %6309 = vmatpush1.msra.mxu0 0.0
    %6310 = vmatprep.subr.mxu0 0.0
    %6311 = vmatpush1.msra.mxu0 0.0
    %6312 = vmatprep.subr.mxu0 0.0
    %6313 = vmatpush1.msra.mxu0 0.0
    %6314 = vmatprep.subr.mxu0 0.0
    %6315 = vmatpush1.msra.mxu0 0.0
    %6316 = vmatprep.subr.mxu0 0.0
    %6317 = vmatpush1.msra.mxu0 0.0
    %6318 = vmatprep.mubr.f32.mxu0 0.0
    %6319 = vmatmul.mubr.f32.gmra.mrb[0].mxu0 %v6249
    %v6320 = vpop.f32.mrb[0].mxu0
    %v6321 = vadd.f32 %v6247, %v6320
    %v6322 = vpop.f32.mrb[0].mxu0
    %6323 = vmatprep.mubr.f32.mxu0 0.0
    %6324 = vmatmul.mubr.f32.gmra.mrb[0].mxu0 %v6252
    %v6325 = vpop.f32.mrb[0].mxu0
    %v6326 = vadd.f32 %v6247, %v6325
    %v6327 = vpop.f32.mrb[0].mxu0
    %6328 = vdwg.mxu0
    %v6329 = vadd.f32 %v6321, %v4966
    %v6330 = vadd.f32 %v6326, %v4967
    %v6331 = vsel %vm64, %v6329, 0.0
    %6332 = vadd.xlane.f32.xlu0 %v6331
    %v6333 = vpop.xlane.xlu0 %6332
    %v6334 = vsel %vm64, %v6330, 0.0
    %6335 = vadd.xlane.f32.xlu0 %v6334
    %v6336 = vpop.xlane.xlu0 %6335
    %v6337 = vmul.f32 %v6333, %v1439
    %v6338 = vmul.f32 %v6336, %v1439
    %v6339 = vsub.f32 %v6329, %v6337
    %v6340 = vsub.f32 %v6330, %v6338
    %v6341 = vmul.f32 %v6339, %v6339
    %v6342 = vmul.f32 %v6340, %v6340
    %v6343 = vsel %vm64, %v6341, 0.0
    %6344 = vadd.xlane.f32.xlu0 %v6343
    %v6345 = vpop.xlane.xlu0 %6344
    %v6346 = vsel %vm64, %v6342, 0.0
    %6347 = vadd.xlane.f32.xlu0 %v6346
    %v6348 = vpop.xlane.xlu0 %6347
    %v6349 = vmul.f32 %v6345, %v1439
    %v6350 = vmul.f32 %v6348, %v1439
    %v6351 = vadd.f32 %v6349, 1e-05
    %v6352 = vadd.f32 %v6350, 1e-05
    %v6353 = vrsqrt.pop %v6351
    %v6354 = vrsqrt.pop %v6352
    %v6355 = vmul.f32 %v6339, %v6353
    %v6356 = vmul.f32 %v6340, %v6354
    %v6357 = vlaneseq
    %v6358 = vshrl.u32 %v6357, 7
    %v6359 = vsub.s32 1, %v6358
    %v6360 = vrot.slane %v4985, %v6359
    %v6361 = vmul.f32 %v6355, %v6360
    %v6362 = vmul.f32 %v6356, %v6360
    %v6363 = vlaneseq
    %v6364 = vshrl.u32 %v6363, 7
    %v6365 = vsub.s32 2, %v6364
    %v6366 = vrot.slane %v4985, %v6365
    %v6367 = vadd.f32 %v6361, %v6366
    %v6368 = vadd.f32 %v6362, %v6366
    %v6369 = vlaneseq
    %v6370 = vshrl.u32 %v6369, 7
    %v6371 = vsub.s32 3, %v6370
    %v6372 = vrot.slane %v4985, %v6371
    %v6374 = vsel %vm64, %v6367, 0
    %v6377 = vsel %vm64, %v6368, 0
    %6379 = vmatprep.subr.mxu0 0.0
    %6380 = vmatpush1.msra.mxu0 %v4973
    %6381 = vmatprep.subr.mxu0 0.0
    %6382 = vmatpush1.msra.mxu0 %v4974
    %6383 = vmatprep.subr.mxu0 0.0
    %6384 = vmatpush1.msra.mxu0 %v4975
    %6385 = vmatprep.subr.mxu0 0.0
    %6386 = vmatpush1.msra.mxu0 %v4976
    %6387 = vmatprep.subr.mxu0 0.0
    %6388 = vmatpush1.msra.mxu0 0.0
    %6389 = vmatprep.subr.mxu0 0.0
    %6390 = vmatpush1.msra.mxu0 0.0
    %6391 = vmatprep.subr.mxu0 0.0
    %6392 = vmatpush1.msra.mxu0 0.0
    %6393 = vmatprep.subr.mxu0 0.0
    %6394 = vmatpush1.msra.mxu0 0.0
    %6395 = vmatprep.subr.mxu0 0.0
    %6396 = vmatpush1.msra.mxu0 0.0
    %6397 = vmatprep.subr.mxu0 0.0
    %6398 = vmatpush1.msra.mxu0 0.0
    %6399 = vmatprep.subr.mxu0 0.0
    %6400 = vmatpush1.msra.mxu0 0.0
    %6401 = vmatprep.subr.mxu0 0.0
    %6402 = vmatpush1.msra.mxu0 0.0
    %6403 = vmatprep.subr.mxu0 0.0
    %6404 = vmatpush1.msra.mxu0 0.0
    %6405 = vmatprep.subr.mxu0 0.0
    %6406 = vmatpush1.msra.mxu0 0.0
    %6407 = vmatprep.subr.mxu0 0.0
    %6408 = vmatpush1.msra.mxu0 0.0
    %6409 = vmatprep.subr.mxu0 0.0
    %6410 = vmatpush1.msra.mxu0 0.0
    %6411 = vmatprep.subr.mxu0 0.0
    %6412 = vmatpush1.msra.mxu0 0.0
    %6413 = vmatprep.subr.mxu0 0.0
    %6414 = vmatpush1.msra.mxu0 0.0
    %6415 = vmatprep.subr.mxu0 0.0
    %6416 = vmatpush1.msra.mxu0 0.0
    %6417 = vmatprep.subr.mxu0 0.0
    %6418 = vmatpush1.msra.mxu0 0.0
    %6419 = vmatprep.subr.mxu0 0.0
    %6420 = vmatpush1.msra.mxu0 0.0
    %6421 = vmatprep.subr.mxu0 0.0
    %6422 = vmatpush1.msra.mxu0 0.0
    %6423 = vmatprep.subr.mxu0 0.0
    %6424 = vmatpush1.msra.mxu0 0.0
    %6425 = vmatprep.subr.mxu0 0.0
    %6426 = vmatpush1.msra.mxu0 0.0
    %6427 = vmatprep.subr.mxu0 0.0
    %6428 = vmatpush1.msra.mxu0 0.0
    %6429 = vmatprep.subr.mxu0 0.0
    %6430 = vmatpush1.msra.mxu0 0.0
    %6431 = vmatprep.subr.mxu0 0.0
    %6432 = vmatpush1.msra.mxu0 0.0
    %6433 = vmatprep.subr.mxu0 0.0
    %6434 = vmatpush1.msra.mxu0 0.0
    %6435 = vmatprep.subr.mxu0 0.0
    %6436 = vmatpush1.msra.mxu0 0.0
    %6437 = vmatprep.subr.mxu0 0.0
    %6438 = vmatpush1.msra.mxu0 0.0
    %6439 = vmatprep.subr.mxu0 0.0
    %6440 = vmatpush1.msra.mxu0 0.0
    %6441 = vmatprep.subr.mxu0 0.0
    %6442 = vmatpush1.msra.mxu0 0.0
    %6443 = vmatprep.mubr.f32.mxu0 0.0
    %6444 = vmatmul.mubr.f32.gmra.mrb[0].mxu0 %v6374
    %v6445 = vpop.f32.mrb[0].mxu0
    %v6446 = vadd.f32 %v6372, %v6445
    %v6447 = vpop.f32.mrb[0].mxu0
    %6448 = vmatprep.mubr.f32.mxu0 0.0
    %6449 = vmatmul.mubr.f32.gmra.mrb[0].mxu0 %v6377
    %v6450 = vpop.f32.mrb[0].mxu0
    %v6451 = vadd.f32 %v6372, %v6450
    %v6452 = vpop.f32.mrb[0].mxu0
    %6453 = vdwg.mxu0
    %v6454 = vmax.f32 %v6446, 0.0
    %v6455 = vmax.f32 %v6451, 0.0
    %v6456 = vlaneseq
    %v6457 = vshrl.u32 %v6456, 7
    %v6458 = vsub.s32 4, %v6457
    %v6459 = vrot.slane %v4985, %v6458
    %v6461 = vsel %vm1563, %v6454, 0
    %v6464 = vsel %vm1563, %v6455, 0
    %6466 = vmatprep.subr.mxu0 0.0
    %6467 = vmatpush1.msra.mxu0 %v4977
    %6468 = vmatprep.subr.mxu0 0.0
    %6469 = vmatpush1.msra.mxu0 %v4978
    %6470 = vmatprep.subr.mxu0 0.0
    %6471 = vmatpush1.msra.mxu0 %v4979
    %6472 = vmatprep.subr.mxu0 0.0
    %6473 = vmatpush1.msra.mxu0 %v4980
    %6474 = vmatprep.subr.mxu0 0.0
    %6475 = vmatpush1.msra.mxu0 %v4981
    %6476 = vmatprep.subr.mxu0 0.0
    %6477 = vmatpush1.msra.mxu0 %v4982
    %6478 = vmatprep.subr.mxu0 0.0
    %6479 = vmatpush1.msra.mxu0 %v4983
    %6480 = vmatprep.subr.mxu0 0.0
    %6481 = vmatpush1.msra.mxu0 %v4984
    %6482 = vmatprep.subr.mxu0 0.0
    %6483 = vmatpush1.msra.mxu0 0.0
    %6484 = vmatprep.subr.mxu0 0.0
    %6485 = vmatpush1.msra.mxu0 0.0
    %6486 = vmatprep.subr.mxu0 0.0
    %6487 = vmatpush1.msra.mxu0 0.0
    %6488 = vmatprep.subr.mxu0 0.0
    %6489 = vmatpush1.msra.mxu0 0.0
    %6490 = vmatprep.subr.mxu0 0.0
    %6491 = vmatpush1.msra.mxu0 0.0
    %6492 = vmatprep.subr.mxu0 0.0
    %6493 = vmatpush1.msra.mxu0 0.0
    %6494 = vmatprep.subr.mxu0 0.0
    %6495 = vmatpush1.msra.mxu0 0.0
    %6496 = vmatprep.subr.mxu0 0.0
    %6497 = vmatpush1.msra.mxu0 0.0
    %6498 = vmatprep.subr.mxu0 0.0
    %6499 = vmatpush1.msra.mxu0 0.0
    %6500 = vmatprep.subr.mxu0 0.0
    %6501 = vmatpush1.msra.mxu0 0.0
    %6502 = vmatprep.subr.mxu0 0.0
    %6503 = vmatpush1.msra.mxu0 0.0
    %6504 = vmatprep.subr.mxu0 0.0
    %6505 = vmatpush1.msra.mxu0 0.0
    %6506 = vmatprep.subr.mxu0 0.0
    %6507 = vmatpush1.msra.mxu0 0.0
    %6508 = vmatprep.subr.mxu0 0.0
    %6509 = vmatpush1.msra.mxu0 0.0
    %6510 = vmatprep.subr.mxu0 0.0
    %6511 = vmatpush1.msra.mxu0 0.0
    %6512 = vmatprep.subr.mxu0 0.0
    %6513 = vmatpush1.msra.mxu0 0.0
    %6514 = vmatprep.subr.mxu0 0.0
    %6515 = vmatpush1.msra.mxu0 0.0
    %6516 = vmatprep.subr.mxu0 0.0
    %6517 = vmatpush1.msra.mxu0 0.0
    %6518 = vmatprep.subr.mxu0 0.0
    %6519 = vmatpush1.msra.mxu0 0.0
    %6520 = vmatprep.subr.mxu0 0.0
    %6521 = vmatpush1.msra.mxu0 0.0
    %6522 = vmatprep.subr.mxu0 0.0
    %6523 = vmatpush1.msra.mxu0 0.0
    %6524 = vmatprep.subr.mxu0 0.0
    %6525 = vmatpush1.msra.mxu0 0.0
    %6526 = vmatprep.subr.mxu0 0.0
    %6527 = vmatpush1.msra.mxu0 0.0
    %6528 = vmatprep.subr.mxu0 0.0
    %6529 = vmatpush1.msra.mxu0 0.0
    %6530 = vmatprep.mubr.f32.mxu0 0.0
    %6531 = vmatmul.mubr.f32.gmra.mrb[0].mxu0 %v6461
    %v6532 = vpop.f32.mrb[0].mxu0
    %v6533 = vadd.f32 %v6459, %v6532
    %v6534 = vpop.f32.mrb[0].mxu0
    %6535 = vmatprep.mubr.f32.mxu0 0.0
    %6536 = vmatmul.mubr.f32.gmra.mrb[0].mxu0 %v6464
    %v6537 = vpop.f32.mrb[0].mxu0
    %v6538 = vadd.f32 %v6459, %v6537
    %v6539 = vpop.f32.mrb[0].mxu0
    %6540 = vdwg.mxu0
    %v6541 = vadd.f32 %v6533, %v6367
    %v6542 = vadd.f32 %v6538, %v6368
    %v6543 = vsel %vm64, %v6541, 0.0
    %6544 = vadd.xlane.f32.xlu0 %v6543
    %v6545 = vpop.xlane.xlu0 %6544
    %v6546 = vsel %vm64, %v6542, 0.0
    %6547 = vadd.xlane.f32.xlu0 %v6546
    %v6548 = vpop.xlane.xlu0 %6547
    %v6549 = vmul.f32 %v6545, %v1439
    %v6550 = vmul.f32 %v6548, %v1439
    %v6551 = vsub.f32 %v6541, %v6549
    %v6552 = vsub.f32 %v6542, %v6550
    %v6553 = vmul.f32 %v6551, %v6551
    %v6554 = vmul.f32 %v6552, %v6552
    %v6555 = vsel %vm64, %v6553, 0.0
    %6556 = vadd.xlane.f32.xlu0 %v6555
    %v6557 = vpop.xlane.xlu0 %6556
    %v6558 = vsel %vm64, %v6554, 0.0
    %6559 = vadd.xlane.f32.xlu0 %v6558
    %v6560 = vpop.xlane.xlu0 %6559
    %v6561 = vmul.f32 %v6557, %v1439
    %v6562 = vmul.f32 %v6560, %v1439
    %v6563 = vadd.f32 %v6561, 1e-05
    %v6564 = vadd.f32 %v6562, 1e-05
    %v6565 = vrsqrt.pop %v6563
    %v6566 = vrsqrt.pop %v6564
    %v6567 = vmul.f32 %v6551, %v6565
    %v6568 = vmul.f32 %v6552, %v6566
    %v6569 = vlaneseq
    %v6570 = vshrl.u32 %v6569, 7
    %v6571 = vsub.s32 5, %v6570
    %v6572 = vrot.slane %v4985, %v6571
    %v6573 = vmul.f32 %v6567, %v6572
    %v6574 = vmul.f32 %v6568, %v6572
    %v6575 = vlaneseq
    %v6576 = vshrl.u32 %v6575, 7
    %v6577 = vsub.s32 6, %v6576
    %v6578 = vrot.slane %v4985, %v6577
    %v6579 = vadd.f32 %v6573, %v6578
    %v6580 = vadd.f32 %v6574, %v6578
    %v6581 = vld [vmem:[%s4] sm:$0xff]
    %v6582 = vld [vmem:[%s4 + $0x8] sm:$0xff]
    %v6583 = vld [vmem:[%s4 + $0x10] sm:$0xff]
    %v6584 = vld [vmem:[%s4 + $0x18] sm:$0xff]
    %v6585 = vld [vmem:[%s4 + $0x20] sm:$0x1]
    %v6586 = vlaneseq
    %v6587 = vshrl.u32 %v6586, 7
    %v6588 = vsub.s32 0, %v6587
    %v6589 = vrot.slane %v6585, %v6588
    %v6591 = vsel %vm64, %v6579, 0
    %v6594 = vsel %vm64, %v6580, 0
    %6596 = vmatprep.subr.mxu0 0.0
    %6597 = vmatpush1.msra.mxu0 %v6581
    %6598 = vmatprep.subr.mxu0 0.0
    %6599 = vmatpush1.msra.mxu0 %v6582
    %6600 = vmatprep.subr.mxu0 0.0
    %6601 = vmatpush1.msra.mxu0 %v6583
    %6602 = vmatprep.subr.mxu0 0.0
    %6603 = vmatpush1.msra.mxu0 %v6584
    %6604 = vmatprep.subr.mxu0 0.0
    %6605 = vmatpush1.msra.mxu0 0.0
    %6606 = vmatprep.subr.mxu0 0.0
    %6607 = vmatpush1.msra.mxu0 0.0
    %6608 = vmatprep.subr.mxu0 0.0
    %6609 = vmatpush1.msra.mxu0 0.0
    %6610 = vmatprep.subr.mxu0 0.0
    %6611 = vmatpush1.msra.mxu0 0.0
    %6612 = vmatprep.subr.mxu0 0.0
    %6613 = vmatpush1.msra.mxu0 0.0
    %6614 = vmatprep.subr.mxu0 0.0
    %6615 = vmatpush1.msra.mxu0 0.0
    %6616 = vmatprep.subr.mxu0 0.0
    %6617 = vmatpush1.msra.mxu0 0.0
    %6618 = vmatprep.subr.mxu0 0.0
    %6619 = vmatpush1.msra.mxu0 0.0
    %6620 = vmatprep.subr.mxu0 0.0
    %6621 = vmatpush1.msra.mxu0 0.0
    %6622 = vmatprep.subr.mxu0 0.0
    %6623 = vmatpush1.msra.mxu0 0.0
    %6624 = vmatprep.subr.mxu0 0.0
    %6625 = vmatpush1.msra.mxu0 0.0
    %6626 = vmatprep.subr.mxu0 0.0
    %6627 = vmatpush1.msra.mxu0 0.0
    %6628 = vmatprep.subr.mxu0 0.0
    %6629 = vmatpush1.msra.mxu0 0.0
    %6630 = vmatprep.subr.mxu0 0.0
    %6631 = vmatpush1.msra.mxu0 0.0
    %6632 = vmatprep.subr.mxu0 0.0
    %6633 = vmatpush1.msra.mxu0 0.0
    %6634 = vmatprep.subr.mxu0 0.0
    %6635 = vmatpush1.msra.mxu0 0.0
    %6636 = vmatprep.subr.mxu0 0.0
    %6637 = vmatpush1.msra.mxu0 0.0
    %6638 = vmatprep.subr.mxu0 0.0
    %6639 = vmatpush1.msra.mxu0 0.0
    %6640 = vmatprep.subr.mxu0 0.0
    %6641 = vmatpush1.msra.mxu0 0.0
    %6642 = vmatprep.subr.mxu0 0.0
    %6643 = vmatpush1.msra.mxu0 0.0
    %6644 = vmatprep.subr.mxu0 0.0
    %6645 = vmatpush1.msra.mxu0 0.0
    %6646 = vmatprep.subr.mxu0 0.0
    %6647 = vmatpush1.msra.mxu0 0.0
    %6648 = vmatprep.subr.mxu0 0.0
    %6649 = vmatpush1.msra.mxu0 0.0
    %6650 = vmatprep.subr.mxu0 0.0
    %6651 = vmatpush1.msra.mxu0 0.0
    %6652 = vmatprep.subr.mxu0 0.0
    %6653 = vmatpush1.msra.mxu0 0.0
    %6654 = vmatprep.subr.mxu0 0.0
    %6655 = vmatpush1.msra.mxu0 0.0
    %6656 = vmatprep.subr.mxu0 0.0
    %6657 = vmatpush1.msra.mxu0 0.0
    %6658 = vmatprep.subr.mxu0 0.0
    %6659 = vmatpush1.msra.mxu0 0.0
    %6660 = vmatprep.mubr.f32.mxu0 0.0
    %6661 = vmatmul.mubr.f32.gmra.mrb[0].mxu0 %v6591
    %v6662 = vpop.f32.mrb[0].mxu0
    %v6663 = vadd.f32 %v6589, %v6662
    %v6664 = vpop.f32.mrb[0].mxu0
    %6665 = vmatprep.mubr.f32.mxu0 0.0
    %6666 = vmatmul.mubr.f32.gmra.mrb[0].mxu0 %v6594
    %v6667 = vpop.f32.mrb[0].mxu0
    %v6668 = vadd.f32 %v6589, %v6667
    %v6669 = vpop.f32.mrb[0].mxu0
    %6670 = vdwg.mxu0
    %6671 = vst [vmem:[#allocation2] sm:$0xff] %v6663
    %6672 = vst [vmem:[#allocation2 + $0x8] sm:$0xff] %v6668
    // Predicated region
    $region22: #{transformer_forward.1} parent=1 // pred_check
      _
    $region23: #{transformer_forward.1} parent=1 // pred_check_branch
      %6674 = sbr.rel (0) target = $region25
    $region24: #{transformer_forward.1} parent=1 // pred_region
      %s6676 = ssub.s32 256, 256
      %6677 = vsyncadd [#allocation3], %s6676
      %s6678 = sshll.u32 [#allocation2], 4
      %s6679 = int_to_ptr.vmem [resolvable:$true] %s6678
      %6684 = dma.vmem_to_hbm [thread:$0]  %s6679, 256, %s5, [#allocation3], 128, 128, 8
    $region25: #{transformer_forward.1} parent=1 // pred_fallthru
      _
    // Predicated region
    $region26: #{transformer_forward.1} parent=1 // pred_check
      _
    $region27: #{transformer_forward.1} parent=1 // pred_check_branch
      %6686 = sbr.rel (0) target = $region29
    $region28: #{transformer_forward.1} parent=1 // pred_region
      %6687 = dma.done [#allocation3], 256
    $region29: #{transformer_forward.1} parent=1 // pred_fallthru
      _
    %6688 = vsyncpa [#allocation3], 1

</llo_original>
